<compile_context>
chip_gen: v7x
topology: tpu7x:2x2x1
jax: 0.10.0
libtpu: 0.0.40
codegen_flags: <defaults>
</compile_context>

<pallas_src>
import functools

import jax
import jax.numpy as jnp
from jax import lax
from jax.experimental import pallas as pl
from jax.experimental.pallas import tpu as pltpu


KERNEL_SIZES = [8, 4, 3]
N_CHANNELS = [32, 64, 64]
STRIDES = [4, 2, 1]
PADDINGS = [2, 1, 1]

_VMEM_LIMIT = 32 * 1024 * 1024   # >= default on all of v5e/v6e/v7x, << physical


# ------------------------------ helpers ------------------------------------

def _round_up(x, m):
    return ((x + m - 1) // m) * m


def _cdiv(a, b):
    return -(-a // b)


def _resident_spec(shape):
    nd = len(shape)
    return pl.BlockSpec(shape, lambda i, _nd=nd: (0,) * _nd)


# --------------------------- generic dense GEMM -----------------------------

def _dense_kernel(x_ref, w_ref, b_ref, o_ref, *, apply_relu):
    y = jnp.dot(x_ref[...], w_ref[...], preferred_element_type=jnp.float32)
    y = y + b_ref[...]
    if apply_relu:
        y = jnp.maximum(y, 0.0)
    o_ref[...] = y.astype(o_ref.dtype)


def dense_tiled(x, w, b, *, relu, out_dtype=jnp.bfloat16, tile_m=1024):
    """y = relu?(x @ w + b), M-tiled, resident weight, no M-pad copies."""
    x = x.astype(jnp.bfloat16)
    w = w.astype(jnp.bfloat16)
    M, K = x.shape
    _, N = w.shape
    tm = min(tile_m, M)                       # single full block for small M
    grid_m = pl.cdiv(M, tm)                   # ragged tail handled by Pallas
    return pl.pallas_call(
        functools.partial(_dense_kernel, apply_relu=relu),
        grid=(grid_m,),
        in_specs=[
            pl.BlockSpec((tm, K), lambda i: (i, 0)),
            pl.BlockSpec((K, N), lambda i: (0, 0)),    # weight stays resident
            pl.BlockSpec((1, N), lambda i: (0, 0)),
        ],
        out_specs=pl.BlockSpec((tm, N), lambda i: (i, 0)),
        out_shape=jax.ShapeDtypeStruct((M, N), out_dtype),
        compiler_params=pltpu.CompilerParams(
            dimension_semantics=("parallel",),
            vmem_limit_bytes=_VMEM_LIMIT),
    )(x, w, b.reshape(1, N).astype(jnp.float32))


# ------------------------------ fused conv ----------------------------------
#
# Each conv layer is expressed as a VALID stride-1 conv on a (space-to-depth
# transformed, zero-padded) input stored as a flattened (rows, channels)
# slab per image.  Inside the kernel the Kq*Kq kernel taps are plain 2-D
# matmuls on row-shifted slices of the VMEM-resident slab, accumulated in
# f32, so the im2col duplication never touches HBM.

def _conv_tap_kernel(x_ref, w_ref, b_ref, o_ref, *, n_img, kq, wq, m_out):
    cout = o_ref.shape[-1]
    for g in range(n_img):                              # images in this block
        acc = jnp.zeros((m_out, cout), jnp.float32)
        for qh in range(kq):
            for qw in range(kq):
                off = qh * wq + qw
                xs = x_ref[g, pl.ds(off, m_out), :]      # (m_out, Cin') bf16
                acc = acc + jnp.dot(xs, w_ref[qh * kq + qw],
                                    preferred_element_type=jnp.float32)
        y = jnp.maximum(acc + b_ref[...], 0.0)
        # NOTE(review item 4): Cout is kept at 32/64 (not padded to 128
        # lanes) -- this kernel is HBM-bound and lane-padding would write
        # 2-4x more output bytes; stores are not the binding slot here.
        o_ref[g, :, :] = y.astype(o_ref.dtype)


def conv_layer_pallas(x_flat, w_taps, bias, geom, imgs_per_block):
    n_total, r_in, cs = x_flat.shape
    n_taps, _, cout = w_taps.shape
    g = imgs_per_block
    m_out = geom['m_out']
    return pl.pallas_call(
        functools.partial(_conv_tap_kernel, n_img=g, kq=geom['kq'],
                          wq=geom['wq'], m_out=m_out),
        grid=(n_total // g,),
        in_specs=[
            pl.BlockSpec((g, r_in, cs), lambda i: (i, 0, 0)),
            pl.BlockSpec((n_taps, cs, cout), lambda i: (0, 0, 0)),
            pl.BlockSpec((1, cout), lambda i: (0, 0)),
        ],
        out_specs=pl.BlockSpec((g, m_out, cout), lambda i: (i, 0, 0)),
        out_shape=jax.ShapeDtypeStruct((n_total, m_out, cout), jnp.bfloat16),
        compiler_params=pltpu.CompilerParams(
            dimension_semantics=("parallel",),
            vmem_limit_bytes=_VMEM_LIMIT),
    )(x_flat, w_taps, bias.reshape(1, cout).astype(jnp.float32))


def conv_geometry(h_in, ks, stride, pad):
    hp = h_in + 2 * pad
    hs = _cdiv(hp, stride)                     # spatial size after s2d
    extra = hs * stride - hp                   # extra bottom/right zero pad
    kq = _cdiv(ks, stride)                     # taps per dim after s2d
    ho_full = hs - kq + 1                      # rows the kernel computes
    ho_valid = (h_in + 2 * pad - ks) // stride + 1   # torch output size
    assert 1 <= ho_valid <= ho_full
    m_out = ho_full * hs                       # output rows per image
    r_in = _round_up(hs * hs + kq - 1, 8)      # flattened input rows (+reach)
    return dict(hs=hs, wq=hs, extra=extra, kq=kq, ho_full=ho_full,
                ho_valid=ho_valid, wo_valid=ho_valid, m_out=m_out, r_in=r_in)


def prep_conv_input(x_nhwc, geom, stride, pad):
    """pad -> (space-to-depth if strided) -> flatten rows, all cheap XLA."""
    n, _, _, c = x_nhwc.shape
    hs, extra = geom['hs'], geom['extra']
    x = jnp.pad(x_nhwc, ((0, 0), (pad, pad + extra), (pad, pad + extra),
                         (0, 0)))
    if stride > 1:
        x = x.reshape(n, hs, stride, hs, stride, c)
        x = x.transpose(0, 1, 3, 2, 4, 5).reshape(n, hs, hs, stride * stride * c)
    x = x.reshape(n, hs * hs, x.shape[-1])
    x = jnp.pad(x, ((0, 0), (0, geom['r_in'] - hs * hs), (0, 0)))
    return x.astype(jnp.bfloat16)


def build_tap_weights(w_oihw, stride, kq):
    """PyTorch (Cout,Cin,kh,kw) -> (kq*kq, stride*stride*Cin, Cout) taps."""
    cout, cin, ks, _ = w_oihw.shape
    padk = kq * stride - ks
    wp = jnp.pad(w_oihw, ((0, 0), (0, 0), (0, padk), (0, padk)))
    wp = wp.reshape(cout, cin, kq, stride, kq, stride)
    wp = wp.transpose(2, 4, 3, 5, 1, 0)          # (qh, qw, ph, pw, cin, cout)
    return wp.reshape(kq * kq, stride * stride * cin, cout).astype(jnp.bfloat16)


# ----------------------------- heads kernels --------------------------------

def _mlp_tail(h0, tail_refs, hidden0, act_dtype):
    """Hidden layers 1.. + final layer for a fused encoder pair.
    Two sliced matmuls per layer (no block-diagonal zeros, review item 8)."""
    ha = h0[:, :hidden0]
    hb = h0[:, hidden0:]
    n_tail = len(tail_refs) // 4
    for li in range(n_tail):
        w1 = tail_refs[4 * li][...]
        b1 = tail_refs[4 * li + 1][...]
        w2 = tail_refs[4 * li + 2][...]
        b2 = tail_refs[4 * li + 3][...]
        ya = jnp.dot(ha, w1, preferred_element_type=jnp.float32) + b1
        yb = jnp.dot(hb, w2, preferred_element_type=jnp.float32) + b2
        if li < n_tail - 1:
            ha = jnp.maximum(ya, 0.0).astype(act_dtype)
            hb = jnp.maximum(yb, 0.0).astype(act_dtype)
        else:
            ha, hb = ya, yb                         # (tb, rp) f32 reprs
    return ha, hb


def _fs_tail_kernel(h0_ref, *refs, hidden0, rp):
    o_ref = refs[-1]
    ra, rb = _mlp_tail(h0_ref[...], refs[:-1], hidden0, h0_ref.dtype)
    o_ref[:, :rp] = ra                               # 128-lane aligned split
    o_ref[:, rp:] = rb


def _sa_tail_outer_kernel(h0_ref, fs_ref, *refs, hidden0, rp):
    o_ref = refs[-1]
    ra, rb = _mlp_tail(h0_ref[...], refs[:-1], hidden0, h0_ref.dtype)
    fs = fs_ref[...]                                 # (B, 2*rp) f32, resident
    dn = (((1,), (1,)), ((), ()))                    # contract last dims
    o_ref[0, :, :] = lax.dot_general(ra, fs[:, :rp], dn,
                                     preferred_element_type=jnp.float32)
    o_ref[1, :, :] = lax.dot_general(rb, fs[:, rp:], dn,
                                     preferred_element_type=jnp.float32)


def _flatten_tail(tail):
    flat = []
    for layer in tail:
        flat.extend(layer)
    return flat


def fs_tail(h0, tail_params, hidden0, rp, tile_b=128):
    b = h0.shape[0]
    tb = min(tile_b, b)
    flat = _flatten_tail(tail_params)
    in_specs = [pl.BlockSpec((tb, h0.shape[1]), lambda i: (i, 0))]
    in_specs += [_resident_spec(a.shape) for a in flat]
    return pl.pallas_call(
        functools.partial(_fs_tail_kernel, hidden0=hidden0, rp=rp),
        grid=(pl.cdiv(b, tb),),
        in_specs=in_specs,
        out_specs=pl.BlockSpec((tb, 2 * rp), lambda i: (i, 0)),
        out_shape=jax.ShapeDtypeStruct((b, 2 * rp), jnp.float32),
        compiler_params=pltpu.CompilerParams(
            dimension_semantics=("parallel",),
            vmem_limit_bytes=_VMEM_LIMIT),
    )(h0, *flat)


def sa_tail_outer(h0, fs_repr, tail_params, hidden0, rp, tile_b=128):
    b = h0.shape[0]
    tb = min(tile_b, b)
    flat = _flatten_tail(tail_params)
    in_specs = [pl.BlockSpec((tb, h0.shape[1]), lambda i: (i, 0)),
                _resident_spec(fs_repr.shape)]
    in_specs += [_resident_spec(a.shape) for a in flat]
    return pl.pallas_call(
        functools.partial(_sa_tail_outer_kernel, hidden0=hidden0, rp=rp),
        grid=(pl.cdiv(b, tb),),
        in_specs=in_specs,
        out_specs=pl.BlockSpec((2, tb, b), lambda i: (0, i, 0)),
        out_shape=jax.ShapeDtypeStruct((2, b, b), jnp.float32),
        compiler_params=pltpu.CompilerParams(
            dimension_semantics=("parallel",),
            vmem_limit_bytes=_VMEM_LIMIT),
    )(h0, fs_repr, *flat)


# --------------------------- parameter building -----------------------------

def init_torch_params(key, imsize, action_dim, hidden_sizes, repr_dim):
    """Random parameters in the PyTorch module's layouts/conventions."""
    keys = iter(jax.random.split(key, 64))
    conv = []
    cin = 3
    for ks, cout in zip(KERNEL_SIZES, N_CHANNELS):
        w = 0.05 * jax.random.normal(next(keys), (cout, cin, ks, ks), jnp.float32)
        b = 0.01 * jax.random.normal(next(keys), (cout,), jnp.float32)
        conv.append((w, b))
        cin = cout
    h = imsize
    for ks, s, p in zip(KERNEL_SIZES, STRIDES, PADDINGS):
        h = (h + 2 * p - ks) // s + 1
    state_dim = N_CHANNELS[-1] * h * h

    def mlp(in_dim):
        ps, d = [], in_dim
        for hs_ in hidden_sizes:
            ps.append((0.05 * jax.random.normal(next(keys), (d, hs_), jnp.float32),
                       0.01 * jax.random.normal(next(keys), (hs_,), jnp.float32)))
            d = hs_
        ps.append((0.05 * jax.random.normal(next(keys), (d, repr_dim), jnp.float32),
                   0.01 * jax.random.normal(next(keys), (repr_dim,), jnp.float32)))
        return ps

    return dict(conv=conv,
                sa1=mlp(state_dim + action_dim), fs1=mlp(state_dim),
                sa2=mlp(state_dim + action_dim), fs2=mlp(state_dim),
                state_hw=h, state_dim=state_dim)


def build_pallas_params(tparams, imsize, hidden_sizes, repr_dim):
    """One-time transformation of torch-layout params into kernel layouts."""
    assert len(hidden_sizes) >= 1
    conv_layers = []
    h = imsize
    for (w, b), ks, s, p in zip(tparams['conv'], KERNEL_SIZES, STRIDES,
                                PADDINGS):
        geom = conv_geometry(h, ks, s, p)
        conv_layers.append(dict(stride=s, pad=p, geom=geom,
                                w_taps=build_tap_weights(w, s, geom['kq']),
                                bias=b.astype(jnp.float32)))
        h = geom['ho_valid']

    c_last = N_CHANNELS[-1]
    state_dim = c_last * h * h
    # Fold the NHWC flatten into the layer-0 weight rows (review item 10):
    # torch feature (c, h, w)  <->  our feature (h, w, c).
    perm = jnp.arange(state_dim).reshape(c_last, h, h).transpose(1, 2, 0).reshape(-1)

    def perm_rows(w, has_action):
        ws = w[:state_dim][perm]
        if has_action:
            return jnp.concatenate([ws, w[state_dim:]], axis=0)
        return ws

    rp = _round_up(repr_dim, 128)               # lane-aligned repr blocks

    def fuse_layer0(p1, p2, has_action):        # concat-N (shared input only)
        w = jnp.concatenate([perm_rows(p1[0][0], has_action),
                             perm_rows(p2[0][0], has_action)], axis=1)
        b = jnp.concatenate([p1[0][1], p2[0][1]], axis=0)
        return w.astype(jnp.bfloat16), b.astype(jnp.float32)

    def tails(p1, p2):
        out = []
        n_layers = len(p1)
        for li in range(1, n_layers):
            w1, b1 = p1[li]
            w2, b2 = p2[li]
            if li == n_layers - 1:              # final layer -> pad to rp
                padn = rp - repr_dim
                w1 = jnp.pad(w1, ((0, 0), (0, padn)))
                b1 = jnp.pad(b1, (0, padn))
                w2 = jnp.pad(w2, ((0, 0), (0, padn)))
                b2 = jnp.pad(b2, (0, padn))
            out.append((w1.astype(jnp.bfloat16),
                        b1.reshape(1, -1).astype(jnp.float32),
                        w2.astype(jnp.bfloat16),
                        b2.reshape(1, -1).astype(jnp.float32)))
        return out

    sa1, sa2 = tparams['sa1'], tparams['sa2']
    fs1, fs2 = tparams['fs1'], tparams['fs2']
    w0_sa, b0_sa = fuse_layer0(sa1, sa2, True)
    w0_fs, b0_fs = fuse_layer0(fs1, fs2, False)
    heads = dict(w0_sa=w0_sa, b0_sa=b0_sa, w0_fs=w0_fs, b0_fs=b0_fs,
                 sa_tail=tails(sa1, sa2), fs_tail=tails(fs1, fs2),
                 hidden0=int(hidden_sizes[0]), rp=rp)
    return dict(conv=conv_layers, heads=heads)


# ------------------------------- forward ------------------------------------

def contrastive_qf_forward(obs, action, *, params, imsize):
    b = obs.shape[0]
    imlen = imsize * imsize * 3
    # obs rows pack [current image | future image], each flattened NCHW.
    imgs = obs.reshape(b, 2, imlen).transpose(1, 0, 2)
    imgs = imgs.reshape(2 * b, 3, imsize, imsize)
    x = jnp.transpose(imgs, (0, 2, 3, 1))                 # NHWC
    n_img = 2 * b
    g = min(8, n_img)                                     # images per block
    n_pad = _round_up(n_img, g)
    if n_pad != n_img:
        x = jnp.pad(x, ((0, n_pad - n_img), (0, 0), (0, 0), (0, 0)))
    x = x.astype(jnp.bfloat16)

    # Single CNN pass over current + future images, fused tap-matmul convs.
    for lp in params['conv']:
        geom = lp['geom']
        xin = prep_conv_input(x, geom, lp['stride'], lp['pad'])
        y = conv_layer_pallas(xin, lp['w_taps'], lp['bias'], geom, g)
        x = y.reshape(n_pad, geom['ho_full'], geom['wq'], y.shape[-1])
        x = x[:, :geom['ho_valid'], :geom['wo_valid'], :]

    feat = x.reshape(n_pad, -1)[:n_img]                   # NHWC-flat features
    state, future = feat[:b], feat[b:]

    hp = params['heads']
    sa_in = jnp.concatenate([state, action.astype(feat.dtype)], axis=-1)

    # Layer 0 (big K) streamed through the M-tiled GEMM; pairs fused along N.
    sa_h0 = dense_tiled(sa_in, hp['w0_sa'], hp['b0_sa'], relu=True)
    fs_h0 = dense_tiled(future, hp['w0_fs'], hp['b0_fs'], relu=True)

    fs_repr = fs_tail(fs_h0, hp['fs_tail'], hp['hidden0'], hp['rp'])
    out2 = sa_tail_outer(sa_h0, fs_repr, hp['sa_tail'], hp['hidden0'],
                         hp['rp'])                        # (2, B, B) f32
    # (B, B, 2): matches torch.stack([outer, outer2], dim=-1).
    return jnp.moveaxis(out2, 0, -1)


# ------------------------- pure-XLA f32 reference ---------------------------

def reference_forward(obs, action, tparams, imsize):
    b = obs.shape[0]
    imlen = imsize * imsize * 3

    def encode(flat):
        x = flat.reshape(b, 3, imsize, imsize)
        for (w, bias), s, p in zip(tparams['conv'], STRIDES, PADDINGS):
            x = lax.conv_general_dilated(
                x, w, (s, s), [(p, p), (p, p)],
                dimension_numbers=('NCHW', 'OIHW', 'NCHW'),
                precision=lax.Precision.HIGHEST)
            x = jnp.maximum(x + bias[None, :, None, None], 0.0)
        return x.reshape(b, -1)

    def mlp(x, ps):
        for i, (w, bias) in enumerate(ps):
            x = jnp.dot(x, w, precision=lax.Precision.HIGHEST) + bias
            if i < len(ps) - 1:
                x = jnp.maximum(x, 0.0)
        return x

    state = encode(obs[:, :imlen])
    future = encode(obs[:, imlen:])
    sa = jnp.concatenate([state, action], axis=-1)
    o1 = jnp.dot(mlp(sa, tparams['sa1']), mlp(future, tparams['fs1']).T,
                 precision=lax.Precision.HIGHEST)
    o2 = jnp.dot(mlp(sa, tparams['sa2']), mlp(future, tparams['fs2']).T,
                 precision=lax.Precision.HIGHEST)
    return jnp.stack([o1, o2], axis=-1)


# --------------------------------- main --------------------------------------

if __name__ == "__main__":
    B = 2
    IMSIZE = 16
    ACTION_DIM = 4
    HIDDEN_SIZES = (32, 32)
    REPR_DIM = 8

    root = jax.random.PRNGKey(0)
    k_param, k_obs, k_act = jax.random.split(root, 3)

    tparams = init_torch_params(k_param, IMSIZE, ACTION_DIM, HIDDEN_SIZES,
                                REPR_DIM)
    pparams = build_pallas_params(tparams, IMSIZE, HIDDEN_SIZES, REPR_DIM)

    imlen = IMSIZE * IMSIZE * 3
    obs = jax.random.normal(k_obs, (B, 2 * imlen), jnp.float32)
    action = jax.random.normal(k_act, (B, ACTION_DIM), jnp.float32)

    fwd = jax.jit(functools.partial(contrastive_qf_forward, params=pparams,
                                    imsize=IMSIZE))
    out = jax.block_until_ready(fwd(obs, action))
    assert out.shape == (B, B, 2) and out.dtype == jnp.float32

    # Validate against the f32 PyTorch-convention reference (review concern).
    ref = reference_forward(obs, action, tparams, IMSIZE)
    err = float(jnp.max(jnp.abs(out - ref)))
    scale = float(jnp.max(jnp.abs(ref)))
    assert err <= 0.05 * scale + 1e-5, (
        f"numerical mismatch: max_err={err:.3e} scale={scale:.3e}")

    print("KERNEL_OK")
</pallas_src>

<mosaic_0001>
module attributes {stable_mosaic.version = 11 : i64} {
  func.func @_conv_tap_kernel(%arg0: i32, %arg1: memref<4x32x48xbf16, #tpu.memory_space<vmem>>, %arg2: memref<4x48x32xbf16, #tpu.memory_space<vmem>>, %arg3: memref<1x32xf32, #tpu.memory_space<vmem>>, %arg4: memref<4x20x32xbf16, #tpu.memory_space<vmem>>) attributes {dimension_semantics = [#tpu.dimension_semantics<parallel>], iteration_bounds = array<i64: 1>, scalar_prefetch = 0 : i64, scratch_operands = 0 : i64, tpu.core_type = #tpu.core_type<tc>, window_params = [{transform_indices = @transform_0, window_bounds = array<i64: 4, 32, 48>}, {pipeline_mode = #tpu.pipeline_mode<synchronous>, transform_indices = @transform_1, window_bounds = array<i64: 4, 48, 32>}, {pipeline_mode = #tpu.pipeline_mode<synchronous>, transform_indices = @transform_2, window_bounds = array<i64: 1, 32>}, {transform_indices = @transform_3, window_bounds = array<i64: 4, 20, 32>}]} {
    %cst = arith.constant 0.000000e+00 : f32
    %0 = vector.broadcast %cst : f32 to vector<20x32xf32>
    %c0 = arith.constant 0 : index
    %c0_0 = arith.constant 0 : index
    %c0_1 = arith.constant 0 : index
    %1 = vector.load %arg1[%c0, %c0_0, %c0_1] : memref<4x32x48xbf16, #tpu.memory_space<vmem>>, vector<1x20x48xbf16>
    %2 = vector.shape_cast %1 : vector<1x20x48xbf16> to vector<20x48xbf16>
    %c0_2 = arith.constant 0 : index
    %c0_3 = arith.constant 0 : index
    %c0_4 = arith.constant 0 : index
    %3 = vector.load %arg2[%c0_2, %c0_3, %c0_4] : memref<4x48x32xbf16, #tpu.memory_space<vmem>>, vector<1x48x32xbf16>
    %4 = vector.shape_cast %3 : vector<1x48x32xbf16> to vector<48x32xbf16>
    %cst_5 = arith.constant dense<0.000000e+00> : vector<20x32xf32>
    %5 = tpu.matmul %2, %4, %cst_5 {dimension_numbers = #tpu.dot_dimension_numbers<[1], [0], [0], [1], [0, 0, 1, 1], [], []>} : vector<20x48xbf16>, vector<48x32xbf16>, vector<20x32xf32> -> vector<20x32xf32>
    %6 = arith.addf %0, %5 : vector<20x32xf32>
    %c0_6 = arith.constant 0 : index
    %c1 = arith.constant 1 : index
    %c0_7 = arith.constant 0 : index
    %7 = vector.load %arg1[%c0_6, %c1, %c0_7] : memref<4x32x48xbf16, #tpu.memory_space<vmem>>, vector<1x20x48xbf16>
    %8 = vector.shape_cast %7 : vector<1x20x48xbf16> to vector<20x48xbf16>
    %c1_8 = arith.constant 1 : index
    %c0_9 = arith.constant 0 : index
    %c0_10 = arith.constant 0 : index
    %9 = vector.load %arg2[%c1_8, %c0_9, %c0_10] : memref<4x48x32xbf16, #tpu.memory_space<vmem>>, vector<1x48x32xbf16>
    %10 = vector.shape_cast %9 : vector<1x48x32xbf16> to vector<48x32xbf16>
    %cst_11 = arith.constant dense<0.000000e+00> : vector<20x32xf32>
    %11 = tpu.matmul %8, %10, %cst_11 {dimension_numbers = #tpu.dot_dimension_numbers<[1], [0], [0], [1], [0, 0, 1, 1], [], []>} : vector<20x48xbf16>, vector<48x32xbf16>, vector<20x32xf32> -> vector<20x32xf32>
    %12 = arith.addf %6, %11 : vector<20x32xf32>
    %c0_12 = arith.constant 0 : index
    %c5 = arith.constant 5 : index
    %c0_13 = arith.constant 0 : index
    %13 = vector.load %arg1[%c0_12, %c5, %c0_13] : memref<4x32x48xbf16, #tpu.memory_space<vmem>>, vector<1x20x48xbf16>
    %14 = vector.shape_cast %13 : vector<1x20x48xbf16> to vector<20x48xbf16>
    %c2 = arith.constant 2 : index
    %c0_14 = arith.constant 0 : index
    %c0_15 = arith.constant 0 : index
    %15 = vector.load %arg2[%c2, %c0_14, %c0_15] : memref<4x48x32xbf16, #tpu.memory_space<vmem>>, vector<1x48x32xbf16>
    %16 = vector.shape_cast %15 : vector<1x48x32xbf16> to vector<48x32xbf16>
    %cst_16 = arith.constant dense<0.000000e+00> : vector<20x32xf32>
    %17 = tpu.matmul %14, %16, %cst_16 {dimension_numbers = #tpu.dot_dimension_numbers<[1], [0], [0], [1], [0, 0, 1, 1], [], []>} : vector<20x48xbf16>, vector<48x32xbf16>, vector<20x32xf32> -> vector<20x32xf32>
    %18 = arith.addf %12, %17 : vector<20x32xf32>
    %c0_17 = arith.constant 0 : index
    %c6 = arith.constant 6 : index
    %c0_18 = arith.constant 0 : index
    %19 = vector.load %arg1[%c0_17, %c6, %c0_18] : memref<4x32x48xbf16, #tpu.memory_space<vmem>>, vector<1x20x48xbf16>
    %20 = vector.shape_cast %19 : vector<1x20x48xbf16> to vector<20x48xbf16>
    %c3 = arith.constant 3 : index
    %c0_19 = arith.constant 0 : index
    %c0_20 = arith.constant 0 : index
    %21 = vector.load %arg2[%c3, %c0_19, %c0_20] : memref<4x48x32xbf16, #tpu.memory_space<vmem>>, vector<1x48x32xbf16>
    %22 = vector.shape_cast %21 : vector<1x48x32xbf16> to vector<48x32xbf16>
    %cst_21 = arith.constant dense<0.000000e+00> : vector<20x32xf32>
    %23 = tpu.matmul %20, %22, %cst_21 {dimension_numbers = #tpu.dot_dimension_numbers<[1], [0], [0], [1], [0, 0, 1, 1], [], []>} : vector<20x48xbf16>, vector<48x32xbf16>, vector<20x32xf32> -> vector<20x32xf32>
    %24 = arith.addf %18, %23 : vector<20x32xf32>
    %c0_22 = arith.constant 0 : index
    %c0_23 = arith.constant 0 : index
    %25 = vector.load %arg3[%c0_22, %c0_23] : memref<1x32xf32, #tpu.memory_space<vmem>>, vector<1x32xf32>
    %26 = vector.broadcast %25 : vector<1x32xf32> to vector<20x32xf32>
    %27 = arith.addf %24, %26 : vector<20x32xf32>
    %cst_24 = arith.constant 0.000000e+00 : f32
    %28 = vector.broadcast %cst_24 : f32 to vector<20x32xf32>
    %29 = arith.maximumf %27, %28 : vector<20x32xf32>
    %30 = arith.truncf %29 : vector<20x32xf32> to vector<20x32xbf16>
    %c0_25 = arith.constant 0 : index
    %c0_26 = arith.constant 0 : index
    %c0_27 = arith.constant 0 : index
    %31 = vector.load %arg4[%c0_25, %c0_26, %c0_27] : memref<4x20x32xbf16, #tpu.memory_space<vmem>>, vector<1x20x32xbf16>
    %32 = vector.shape_cast %31 : vector<1x20x32xbf16> to vector<20x32xbf16>
    %33 = vector.shape_cast %30 : vector<20x32xbf16> to vector<1x20x32xbf16>
    tpu.vector_store %arg4[%c0_25, %c0_26, %c0_27], %33 {strides = array<i32>} : memref<4x20x32xbf16, #tpu.memory_space<vmem>>, vector<1x20x32xbf16>,
    %cst_28 = arith.constant 0.000000e+00 : f32
    %34 = vector.broadcast %cst_28 : f32 to vector<20x32xf32>
    %c1_29 = arith.constant 1 : index
    %c0_30 = arith.constant 0 : index
    %c0_31 = arith.constant 0 : index
    %35 = vector.load %arg1[%c1_29, %c0_30, %c0_31] : memref<4x32x48xbf16, #tpu.memory_space<vmem>>, vector<1x20x48xbf16>
    %36 = vector.shape_cast %35 : vector<1x20x48xbf16> to vector<20x48xbf16>
    %c0_32 = arith.constant 0 : index
    %c0_33 = arith.constant 0 : index
    %c0_34 = arith.constant 0 : index
    %37 = vector.load %arg2[%c0_32, %c0_33, %c0_34] : memref<4x48x32xbf16, #tpu.memory_space<vmem>>, vector<1x48x32xbf16>
    %38 = vector.shape_cast %37 : vector<1x48x32xbf16> to vector<48x32xbf16>
    %cst_35 = arith.constant dense<0.000000e+00> : vector<20x32xf32>
    %39 = tpu.matmul %36, %38, %cst_35 {dimension_numbers = #tpu.dot_dimension_numbers<[1], [0], [0], [1], [0, 0, 1, 1], [], []>} : vector<20x48xbf16>, vector<48x32xbf16>, vector<20x32xf32> -> vector<20x32xf32>
    %40 = arith.addf %34, %39 : vector<20x32xf32>
    %c1_36 = arith.constant 1 : index
    %c1_37 = arith.constant 1 : index
    %c0_38 = arith.constant 0 : index
    %41 = vector.load %arg1[%c1_36, %c1_37, %c0_38] : memref<4x32x48xbf16, #tpu.memory_space<vmem>>, vector<1x20x48xbf16>
    %42 = vector.shape_cast %41 : vector<1x20x48xbf16> to vector<20x48xbf16>
    %c1_39 = arith.constant 1 : index
    %c0_40 = arith.constant 0 : index
    %c0_41 = arith.constant 0 : index
    %43 = vector.load %arg2[%c1_39, %c0_40, %c0_41] : memref<4x48x32xbf16, #tpu.memory_space<vmem>>, vector<1x48x32xbf16>
    %44 = vector.shape_cast %43 : vector<1x48x32xbf16> to vector<48x32xbf16>
    %cst_42 = arith.constant dense<0.000000e+00> : vector<20x32xf32>
    %45 = tpu.matmul %42, %44, %cst_42 {dimension_numbers = #tpu.dot_dimension_numbers<[1], [0], [0], [1], [0, 0, 1, 1], [], []>} : vector<20x48xbf16>, vector<48x32xbf16>, vector<20x32xf32> -> vector<20x32xf32>
    %46 = arith.addf %40, %45 : vector<20x32xf32>
    %c1_43 = arith.constant 1 : index
    %c5_44 = arith.constant 5 : index
    %c0_45 = arith.constant 0 : index
    %47 = vector.load %arg1[%c1_43, %c5_44, %c0_45] : memref<4x32x48xbf16, #tpu.memory_space<vmem>>, vector<1x20x48xbf16>
    %48 = vector.shape_cast %47 : vector<1x20x48xbf16> to vector<20x48xbf16>
    %c2_46 = arith.constant 2 : index
    %c0_47 = arith.constant 0 : index
    %c0_48 = arith.constant 0 : index
    %49 = vector.load %arg2[%c2_46, %c0_47, %c0_48] : memref<4x48x32xbf16, #tpu.memory_space<vmem>>, vector<1x48x32xbf16>
    %50 = vector.shape_cast %49 : vector<1x48x32xbf16> to vector<48x32xbf16>
    %cst_49 = arith.constant dense<0.000000e+00> : vector<20x32xf32>
    %51 = tpu.matmul %48, %50, %cst_49 {dimension_numbers = #tpu.dot_dimension_numbers<[1], [0], [0], [1], [0, 0, 1, 1], [], []>} : vector<20x48xbf16>, vector<48x32xbf16>, vector<20x32xf32> -> vector<20x32xf32>
    %52 = arith.addf %46, %51 : vector<20x32xf32>
    %c1_50 = arith.constant 1 : index
    %c6_51 = arith.constant 6 : index
    %c0_52 = arith.constant 0 : index
    %53 = vector.load %arg1[%c1_50, %c6_51, %c0_52] : memref<4x32x48xbf16, #tpu.memory_space<vmem>>, vector<1x20x48xbf16>
    %54 = vector.shape_cast %53 : vector<1x20x48xbf16> to vector<20x48xbf16>
    %c3_53 = arith.constant 3 : index
    %c0_54 = arith.constant 0 : index
    %c0_55 = arith.constant 0 : index
    %55 = vector.load %arg2[%c3_53, %c0_54, %c0_55] : memref<4x48x32xbf16, #tpu.memory_space<vmem>>, vector<1x48x32xbf16>
    %56 = vector.shape_cast %55 : vector<1x48x32xbf16> to vector<48x32xbf16>
    %cst_56 = arith.constant dense<0.000000e+00> : vector<20x32xf32>
    %57 = tpu.matmul %54, %56, %cst_56 {dimension_numbers = #tpu.dot_dimension_numbers<[1], [0], [0], [1], [0, 0, 1, 1], [], []>} : vector<20x48xbf16>, vector<48x32xbf16>, vector<20x32xf32> -> vector<20x32xf32>
    %58 = arith.addf %52, %57 : vector<20x32xf32>
    %c0_57 = arith.constant 0 : index
    %c0_58 = arith.constant 0 : index
    %59 = vector.load %arg3[%c0_57, %c0_58] : memref<1x32xf32, #tpu.memory_space<vmem>>, vector<1x32xf32>
    %60 = vector.broadcast %59 : vector<1x32xf32> to vector<20x32xf32>
    %61 = arith.addf %58, %60 : vector<20x32xf32>
    %cst_59 = arith.constant 0.000000e+00 : f32
    %62 = vector.broadcast %cst_59 : f32 to vector<20x32xf32>
    %63 = arith.maximumf %61, %62 : vector<20x32xf32>
    %64 = arith.truncf %63 : vector<20x32xf32> to vector<20x32xbf16>
    %c1_60 = arith.constant 1 : index
    %c0_61 = arith.constant 0 : index
    %c0_62 = arith.constant 0 : index
    %65 = vector.load %arg4[%c1_60, %c0_61, %c0_62] : memref<4x20x32xbf16, #tpu.memory_space<vmem>>, vector<1x20x32xbf16>
    %66 = vector.shape_cast %65 : vector<1x20x32xbf16> to vector<20x32xbf16>
    %67 = vector.shape_cast %64 : vector<20x32xbf16> to vector<1x20x32xbf16>
    tpu.vector_store %arg4[%c1_60, %c0_61, %c0_62], %67 {strides = array<i32>} : memref<4x20x32xbf16, #tpu.memory_space<vmem>>, vector<1x20x32xbf16>,
    %cst_63 = arith.constant 0.000000e+00 : f32
    %68 = vector.broadcast %cst_63 : f32 to vector<20x32xf32>
    %c2_64 = arith.constant 2 : index
    %c0_65 = arith.constant 0 : index
    %c0_66 = arith.constant 0 : index
    %69 = vector.load %arg1[%c2_64, %c0_65, %c0_66] : memref<4x32x48xbf16, #tpu.memory_space<vmem>>, vector<1x20x48xbf16>
    %70 = vector.shape_cast %69 : vector<1x20x48xbf16> to vector<20x48xbf16>
    %c0_67 = arith.constant 0 : index
    %c0_68 = arith.constant 0 : index
    %c0_69 = arith.constant 0 : index
    %71 = vector.load %arg2[%c0_67, %c0_68, %c0_69] : memref<4x48x32xbf16, #tpu.memory_space<vmem>>, vector<1x48x32xbf16>
    %72 = vector.shape_cast %71 : vector<1x48x32xbf16> to vector<48x32xbf16>
    %cst_70 = arith.constant dense<0.000000e+00> : vector<20x32xf32>
    %73 = tpu.matmul %70, %72, %cst_70 {dimension_numbers = #tpu.dot_dimension_numbers<[1], [0], [0], [1], [0, 0, 1, 1], [], []>} : vector<20x48xbf16>, vector<48x32xbf16>, vector<20x32xf32> -> vector<20x32xf32>
    %74 = arith.addf %68, %73 : vector<20x32xf32>
    %c2_71 = arith.constant 2 : index
    %c1_72 = arith.constant 1 : index
    %c0_73 = arith.constant 0 : index
    %75 = vector.load %arg1[%c2_71, %c1_72, %c0_73] : memref<4x32x48xbf16, #tpu.memory_space<vmem>>, vector<1x20x48xbf16>
    %76 = vector.shape_cast %75 : vector<1x20x48xbf16> to vector<20x48xbf16>
    %c1_74 = arith.constant 1 : index
    %c0_75 = arith.constant 0 : index
    %c0_76 = arith.constant 0 : index
    %77 = vector.load %arg2[%c1_74, %c0_75, %c0_76] : memref<4x48x32xbf16, #tpu.memory_space<vmem>>, vector<1x48x32xbf16>
    %78 = vector.shape_cast %77 : vector<1x48x32xbf16> to vector<48x32xbf16>
    %cst_77 = arith.constant dense<0.000000e+00> : vector<20x32xf32>
    %79 = tpu.matmul %76, %78, %cst_77 {dimension_numbers = #tpu.dot_dimension_numbers<[1], [0], [0], [1], [0, 0, 1, 1], [], []>} : vector<20x48xbf16>, vector<48x32xbf16>, vector<20x32xf32> -> vector<20x32xf32>
    %80 = arith.addf %74, %79 : vector<20x32xf32>
    %c2_78 = arith.constant 2 : index
    %c5_79 = arith.constant 5 : index
    %c0_80 = arith.constant 0 : index
    %81 = vector.load %arg1[%c2_78, %c5_79, %c0_80] : memref<4x32x48xbf16, #tpu.memory_space<vmem>>, vector<1x20x48xbf16>
    %82 = vector.shape_cast %81 : vector<1x20x48xbf16> to vector<20x48xbf16>
    %c2_81 = arith.constant 2 : index
    %c0_82 = arith.constant 0 : index
    %c0_83 = arith.constant 0 : index
    %83 = vector.load %arg2[%c2_81, %c0_82, %c0_83] : memref<4x48x32xbf16, #tpu.memory_space<vmem>>, vector<1x48x32xbf16>
    %84 = vector.shape_cast %83 : vector<1x48x32xbf16> to vector<48x32xbf16>
    %cst_84 = arith.constant dense<0.000000e+00> : vector<20x32xf32>
    %85 = tpu.matmul %82, %84, %cst_84 {dimension_numbers = #tpu.dot_dimension_numbers<[1], [0], [0], [1], [0, 0, 1, 1], [], []>} : vector<20x48xbf16>, vector<48x32xbf16>, vector<20x32xf32> -> vector<20x32xf32>
    %86 = arith.addf %80, %85 : vector<20x32xf32>
    %c2_85 = arith.constant 2 : index
    %c6_86 = arith.constant 6 : index
    %c0_87 = arith.constant 0 : index
    %87 = vector.load %arg1[%c2_85, %c6_86, %c0_87] : memref<4x32x48xbf16, #tpu.memory_space<vmem>>, vector<1x20x48xbf16>
    %88 = vector.shape_cast %87 : vector<1x20x48xbf16> to vector<20x48xbf16>
    %c3_88 = arith.constant 3 : index
    %c0_89 = arith.constant 0 : index
    %c0_90 = arith.constant 0 : index
    %89 = vector.load %arg2[%c3_88, %c0_89, %c0_90] : memref<4x48x32xbf16, #tpu.memory_space<vmem>>, vector<1x48x32xbf16>
    %90 = vector.shape_cast %89 : vector<1x48x32xbf16> to vector<48x32xbf16>
    %cst_91 = arith.constant dense<0.000000e+00> : vector<20x32xf32>
    %91 = tpu.matmul %88, %90, %cst_91 {dimension_numbers = #tpu.dot_dimension_numbers<[1], [0], [0], [1], [0, 0, 1, 1], [], []>} : vector<20x48xbf16>, vector<48x32xbf16>, vector<20x32xf32> -> vector<20x32xf32>
    %92 = arith.addf %86, %91 : vector<20x32xf32>
    %c0_92 = arith.constant 0 : index
    %c0_93 = arith.constant 0 : index
    %93 = vector.load %arg3[%c0_92, %c0_93] : memref<1x32xf32, #tpu.memory_space<vmem>>, vector<1x32xf32>
    %94 = vector.broadcast %93 : vector<1x32xf32> to vector<20x32xf32>
    %95 = arith.addf %92, %94 : vector<20x32xf32>
    %cst_94 = arith.constant 0.000000e+00 : f32
    %96 = vector.broadcast %cst_94 : f32 to vector<20x32xf32>
    %97 = arith.maximumf %95, %96 : vector<20x32xf32>
    %98 = arith.truncf %97 : vector<20x32xf32> to vector<20x32xbf16>
    %c2_95 = arith.constant 2 : index
    %c0_96 = arith.constant 0 : index
    %c0_97 = arith.constant 0 : index
    %99 = vector.load %arg4[%c2_95, %c0_96, %c0_97] : memref<4x20x32xbf16, #tpu.memory_space<vmem>>, vector<1x20x32xbf16>
    %100 = vector.shape_cast %99 : vector<1x20x32xbf16> to vector<20x32xbf16>
    %101 = vector.shape_cast %98 : vector<20x32xbf16> to vector<1x20x32xbf16>
    tpu.vector_store %arg4[%c2_95, %c0_96, %c0_97], %101 {strides = array<i32>} : memref<4x20x32xbf16, #tpu.memory_space<vmem>>, vector<1x20x32xbf16>,
    %cst_98 = arith.constant 0.000000e+00 : f32
    %102 = vector.broadcast %cst_98 : f32 to vector<20x32xf32>
    %c3_99 = arith.constant 3 : index
    %c0_100 = arith.constant 0 : index
    %c0_101 = arith.constant 0 : index
    %103 = vector.load %arg1[%c3_99, %c0_100, %c0_101] : memref<4x32x48xbf16, #tpu.memory_space<vmem>>, vector<1x20x48xbf16>
    %104 = vector.shape_cast %103 : vector<1x20x48xbf16> to vector<20x48xbf16>
    %c0_102 = arith.constant 0 : index
    %c0_103 = arith.constant 0 : index
    %c0_104 = arith.constant 0 : index
    %105 = vector.load %arg2[%c0_102, %c0_103, %c0_104] : memref<4x48x32xbf16, #tpu.memory_space<vmem>>, vector<1x48x32xbf16>
    %106 = vector.shape_cast %105 : vector<1x48x32xbf16> to vector<48x32xbf16>
    %cst_105 = arith.constant dense<0.000000e+00> : vector<20x32xf32>
    %107 = tpu.matmul %104, %106, %cst_105 {dimension_numbers = #tpu.dot_dimension_numbers<[1], [0], [0], [1], [0, 0, 1, 1], [], []>} : vector<20x48xbf16>, vector<48x32xbf16>, vector<20x32xf32> -> vector<20x32xf32>
    %108 = arith.addf %102, %107 : vector<20x32xf32>
    %c3_106 = arith.constant 3 : index
    %c1_107 = arith.constant 1 : index
    %c0_108 = arith.constant 0 : index
    %109 = vector.load %arg1[%c3_106, %c1_107, %c0_108] : memref<4x32x48xbf16, #tpu.memory_space<vmem>>, vector<1x20x48xbf16>
    %110 = vector.shape_cast %109 : vector<1x20x48xbf16> to vector<20x48xbf16>
    %c1_109 = arith.constant 1 : index
    %c0_110 = arith.constant 0 : index
    %c0_111 = arith.constant 0 : index
    %111 = vector.load %arg2[%c1_109, %c0_110, %c0_111] : memref<4x48x32xbf16, #tpu.memory_space<vmem>>, vector<1x48x32xbf16>
    %112 = vector.shape_cast %111 : vector<1x48x32xbf16> to vector<48x32xbf16>
    %cst_112 = arith.constant dense<0.000000e+00> : vector<20x32xf32>
    %113 = tpu.matmul %110, %112, %cst_112 {dimension_numbers = #tpu.dot_dimension_numbers<[1], [0], [0], [1], [0, 0, 1, 1], [], []>} : vector<20x48xbf16>, vector<48x32xbf16>, vector<20x32xf32> -> vector<20x32xf32>
    %114 = arith.addf %108, %113 : vector<20x32xf32>
    %c3_113 = arith.constant 3 : index
    %c5_114 = arith.constant 5 : index
    %c0_115 = arith.constant 0 : index
    %115 = vector.load %arg1[%c3_113, %c5_114, %c0_115] : memref<4x32x48xbf16, #tpu.memory_space<vmem>>, vector<1x20x48xbf16>
    %116 = vector.shape_cast %115 : vector<1x20x48xbf16> to vector<20x48xbf16>
    %c2_116 = arith.constant 2 : index
    %c0_117 = arith.constant 0 : index
    %c0_118 = arith.constant 0 : index
    %117 = vector.load %arg2[%c2_116, %c0_117, %c0_118] : memref<4x48x32xbf16, #tpu.memory_space<vmem>>, vector<1x48x32xbf16>
    %118 = vector.shape_cast %117 : vector<1x48x32xbf16> to vector<48x32xbf16>
    %cst_119 = arith.constant dense<0.000000e+00> : vector<20x32xf32>
    %119 = tpu.matmul %116, %118, %cst_119 {dimension_numbers = #tpu.dot_dimension_numbers<[1], [0], [0], [1], [0, 0, 1, 1], [], []>} : vector<20x48xbf16>, vector<48x32xbf16>, vector<20x32xf32> -> vector<20x32xf32>
    %120 = arith.addf %114, %119 : vector<20x32xf32>
    %c3_120 = arith.constant 3 : index
    %c6_121 = arith.constant 6 : index
    %c0_122 = arith.constant 0 : index
    %121 = vector.load %arg1[%c3_120, %c6_121, %c0_122] : memref<4x32x48xbf16, #tpu.memory_space<vmem>>, vector<1x20x48xbf16>
    %122 = vector.shape_cast %121 : vector<1x20x48xbf16> to vector<20x48xbf16>
    %c3_123 = arith.constant 3 : index
    %c0_124 = arith.constant 0 : index
    %c0_125 = arith.constant 0 : index
    %123 = vector.load %arg2[%c3_123, %c0_124, %c0_125] : memref<4x48x32xbf16, #tpu.memory_space<vmem>>, vector<1x48x32xbf16>
    %124 = vector.shape_cast %123 : vector<1x48x32xbf16> to vector<48x32xbf16>
    %cst_126 = arith.constant dense<0.000000e+00> : vector<20x32xf32>
    %125 = tpu.matmul %122, %124, %cst_126 {dimension_numbers = #tpu.dot_dimension_numbers<[1], [0], [0], [1], [0, 0, 1, 1], [], []>} : vector<20x48xbf16>, vector<48x32xbf16>, vector<20x32xf32> -> vector<20x32xf32>
    %126 = arith.addf %120, %125 : vector<20x32xf32>
    %c0_127 = arith.constant 0 : index
    %c0_128 = arith.constant 0 : index
    %127 = vector.load %arg3[%c0_127, %c0_128] : memref<1x32xf32, #tpu.memory_space<vmem>>, vector<1x32xf32>
    %128 = vector.broadcast %127 : vector<1x32xf32> to vector<20x32xf32>
    %129 = arith.addf %126, %128 : vector<20x32xf32>
    %cst_129 = arith.constant 0.000000e+00 : f32
    %130 = vector.broadcast %cst_129 : f32 to vector<20x32xf32>
    %131 = arith.maximumf %129, %130 : vector<20x32xf32>
    %132 = arith.truncf %131 : vector<20x32xf32> to vector<20x32xbf16>
    %c3_130 = arith.constant 3 : index
    %c0_131 = arith.constant 0 : index
    %c0_132 = arith.constant 0 : index
    %133 = vector.load %arg4[%c3_130, %c0_131, %c0_132] : memref<4x20x32xbf16, #tpu.memory_space<vmem>>, vector<1x20x32xbf16>
    %134 = vector.shape_cast %133 : vector<1x20x32xbf16> to vector<20x32xbf16>
    %135 = vector.shape_cast %132 : vector<20x32xbf16> to vector<1x20x32xbf16>
    tpu.vector_store %arg4[%c3_130, %c0_131, %c0_132], %135 {strides = array<i32>} : memref<4x20x32xbf16, #tpu.memory_space<vmem>>, vector<1x20x32xbf16>,
    return
  }
  func.func @transform_0(%arg0: i32) -> (i32, i32, i32) {
    %c0_i32 = arith.constant 0 : i32
    %c0_i32_0 = arith.constant 0 : i32
    %c0_i32_1 = arith.constant 0 : i32
    return %arg0, %c0_i32, %c0_i32_0 : i32, i32, i32
  }
  func.func @transform_1(%arg0: i32) -> (i32, i32, i32) {
    %c0_i32 = arith.constant 0 : i32
    %c0_i32_0 = arith.constant 0 : i32
    %c0_i32_1 = arith.constant 0 : i32
    %c0_i32_2 = arith.constant 0 : i32
    return %c0_i32, %c0_i32_0, %c0_i32_1 : i32, i32, i32
  }
  func.func @transform_2(%arg0: i32) -> (i32, i32) {
    %c0_i32 = arith.constant 0 : i32
    %c0_i32_0 = arith.constant 0 : i32
    %c0_i32_1 = arith.constant 0 : i32
    return %c0_i32, %c0_i32_0 : i32, i32
  }
  func.func @transform_3(%arg0: i32) -> (i32, i32, i32) {
    %c0_i32 = arith.constant 0 : i32
    %c0_i32_0 = arith.constant 0 : i32
    %c0_i32_1 = arith.constant 0 : i32
    return %arg0, %c0_i32, %c0_i32_0 : i32, i32, i32
  }
}

module attributes {stable_mosaic.version = 11 : i64} {
  func.func @_conv_tap_kernel(%arg0: i32, %arg1: memref<4x16x128xbf16, #tpu.memory_space<vmem>>, %arg2: memref<4x128x64xbf16, #tpu.memory_space<vmem>>, %arg3: memref<1x64xf32, #tpu.memory_space<vmem>>, %arg4: memref<4x6x64xbf16, #tpu.memory_space<vmem>>) attributes {dimension_semantics = [#tpu.dimension_semantics<parallel>], iteration_bounds = array<i64: 1>, scalar_prefetch = 0 : i64, scratch_operands = 0 : i64, tpu.core_type = #tpu.core_type<tc>, window_params = [{transform_indices = @transform_0, window_bounds = array<i64: 4, 16, 128>}, {pipeline_mode = #tpu.pipeline_mode<synchronous>, transform_indices = @transform_1, window_bounds = array<i64: 4, 128, 64>}, {pipeline_mode = #tpu.pipeline_mode<synchronous>, transform_indices = @transform_2, window_bounds = array<i64: 1, 64>}, {transform_indices = @transform_3, window_bounds = array<i64: 4, 6, 64>}]} {
    %cst = arith.constant 0.000000e+00 : f32
    %0 = vector.broadcast %cst : f32 to vector<6x64xf32>
    %c0 = arith.constant 0 : index
    %c0_0 = arith.constant 0 : index
    %c0_1 = arith.constant 0 : index
    %1 = vector.load %arg1[%c0, %c0_0, %c0_1] : memref<4x16x128xbf16, #tpu.memory_space<vmem>>, vector<1x6x128xbf16>
    %2 = vector.shape_cast %1 : vector<1x6x128xbf16> to vector<6x128xbf16>
    %c0_2 = arith.constant 0 : index
    %c0_3 = arith.constant 0 : index
    %c0_4 = arith.constant 0 : index
    %3 = vector.load %arg2[%c0_2, %c0_3, %c0_4] : memref<4x128x64xbf16, #tpu.memory_space<vmem>>, vector<1x128x64xbf16>
    %4 = vector.shape_cast %3 : vector<1x128x64xbf16> to vector<128x64xbf16>
    %cst_5 = arith.constant dense<0.000000e+00> : vector<6x64xf32>
    %5 = tpu.matmul %2, %4, %cst_5 {dimension_numbers = #tpu.dot_dimension_numbers<[1], [0], [0], [1], [0, 0, 1, 1], [], []>} : vector<6x128xbf16>, vector<128x64xbf16>, vector<6x64xf32> -> vector<6x64xf32>
    %6 = arith.addf %0, %5 : vector<6x64xf32>
    %c0_6 = arith.constant 0 : index
    %c1 = arith.constant 1 : index
    %c0_7 = arith.constant 0 : index
    %7 = vector.load %arg1[%c0_6, %c1, %c0_7] : memref<4x16x128xbf16, #tpu.memory_space<vmem>>, vector<1x6x128xbf16>
    %8 = vector.shape_cast %7 : vector<1x6x128xbf16> to vector<6x128xbf16>
    %c1_8 = arith.constant 1 : index
    %c0_9 = arith.constant 0 : index
    %c0_10 = arith.constant 0 : index
    %9 = vector.load %arg2[%c1_8, %c0_9, %c0_10] : memref<4x128x64xbf16, #tpu.memory_space<vmem>>, vector<1x128x64xbf16>
    %10 = vector.shape_cast %9 : vector<1x128x64xbf16> to vector<128x64xbf16>
    %cst_11 = arith.constant dense<0.000000e+00> : vector<6x64xf32>
    %11 = tpu.matmul %8, %10, %cst_11 {dimension_numbers = #tpu.dot_dimension_numbers<[1], [0], [0], [1], [0, 0, 1, 1], [], []>} : vector<6x128xbf16>, vector<128x64xbf16>, vector<6x64xf32> -> vector<6x64xf32>
    %12 = arith.addf %6, %11 : vector<6x64xf32>
    %c0_12 = arith.constant 0 : index
    %c3 = arith.constant 3 : index
    %c0_13 = arith.constant 0 : index
    %13 = vector.load %arg1[%c0_12, %c3, %c0_13] : memref<4x16x128xbf16, #tpu.memory_space<vmem>>, vector<1x6x128xbf16>
    %14 = vector.shape_cast %13 : vector<1x6x128xbf16> to vector<6x128xbf16>
    %c2 = arith.constant 2 : index
    %c0_14 = arith.constant 0 : index
    %c0_15 = arith.constant 0 : index
    %15 = vector.load %arg2[%c2, %c0_14, %c0_15] : memref<4x128x64xbf16, #tpu.memory_space<vmem>>, vector<1x128x64xbf16>
    %16 = vector.shape_cast %15 : vector<1x128x64xbf16> to vector<128x64xbf16>
    %cst_16 = arith.constant dense<0.000000e+00> : vector<6x64xf32>
    %17 = tpu.matmul %14, %16, %cst_16 {dimension_numbers = #tpu.dot_dimension_numbers<[1], [0], [0], [1], [0, 0, 1, 1], [], []>} : vector<6x128xbf16>, vector<128x64xbf16>, vector<6x64xf32> -> vector<6x64xf32>
    %18 = arith.addf %12, %17 : vector<6x64xf32>
    %c0_17 = arith.constant 0 : index
    %c4 = arith.constant 4 : index
    %c0_18 = arith.constant 0 : index
    %19 = vector.load %arg1[%c0_17, %c4, %c0_18] : memref<4x16x128xbf16, #tpu.memory_space<vmem>>, vector<1x6x128xbf16>
    %20 = vector.shape_cast %19 : vector<1x6x128xbf16> to vector<6x128xbf16>
    %c3_19 = arith.constant 3 : index
    %c0_20 = arith.constant 0 : index
    %c0_21 = arith.constant 0 : index
    %21 = vector.load %arg2[%c3_19, %c0_20, %c0_21] : memref<4x128x64xbf16, #tpu.memory_space<vmem>>, vector<1x128x64xbf16>
    %22 = vector.shape_cast %21 : vector<1x128x64xbf16> to vector<128x64xbf16>
    %cst_22 = arith.constant dense<0.000000e+00> : vector<6x64xf32>
    %23 = tpu.matmul %20, %22, %cst_22 {dimension_numbers = #tpu.dot_dimension_numbers<[1], [0], [0], [1], [0, 0, 1, 1], [], []>} : vector<6x128xbf16>, vector<128x64xbf16>, vector<6x64xf32> -> vector<6x64xf32>
    %24 = arith.addf %18, %23 : vector<6x64xf32>
    %c0_23 = arith.constant 0 : index
    %c0_24 = arith.constant 0 : index
    %25 = vector.load %arg3[%c0_23, %c0_24] : memref<1x64xf32, #tpu.memory_space<vmem>>, vector<1x64xf32>
    %26 = vector.broadcast %25 : vector<1x64xf32> to vector<6x64xf32>
    %27 = arith.addf %24, %26 : vector<6x64xf32>
    %cst_25 = arith.constant 0.000000e+00 : f32
    %28 = vector.broadcast %cst_25 : f32 to vector<6x64xf32>
    %29 = arith.maximumf %27, %28 : vector<6x64xf32>
    %30 = arith.truncf %29 : vector<6x64xf32> to vector<6x64xbf16>
    %c0_26 = arith.constant 0 : index
    %c0_27 = arith.constant 0 : index
    %c0_28 = arith.constant 0 : index
    %31 = vector.load %arg4[%c0_26, %c0_27, %c0_28] : memref<4x6x64xbf16, #tpu.memory_space<vmem>>, vector<1x6x64xbf16>
    %32 = vector.shape_cast %31 : vector<1x6x64xbf16> to vector<6x64xbf16>
    %33 = vector.shape_cast %30 : vector<6x64xbf16> to vector<1x6x64xbf16>
    tpu.vector_store %arg4[%c0_26, %c0_27, %c0_28], %33 {strides = array<i32>} : memref<4x6x64xbf16, #tpu.memory_space<vmem>>, vector<1x6x64xbf16>,
    %cst_29 = arith.constant 0.000000e+00 : f32
    %34 = vector.broadcast %cst_29 : f32 to vector<6x64xf32>
    %c1_30 = arith.constant 1 : index
    %c0_31 = arith.constant 0 : index
    %c0_32 = arith.constant 0 : index
    %35 = vector.load %arg1[%c1_30, %c0_31, %c0_32] : memref<4x16x128xbf16, #tpu.memory_space<vmem>>, vector<1x6x128xbf16>
    %36 = vector.shape_cast %35 : vector<1x6x128xbf16> to vector<6x128xbf16>
    %c0_33 = arith.constant 0 : index
    %c0_34 = arith.constant 0 : index
    %c0_35 = arith.constant 0 : index
    %37 = vector.load %arg2[%c0_33, %c0_34, %c0_35] : memref<4x128x64xbf16, #tpu.memory_space<vmem>>, vector<1x128x64xbf16>
    %38 = vector.shape_cast %37 : vector<1x128x64xbf16> to vector<128x64xbf16>
    %cst_36 = arith.constant dense<0.000000e+00> : vector<6x64xf32>
    %39 = tpu.matmul %36, %38, %cst_36 {dimension_numbers = #tpu.dot_dimension_numbers<[1], [0], [0], [1], [0, 0, 1, 1], [], []>} : vector<6x128xbf16>, vector<128x64xbf16>, vector<6x64xf32> -> vector<6x64xf32>
    %40 = arith.addf %34, %39 : vector<6x64xf32>
    %c1_37 = arith.constant 1 : index
    %c1_38 = arith.constant 1 : index
    %c0_39 = arith.constant 0 : index
    %41 = vector.load %arg1[%c1_37, %c1_38, %c0_39] : memref<4x16x128xbf16, #tpu.memory_space<vmem>>, vector<1x6x128xbf16>
    %42 = vector.shape_cast %41 : vector<1x6x128xbf16> to vector<6x128xbf16>
    %c1_40 = arith.constant 1 : index
    %c0_41 = arith.constant 0 : index
    %c0_42 = arith.constant 0 : index
    %43 = vector.load %arg2[%c1_40, %c0_41, %c0_42] : memref<4x128x64xbf16, #tpu.memory_space<vmem>>, vector<1x128x64xbf16>
    %44 = vector.shape_cast %43 : vector<1x128x64xbf16> to vector<128x64xbf16>
    %cst_43 = arith.constant dense<0.000000e+00> : vector<6x64xf32>
    %45 = tpu.matmul %42, %44, %cst_43 {dimension_numbers = #tpu.dot_dimension_numbers<[1], [0], [0], [1], [0, 0, 1, 1], [], []>} : vector<6x128xbf16>, vector<128x64xbf16>, vector<6x64xf32> -> vector<6x64xf32>
    %46 = arith.addf %40, %45 : vector<6x64xf32>
    %c1_44 = arith.constant 1 : index
    %c3_45 = arith.constant 3 : index
    %c0_46 = arith.constant 0 : index
    %47 = vector.load %arg1[%c1_44, %c3_45, %c0_46] : memref<4x16x128xbf16, #tpu.memory_space<vmem>>, vector<1x6x128xbf16>
    %48 = vector.shape_cast %47 : vector<1x6x128xbf16> to vector<6x128xbf16>
    %c2_47 = arith.constant 2 : index
    %c0_48 = arith.constant 0 : index
    %c0_49 = arith.constant 0 : index
    %49 = vector.load %arg2[%c2_47, %c0_48, %c0_49] : memref<4x128x64xbf16, #tpu.memory_space<vmem>>, vector<1x128x64xbf16>
    %50 = vector.shape_cast %49 : vector<1x128x64xbf16> to vector<128x64xbf16>
    %cst_50 = arith.constant dense<0.000000e+00> : vector<6x64xf32>
    %51 = tpu.matmul %48, %50, %cst_50 {dimension_numbers = #tpu.dot_dimension_numbers<[1], [0], [0], [1], [0, 0, 1, 1], [], []>} : vector<6x128xbf16>, vector<128x64xbf16>, vector<6x64xf32> -> vector<6x64xf32>
    %52 = arith.addf %46, %51 : vector<6x64xf32>
    %c1_51 = arith.constant 1 : index
    %c4_52 = arith.constant 4 : index
    %c0_53 = arith.constant 0 : index
    %53 = vector.load %arg1[%c1_51, %c4_52, %c0_53] : memref<4x16x128xbf16, #tpu.memory_space<vmem>>, vector<1x6x128xbf16>
    %54 = vector.shape_cast %53 : vector<1x6x128xbf16> to vector<6x128xbf16>
    %c3_54 = arith.constant 3 : index
    %c0_55 = arith.constant 0 : index
    %c0_56 = arith.constant 0 : index
    %55 = vector.load %arg2[%c3_54, %c0_55, %c0_56] : memref<4x128x64xbf16, #tpu.memory_space<vmem>>, vector<1x128x64xbf16>
    %56 = vector.shape_cast %55 : vector<1x128x64xbf16> to vector<128x64xbf16>
    %cst_57 = arith.constant dense<0.000000e+00> : vector<6x64xf32>
    %57 = tpu.matmul %54, %56, %cst_57 {dimension_numbers = #tpu.dot_dimension_numbers<[1], [0], [0], [1], [0, 0, 1, 1], [], []>} : vector<6x128xbf16>, vector<128x64xbf16>, vector<6x64xf32> -> vector<6x64xf32>
    %58 = arith.addf %52, %57 : vector<6x64xf32>
    %c0_58 = arith.constant 0 : index
    %c0_59 = arith.constant 0 : index
    %59 = vector.load %arg3[%c0_58, %c0_59] : memref<1x64xf32, #tpu.memory_space<vmem>>, vector<1x64xf32>
    %60 = vector.broadcast %59 : vector<1x64xf32> to vector<6x64xf32>
    %61 = arith.addf %58, %60 : vector<6x64xf32>
    %cst_60 = arith.constant 0.000000e+00 : f32
    %62 = vector.broadcast %cst_60 : f32 to vector<6x64xf32>
    %63 = arith.maximumf %61, %62 : vector<6x64xf32>
    %64 = arith.truncf %63 : vector<6x64xf32> to vector<6x64xbf16>
    %c1_61 = arith.constant 1 : index
    %c0_62 = arith.constant 0 : index
    %c0_63 = arith.constant 0 : index
    %65 = vector.load %arg4[%c1_61, %c0_62, %c0_63] : memref<4x6x64xbf16, #tpu.memory_space<vmem>>, vector<1x6x64xbf16>
    %66 = vector.shape_cast %65 : vector<1x6x64xbf16> to vector<6x64xbf16>
    %67 = vector.shape_cast %64 : vector<6x64xbf16> to vector<1x6x64xbf16>
    tpu.vector_store %arg4[%c1_61, %c0_62, %c0_63], %67 {strides = array<i32>} : memref<4x6x64xbf16, #tpu.memory_space<vmem>>, vector<1x6x64xbf16>,
    %cst_64 = arith.constant 0.000000e+00 : f32
    %68 = vector.broadcast %cst_64 : f32 to vector<6x64xf32>
    %c2_65 = arith.constant 2 : index
    %c0_66 = arith.constant 0 : index
    %c0_67 = arith.constant 0 : index
    %69 = vector.load %arg1[%c2_65, %c0_66, %c0_67] : memref<4x16x128xbf16, #tpu.memory_space<vmem>>, vector<1x6x128xbf16>
    %70 = vector.shape_cast %69 : vector<1x6x128xbf16> to vector<6x128xbf16>
    %c0_68 = arith.constant 0 : index
    %c0_69 = arith.constant 0 : index
    %c0_70 = arith.constant 0 : index
    %71 = vector.load %arg2[%c0_68, %c0_69, %c0_70] : memref<4x128x64xbf16, #tpu.memory_space<vmem>>, vector<1x128x64xbf16>
    %72 = vector.shape_cast %71 : vector<1x128x64xbf16> to vector<128x64xbf16>
    %cst_71 = arith.constant dense<0.000000e+00> : vector<6x64xf32>
    %73 = tpu.matmul %70, %72, %cst_71 {dimension_numbers = #tpu.dot_dimension_numbers<[1], [0], [0], [1], [0, 0, 1, 1], [], []>} : vector<6x128xbf16>, vector<128x64xbf16>, vector<6x64xf32> -> vector<6x64xf32>
    %74 = arith.addf %68, %73 : vector<6x64xf32>
    %c2_72 = arith.constant 2 : index
    %c1_73 = arith.constant 1 : index
    %c0_74 = arith.constant 0 : index
    %75 = vector.load %arg1[%c2_72, %c1_73, %c0_74] : memref<4x16x128xbf16, #tpu.memory_space<vmem>>, vector<1x6x128xbf16>
    %76 = vector.shape_cast %75 : vector<1x6x128xbf16> to vector<6x128xbf16>
    %c1_75 = arith.constant 1 : index
    %c0_76 = arith.constant 0 : index
    %c0_77 = arith.constant 0 : index
    %77 = vector.load %arg2[%c1_75, %c0_76, %c0_77] : memref<4x128x64xbf16, #tpu.memory_space<vmem>>, vector<1x128x64xbf16>
    %78 = vector.shape_cast %77 : vector<1x128x64xbf16> to vector<128x64xbf16>
    %cst_78 = arith.constant dense<0.000000e+00> : vector<6x64xf32>
    %79 = tpu.matmul %76, %78, %cst_78 {dimension_numbers = #tpu.dot_dimension_numbers<[1], [0], [0], [1], [0, 0, 1, 1], [], []>} : vector<6x128xbf16>, vector<128x64xbf16>, vector<6x64xf32> -> vector<6x64xf32>
    %80 = arith.addf %74, %79 : vector<6x64xf32>
    %c2_79 = arith.constant 2 : index
    %c3_80 = arith.constant 3 : index
    %c0_81 = arith.constant 0 : index
    %81 = vector.load %arg1[%c2_79, %c3_80, %c0_81] : memref<4x16x128xbf16, #tpu.memory_space<vmem>>, vector<1x6x128xbf16>
    %82 = vector.shape_cast %81 : vector<1x6x128xbf16> to vector<6x128xbf16>
    %c2_82 = arith.constant 2 : index
    %c0_83 = arith.constant 0 : index
    %c0_84 = arith.constant 0 : index
    %83 = vector.load %arg2[%c2_82, %c0_83, %c0_84] : memref<4x128x64xbf16, #tpu.memory_space<vmem>>, vector<1x128x64xbf16>
    %84 = vector.shape_cast %83 : vector<1x128x64xbf16> to vector<128x64xbf16>
    %cst_85 = arith.constant dense<0.000000e+00> : vector<6x64xf32>
    %85 = tpu.matmul %82, %84, %cst_85 {dimension_numbers = #tpu.dot_dimension_numbers<[1], [0], [0], [1], [0, 0, 1, 1], [], []>} : vector<6x128xbf16>, vector<128x64xbf16>, vector<6x64xf32> -> vector<6x64xf32>
    %86 = arith.addf %80, %85 : vector<6x64xf32>
    %c2_86 = arith.constant 2 : index
    %c4_87 = arith.constant 4 : index
    %c0_88 = arith.constant 0 : index
    %87 = vector.load %arg1[%c2_86, %c4_87, %c0_88] : memref<4x16x128xbf16, #tpu.memory_space<vmem>>, vector<1x6x128xbf16>
    %88 = vector.shape_cast %87 : vector<1x6x128xbf16> to vector<6x128xbf16>
    %c3_89 = arith.constant 3 : index
    %c0_90 = arith.constant 0 : index
    %c0_91 = arith.constant 0 : index
    %89 = vector.load %arg2[%c3_89, %c0_90, %c0_91] : memref<4x128x64xbf16, #tpu.memory_space<vmem>>, vector<1x128x64xbf16>
    %90 = vector.shape_cast %89 : vector<1x128x64xbf16> to vector<128x64xbf16>
    %cst_92 = arith.constant dense<0.000000e+00> : vector<6x64xf32>
    %91 = tpu.matmul %88, %90, %cst_92 {dimension_numbers = #tpu.dot_dimension_numbers<[1], [0], [0], [1], [0, 0, 1, 1], [], []>} : vector<6x128xbf16>, vector<128x64xbf16>, vector<6x64xf32> -> vector<6x64xf32>
    %92 = arith.addf %86, %91 : vector<6x64xf32>
    %c0_93 = arith.constant 0 : index
    %c0_94 = arith.constant 0 : index
    %93 = vector.load %arg3[%c0_93, %c0_94] : memref<1x64xf32, #tpu.memory_space<vmem>>, vector<1x64xf32>
    %94 = vector.broadcast %93 : vector<1x64xf32> to vector<6x64xf32>
    %95 = arith.addf %92, %94 : vector<6x64xf32>
    %cst_95 = arith.constant 0.000000e+00 : f32
    %96 = vector.broadcast %cst_95 : f32 to vector<6x64xf32>
    %97 = arith.maximumf %95, %96 : vector<6x64xf32>
    %98 = arith.truncf %97 : vector<6x64xf32> to vector<6x64xbf16>
    %c2_96 = arith.constant 2 : index
    %c0_97 = arith.constant 0 : index
    %c0_98 = arith.constant 0 : index
    %99 = vector.load %arg4[%c2_96, %c0_97, %c0_98] : memref<4x6x64xbf16, #tpu.memory_space<vmem>>, vector<1x6x64xbf16>
    %100 = vector.shape_cast %99 : vector<1x6x64xbf16> to vector<6x64xbf16>
    %101 = vector.shape_cast %98 : vector<6x64xbf16> to vector<1x6x64xbf16>
    tpu.vector_store %arg4[%c2_96, %c0_97, %c0_98], %101 {strides = array<i32>} : memref<4x6x64xbf16, #tpu.memory_space<vmem>>, vector<1x6x64xbf16>,
    %cst_99 = arith.constant 0.000000e+00 : f32
    %102 = vector.broadcast %cst_99 : f32 to vector<6x64xf32>
    %c3_100 = arith.constant 3 : index
    %c0_101 = arith.constant 0 : index
    %c0_102 = arith.constant 0 : index
    %103 = vector.load %arg1[%c3_100, %c0_101, %c0_102] : memref<4x16x128xbf16, #tpu.memory_space<vmem>>, vector<1x6x128xbf16>
    %104 = vector.shape_cast %103 : vector<1x6x128xbf16> to vector<6x128xbf16>
    %c0_103 = arith.constant 0 : index
    %c0_104 = arith.constant 0 : index
    %c0_105 = arith.constant 0 : index
    %105 = vector.load %arg2[%c0_103, %c0_104, %c0_105] : memref<4x128x64xbf16, #tpu.memory_space<vmem>>, vector<1x128x64xbf16>
    %106 = vector.shape_cast %105 : vector<1x128x64xbf16> to vector<128x64xbf16>
    %cst_106 = arith.constant dense<0.000000e+00> : vector<6x64xf32>
    %107 = tpu.matmul %104, %106, %cst_106 {dimension_numbers = #tpu.dot_dimension_numbers<[1], [0], [0], [1], [0, 0, 1, 1], [], []>} : vector<6x128xbf16>, vector<128x64xbf16>, vector<6x64xf32> -> vector<6x64xf32>
    %108 = arith.addf %102, %107 : vector<6x64xf32>
    %c3_107 = arith.constant 3 : index
    %c1_108 = arith.constant 1 : index
    %c0_109 = arith.constant 0 : index
    %109 = vector.load %arg1[%c3_107, %c1_108, %c0_109] : memref<4x16x128xbf16, #tpu.memory_space<vmem>>, vector<1x6x128xbf16>
    %110 = vector.shape_cast %109 : vector<1x6x128xbf16> to vector<6x128xbf16>
    %c1_110 = arith.constant 1 : index
    %c0_111 = arith.constant 0 : index
    %c0_112 = arith.constant 0 : index
    %111 = vector.load %arg2[%c1_110, %c0_111, %c0_112] : memref<4x128x64xbf16, #tpu.memory_space<vmem>>, vector<1x128x64xbf16>
    %112 = vector.shape_cast %111 : vector<1x128x64xbf16> to vector<128x64xbf16>
    %cst_113 = arith.constant dense<0.000000e+00> : vector<6x64xf32>
    %113 = tpu.matmul %110, %112, %cst_113 {dimension_numbers = #tpu.dot_dimension_numbers<[1], [0], [0], [1], [0, 0, 1, 1], [], []>} : vector<6x128xbf16>, vector<128x64xbf16>, vector<6x64xf32> -> vector<6x64xf32>
    %114 = arith.addf %108, %113 : vector<6x64xf32>
    %c3_114 = arith.constant 3 : index
    %c3_115 = arith.constant 3 : index
    %c0_116 = arith.constant 0 : index
    %115 = vector.load %arg1[%c3_114, %c3_115, %c0_116] : memref<4x16x128xbf16, #tpu.memory_space<vmem>>, vector<1x6x128xbf16>
    %116 = vector.shape_cast %115 : vector<1x6x128xbf16> to vector<6x128xbf16>
    %c2_117 = arith.constant 2 : index
    %c0_118 = arith.constant 0 : index
    %c0_119 = arith.constant 0 : index
    %117 = vector.load %arg2[%c2_117, %c0_118, %c0_119] : memref<4x128x64xbf16, #tpu.memory_space<vmem>>, vector<1x128x64xbf16>
    %118 = vector.shape_cast %117 : vector<1x128x64xbf16> to vector<128x64xbf16>
    %cst_120 = arith.constant dense<0.000000e+00> : vector<6x64xf32>
    %119 = tpu.matmul %116, %118, %cst_120 {dimension_numbers = #tpu.dot_dimension_numbers<[1], [0], [0], [1], [0, 0, 1, 1], [], []>} : vector<6x128xbf16>, vector<128x64xbf16>, vector<6x64xf32> -> vector<6x64xf32>
    %120 = arith.addf %114, %119 : vector<6x64xf32>
    %c3_121 = arith.constant 3 : index
    %c4_122 = arith.constant 4 : index
    %c0_123 = arith.constant 0 : index
    %121 = vector.load %arg1[%c3_121, %c4_122, %c0_123] : memref<4x16x128xbf16, #tpu.memory_space<vmem>>, vector<1x6x128xbf16>
    %122 = vector.shape_cast %121 : vector<1x6x128xbf16> to vector<6x128xbf16>
    %c3_124 = arith.constant 3 : index
    %c0_125 = arith.constant 0 : index
    %c0_126 = arith.constant 0 : index
    %123 = vector.load %arg2[%c3_124, %c0_125, %c0_126] : memref<4x128x64xbf16, #tpu.memory_space<vmem>>, vector<1x128x64xbf16>
    %124 = vector.shape_cast %123 : vector<1x128x64xbf16> to vector<128x64xbf16>
    %cst_127 = arith.constant dense<0.000000e+00> : vector<6x64xf32>
    %125 = tpu.matmul %122, %124, %cst_127 {dimension_numbers = #tpu.dot_dimension_numbers<[1], [0], [0], [1], [0, 0, 1, 1], [], []>} : vector<6x128xbf16>, vector<128x64xbf16>, vector<6x64xf32> -> vector<6x64xf32>
    %126 = arith.addf %120, %125 : vector<6x64xf32>
    %c0_128 = arith.constant 0 : index
    %c0_129 = arith.constant 0 : index
    %127 = vector.load %arg3[%c0_128, %c0_129] : memref<1x64xf32, #tpu.memory_space<vmem>>, vector<1x64xf32>
    %128 = vector.broadcast %127 : vector<1x64xf32> to vector<6x64xf32>
    %129 = arith.addf %126, %128 : vector<6x64xf32>
    %cst_130 = arith.constant 0.000000e+00 : f32
    %130 = vector.broadcast %cst_130 : f32 to vector<6x64xf32>
    %131 = arith.maximumf %129, %130 : vector<6x64xf32>
    %132 = arith.truncf %131 : vector<6x64xf32> to vector<6x64xbf16>
    %c3_131 = arith.constant 3 : index
    %c0_132 = arith.constant 0 : index
    %c0_133 = arith.constant 0 : index
    %133 = vector.load %arg4[%c3_131, %c0_132, %c0_133] : memref<4x6x64xbf16, #tpu.memory_space<vmem>>, vector<1x6x64xbf16>
    %134 = vector.shape_cast %133 : vector<1x6x64xbf16> to vector<6x64xbf16>
    %135 = vector.shape_cast %132 : vector<6x64xbf16> to vector<1x6x64xbf16>
    tpu.vector_store %arg4[%c3_131, %c0_132, %c0_133], %135 {strides = array<i32>} : memref<4x6x64xbf16, #tpu.memory_space<vmem>>, vector<1x6x64xbf16>,
    return
  }
  func.func @transform_0(%arg0: i32) -> (i32, i32, i32) {
    %c0_i32 = arith.constant 0 : i32
    %c0_i32_0 = arith.constant 0 : i32
    %c0_i32_1 = arith.constant 0 : i32
    return %arg0, %c0_i32, %c0_i32_0 : i32, i32, i32
  }
  func.func @transform_1(%arg0: i32) -> (i32, i32, i32) {
    %c0_i32 = arith.constant 0 : i32
    %c0_i32_0 = arith.constant 0 : i32
    %c0_i32_1 = arith.constant 0 : i32
    %c0_i32_2 = arith.constant 0 : i32
    return %c0_i32, %c0_i32_0, %c0_i32_1 : i32, i32, i32
  }
  func.func @transform_2(%arg0: i32) -> (i32, i32) {
    %c0_i32 = arith.constant 0 : i32
    %c0_i32_0 = arith.constant 0 : i32
    %c0_i32_1 = arith.constant 0 : i32
    return %c0_i32, %c0_i32_0 : i32, i32
  }
  func.func @transform_3(%arg0: i32) -> (i32, i32, i32) {
    %c0_i32 = arith.constant 0 : i32
    %c0_i32_0 = arith.constant 0 : i32
    %c0_i32_1 = arith.constant 0 : i32
    return %arg0, %c0_i32, %c0_i32_0 : i32, i32, i32
  }
}

module attributes {stable_mosaic.version = 11 : i64} {
  func.func @_conv_tap_kernel(%arg0: i32, %arg1: memref<4x24x64xbf16, #tpu.memory_space<vmem>>, %arg2: memref<9x64x64xbf16, #tpu.memory_space<vmem>>, %arg3: memref<1x64xf32, #tpu.memory_space<vmem>>, %arg4: memref<4x8x64xbf16, #tpu.memory_space<vmem>>) attributes {dimension_semantics = [#tpu.dimension_semantics<parallel>], iteration_bounds = array<i64: 1>, scalar_prefetch = 0 : i64, scratch_operands = 0 : i64, tpu.core_type = #tpu.core_type<tc>, window_params = [{transform_indices = @transform_0, window_bounds = array<i64: 4, 24, 64>}, {pipeline_mode = #tpu.pipeline_mode<synchronous>, transform_indices = @transform_1, window_bounds = array<i64: 9, 64, 64>}, {pipeline_mode = #tpu.pipeline_mode<synchronous>, transform_indices = @transform_2, window_bounds = array<i64: 1, 64>}, {transform_indices = @transform_3, window_bounds = array<i64: 4, 8, 64>}]} {
    %cst = arith.constant 0.000000e+00 : f32
    %0 = vector.broadcast %cst : f32 to vector<8x64xf32>
    %c0 = arith.constant 0 : index
    %c0_0 = arith.constant 0 : index
    %c0_1 = arith.constant 0 : index
    %1 = vector.load %arg1[%c0, %c0_0, %c0_1] : memref<4x24x64xbf16, #tpu.memory_space<vmem>>, vector<1x8x64xbf16>
    %2 = vector.shape_cast %1 : vector<1x8x64xbf16> to vector<8x64xbf16>
    %c0_2 = arith.constant 0 : index
    %c0_3 = arith.constant 0 : index
    %c0_4 = arith.constant 0 : index
    %3 = vector.load %arg2[%c0_2, %c0_3, %c0_4] : memref<9x64x64xbf16, #tpu.memory_space<vmem>>, vector<1x64x64xbf16>
    %4 = vector.shape_cast %3 : vector<1x64x64xbf16> to vector<64x64xbf16>
    %cst_5 = arith.constant dense<0.000000e+00> : vector<8x64xf32>
    %5 = tpu.matmul %2, %4, %cst_5 {dimension_numbers = #tpu.dot_dimension_numbers<[1], [0], [0], [1], [0, 0, 1, 1], [], []>} : vector<8x64xbf16>, vector<64x64xbf16>, vector<8x64xf32> -> vector<8x64xf32>
    %6 = arith.addf %0, %5 : vector<8x64xf32>
    %c0_6 = arith.constant 0 : index
    %c1 = arith.constant 1 : index
    %c0_7 = arith.constant 0 : index
    %7 = vector.load %arg1[%c0_6, %c1, %c0_7] : memref<4x24x64xbf16, #tpu.memory_space<vmem>>, vector<1x8x64xbf16>
    %8 = vector.shape_cast %7 : vector<1x8x64xbf16> to vector<8x64xbf16>
    %c1_8 = arith.constant 1 : index
    %c0_9 = arith.constant 0 : index
    %c0_10 = arith.constant 0 : index
    %9 = vector.load %arg2[%c1_8, %c0_9, %c0_10] : memref<9x64x64xbf16, #tpu.memory_space<vmem>>, vector<1x64x64xbf16>
    %10 = vector.shape_cast %9 : vector<1x64x64xbf16> to vector<64x64xbf16>
    %cst_11 = arith.constant dense<0.000000e+00> : vector<8x64xf32>
    %11 = tpu.matmul %8, %10, %cst_11 {dimension_numbers = #tpu.dot_dimension_numbers<[1], [0], [0], [1], [0, 0, 1, 1], [], []>} : vector<8x64xbf16>, vector<64x64xbf16>, vector<8x64xf32> -> vector<8x64xf32>
    %12 = arith.addf %6, %11 : vector<8x64xf32>
    %c0_12 = arith.constant 0 : index
    %c2 = arith.constant 2 : index
    %c0_13 = arith.constant 0 : index
    %13 = vector.load %arg1[%c0_12, %c2, %c0_13] : memref<4x24x64xbf16, #tpu.memory_space<vmem>>, vector<1x8x64xbf16>
    %14 = vector.shape_cast %13 : vector<1x8x64xbf16> to vector<8x64xbf16>
    %c2_14 = arith.constant 2 : index
    %c0_15 = arith.constant 0 : index
    %c0_16 = arith.constant 0 : index
    %15 = vector.load %arg2[%c2_14, %c0_15, %c0_16] : memref<9x64x64xbf16, #tpu.memory_space<vmem>>, vector<1x64x64xbf16>
    %16 = vector.shape_cast %15 : vector<1x64x64xbf16> to vector<64x64xbf16>
    %cst_17 = arith.constant dense<0.000000e+00> : vector<8x64xf32>
    %17 = tpu.matmul %14, %16, %cst_17 {dimension_numbers = #tpu.dot_dimension_numbers<[1], [0], [0], [1], [0, 0, 1, 1], [], []>} : vector<8x64xbf16>, vector<64x64xbf16>, vector<8x64xf32> -> vector<8x64xf32>
    %18 = arith.addf %12, %17 : vector<8x64xf32>
    %c0_18 = arith.constant 0 : index
    %c4 = arith.constant 4 : index
    %c0_19 = arith.constant 0 : index
    %19 = vector.load %arg1[%c0_18, %c4, %c0_19] : memref<4x24x64xbf16, #tpu.memory_space<vmem>>, vector<1x8x64xbf16>
    %20 = vector.shape_cast %19 : vector<1x8x64xbf16> to vector<8x64xbf16>
    %c3 = arith.constant 3 : index
    %c0_20 = arith.constant 0 : index
    %c0_21 = arith.constant 0 : index
    %21 = vector.load %arg2[%c3, %c0_20, %c0_21] : memref<9x64x64xbf16, #tpu.memory_space<vmem>>, vector<1x64x64xbf16>
    %22 = vector.shape_cast %21 : vector<1x64x64xbf16> to vector<64x64xbf16>
    %cst_22 = arith.constant dense<0.000000e+00> : vector<8x64xf32>
    %23 = tpu.matmul %20, %22, %cst_22 {dimension_numbers = #tpu.dot_dimension_numbers<[1], [0], [0], [1], [0, 0, 1, 1], [], []>} : vector<8x64xbf16>, vector<64x64xbf16>, vector<8x64xf32> -> vector<8x64xf32>
    %24 = arith.addf %18, %23 : vector<8x64xf32>
    %c0_23 = arith.constant 0 : index
    %c5 = arith.constant 5 : index
    %c0_24 = arith.constant 0 : index
    %25 = vector.load %arg1[%c0_23, %c5, %c0_24] : memref<4x24x64xbf16, #tpu.memory_space<vmem>>, vector<1x8x64xbf16>
    %26 = vector.shape_cast %25 : vector<1x8x64xbf16> to vector<8x64xbf16>
    %c4_25 = arith.constant 4 : index
    %c0_26 = arith.constant 0 : index
    %c0_27 = arith.constant 0 : index
    %27 = vector.load %arg2[%c4_25, %c0_26, %c0_27] : memref<9x64x64xbf16, #tpu.memory_space<vmem>>, vector<1x64x64xbf16>
    %28 = vector.shape_cast %27 : vector<1x64x64xbf16> to vector<64x64xbf16>
    %cst_28 = arith.constant dense<0.000000e+00> : vector<8x64xf32>
    %29 = tpu.matmul %26, %28, %cst_28 {dimension_numbers = #tpu.dot_dimension_numbers<[1], [0], [0], [1], [0, 0, 1, 1], [], []>} : vector<8x64xbf16>, vector<64x64xbf16>, vector<8x64xf32> -> vector<8x64xf32>
    %30 = arith.addf %24, %29 : vector<8x64xf32>
    %c0_29 = arith.constant 0 : index
    %c6 = arith.constant 6 : index
    %c0_30 = arith.constant 0 : index
    %31 = vector.load %arg1[%c0_29, %c6, %c0_30] : memref<4x24x64xbf16, #tpu.memory_space<vmem>>, vector<1x8x64xbf16>
    %32 = vector.shape_cast %31 : vector<1x8x64xbf16> to vector<8x64xbf16>
    %c5_31 = arith.constant 5 : index
    %c0_32 = arith.constant 0 : index
    %c0_33 = arith.constant 0 : index
    %33 = vector.load %arg2[%c5_31, %c0_32, %c0_33] : memref<9x64x64xbf16, #tpu.memory_space<vmem>>, vector<1x64x64xbf16>
    %34 = vector.shape_cast %33 : vector<1x64x64xbf16> to vector<64x64xbf16>
    %cst_34 = arith.constant dense<0.000000e+00> : vector<8x64xf32>
    %35 = tpu.matmul %32, %34, %cst_34 {dimension_numbers = #tpu.dot_dimension_numbers<[1], [0], [0], [1], [0, 0, 1, 1], [], []>} : vector<8x64xbf16>, vector<64x64xbf16>, vector<8x64xf32> -> vector<8x64xf32>
    %36 = arith.addf %30, %35 : vector<8x64xf32>
    %c0_35 = arith.constant 0 : index
    %c8 = arith.constant 8 : index
    %c0_36 = arith.constant 0 : index
    %37 = vector.load %arg1[%c0_35, %c8, %c0_36] : memref<4x24x64xbf16, #tpu.memory_space<vmem>>, vector<1x8x64xbf16>
    %38 = vector.shape_cast %37 : vector<1x8x64xbf16> to vector<8x64xbf16>
    %c6_37 = arith.constant 6 : index
    %c0_38 = arith.constant 0 : index
    %c0_39 = arith.constant 0 : index
    %39 = vector.load %arg2[%c6_37, %c0_38, %c0_39] : memref<9x64x64xbf16, #tpu.memory_space<vmem>>, vector<1x64x64xbf16>
    %40 = vector.shape_cast %39 : vector<1x64x64xbf16> to vector<64x64xbf16>
    %cst_40 = arith.constant dense<0.000000e+00> : vector<8x64xf32>
    %41 = tpu.matmul %38, %40, %cst_40 {dimension_numbers = #tpu.dot_dimension_numbers<[1], [0], [0], [1], [0, 0, 1, 1], [], []>} : vector<8x64xbf16>, vector<64x64xbf16>, vector<8x64xf32> -> vector<8x64xf32>
    %42 = arith.addf %36, %41 : vector<8x64xf32>
    %c0_41 = arith.constant 0 : index
    %c9 = arith.constant 9 : index
    %c0_42 = arith.constant 0 : index
    %43 = vector.load %arg1[%c0_41, %c9, %c0_42] : memref<4x24x64xbf16, #tpu.memory_space<vmem>>, vector<1x8x64xbf16>
    %44 = vector.shape_cast %43 : vector<1x8x64xbf16> to vector<8x64xbf16>
    %c7 = arith.constant 7 : index
    %c0_43 = arith.constant 0 : index
    %c0_44 = arith.constant 0 : index
    %45 = vector.load %arg2[%c7, %c0_43, %c0_44] : memref<9x64x64xbf16, #tpu.memory_space<vmem>>, vector<1x64x64xbf16>
    %46 = vector.shape_cast %45 : vector<1x64x64xbf16> to vector<64x64xbf16>
    %cst_45 = arith.constant dense<0.000000e+00> : vector<8x64xf32>
    %47 = tpu.matmul %44, %46, %cst_45 {dimension_numbers = #tpu.dot_dimension_numbers<[1], [0], [0], [1], [0, 0, 1, 1], [], []>} : vector<8x64xbf16>, vector<64x64xbf16>, vector<8x64xf32> -> vector<8x64xf32>
    %48 = arith.addf %42, %47 : vector<8x64xf32>
    %c0_46 = arith.constant 0 : index
    %c10 = arith.constant 10 : index
    %c0_47 = arith.constant 0 : index
    %49 = vector.load %arg1[%c0_46, %c10, %c0_47] : memref<4x24x64xbf16, #tpu.memory_space<vmem>>, vector<1x8x64xbf16>
    %50 = vector.shape_cast %49 : vector<1x8x64xbf16> to vector<8x64xbf16>
    %c8_48 = arith.constant 8 : index
    %c0_49 = arith.constant 0 : index
    %c0_50 = arith.constant 0 : index
    %51 = vector.load %arg2[%c8_48, %c0_49, %c0_50] : memref<9x64x64xbf16, #tpu.memory_space<vmem>>, vector<1x64x64xbf16>
    %52 = vector.shape_cast %51 : vector<1x64x64xbf16> to vector<64x64xbf16>
    %cst_51 = arith.constant dense<0.000000e+00> : vector<8x64xf32>
    %53 = tpu.matmul %50, %52, %cst_51 {dimension_numbers = #tpu.dot_dimension_numbers<[1], [0], [0], [1], [0, 0, 1, 1], [], []>} : vector<8x64xbf16>, vector<64x64xbf16>, vector<8x64xf32> -> vector<8x64xf32>
    %54 = arith.addf %48, %53 : vector<8x64xf32>
    %c0_52 = arith.constant 0 : index
    %c0_53 = arith.constant 0 : index
    %55 = vector.load %arg3[%c0_52, %c0_53] : memref<1x64xf32, #tpu.memory_space<vmem>>, vector<1x64xf32>
    %56 = vector.broadcast %55 : vector<1x64xf32> to vector<8x64xf32>
    %57 = arith.addf %54, %56 : vector<8x64xf32>
    %cst_54 = arith.constant 0.000000e+00 : f32
    %58 = vector.broadcast %cst_54 : f32 to vector<8x64xf32>
    %59 = arith.maximumf %57, %58 : vector<8x64xf32>
    %60 = arith.truncf %59 : vector<8x64xf32> to vector<8x64xbf16>
    %c0_55 = arith.constant 0 : index
    %c0_56 = arith.constant 0 : index
    %c0_57 = arith.constant 0 : index
    %61 = vector.load %arg4[%c0_55, %c0_56, %c0_57] : memref<4x8x64xbf16, #tpu.memory_space<vmem>>, vector<1x8x64xbf16>
    %62 = vector.shape_cast %61 : vector<1x8x64xbf16> to vector<8x64xbf16>
    %63 = vector.shape_cast %60 : vector<8x64xbf16> to vector<1x8x64xbf16>
    tpu.vector_store %arg4[%c0_55, %c0_56, %c0_57], %63 {strides = array<i32>} : memref<4x8x64xbf16, #tpu.memory_space<vmem>>, vector<1x8x64xbf16>,
    %cst_58 = arith.constant 0.000000e+00 : f32
    %64 = vector.broadcast %cst_58 : f32 to vector<8x64xf32>
    %c1_59 = arith.constant 1 : index
    %c0_60 = arith.constant 0 : index
    %c0_61 = arith.constant 0 : index
    %65 = vector.load %arg1[%c1_59, %c0_60, %c0_61] : memref<4x24x64xbf16, #tpu.memory_space<vmem>>, vector<1x8x64xbf16>
    %66 = vector.shape_cast %65 : vector<1x8x64xbf16> to vector<8x64xbf16>
    %c0_62 = arith.constant 0 : index
    %c0_63 = arith.constant 0 : index
    %c0_64 = arith.constant 0 : index
    %67 = vector.load %arg2[%c0_62, %c0_63, %c0_64] : memref<9x64x64xbf16, #tpu.memory_space<vmem>>, vector<1x64x64xbf16>
    %68 = vector.shape_cast %67 : vector<1x64x64xbf16> to vector<64x64xbf16>
    %cst_65 = arith.constant dense<0.000000e+00> : vector<8x64xf32>
    %69 = tpu.matmul %66, %68, %cst_65 {dimension_numbers = #tpu.dot_dimension_numbers<[1], [0], [0], [1], [0, 0, 1, 1], [], []>} : vector<8x64xbf16>, vector<64x64xbf16>, vector<8x64xf32> -> vector<8x64xf32>
    %70 = arith.addf %64, %69 : vector<8x64xf32>
    %c1_66 = arith.constant 1 : index
    %c1_67 = arith.constant 1 : index
    %c0_68 = arith.constant 0 : index
    %71 = vector.load %arg1[%c1_66, %c1_67, %c0_68] : memref<4x24x64xbf16, #tpu.memory_space<vmem>>, vector<1x8x64xbf16>
    %72 = vector.shape_cast %71 : vector<1x8x64xbf16> to vector<8x64xbf16>
    %c1_69 = arith.constant 1 : index
    %c0_70 = arith.constant 0 : index
    %c0_71 = arith.constant 0 : index
    %73 = vector.load %arg2[%c1_69, %c0_70, %c0_71] : memref<9x64x64xbf16, #tpu.memory_space<vmem>>, vector<1x64x64xbf16>
    %74 = vector.shape_cast %73 : vector<1x64x64xbf16> to vector<64x64xbf16>
    %cst_72 = arith.constant dense<0.000000e+00> : vector<8x64xf32>
    %75 = tpu.matmul %72, %74, %cst_72 {dimension_numbers = #tpu.dot_dimension_numbers<[1], [0], [0], [1], [0, 0, 1, 1], [], []>} : vector<8x64xbf16>, vector<64x64xbf16>, vector<8x64xf32> -> vector<8x64xf32>
    %76 = arith.addf %70, %75 : vector<8x64xf32>
    %c1_73 = arith.constant 1 : index
    %c2_74 = arith.constant 2 : index
    %c0_75 = arith.constant 0 : index
    %77 = vector.load %arg1[%c1_73, %c2_74, %c0_75] : memref<4x24x64xbf16, #tpu.memory_space<vmem>>, vector<1x8x64xbf16>
    %78 = vector.shape_cast %77 : vector<1x8x64xbf16> to vector<8x64xbf16>
    %c2_76 = arith.constant 2 : index
    %c0_77 = arith.constant 0 : index
    %c0_78 = arith.constant 0 : index
    %79 = vector.load %arg2[%c2_76, %c0_77, %c0_78] : memref<9x64x64xbf16, #tpu.memory_space<vmem>>, vector<1x64x64xbf16>
    %80 = vector.shape_cast %79 : vector<1x64x64xbf16> to vector<64x64xbf16>
    %cst_79 = arith.constant dense<0.000000e+00> : vector<8x64xf32>
    %81 = tpu.matmul %78, %80, %cst_79 {dimension_numbers = #tpu.dot_dimension_numbers<[1], [0], [0], [1], [0, 0, 1, 1], [], []>} : vector<8x64xbf16>, vector<64x64xbf16>, vector<8x64xf32> -> vector<8x64xf32>
    %82 = arith.addf %76, %81 : vector<8x64xf32>
    %c1_80 = arith.constant 1 : index
    %c4_81 = arith.constant 4 : index
    %c0_82 = arith.constant 0 : index
    %83 = vector.load %arg1[%c1_80, %c4_81, %c0_82] : memref<4x24x64xbf16, #tpu.memory_space<vmem>>, vector<1x8x64xbf16>
    %84 = vector.shape_cast %83 : vector<1x8x64xbf16> to vector<8x64xbf16>
    %c3_83 = arith.constant 3 : index
    %c0_84 = arith.constant 0 : index
    %c0_85 = arith.constant 0 : index
    %85 = vector.load %arg2[%c3_83, %c0_84, %c0_85] : memref<9x64x64xbf16, #tpu.memory_space<vmem>>, vector<1x64x64xbf16>
    %86 = vector.shape_cast %85 : vector<1x64x64xbf16> to vector<64x64xbf16>
    %cst_86 = arith.constant dense<0.000000e+00> : vector<8x64xf32>
    %87 = tpu.matmul %84, %86, %cst_86 {dimension_numbers = #tpu.dot_dimension_numbers<[1], [0], [0], [1], [0, 0, 1, 1], [], []>} : vector<8x64xbf16>, vector<64x64xbf16>, vector<8x64xf32> -> vector<8x64xf32>
    %88 = arith.addf %82, %87 : vector<8x64xf32>
    %c1_87 = arith.constant 1 : index
    %c5_88 = arith.constant 5 : index
    %c0_89 = arith.constant 0 : index
    %89 = vector.load %arg1[%c1_87, %c5_88, %c0_89] : memref<4x24x64xbf16, #tpu.memory_space<vmem>>, vector<1x8x64xbf16>
    %90 = vector.shape_cast %89 : vector<1x8x64xbf16> to vector<8x64xbf16>
    %c4_90 = arith.constant 4 : index
    %c0_91 = arith.constant 0 : index
    %c0_92 = arith.constant 0 : index
    %91 = vector.load %arg2[%c4_90, %c0_91, %c0_92] : memref<9x64x64xbf16, #tpu.memory_space<vmem>>, vector<1x64x64xbf16>
    %92 = vector.shape_cast %91 : vector<1x64x64xbf16> to vector<64x64xbf16>
    %cst_93 = arith.constant dense<0.000000e+00> : vector<8x64xf32>
    %93 = tpu.matmul %90, %92, %cst_93 {dimension_numbers = #tpu.dot_dimension_numbers<[1], [0], [0], [1], [0, 0, 1, 1], [], []>} : vector<8x64xbf16>, vector<64x64xbf16>, vector<8x64xf32> -> vector<8x64xf32>
    %94 = arith.addf %88, %93 : vector<8x64xf32>
    %c1_94 = arith.constant 1 : index
    %c6_95 = arith.constant 6 : index
    %c0_96 = arith.constant 0 : index
    %95 = vector.load %arg1[%c1_94, %c6_95, %c0_96] : memref<4x24x64xbf16, #tpu.memory_space<vmem>>, vector<1x8x64xbf16>
    %96 = vector.shape_cast %95 : vector<1x8x64xbf16> to vector<8x64xbf16>
    %c5_97 = arith.constant 5 : index
    %c0_98 = arith.constant 0 : index
    %c0_99 = arith.constant 0 : index
    %97 = vector.load %arg2[%c5_97, %c0_98, %c0_99] : memref<9x64x64xbf16, #tpu.memory_space<vmem>>, vector<1x64x64xbf16>
    %98 = vector.shape_cast %97 : vector<1x64x64xbf16> to vector<64x64xbf16>
    %cst_100 = arith.constant dense<0.000000e+00> : vector<8x64xf32>
    %99 = tpu.matmul %96, %98, %cst_100 {dimension_numbers = #tpu.dot_dimension_numbers<[1], [0], [0], [1], [0, 0, 1, 1], [], []>} : vector<8x64xbf16>, vector<64x64xbf16>, vector<8x64xf32> -> vector<8x64xf32>
    %100 = arith.addf %94, %99 : vector<8x64xf32>
    %c1_101 = arith.constant 1 : index
    %c8_102 = arith.constant 8 : index
    %c0_103 = arith.constant 0 : index
    %101 = vector.load %arg1[%c1_101, %c8_102, %c0_103] : memref<4x24x64xbf16, #tpu.memory_space<vmem>>, vector<1x8x64xbf16>
    %102 = vector.shape_cast %101 : vector<1x8x64xbf16> to vector<8x64xbf16>
    %c6_104 = arith.constant 6 : index
    %c0_105 = arith.constant 0 : index
    %c0_106 = arith.constant 0 : index
    %103 = vector.load %arg2[%c6_104, %c0_105, %c0_106] : memref<9x64x64xbf16, #tpu.memory_space<vmem>>, vector<1x64x64xbf16>
    %104 = vector.shape_cast %103 : vector<1x64x64xbf16> to vector<64x64xbf16>
    %cst_107 = arith.constant dense<0.000000e+00> : vector<8x64xf32>
    %105 = tpu.matmul %102, %104, %cst_107 {dimension_numbers = #tpu.dot_dimension_numbers<[1], [0], [0], [1], [0, 0, 1, 1], [], []>} : vector<8x64xbf16>, vector<64x64xbf16>, vector<8x64xf32> -> vector<8x64xf32>
    %106 = arith.addf %100, %105 : vector<8x64xf32>
    %c1_108 = arith.constant 1 : index
    %c9_109 = arith.constant 9 : index
    %c0_110 = arith.constant 0 : index
    %107 = vector.load %arg1[%c1_108, %c9_109, %c0_110] : memref<4x24x64xbf16, #tpu.memory_space<vmem>>, vector<1x8x64xbf16>
    %108 = vector.shape_cast %107 : vector<1x8x64xbf16> to vector<8x64xbf16>
    %c7_111 = arith.constant 7 : index
    %c0_112 = arith.constant 0 : index
    %c0_113 = arith.constant 0 : index
    %109 = vector.load %arg2[%c7_111, %c0_112, %c0_113] : memref<9x64x64xbf16, #tpu.memory_space<vmem>>, vector<1x64x64xbf16>
    %110 = vector.shape_cast %109 : vector<1x64x64xbf16> to vector<64x64xbf16>
    %cst_114 = arith.constant dense<0.000000e+00> : vector<8x64xf32>
    %111 = tpu.matmul %108, %110, %cst_114 {dimension_numbers = #tpu.dot_dimension_numbers<[1], [0], [0], [1], [0, 0, 1, 1], [], []>} : vector<8x64xbf16>, vector<64x64xbf16>, vector<8x64xf32> -> vector<8x64xf32>
    %112 = arith.addf %106, %111 : vector<8x64xf32>
    %c1_115 = arith.constant 1 : index
    %c10_116 = arith.constant 10 : index
    %c0_117 = arith.constant 0 : index
    %113 = vector.load %arg1[%c1_115, %c10_116, %c0_117] : memref<4x24x64xbf16, #tpu.memory_space<vmem>>, vector<1x8x64xbf16>
    %114 = vector.shape_cast %113 : vector<1x8x64xbf16> to vector<8x64xbf16>
    %c8_118 = arith.constant 8 : index
    %c0_119 = arith.constant 0 : index
    %c0_120 = arith.constant 0 : index
    %115 = vector.load %arg2[%c8_118, %c0_119, %c0_120] : memref<9x64x64xbf16, #tpu.memory_space<vmem>>, vector<1x64x64xbf16>
    %116 = vector.shape_cast %115 : vector<1x64x64xbf16> to vector<64x64xbf16>
    %cst_121 = arith.constant dense<0.000000e+00> : vector<8x64xf32>
    %117 = tpu.matmul %114, %116, %cst_121 {dimension_numbers = #tpu.dot_dimension_numbers<[1], [0], [0], [1], [0, 0, 1, 1], [], []>} : vector<8x64xbf16>, vector<64x64xbf16>, vector<8x64xf32> -> vector<8x64xf32>
    %118 = arith.addf %112, %117 : vector<8x64xf32>
    %c0_122 = arith.constant 0 : index
    %c0_123 = arith.constant 0 : index
    %119 = vector.load %arg3[%c0_122, %c0_123] : memref<1x64xf32, #tpu.memory_space<vmem>>, vector<1x64xf32>
    %120 = vector.broadcast %119 : vector<1x64xf32> to vector<8x64xf32>
    %121 = arith.addf %118, %120 : vector<8x64xf32>
    %cst_124 = arith.constant 0.000000e+00 : f32
    %122 = vector.broadcast %cst_124 : f32 to vector<8x64xf32>
    %123 = arith.maximumf %121, %122 : vector<8x64xf32>
    %124 = arith.truncf %123 : vector<8x64xf32> to vector<8x64xbf16>
    %c1_125 = arith.constant 1 : index
    %c0_126 = arith.constant 0 : index
    %c0_127 = arith.constant 0 : index
    %125 = vector.load %arg4[%c1_125, %c0_126, %c0_127] : memref<4x8x64xbf16, #tpu.memory_space<vmem>>, vector<1x8x64xbf16>
    %126 = vector.shape_cast %125 : vector<1x8x64xbf16> to vector<8x64xbf16>
    %127 = vector.shape_cast %124 : vector<8x64xbf16> to vector<1x8x64xbf16>
    tpu.vector_store %arg4[%c1_125, %c0_126, %c0_127], %127 {strides = array<i32>} : memref<4x8x64xbf16, #tpu.memory_space<vmem>>, vector<1x8x64xbf16>,
    %cst_128 = arith.constant 0.000000e+00 : f32
    %128 = vector.broadcast %cst_128 : f32 to vector<8x64xf32>
    %c2_129 = arith.constant 2 : index
    %c0_130 = arith.constant 0 : index
    %c0_131 = arith.constant 0 : index
    %129 = vector.load %arg1[%c2_129, %c0_130, %c0_131] : memref<4x24x64xbf16, #tpu.memory_space<vmem>>, vector<1x8x64xbf16>
    %130 = vector.shape_cast %129 : vector<1x8x64xbf16> to vector<8x64xbf16>
    %c0_132 = arith.constant 0 : index
    %c0_133 = arith.constant 0 : index
    %c0_134 = arith.constant 0 : index
    %131 = vector.load %arg2[%c0_132, %c0_133, %c0_134] : memref<9x64x64xbf16, #tpu.memory_space<vmem>>, vector<1x64x64xbf16>
    %132 = vector.shape_cast %131 : vector<1x64x64xbf16> to vector<64x64xbf16>
    %cst_135 = arith.constant dense<0.000000e+00> : vector<8x64xf32>
    %133 = tpu.matmul %130, %132, %cst_135 {dimension_numbers = #tpu.dot_dimension_numbers<[1], [0], [0], [1], [0, 0, 1, 1], [], []>} : vector<8x64xbf16>, vector<64x64xbf16>, vector<8x64xf32> -> vector<8x64xf32>
    %134 = arith.addf %128, %133 : vector<8x64xf32>
    %c2_136 = arith.constant 2 : index
    %c1_137 = arith.constant 1 : index
    %c0_138 = arith.constant 0 : index
    %135 = vector.load %arg1[%c2_136, %c1_137, %c0_138] : memref<4x24x64xbf16, #tpu.memory_space<vmem>>, vector<1x8x64xbf16>
    %136 = vector.shape_cast %135 : vector<1x8x64xbf16> to vector<8x64xbf16>
    %c1_139 = arith.constant 1 : index
    %c0_140 = arith.constant 0 : index
    %c0_141 = arith.constant 0 : index
    %137 = vector.load %arg2[%c1_139, %c0_140, %c0_141] : memref<9x64x64xbf16, #tpu.memory_space<vmem>>, vector<1x64x64xbf16>
    %138 = vector.shape_cast %137 : vector<1x64x64xbf16> to vector<64x64xbf16>
    %cst_142 = arith.constant dense<0.000000e+00> : vector<8x64xf32>
    %139 = tpu.matmul %136, %138, %cst_142 {dimension_numbers = #tpu.dot_dimension_numbers<[1], [0], [0], [1], [0, 0, 1, 1], [], []>} : vector<8x64xbf16>, vector<64x64xbf16>, vector<8x64xf32> -> vector<8x64xf32>
    %140 = arith.addf %134, %139 : vector<8x64xf32>
    %c2_143 = arith.constant 2 : index
    %c2_144 = arith.constant 2 : index
    %c0_145 = arith.constant 0 : index
    %141 = vector.load %arg1[%c2_143, %c2_144, %c0_145] : memref<4x24x64xbf16, #tpu.memory_space<vmem>>, vector<1x8x64xbf16>
    %142 = vector.shape_cast %141 : vector<1x8x64xbf16> to vector<8x64xbf16>
    %c2_146 = arith.constant 2 : index
    %c0_147 = arith.constant 0 : index
    %c0_148 = arith.constant 0 : index
    %143 = vector.load %arg2[%c2_146, %c0_147, %c0_148] : memref<9x64x64xbf16, #tpu.memory_space<vmem>>, vector<1x64x64xbf16>
    %144 = vector.shape_cast %143 : vector<1x64x64xbf16> to vector<64x64xbf16>
    %cst_149 = arith.constant dense<0.000000e+00> : vector<8x64xf32>
    %145 = tpu.matmul %142, %144, %cst_149 {dimension_numbers = #tpu.dot_dimension_numbers<[1], [0], [0], [1], [0, 0, 1, 1], [], []>} : vector<8x64xbf16>, vector<64x64xbf16>, vector<8x64xf32> -> vector<8x64xf32>
    %146 = arith.addf %140, %145 : vector<8x64xf32>
    %c2_150 = arith.constant 2 : index
    %c4_151 = arith.constant 4 : index
    %c0_152 = arith.constant 0 : index
    %147 = vector.load %arg1[%c2_150, %c4_151, %c0_152] : memref<4x24x64xbf16, #tpu.memory_space<vmem>>, vector<1x8x64xbf16>
    %148 = vector.shape_cast %147 : vector<1x8x64xbf16> to vector<8x64xbf16>
    %c3_153 = arith.constant 3 : index
    %c0_154 = arith.constant 0 : index
    %c0_155 = arith.constant 0 : index
    %149 = vector.load %arg2[%c3_153, %c0_154, %c0_155] : memref<9x64x64xbf16, #tpu.memory_space<vmem>>, vector<1x64x64xbf16>
    %150 = vector.shape_cast %149 : vector<1x64x64xbf16> to vector<64x64xbf16>
    %cst_156 = arith.constant dense<0.000000e+00> : vector<8x64xf32>
    %151 = tpu.matmul %148, %150, %cst_156 {dimension_numbers = #tpu.dot_dimension_numbers<[1], [0], [0], [1], [0, 0, 1, 1], [], []>} : vector<8x64xbf16>, vector<64x64xbf16>, vector<8x64xf32> -> vector<8x64xf32>
    %152 = arith.addf %146, %151 : vector<8x64xf32>
    %c2_157 = arith.constant 2 : index
    %c5_158 = arith.constant 5 : index
    %c0_159 = arith.constant 0 : index
    %153 = vector.load %arg1[%c2_157, %c5_158, %c0_159] : memref<4x24x64xbf16, #tpu.memory_space<vmem>>, vector<1x8x64xbf16>
    %154 = vector.shape_cast %153 : vector<1x8x64xbf16> to vector<8x64xbf16>
    %c4_160 = arith.constant 4 : index
    %c0_161 = arith.constant 0 : index
    %c0_162 = arith.constant 0 : index
    %155 = vector.load %arg2[%c4_160, %c0_161, %c0_162] : memref<9x64x64xbf16, #tpu.memory_space<vmem>>, vector<1x64x64xbf16>
    %156 = vector.shape_cast %155 : vector<1x64x64xbf16> to vector<64x64xbf16>
    %cst_163 = arith.constant dense<0.000000e+00> : vector<8x64xf32>
    %157 = tpu.matmul %154, %156, %cst_163 {dimension_numbers = #tpu.dot_dimension_numbers<[1], [0], [0], [1], [0, 0, 1, 1], [], []>} : vector<8x64xbf16>, vector<64x64xbf16>, vector<8x64xf32> -> vector<8x64xf32>
    %158 = arith.addf %152, %157 : vector<8x64xf32>
    %c2_164 = arith.constant 2 : index
    %c6_165 = arith.constant 6 : index
    %c0_166 = arith.constant 0 : index
    %159 = vector.load %arg1[%c2_164, %c6_165, %c0_166] : memref<4x24x64xbf16, #tpu.memory_space<vmem>>, vector<1x8x64xbf16>
    %160 = vector.shape_cast %159 : vector<1x8x64xbf16> to vector<8x64xbf16>
    %c5_167 = arith.constant 5 : index
    %c0_168 = arith.constant 0 : index
    %c0_169 = arith.constant 0 : index
    %161 = vector.load %arg2[%c5_167, %c0_168, %c0_169] : memref<9x64x64xbf16, #tpu.memory_space<vmem>>, vector<1x64x64xbf16>
    %162 = vector.shape_cast %161 : vector<1x64x64xbf16> to vector<64x64xbf16>
    %cst_170 = arith.constant dense<0.000000e+00> : vector<8x64xf32>
    %163 = tpu.matmul %160, %162, %cst_170 {dimension_numbers = #tpu.dot_dimension_numbers<[1], [0], [0], [1], [0, 0, 1, 1], [], []>} : vector<8x64xbf16>, vector<64x64xbf16>, vector<8x64xf32> -> vector<8x64xf32>
    %164 = arith.addf %158, %163 : vector<8x64xf32>
    %c2_171 = arith.constant 2 : index
    %c8_172 = arith.constant 8 : index
    %c0_173 = arith.constant 0 : index
    %165 = vector.load %arg1[%c2_171, %c8_172, %c0_173] : memref<4x24x64xbf16, #tpu.memory_space<vmem>>, vector<1x8x64xbf16>
    %166 = vector.shape_cast %165 : vector<1x8x64xbf16> to vector<8x64xbf16>
    %c6_174 = arith.constant 6 : index
    %c0_175 = arith.constant 0 : index
    %c0_176 = arith.constant 0 : index
    %167 = vector.load %arg2[%c6_174, %c0_175, %c0_176] : memref<9x64x64xbf16, #tpu.memory_space<vmem>>, vector<1x64x64xbf16>
    %168 = vector.shape_cast %167 : vector<1x64x64xbf16> to vector<64x64xbf16>
    %cst_177 = arith.constant dense<0.000000e+00> : vector<8x64xf32>
    %169 = tpu.matmul %166, %168, %cst_177 {dimension_numbers = #tpu.dot_dimension_numbers<[1], [0], [0], [1], [0, 0, 1, 1], [], []>} : vector<8x64xbf16>, vector<64x64xbf16>, vector<8x64xf32> -> vector<8x64xf32>
    %170 = arith.addf %164, %169 : vector<8x64xf32>
    %c2_178 = arith.constant 2 : index
    %c9_179 = arith.constant 9 : index
    %c0_180 = arith.constant 0 : index
    %171 = vector.load %arg1[%c2_178, %c9_179, %c0_180] : memref<4x24x64xbf16, #tpu.memory_space<vmem>>, vector<1x8x64xbf16>
    %172 = vector.shape_cast %171 : vector<1x8x64xbf16> to vector<8x64xbf16>
    %c7_181 = arith.constant 7 : index
    %c0_182 = arith.constant 0 : index
    %c0_183 = arith.constant 0 : index
    %173 = vector.load %arg2[%c7_181, %c0_182, %c0_183] : memref<9x64x64xbf16, #tpu.memory_space<vmem>>, vector<1x64x64xbf16>
    %174 = vector.shape_cast %173 : vector<1x64x64xbf16> to vector<64x64xbf16>
    %cst_184 = arith.constant dense<0.000000e+00> : vector<8x64xf32>
    %175 = tpu.matmul %172, %174, %cst_184 {dimension_numbers = #tpu.dot_dimension_numbers<[1], [0], [0], [1], [0, 0, 1, 1], [], []>} : vector<8x64xbf16>, vector<64x64xbf16>, vector<8x64xf32> -> vector<8x64xf32>
    %176 = arith.addf %170, %175 : vector<8x64xf32>
    %c2_185 = arith.constant 2 : index
    %c10_186 = arith.constant 10 : index
    %c0_187 = arith.constant 0 : index
    %177 = vector.load %arg1[%c2_185, %c10_186, %c0_187] : memref<4x24x64xbf16, #tpu.memory_space<vmem>>, vector<1x8x64xbf16>
    %178 = vector.shape_cast %177 : vector<1x8x64xbf16> to vector<8x64xbf16>
    %c8_188 = arith.constant 8 : index
    %c0_189 = arith.constant 0 : index
    %c0_190 = arith.constant 0 : index
    %179 = vector.load %arg2[%c8_188, %c0_189, %c0_190] : memref<9x64x64xbf16, #tpu.memory_space<vmem>>, vector<1x64x64xbf16>
    %180 = vector.shape_cast %179 : vector<1x64x64xbf16> to vector<64x64xbf16>
    %cst_191 = arith.constant dense<0.000000e+00> : vector<8x64xf32>
    %181 = tpu.matmul %178, %180, %cst_191 {dimension_numbers = #tpu.dot_dimension_numbers<[1], [0], [0], [1], [0, 0, 1, 1], [], []>} : vector<8x64xbf16>, vector<64x64xbf16>, vector<8x64xf32> -> vector<8x64xf32>
    %182 = arith.addf %176, %181 : vector<8x64xf32>
    %c0_192 = arith.constant 0 : index
    %c0_193 = arith.constant 0 : index
    %183 = vector.load %arg3[%c0_192, %c0_193] : memref<1x64xf32, #tpu.memory_space<vmem>>, vector<1x64xf32>
    %184 = vector.broadcast %183 : vector<1x64xf32> to vector<8x64xf32>
    %185 = arith.addf %182, %184 : vector<8x64xf32>
    %cst_194 = arith.constant 0.000000e+00 : f32
    %186 = vector.broadcast %cst_194 : f32 to vector<8x64xf32>
    %187 = arith.maximumf %185, %186 : vector<8x64xf32>
    %188 = arith.truncf %187 : vector<8x64xf32> to vector<8x64xbf16>
    %c2_195 = arith.constant 2 : index
    %c0_196 = arith.constant 0 : index
    %c0_197 = arith.constant 0 : index
    %189 = vector.load %arg4[%c2_195, %c0_196, %c0_197] : memref<4x8x64xbf16, #tpu.memory_space<vmem>>, vector<1x8x64xbf16>
    %190 = vector.shape_cast %189 : vector<1x8x64xbf16> to vector<8x64xbf16>
    %191 = vector.shape_cast %188 : vector<8x64xbf16> to vector<1x8x64xbf16>
    tpu.vector_store %arg4[%c2_195, %c0_196, %c0_197], %191 {strides = array<i32>} : memref<4x8x64xbf16, #tpu.memory_space<vmem>>, vector<1x8x64xbf16>,
    %cst_198 = arith.constant 0.000000e+00 : f32
    %192 = vector.broadcast %cst_198 : f32 to vector<8x64xf32>
    %c3_199 = arith.constant 3 : index
    %c0_200 = arith.constant 0 : index
    %c0_201 = arith.constant 0 : index
    %193 = vector.load %arg1[%c3_199, %c0_200, %c0_201] : memref<4x24x64xbf16, #tpu.memory_space<vmem>>, vector<1x8x64xbf16>
    %194 = vector.shape_cast %193 : vector<1x8x64xbf16> to vector<8x64xbf16>
    %c0_202 = arith.constant 0 : index
    %c0_203 = arith.constant 0 : index
    %c0_204 = arith.constant 0 : index
    %195 = vector.load %arg2[%c0_202, %c0_203, %c0_204] : memref<9x64x64xbf16, #tpu.memory_space<vmem>>, vector<1x64x64xbf16>
    %196 = vector.shape_cast %195 : vector<1x64x64xbf16> to vector<64x64xbf16>
    %cst_205 = arith.constant dense<0.000000e+00> : vector<8x64xf32>
    %197 = tpu.matmul %194, %196, %cst_205 {dimension_numbers = #tpu.dot_dimension_numbers<[1], [0], [0], [1], [0, 0, 1, 1], [], []>} : vector<8x64xbf16>, vector<64x64xbf16>, vector<8x64xf32> -> vector<8x64xf32>
    %198 = arith.addf %192, %197 : vector<8x64xf32>
    %c3_206 = arith.constant 3 : index
    %c1_207 = arith.constant 1 : index
    %c0_208 = arith.constant 0 : index
    %199 = vector.load %arg1[%c3_206, %c1_207, %c0_208] : memref<4x24x64xbf16, #tpu.memory_space<vmem>>, vector<1x8x64xbf16>
    %200 = vector.shape_cast %199 : vector<1x8x64xbf16> to vector<8x64xbf16>
    %c1_209 = arith.constant 1 : index
    %c0_210 = arith.constant 0 : index
    %c0_211 = arith.constant 0 : index
    %201 = vector.load %arg2[%c1_209, %c0_210, %c0_211] : memref<9x64x64xbf16, #tpu.memory_space<vmem>>, vector<1x64x64xbf16>
    %202 = vector.shape_cast %201 : vector<1x64x64xbf16> to vector<64x64xbf16>
    %cst_212 = arith.constant dense<0.000000e+00> : vector<8x64xf32>
    %203 = tpu.matmul %200, %202, %cst_212 {dimension_numbers = #tpu.dot_dimension_numbers<[1], [0], [0], [1], [0, 0, 1, 1], [], []>} : vector<8x64xbf16>, vector<64x64xbf16>, vector<8x64xf32> -> vector<8x64xf32>
    %204 = arith.addf %198, %203 : vector<8x64xf32>
    %c3_213 = arith.constant 3 : index
    %c2_214 = arith.constant 2 : index
    %c0_215 = arith.constant 0 : index
    %205 = vector.load %arg1[%c3_213, %c2_214, %c0_215] : memref<4x24x64xbf16, #tpu.memory_space<vmem>>, vector<1x8x64xbf16>
    %206 = vector.shape_cast %205 : vector<1x8x64xbf16> to vector<8x64xbf16>
    %c2_216 = arith.constant 2 : index
    %c0_217 = arith.constant 0 : index
    %c0_218 = arith.constant 0 : index
    %207 = vector.load %arg2[%c2_216, %c0_217, %c0_218] : memref<9x64x64xbf16, #tpu.memory_space<vmem>>, vector<1x64x64xbf16>
    %208 = vector.shape_cast %207 : vector<1x64x64xbf16> to vector<64x64xbf16>
    %cst_219 = arith.constant dense<0.000000e+00> : vector<8x64xf32>
    %209 = tpu.matmul %206, %208, %cst_219 {dimension_numbers = #tpu.dot_dimension_numbers<[1], [0], [0], [1], [0, 0, 1, 1], [], []>} : vector<8x64xbf16>, vector<64x64xbf16>, vector<8x64xf32> -> vector<8x64xf32>
    %210 = arith.addf %204, %209 : vector<8x64xf32>
    %c3_220 = arith.constant 3 : index
    %c4_221 = arith.constant 4 : index
    %c0_222 = arith.constant 0 : index
    %211 = vector.load %arg1[%c3_220, %c4_221, %c0_222] : memref<4x24x64xbf16, #tpu.memory_space<vmem>>, vector<1x8x64xbf16>
    %212 = vector.shape_cast %211 : vector<1x8x64xbf16> to vector<8x64xbf16>
    %c3_223 = arith.constant 3 : index
    %c0_224 = arith.constant 0 : index
    %c0_225 = arith.constant 0 : index
    %213 = vector.load %arg2[%c3_223, %c0_224, %c0_225] : memref<9x64x64xbf16, #tpu.memory_space<vmem>>, vector<1x64x64xbf16>
    %214 = vector.shape_cast %213 : vector<1x64x64xbf16> to vector<64x64xbf16>
    %cst_226 = arith.constant dense<0.000000e+00> : vector<8x64xf32>
    %215 = tpu.matmul %212, %214, %cst_226 {dimension_numbers = #tpu.dot_dimension_numbers<[1], [0], [0], [1], [0, 0, 1, 1], [], []>} : vector<8x64xbf16>, vector<64x64xbf16>, vector<8x64xf32> -> vector<8x64xf32>
    %216 = arith.addf %210, %215 : vector<8x64xf32>
    %c3_227 = arith.constant 3 : index
    %c5_228 = arith.constant 5 : index
    %c0_229 = arith.constant 0 : index
    %217 = vector.load %arg1[%c3_227, %c5_228, %c0_229] : memref<4x24x64xbf16, #tpu.memory_space<vmem>>, vector<1x8x64xbf16>
    %218 = vector.shape_cast %217 : vector<1x8x64xbf16> to vector<8x64xbf16>
    %c4_230 = arith.constant 4 : index
    %c0_231 = arith.constant 0 : index
    %c0_232 = arith.constant 0 : index
    %219 = vector.load %arg2[%c4_230, %c0_231, %c0_232] : memref<9x64x64xbf16, #tpu.memory_space<vmem>>, vector<1x64x64xbf16>
    %220 = vector.shape_cast %219 : vector<1x64x64xbf16> to vector<64x64xbf16>
    %cst_233 = arith.constant dense<0.000000e+00> : vector<8x64xf32>
    %221 = tpu.matmul %218, %220, %cst_233 {dimension_numbers = #tpu.dot_dimension_numbers<[1], [0], [0], [1], [0, 0, 1, 1], [], []>} : vector<8x64xbf16>, vector<64x64xbf16>, vector<8x64xf32> -> vector<8x64xf32>
    %222 = arith.addf %216, %221 : vector<8x64xf32>
    %c3_234 = arith.constant 3 : index
    %c6_235 = arith.constant 6 : index
    %c0_236 = arith.constant 0 : index
    %223 = vector.load %arg1[%c3_234, %c6_235, %c0_236] : memref<4x24x64xbf16, #tpu.memory_space<vmem>>, vector<1x8x64xbf16>
    %224 = vector.shape_cast %223 : vector<1x8x64xbf16> to vector<8x64xbf16>
    %c5_237 = arith.constant 5 : index
    %c0_238 = arith.constant 0 : index
    %c0_239 = arith.constant 0 : index
    %225 = vector.load %arg2[%c5_237, %c0_238, %c0_239] : memref<9x64x64xbf16, #tpu.memory_space<vmem>>, vector<1x64x64xbf16>
    %226 = vector.shape_cast %225 : vector<1x64x64xbf16> to vector<64x64xbf16>
    %cst_240 = arith.constant dense<0.000000e+00> : vector<8x64xf32>
    %227 = tpu.matmul %224, %226, %cst_240 {dimension_numbers = #tpu.dot_dimension_numbers<[1], [0], [0], [1], [0, 0, 1, 1], [], []>} : vector<8x64xbf16>, vector<64x64xbf16>, vector<8x64xf32> -> vector<8x64xf32>
    %228 = arith.addf %222, %227 : vector<8x64xf32>
    %c3_241 = arith.constant 3 : index
    %c8_242 = arith.constant 8 : index
    %c0_243 = arith.constant 0 : index
    %229 = vector.load %arg1[%c3_241, %c8_242, %c0_243] : memref<4x24x64xbf16, #tpu.memory_space<vmem>>, vector<1x8x64xbf16>
    %230 = vector.shape_cast %229 : vector<1x8x64xbf16> to vector<8x64xbf16>
    %c6_244 = arith.constant 6 : index
    %c0_245 = arith.constant 0 : index
    %c0_246 = arith.constant 0 : index
    %231 = vector.load %arg2[%c6_244, %c0_245, %c0_246] : memref<9x64x64xbf16, #tpu.memory_space<vmem>>, vector<1x64x64xbf16>
    %232 = vector.shape_cast %231 : vector<1x64x64xbf16> to vector<64x64xbf16>
    %cst_247 = arith.constant dense<0.000000e+00> : vector<8x64xf32>
    %233 = tpu.matmul %230, %232, %cst_247 {dimension_numbers = #tpu.dot_dimension_numbers<[1], [0], [0], [1], [0, 0, 1, 1], [], []>} : vector<8x64xbf16>, vector<64x64xbf16>, vector<8x64xf32> -> vector<8x64xf32>
    %234 = arith.addf %228, %233 : vector<8x64xf32>
    %c3_248 = arith.constant 3 : index
    %c9_249 = arith.constant 9 : index
    %c0_250 = arith.constant 0 : index
    %235 = vector.load %arg1[%c3_248, %c9_249, %c0_250] : memref<4x24x64xbf16, #tpu.memory_space<vmem>>, vector<1x8x64xbf16>
    %236 = vector.shape_cast %235 : vector<1x8x64xbf16> to vector<8x64xbf16>
    %c7_251 = arith.constant 7 : index
    %c0_252 = arith.constant 0 : index
    %c0_253 = arith.constant 0 : index
    %237 = vector.load %arg2[%c7_251, %c0_252, %c0_253] : memref<9x64x64xbf16, #tpu.memory_space<vmem>>, vector<1x64x64xbf16>
    %238 = vector.shape_cast %237 : vector<1x64x64xbf16> to vector<64x64xbf16>
    %cst_254 = arith.constant dense<0.000000e+00> : vector<8x64xf32>
    %239 = tpu.matmul %236, %238, %cst_254 {dimension_numbers = #tpu.dot_dimension_numbers<[1], [0], [0], [1], [0, 0, 1, 1], [], []>} : vector<8x64xbf16>, vector<64x64xbf16>, vector<8x64xf32> -> vector<8x64xf32>
    %240 = arith.addf %234, %239 : vector<8x64xf32>
    %c3_255 = arith.constant 3 : index
    %c10_256 = arith.constant 10 : index
    %c0_257 = arith.constant 0 : index
    %241 = vector.load %arg1[%c3_255, %c10_256, %c0_257] : memref<4x24x64xbf16, #tpu.memory_space<vmem>>, vector<1x8x64xbf16>
    %242 = vector.shape_cast %241 : vector<1x8x64xbf16> to vector<8x64xbf16>
    %c8_258 = arith.constant 8 : index
    %c0_259 = arith.constant 0 : index
    %c0_260 = arith.constant 0 : index
    %243 = vector.load %arg2[%c8_258, %c0_259, %c0_260] : memref<9x64x64xbf16, #tpu.memory_space<vmem>>, vector<1x64x64xbf16>
    %244 = vector.shape_cast %243 : vector<1x64x64xbf16> to vector<64x64xbf16>
    %cst_261 = arith.constant dense<0.000000e+00> : vector<8x64xf32>
    %245 = tpu.matmul %242, %244, %cst_261 {dimension_numbers = #tpu.dot_dimension_numbers<[1], [0], [0], [1], [0, 0, 1, 1], [], []>} : vector<8x64xbf16>, vector<64x64xbf16>, vector<8x64xf32> -> vector<8x64xf32>
    %246 = arith.addf %240, %245 : vector<8x64xf32>
    %c0_262 = arith.constant 0 : index
    %c0_263 = arith.constant 0 : index
    %247 = vector.load %arg3[%c0_262, %c0_263] : memref<1x64xf32, #tpu.memory_space<vmem>>, vector<1x64xf32>
    %248 = vector.broadcast %247 : vector<1x64xf32> to vector<8x64xf32>
    %249 = arith.addf %246, %248 : vector<8x64xf32>
    %cst_264 = arith.constant 0.000000e+00 : f32
    %250 = vector.broadcast %cst_264 : f32 to vector<8x64xf32>
    %251 = arith.maximumf %249, %250 : vector<8x64xf32>
    %252 = arith.truncf %251 : vector<8x64xf32> to vector<8x64xbf16>
    %c3_265 = arith.constant 3 : index
    %c0_266 = arith.constant 0 : index
    %c0_267 = arith.constant 0 : index
    %253 = vector.load %arg4[%c3_265, %c0_266, %c0_267] : memref<4x8x64xbf16, #tpu.memory_space<vmem>>, vector<1x8x64xbf16>
    %254 = vector.shape_cast %253 : vector<1x8x64xbf16> to vector<8x64xbf16>
    %255 = vector.shape_cast %252 : vector<8x64xbf16> to vector<1x8x64xbf16>
    tpu.vector_store %arg4[%c3_265, %c0_266, %c0_267], %255 {strides = array<i32>} : memref<4x8x64xbf16, #tpu.memory_space<vmem>>, vector<1x8x64xbf16>,
    return
  }
  func.func @transform_0(%arg0: i32) -> (i32, i32, i32) {
    %c0_i32 = arith.constant 0 : i32
    %c0_i32_0 = arith.constant 0 : i32
    %c0_i32_1 = arith.constant 0 : i32
    return %arg0, %c0_i32, %c0_i32_0 : i32, i32, i32
  }
  func.func @transform_1(%arg0: i32) -> (i32, i32, i32) {
    %c0_i32 = arith.constant 0 : i32
    %c0_i32_0 = arith.constant 0 : i32
    %c0_i32_1 = arith.constant 0 : i32
    %c0_i32_2 = arith.constant 0 : i32
    return %c0_i32, %c0_i32_0, %c0_i32_1 : i32, i32, i32
  }
  func.func @transform_2(%arg0: i32) -> (i32, i32) {
    %c0_i32 = arith.constant 0 : i32
    %c0_i32_0 = arith.constant 0 : i32
    %c0_i32_1 = arith.constant 0 : i32
    return %c0_i32, %c0_i32_0 : i32, i32
  }
  func.func @transform_3(%arg0: i32) -> (i32, i32, i32) {
    %c0_i32 = arith.constant 0 : i32
    %c0_i32_0 = arith.constant 0 : i32
    %c0_i32_1 = arith.constant 0 : i32
    return %arg0, %c0_i32, %c0_i32_0 : i32, i32, i32
  }
}

module attributes {stable_mosaic.version = 11 : i64} {
  func.func @_dense_kernel(%arg0: i32, %arg1: memref<2x256xbf16, #tpu.memory_space<vmem>>, %arg2: memref<256x64xbf16, #tpu.memory_space<vmem>>, %arg3: memref<1x64xf32, #tpu.memory_space<vmem>>, %arg4: memref<2x64xbf16, #tpu.memory_space<vmem>>) attributes {dimension_semantics = [#tpu.dimension_semantics<parallel>], iteration_bounds = array<i64: 1>, scalar_prefetch = 0 : i64, scratch_operands = 0 : i64, tpu.core_type = #tpu.core_type<tc>, window_params = [{transform_indices = @transform_0, window_bounds = array<i64: 2, 256>}, {pipeline_mode = #tpu.pipeline_mode<synchronous>, transform_indices = @transform_1, window_bounds = array<i64: 256, 64>}, {pipeline_mode = #tpu.pipeline_mode<synchronous>, transform_indices = @transform_2, window_bounds = array<i64: 1, 64>}, {transform_indices = @transform_3, window_bounds = array<i64: 2, 64>}]} {
    %c0 = arith.constant 0 : index
    %c0_0 = arith.constant 0 : index
    %0 = vector.load %arg1[%c0, %c0_0] : memref<2x256xbf16, #tpu.memory_space<vmem>>, vector<2x256xbf16>
    %c0_1 = arith.constant 0 : index
    %c0_2 = arith.constant 0 : index
    %1 = vector.load %arg2[%c0_1, %c0_2] : memref<256x64xbf16, #tpu.memory_space<vmem>>, vector<256x64xbf16>
    %cst = arith.constant dense<0.000000e+00> : vector<2x64xf32>
    %2 = tpu.matmul %0, %1, %cst {dimension_numbers = #tpu.dot_dimension_numbers<[1], [0], [0], [1], [0, 0, 1, 1], [], []>} : vector<2x256xbf16>, vector<256x64xbf16>, vector<2x64xf32> -> vector<2x64xf32>
    %c0_3 = arith.constant 0 : index
    %c0_4 = arith.constant 0 : index
    %3 = vector.load %arg3[%c0_3, %c0_4] : memref<1x64xf32, #tpu.memory_space<vmem>>, vector<1x64xf32>
    %4 = vector.broadcast %3 : vector<1x64xf32> to vector<2x64xf32>
    %5 = arith.addf %2, %4 : vector<2x64xf32>
    %cst_5 = arith.constant 0.000000e+00 : f32
    %6 = vector.broadcast %cst_5 : f32 to vector<2x64xf32>
    %7 = arith.maximumf %5, %6 : vector<2x64xf32>
    %8 = arith.truncf %7 : vector<2x64xf32> to vector<2x64xbf16>
    %c0_6 = arith.constant 0 : index
    %c0_7 = arith.constant 0 : index
    %9 = vector.load %arg4[%c0_6, %c0_7] : memref<2x64xbf16, #tpu.memory_space<vmem>>, vector<2x64xbf16>
    tpu.vector_store %arg4[%c0_6, %c0_7], %8 {strides = array<i32>} : memref<2x64xbf16, #tpu.memory_space<vmem>>, vector<2x64xbf16>,
    return
  }
  func.func @transform_0(%arg0: i32) -> (i32, i32) {
    %c0_i32 = arith.constant 0 : i32
    %c0_i32_0 = arith.constant 0 : i32
    return %arg0, %c0_i32 : i32, i32
  }
  func.func @transform_1(%arg0: i32) -> (i32, i32) {
    %c0_i32 = arith.constant 0 : i32
    %c0_i32_0 = arith.constant 0 : i32
    %c0_i32_1 = arith.constant 0 : i32
    return %c0_i32, %c0_i32_0 : i32, i32
  }
  func.func @transform_2(%arg0: i32) -> (i32, i32) {
    %c0_i32 = arith.constant 0 : i32
    %c0_i32_0 = arith.constant 0 : i32
    %c0_i32_1 = arith.constant 0 : i32
    return %c0_i32, %c0_i32_0 : i32, i32
  }
  func.func @transform_3(%arg0: i32) -> (i32, i32) {
    %c0_i32 = arith.constant 0 : i32
    %c0_i32_0 = arith.constant 0 : i32
    return %arg0, %c0_i32 : i32, i32
  }
}

module attributes {stable_mosaic.version = 11 : i64} {
  func.func @_fs_tail_kernel(%arg0: i32, %arg1: memref<2x64xbf16, #tpu.memory_space<vmem>>, %arg2: memref<32x32xbf16, #tpu.memory_space<vmem>>, %arg3: memref<1x32xf32, #tpu.memory_space<vmem>>, %arg4: memref<32x32xbf16, #tpu.memory_space<vmem>>, %arg5: memref<1x32xf32, #tpu.memory_space<vmem>>, %arg6: memref<32x128xbf16, #tpu.memory_space<vmem>>, %arg7: memref<1x128xf32, #tpu.memory_space<vmem>>, %arg8: memref<32x128xbf16, #tpu.memory_space<vmem>>, %arg9: memref<1x128xf32, #tpu.memory_space<vmem>>, %arg10: memref<2x256xf32, #tpu.memory_space<vmem>>) attributes {dimension_semantics = [#tpu.dimension_semantics<parallel>], iteration_bounds = array<i64: 1>, scalar_prefetch = 0 : i64, scratch_operands = 0 : i64, tpu.core_type = #tpu.core_type<tc>, window_params = [{transform_indices = @transform_0, window_bounds = array<i64: 2, 64>}, {pipeline_mode = #tpu.pipeline_mode<synchronous>, transform_indices = @transform_1, window_bounds = array<i64: 32, 32>}, {pipeline_mode = #tpu.pipeline_mode<synchronous>, transform_indices = @transform_2, window_bounds = array<i64: 1, 32>}, {pipeline_mode = #tpu.pipeline_mode<synchronous>, transform_indices = @transform_3, window_bounds = array<i64: 32, 32>}, {pipeline_mode = #tpu.pipeline_mode<synchronous>, transform_indices = @transform_4, window_bounds = array<i64: 1, 32>}, {pipeline_mode = #tpu.pipeline_mode<synchronous>, transform_indices = @transform_5, window_bounds = array<i64: 32, 128>}, {pipeline_mode = #tpu.pipeline_mode<synchronous>, transform_indices = @transform_6, window_bounds = array<i64: 1, 128>}, {pipeline_mode = #tpu.pipeline_mode<synchronous>, transform_indices = @transform_7, window_bounds = array<i64: 32, 128>}, {pipeline_mode = #tpu.pipeline_mode<synchronous>, transform_indices = @transform_8, window_bounds = array<i64: 1, 128>}, {transform_indices = @transform_9, window_bounds = array<i64: 2, 256>}]} {
    %c0 = arith.constant 0 : index
    %c0_0 = arith.constant 0 : index
    %0 = vector.load %arg1[%c0, %c0_0] : memref<2x64xbf16, #tpu.memory_space<vmem>>, vector<2x64xbf16>
    %1 = vector.extract_strided_slice %0 {offsets = [0, 0], sizes = [2, 32], strides = [1, 1]} : vector<2x64xbf16> to vector<2x32xbf16>
    %2 = vector.extract_strided_slice %0 {offsets = [0, 32], sizes = [2, 32], strides = [1, 1]} : vector<2x64xbf16> to vector<2x32xbf16>
    %c0_1 = arith.constant 0 : index
    %c0_2 = arith.constant 0 : index
    %3 = vector.load %arg2[%c0_1, %c0_2] : memref<32x32xbf16, #tpu.memory_space<vmem>>, vector<32x32xbf16>
    %c0_3 = arith.constant 0 : index
    %c0_4 = arith.constant 0 : index
    %4 = vector.load %arg3[%c0_3, %c0_4] : memref<1x32xf32, #tpu.memory_space<vmem>>, vector<1x32xf32>
    %c0_5 = arith.constant 0 : index
    %c0_6 = arith.constant 0 : index
    %5 = vector.load %arg4[%c0_5, %c0_6] : memref<32x32xbf16, #tpu.memory_space<vmem>>, vector<32x32xbf16>
    %c0_7 = arith.constant 0 : index
    %c0_8 = arith.constant 0 : index
    %6 = vector.load %arg5[%c0_7, %c0_8] : memref<1x32xf32, #tpu.memory_space<vmem>>, vector<1x32xf32>
    %cst = arith.constant dense<0.000000e+00> : vector<2x32xf32>
    %7 = tpu.matmul %1, %3, %cst {dimension_numbers = #tpu.dot_dimension_numbers<[1], [0], [0], [1], [0, 0, 1, 1], [], []>} : vector<2x32xbf16>, vector<32x32xbf16>, vector<2x32xf32> -> vector<2x32xf32>
    %8 = vector.broadcast %4 : vector<1x32xf32> to vector<2x32xf32>
    %9 = arith.addf %7, %8 : vector<2x32xf32>
    %cst_9 = arith.constant dense<0.000000e+00> : vector<2x32xf32>
    %10 = tpu.matmul %2, %5, %cst_9 {dimension_numbers = #tpu.dot_dimension_numbers<[1], [0], [0], [1], [0, 0, 1, 1], [], []>} : vector<2x32xbf16>, vector<32x32xbf16>, vector<2x32xf32> -> vector<2x32xf32>
    %11 = vector.broadcast %6 : vector<1x32xf32> to vector<2x32xf32>
    %12 = arith.addf %10, %11 : vector<2x32xf32>
    %cst_10 = arith.constant 0.000000e+00 : f32
    %13 = vector.broadcast %cst_10 : f32 to vector<2x32xf32>
    %14 = arith.maximumf %9, %13 : vector<2x32xf32>
    %15 = arith.truncf %14 : vector<2x32xf32> to vector<2x32xbf16>
    %cst_11 = arith.constant 0.000000e+00 : f32
    %16 = vector.broadcast %cst_11 : f32 to vector<2x32xf32>
    %17 = arith.maximumf %12, %16 : vector<2x32xf32>
    %18 = arith.truncf %17 : vector<2x32xf32> to vector<2x32xbf16>
    %c0_12 = arith.constant 0 : index
    %c0_13 = arith.constant 0 : index
    %19 = vector.load %arg6[%c0_12, %c0_13] : memref<32x128xbf16, #tpu.memory_space<vmem>>, vector<32x128xbf16>
    %c0_14 = arith.constant 0 : index
    %c0_15 = arith.constant 0 : index
    %20 = vector.load %arg7[%c0_14, %c0_15] : memref<1x128xf32, #tpu.memory_space<vmem>>, vector<1x128xf32>
    %c0_16 = arith.constant 0 : index
    %c0_17 = arith.constant 0 : index
    %21 = vector.load %arg8[%c0_16, %c0_17] : memref<32x128xbf16, #tpu.memory_space<vmem>>, vector<32x128xbf16>
    %c0_18 = arith.constant 0 : index
    %c0_19 = arith.constant 0 : index
    %22 = vector.load %arg9[%c0_18, %c0_19] : memref<1x128xf32, #tpu.memory_space<vmem>>, vector<1x128xf32>
    %cst_20 = arith.constant dense<0.000000e+00> : vector<2x128xf32>
    %23 = tpu.matmul %15, %19, %cst_20 {dimension_numbers = #tpu.dot_dimension_numbers<[1], [0], [0], [1], [0, 0, 1, 1], [], []>} : vector<2x32xbf16>, vector<32x128xbf16>, vector<2x128xf32> -> vector<2x128xf32>
    %24 = vector.broadcast %20 : vector<1x128xf32> to vector<2x128xf32>
    %25 = arith.addf %23, %24 : vector<2x128xf32>
    %cst_21 = arith.constant dense<0.000000e+00> : vector<2x128xf32>
    %26 = tpu.matmul %18, %21, %cst_21 {dimension_numbers = #tpu.dot_dimension_numbers<[1], [0], [0], [1], [0, 0, 1, 1], [], []>} : vector<2x32xbf16>, vector<32x128xbf16>, vector<2x128xf32> -> vector<2x128xf32>
    %27 = vector.broadcast %22 : vector<1x128xf32> to vector<2x128xf32>
    %28 = arith.addf %26, %27 : vector<2x128xf32>
    %c0_22 = arith.constant 0 : index
    %c0_23 = arith.constant 0 : index
    %29 = vector.load %arg10[%c0_22, %c0_23] : memref<2x256xf32, #tpu.memory_space<vmem>>, vector<2x128xf32>
    tpu.vector_store %arg10[%c0_22, %c0_23], %25 {strides = array<i32>} : memref<2x256xf32, #tpu.memory_space<vmem>>, vector<2x128xf32>,
    %c0_24 = arith.constant 0 : index
    %c128 = arith.constant 128 : index
    %30 = vector.load %arg10[%c0_24, %c128] : memref<2x256xf32, #tpu.memory_space<vmem>>, vector<2x128xf32>
    tpu.vector_store %arg10[%c0_24, %c128], %28 {strides = array<i32>} : memref<2x256xf32, #tpu.memory_space<vmem>>, vector<2x128xf32>,
    return
  }
  func.func @transform_0(%arg0: i32) -> (i32, i32) {
    %c0_i32 = arith.constant 0 : i32
    %c0_i32_0 = arith.constant 0 : i32
    return %arg0, %c0_i32 : i32, i32
  }
  func.func @transform_1(%arg0: i32) -> (i32, i32) {
    %c0_i32 = arith.constant 0 : i32
    %c0_i32_0 = arith.constant 0 : i32
    %c0_i32_1 = arith.constant 0 : i32
    return %c0_i32, %c0_i32_0 : i32, i32
  }
  func.func @transform_2(%arg0: i32) -> (i32, i32) {
    %c0_i32 = arith.constant 0 : i32
    %c0_i32_0 = arith.constant 0 : i32
    %c0_i32_1 = arith.constant 0 : i32
    return %c0_i32, %c0_i32_0 : i32, i32
  }
  func.func @transform_3(%arg0: i32) -> (i32, i32) {
    %c0_i32 = arith.constant 0 : i32
    %c0_i32_0 = arith.constant 0 : i32
    %c0_i32_1 = arith.constant 0 : i32
    return %c0_i32, %c0_i32_0 : i32, i32
  }
  func.func @transform_4(%arg0: i32) -> (i32, i32) {
    %c0_i32 = arith.constant 0 : i32
    %c0_i32_0 = arith.constant 0 : i32
    %c0_i32_1 = arith.constant 0 : i32
    return %c0_i32, %c0_i32_0 : i32, i32
  }
  func.func @transform_5(%arg0: i32) -> (i32, i32) {
    %c0_i32 = arith.constant 0 : i32
    %c0_i32_0 = arith.constant 0 : i32
    %c0_i32_1 = arith.constant 0 : i32
    return %c0_i32, %c0_i32_0 : i32, i32
  }
  func.func @transform_6(%arg0: i32) -> (i32, i32) {
    %c0_i32 = arith.constant 0 : i32
    %c0_i32_0 = arith.constant 0 : i32
    %c0_i32_1 = arith.constant 0 : i32
    return %c0_i32, %c0_i32_0 : i32, i32
  }
  func.func @transform_7(%arg0: i32) -> (i32, i32) {
    %c0_i32 = arith.constant 0 : i32
    %c0_i32_0 = arith.constant 0 : i32
    %c0_i32_1 = arith.constant 0 : i32
    return %c0_i32, %c0_i32_0 : i32, i32
  }
  func.func @transform_8(%arg0: i32) -> (i32, i32) {
    %c0_i32 = arith.constant 0 : i32
    %c0_i32_0 = arith.constant 0 : i32
    %c0_i32_1 = arith.constant 0 : i32
    return %c0_i32, %c0_i32_0 : i32, i32
  }
  func.func @transform_9(%arg0: i32) -> (i32, i32) {
    %c0_i32 = arith.constant 0 : i32
    %c0_i32_0 = arith.constant 0 : i32
    return %arg0, %c0_i32 : i32, i32
  }
}

module attributes {stable_mosaic.version = 11 : i64} {
  func.func @_dense_kernel(%arg0: i32, %arg1: memref<2x260xbf16, #tpu.memory_space<vmem>>, %arg2: memref<260x64xbf16, #tpu.memory_space<vmem>>, %arg3: memref<1x64xf32, #tpu.memory_space<vmem>>, %arg4: memref<2x64xbf16, #tpu.memory_space<vmem>>) attributes {dimension_semantics = [#tpu.dimension_semantics<parallel>], iteration_bounds = array<i64: 1>, scalar_prefetch = 0 : i64, scratch_operands = 0 : i64, tpu.core_type = #tpu.core_type<tc>, window_params = [{transform_indices = @transform_0, window_bounds = array<i64: 2, 260>}, {pipeline_mode = #tpu.pipeline_mode<synchronous>, transform_indices = @transform_1, window_bounds = array<i64: 260, 64>}, {pipeline_mode = #tpu.pipeline_mode<synchronous>, transform_indices = @transform_2, window_bounds = array<i64: 1, 64>}, {transform_indices = @transform_3, window_bounds = array<i64: 2, 64>}]} {
    %c0 = arith.constant 0 : index
    %c0_0 = arith.constant 0 : index
    %0 = vector.load %arg1[%c0, %c0_0] : memref<2x260xbf16, #tpu.memory_space<vmem>>, vector<2x260xbf16>
    %c0_1 = arith.constant 0 : index
    %c0_2 = arith.constant 0 : index
    %1 = vector.load %arg2[%c0_1, %c0_2] : memref<260x64xbf16, #tpu.memory_space<vmem>>, vector<260x64xbf16>
    %cst = arith.constant dense<0.000000e+00> : vector<2x64xf32>
    %2 = tpu.matmul %0, %1, %cst {dimension_numbers = #tpu.dot_dimension_numbers<[1], [0], [0], [1], [0, 0, 1, 1], [], []>} : vector<2x260xbf16>, vector<260x64xbf16>, vector<2x64xf32> -> vector<2x64xf32>
    %c0_3 = arith.constant 0 : index
    %c0_4 = arith.constant 0 : index
    %3 = vector.load %arg3[%c0_3, %c0_4] : memref<1x64xf32, #tpu.memory_space<vmem>>, vector<1x64xf32>
    %4 = vector.broadcast %3 : vector<1x64xf32> to vector<2x64xf32>
    %5 = arith.addf %2, %4 : vector<2x64xf32>
    %cst_5 = arith.constant 0.000000e+00 : f32
    %6 = vector.broadcast %cst_5 : f32 to vector<2x64xf32>
    %7 = arith.maximumf %5, %6 : vector<2x64xf32>
    %8 = arith.truncf %7 : vector<2x64xf32> to vector<2x64xbf16>
    %c0_6 = arith.constant 0 : index
    %c0_7 = arith.constant 0 : index
    %9 = vector.load %arg4[%c0_6, %c0_7] : memref<2x64xbf16, #tpu.memory_space<vmem>>, vector<2x64xbf16>
    tpu.vector_store %arg4[%c0_6, %c0_7], %8 {strides = array<i32>} : memref<2x64xbf16, #tpu.memory_space<vmem>>, vector<2x64xbf16>,
    return
  }
  func.func @transform_0(%arg0: i32) -> (i32, i32) {
    %c0_i32 = arith.constant 0 : i32
    %c0_i32_0 = arith.constant 0 : i32
    return %arg0, %c0_i32 : i32, i32
  }
  func.func @transform_1(%arg0: i32) -> (i32, i32) {
    %c0_i32 = arith.constant 0 : i32
    %c0_i32_0 = arith.constant 0 : i32
    %c0_i32_1 = arith.constant 0 : i32
    return %c0_i32, %c0_i32_0 : i32, i32
  }
  func.func @transform_2(%arg0: i32) -> (i32, i32) {
    %c0_i32 = arith.constant 0 : i32
    %c0_i32_0 = arith.constant 0 : i32
    %c0_i32_1 = arith.constant 0 : i32
    return %c0_i32, %c0_i32_0 : i32, i32
  }
  func.func @transform_3(%arg0: i32) -> (i32, i32) {
    %c0_i32 = arith.constant 0 : i32
    %c0_i32_0 = arith.constant 0 : i32
    return %arg0, %c0_i32 : i32, i32
  }
}

module attributes {stable_mosaic.version = 11 : i64} {
  func.func @_sa_tail_outer_kernel(%arg0: i32, %arg1: memref<2x64xbf16, #tpu.memory_space<vmem>>, %arg2: memref<2x256xf32, #tpu.memory_space<vmem>>, %arg3: memref<32x32xbf16, #tpu.memory_space<vmem>>, %arg4: memref<1x32xf32, #tpu.memory_space<vmem>>, %arg5: memref<32x32xbf16, #tpu.memory_space<vmem>>, %arg6: memref<1x32xf32, #tpu.memory_space<vmem>>, %arg7: memref<32x128xbf16, #tpu.memory_space<vmem>>, %arg8: memref<1x128xf32, #tpu.memory_space<vmem>>, %arg9: memref<32x128xbf16, #tpu.memory_space<vmem>>, %arg10: memref<1x128xf32, #tpu.memory_space<vmem>>, %arg11: memref<2x2x2xf32, #tpu.memory_space<vmem>>) attributes {dimension_semantics = [#tpu.dimension_semantics<parallel>], iteration_bounds = array<i64: 1>, scalar_prefetch = 0 : i64, scratch_operands = 0 : i64, tpu.core_type = #tpu.core_type<tc>, window_params = [{transform_indices = @transform_0, window_bounds = array<i64: 2, 64>}, {pipeline_mode = #tpu.pipeline_mode<synchronous>, transform_indices = @transform_1, window_bounds = array<i64: 2, 256>}, {pipeline_mode = #tpu.pipeline_mode<synchronous>, transform_indices = @transform_2, window_bounds = array<i64: 32, 32>}, {pipeline_mode = #tpu.pipeline_mode<synchronous>, transform_indices = @transform_3, window_bounds = array<i64: 1, 32>}, {pipeline_mode = #tpu.pipeline_mode<synchronous>, transform_indices = @transform_4, window_bounds = array<i64: 32, 32>}, {pipeline_mode = #tpu.pipeline_mode<synchronous>, transform_indices = @transform_5, window_bounds = array<i64: 1, 32>}, {pipeline_mode = #tpu.pipeline_mode<synchronous>, transform_indices = @transform_6, window_bounds = array<i64: 32, 128>}, {pipeline_mode = #tpu.pipeline_mode<synchronous>, transform_indices = @transform_7, window_bounds = array<i64: 1, 128>}, {pipeline_mode = #tpu.pipeline_mode<synchronous>, transform_indices = @transform_8, window_bounds = array<i64: 32, 128>}, {pipeline_mode = #tpu.pipeline_mode<synchronous>, transform_indices = @transform_9, window_bounds = array<i64: 1, 128>}, {transform_indices = @transform_10, window_bounds = array<i64: 2, 2, 2>}]} {
    %c0 = arith.constant 0 : index
    %c0_0 = arith.constant 0 : index
    %0 = vector.load %arg1[%c0, %c0_0] : memref<2x64xbf16, #tpu.memory_space<vmem>>, vector<2x64xbf16>
    %1 = vector.extract_strided_slice %0 {offsets = [0, 0], sizes = [2, 32], strides = [1, 1]} : vector<2x64xbf16> to vector<2x32xbf16>
    %2 = vector.extract_strided_slice %0 {offsets = [0, 32], sizes = [2, 32], strides = [1, 1]} : vector<2x64xbf16> to vector<2x32xbf16>
    %c0_1 = arith.constant 0 : index
    %c0_2 = arith.constant 0 : index
    %3 = vector.load %arg3[%c0_1, %c0_2] : memref<32x32xbf16, #tpu.memory_space<vmem>>, vector<32x32xbf16>
    %c0_3 = arith.constant 0 : index
    %c0_4 = arith.constant 0 : index
    %4 = vector.load %arg4[%c0_3, %c0_4] : memref<1x32xf32, #tpu.memory_space<vmem>>, vector<1x32xf32>
    %c0_5 = arith.constant 0 : index
    %c0_6 = arith.constant 0 : index
    %5 = vector.load %arg5[%c0_5, %c0_6] : memref<32x32xbf16, #tpu.memory_space<vmem>>, vector<32x32xbf16>
    %c0_7 = arith.constant 0 : index
    %c0_8 = arith.constant 0 : index
    %6 = vector.load %arg6[%c0_7, %c0_8] : memref<1x32xf32, #tpu.memory_space<vmem>>, vector<1x32xf32>
    %cst = arith.constant dense<0.000000e+00> : vector<2x32xf32>
    %7 = tpu.matmul %1, %3, %cst {dimension_numbers = #tpu.dot_dimension_numbers<[1], [0], [0], [1], [0, 0, 1, 1], [], []>} : vector<2x32xbf16>, vector<32x32xbf16>, vector<2x32xf32> -> vector<2x32xf32>
    %8 = vector.broadcast %4 : vector<1x32xf32> to vector<2x32xf32>
    %9 = arith.addf %7, %8 : vector<2x32xf32>
    %cst_9 = arith.constant dense<0.000000e+00> : vector<2x32xf32>
    %10 = tpu.matmul %2, %5, %cst_9 {dimension_numbers = #tpu.dot_dimension_numbers<[1], [0], [0], [1], [0, 0, 1, 1], [], []>} : vector<2x32xbf16>, vector<32x32xbf16>, vector<2x32xf32> -> vector<2x32xf32>
    %11 = vector.broadcast %6 : vector<1x32xf32> to vector<2x32xf32>
    %12 = arith.addf %10, %11 : vector<2x32xf32>
    %cst_10 = arith.constant 0.000000e+00 : f32
    %13 = vector.broadcast %cst_10 : f32 to vector<2x32xf32>
    %14 = arith.maximumf %9, %13 : vector<2x32xf32>
    %15 = arith.truncf %14 : vector<2x32xf32> to vector<2x32xbf16>
    %cst_11 = arith.constant 0.000000e+00 : f32
    %16 = vector.broadcast %cst_11 : f32 to vector<2x32xf32>
    %17 = arith.maximumf %12, %16 : vector<2x32xf32>
    %18 = arith.truncf %17 : vector<2x32xf32> to vector<2x32xbf16>
    %c0_12 = arith.constant 0 : index
    %c0_13 = arith.constant 0 : index
    %19 = vector.load %arg7[%c0_12, %c0_13] : memref<32x128xbf16, #tpu.memory_space<vmem>>, vector<32x128xbf16>
    %c0_14 = arith.constant 0 : index
    %c0_15 = arith.constant 0 : index
    %20 = vector.load %arg8[%c0_14, %c0_15] : memref<1x128xf32, #tpu.memory_space<vmem>>, vector<1x128xf32>
    %c0_16 = arith.constant 0 : index
    %c0_17 = arith.constant 0 : index
    %21 = vector.load %arg9[%c0_16, %c0_17] : memref<32x128xbf16, #tpu.memory_space<vmem>>, vector<32x128xbf16>
    %c0_18 = arith.constant 0 : index
    %c0_19 = arith.constant 0 : index
    %22 = vector.load %arg10[%c0_18, %c0_19] : memref<1x128xf32, #tpu.memory_space<vmem>>, vector<1x128xf32>
    %cst_20 = arith.constant dense<0.000000e+00> : vector<2x128xf32>
    %23 = tpu.matmul %15, %19, %cst_20 {dimension_numbers = #tpu.dot_dimension_numbers<[1], [0], [0], [1], [0, 0, 1, 1], [], []>} : vector<2x32xbf16>, vector<32x128xbf16>, vector<2x128xf32> -> vector<2x128xf32>
    %24 = vector.broadcast %20 : vector<1x128xf32> to vector<2x128xf32>
    %25 = arith.addf %23, %24 : vector<2x128xf32>
    %cst_21 = arith.constant dense<0.000000e+00> : vector<2x128xf32>
    %26 = tpu.matmul %18, %21, %cst_21 {dimension_numbers = #tpu.dot_dimension_numbers<[1], [0], [0], [1], [0, 0, 1, 1], [], []>} : vector<2x32xbf16>, vector<32x128xbf16>, vector<2x128xf32> -> vector<2x128xf32>
    %27 = vector.broadcast %22 : vector<1x128xf32> to vector<2x128xf32>
    %28 = arith.addf %26, %27 : vector<2x128xf32>
    %c0_22 = arith.constant 0 : index
    %c0_23 = arith.constant 0 : index
    %29 = vector.load %arg2[%c0_22, %c0_23] : memref<2x256xf32, #tpu.memory_space<vmem>>, vector<2x256xf32>
    %30 = vector.extract_strided_slice %29 {offsets = [0, 0], sizes = [2, 128], strides = [1, 1]} : vector<2x256xf32> to vector<2x128xf32>
    %cst_24 = arith.constant dense<0.000000e+00> : vector<2x2xf32>
    %31 = tpu.matmul %25, %30, %cst_24 {dimension_numbers = #tpu.dot_dimension_numbers<[1], [1], [0], [0], [0, 0, 1, 0], [], []>} : vector<2x128xf32>, vector<2x128xf32>, vector<2x2xf32> -> vector<2x2xf32>
    %c0_25 = arith.constant 0 : index
    %c0_26 = arith.constant 0 : index
    %c0_27 = arith.constant 0 : index
    %32 = vector.load %arg11[%c0_25, %c0_26, %c0_27] : memref<2x2x2xf32, #tpu.memory_space<vmem>>, vector<1x2x2xf32>
    %33 = vector.shape_cast %32 : vector<1x2x2xf32> to vector<2x2xf32>
    %34 = vector.shape_cast %31 : vector<2x2xf32> to vector<1x2x2xf32>
    tpu.vector_store %arg11[%c0_25, %c0_26, %c0_27], %34 {strides = array<i32>} : memref<2x2x2xf32, #tpu.memory_space<vmem>>, vector<1x2x2xf32>,
    %35 = vector.extract_strided_slice %29 {offsets = [0, 128], sizes = [2, 128], strides = [1, 1]} : vector<2x256xf32> to vector<2x128xf32>
    %cst_28 = arith.constant dense<0.000000e+00> : vector<2x2xf32>
    %36 = tpu.matmul %28, %35, %cst_28 {dimension_numbers = #tpu.dot_dimension_numbers<[1], [1], [0], [0], [0, 0, 1, 0], [], []>} : vector<2x128xf32>, vector<2x128xf32>, vector<2x2xf32> -> vector<2x2xf32>
    %c1 = arith.constant 1 : index
    %c0_29 = arith.constant 0 : index
    %c0_30 = arith.constant 0 : index
    %37 = vector.load %arg11[%c1, %c0_29, %c0_30] : memref<2x2x2xf32, #tpu.memory_space<vmem>>, vector<1x2x2xf32>
    %38 = vector.shape_cast %37 : vector<1x2x2xf32> to vector<2x2xf32>
    %39 = vector.shape_cast %36 : vector<2x2xf32> to vector<1x2x2xf32>
    tpu.vector_store %arg11[%c1, %c0_29, %c0_30], %39 {strides = array<i32>} : memref<2x2x2xf32, #tpu.memory_space<vmem>>, vector<1x2x2xf32>,
    return
  }
  func.func @transform_0(%arg0: i32) -> (i32, i32) {
    %c0_i32 = arith.constant 0 : i32
    %c0_i32_0 = arith.constant 0 : i32
    return %arg0, %c0_i32 : i32, i32
  }
  func.func @transform_1(%arg0: i32) -> (i32, i32) {
    %c0_i32 = arith.constant 0 : i32
    %c0_i32_0 = arith.constant 0 : i32
    %c0_i32_1 = arith.constant 0 : i32
    return %c0_i32, %c0_i32_0 : i32, i32
  }
  func.func @transform_2(%arg0: i32) -> (i32, i32) {
    %c0_i32 = arith.constant 0 : i32
    %c0_i32_0 = arith.constant 0 : i32
    %c0_i32_1 = arith.constant 0 : i32
    return %c0_i32, %c0_i32_0 : i32, i32
  }
  func.func @transform_3(%arg0: i32) -> (i32, i32) {
    %c0_i32 = arith.constant 0 : i32
    %c0_i32_0 = arith.constant 0 : i32
    %c0_i32_1 = arith.constant 0 : i32
    return %c0_i32, %c0_i32_0 : i32, i32
  }
  func.func @transform_4(%arg0: i32) -> (i32, i32) {
    %c0_i32 = arith.constant 0 : i32
    %c0_i32_0 = arith.constant 0 : i32
    %c0_i32_1 = arith.constant 0 : i32
    return %c0_i32, %c0_i32_0 : i32, i32
  }
  func.func @transform_5(%arg0: i32) -> (i32, i32) {
    %c0_i32 = arith.constant 0 : i32
    %c0_i32_0 = arith.constant 0 : i32
    %c0_i32_1 = arith.constant 0 : i32
    return %c0_i32, %c0_i32_0 : i32, i32
  }
  func.func @transform_6(%arg0: i32) -> (i32, i32) {
    %c0_i32 = arith.constant 0 : i32
    %c0_i32_0 = arith.constant 0 : i32
    %c0_i32_1 = arith.constant 0 : i32
    return %c0_i32, %c0_i32_0 : i32, i32
  }
  func.func @transform_7(%arg0: i32) -> (i32, i32) {
    %c0_i32 = arith.constant 0 : i32
    %c0_i32_0 = arith.constant 0 : i32
    %c0_i32_1 = arith.constant 0 : i32
    return %c0_i32, %c0_i32_0 : i32, i32
  }
  func.func @transform_8(%arg0: i32) -> (i32, i32) {
    %c0_i32 = arith.constant 0 : i32
    %c0_i32_0 = arith.constant 0 : i32
    %c0_i32_1 = arith.constant 0 : i32
    return %c0_i32, %c0_i32_0 : i32, i32
  }
  func.func @transform_9(%arg0: i32) -> (i32, i32) {
    %c0_i32 = arith.constant 0 : i32
    %c0_i32_0 = arith.constant 0 : i32
    %c0_i32_1 = arith.constant 0 : i32
    return %c0_i32, %c0_i32_0 : i32, i32
  }
  func.func @transform_10(%arg0: i32) -> (i32, i32, i32) {
    %c0_i32 = arith.constant 0 : i32
    %c0_i32_0 = arith.constant 0 : i32
    %c0_i32_1 = arith.constant 0 : i32
    return %c0_i32, %arg0, %c0_i32_0 : i32, i32, i32
  }
}

</mosaic_0001>

<llo_original>
// kernel: contrastive_qf_forward.7
$region0: #{contrastive_qf_forward.7}
  #allocation0 [shape = 'u32[]', space=smem, size = 0x4, offset = 0x4, fixed_abs, tag = 'smem constant byte address 0x4 - core index']
  #allocation1 [shape = 'u32[144,128]{1,0:T(1,128)}', space=vmem, size = 0x12000, scoped, tag = 'internal scratch']
  %s0 = inlined_call_operand.vmem [shape: bf16[4,32,48], index: 0, kind: input, shape index: {}]
  %s1 = inlined_call_operand.vmem [shape: bf16[4,48,32], index: 1, kind: input, shape index: {}]
  %s2 = inlined_call_operand.vmem [shape: f32[1,32], index: 2, kind: input, shape index: {}]
  %s3 = inlined_call_operand.vmem [shape: bf16[4,20,32], index: 3, kind: output, shape index: {}]
  %s4 = sld [smem:[#allocation0]]
  $region22: #{contrastive_qf_forward.7} parent=0
    _
  %s6 = ssub.s32 1, %s4
  %s7 = scalar_select 0, %s6, %s4
  // Predicated region
  $region2: #{contrastive_qf_forward.7} parent=0 // pred_check
    _
  $region3: #{contrastive_qf_forward.7} parent=0 // pred_check_branch
    %9 = sbr.rel (0) target = $region5
  $region4: #{contrastive_qf_forward.7} parent=0 // pred_region
    _
  $region5: #{contrastive_qf_forward.7} parent=0 // pred_fallthru
    _
  // Predicated region
  $region6: #{contrastive_qf_forward.7} parent=0 // pred_check
    _
  $region7: #{contrastive_qf_forward.7} parent=0 // pred_check_branch
    %11 = sbr.rel (0) target = $region9
  $region8: #{contrastive_qf_forward.7} parent=0 // pred_region
    _
  $region9: #{contrastive_qf_forward.7} parent=0 // pred_fallthru
    _
  // Predicated region
  $region10: #{contrastive_qf_forward.7} parent=0 // pred_check
    _
  $region11: #{contrastive_qf_forward.7} parent=0 // pred_check_branch
    %13 = sbr.rel (0) target = $region13
  $region12: #{contrastive_qf_forward.7} parent=0 // pred_region
    _
  $region13: #{contrastive_qf_forward.7} parent=0 // pred_fallthru
    _
  %v15 = vld [vmem:[%s0] sm:$0xf]
  %v16 = vld [vmem:[%s0 + $0x4] sm:$0xf]
  %v17 = vld [vmem:[%s0 + $0x8] sm:$0x3]
  %v18 = vld [vmem:[%s1] sm:$0xf]
  %v19 = vld [vmem:[%s1 + $0x4] sm:$0xf]
  %v20 = vld [vmem:[%s1 + $0x8] sm:$0xf]
  %v21 = vld [vmem:[%s1 + $0xc] sm:$0xf]
  %v22 = vld [vmem:[%s1 + $0x10] sm:$0xf]
  %v23 = vld [vmem:[%s1 + $0x14] sm:$0xf]
  %v24 = vld [vmem:[%s0 + $0x8] sm:$0x7]
  %s25 = scalar_lea.vmem %s1, 24
  %v26 = vld [vmem:[%s25] sm:$0xf]
  %v27 = vld [vmem:[%s25 + $0x4] sm:$0xf]
  %v28 = vld [vmem:[%s25 + $0x8] sm:$0xf]
  %v29 = vld [vmem:[%s25 + $0xc] sm:$0xf]
  %v30 = vld [vmem:[%s25 + $0x10] sm:$0xf]
  %v31 = vld [vmem:[%s25 + $0x14] sm:$0xf]
  %v35 = vunpack.c.l.b16 %v15
  %v36 = vunpack.c.l.b16 %v16
  %v37 = vunpack.c.l.b16 %v24
  %v38 = vpack.c.b16 %v36, %v35
  %v39 = vpack.c.b16 %v37, %v37
  %vm40 = vsmask.f32 7424
  %v42 = vshrl.u32 %v38, 16
  %v44 = vshll.u32 %v38, 16
  %v46 = vrot.slane %v44, 1
  %v47 = vor.u32 %v42, %v46
  %v49 = vshll.u32 %v39, 16
  %v51 = vrot.slane %v49, 1
  %v52 = vsel %vm40, %v47, %v51
  %v53 = vshrl.u32 %v39, 16
  %v55 = vor.u32 %v53, %v51
  %v62 = vunpack.c.l.b16 %v26
  %v63 = vunpack.c.l.b16 %v27
  %v64 = vunpack.c.l.b16 %v28
  %v65 = vunpack.c.l.b16 %v29
  %v66 = vunpack.c.l.b16 %v30
  %v67 = vunpack.c.l.b16 %v31
  %v68 = vpack.c.b16 %v63, %v62
  %v69 = vpack.c.b16 %v65, %v64
  %v70 = vpack.c.b16 %v67, %v66
  %vm74 = vcmask 392192
  %v76 = vsel %vm74, %v52, 0
  %v79 = vsel %vm74, %v55, 0
  %81 = vmatprep.subr.bf16.mxu0 0
  %82 = vmatpush1.bf16.msra.mxu0 %v68
  %83 = vmatprep.subr.bf16.mxu0 0
  %84 = vmatpush1.bf16.msra.mxu0 %v69
  %85 = vmatprep.subr.bf16.mxu0 0
  %86 = vmatpush1.bf16.msra.mxu0 %v70
  %87 = vmatprep.subr.bf16.mxu0 0
  %88 = vmatpush1.bf16.msra.mxu0 0
  %89 = vmatprep.subr.bf16.mxu0 0
  %90 = vmatpush1.bf16.msra.mxu0 0
  %91 = vmatprep.subr.bf16.mxu0 0
  %92 = vmatpush1.bf16.msra.mxu0 0
  %93 = vmatprep.subr.bf16.mxu0 0
  %94 = vmatpush1.bf16.msra.mxu0 0
  %95 = vmatprep.subr.bf16.mxu0 0
  %96 = vmatpush1.bf16.msra.mxu0 0
  %97 = vmatprep.subr.bf16.mxu0 0
  %98 = vmatpush1.bf16.msra.mxu0 0
  %99 = vmatprep.subr.bf16.mxu0 0
  %100 = vmatpush1.bf16.msra.mxu0 0
  %101 = vmatprep.subr.bf16.mxu0 0
  %102 = vmatpush1.bf16.msra.mxu0 0
  %103 = vmatprep.subr.bf16.mxu0 0
  %104 = vmatpush1.bf16.msra.mxu0 0
  %105 = vmatprep.subr.bf16.mxu0 0
  %106 = vmatpush1.bf16.msra.mxu0 0
  %107 = vmatprep.subr.bf16.mxu0 0
  %108 = vmatpush1.bf16.msra.mxu0 0
  %109 = vmatprep.subr.bf16.mxu0 0
  %110 = vmatpush1.bf16.msra.mxu0 0
  %111 = vmatprep.subr.bf16.mxu0 0
  %112 = vmatpush1.bf16.msra.mxu0 0
  %113 = vmatprep.mubr.bf16.mxu0 0
  %114 = vmatmul.mubr.bf16.gmra.mrb[0].mxu0 %v76
  %v115 = vpop.f32.mrb[0].mxu0
  %v116 = vadd.f32 0.0, %v115
  %v117 = vpop.f32.mrb[0].mxu0
  %v118 = vpop.f32.mrb[0].mxu0
  %v119 = vadd.f32 0.0, %v118
  %v120 = vpop.f32.mrb[0].mxu0
  %121 = vmatprep.mubr.bf16.mxu0 0
  %122 = vmatmul.mubr.bf16.gmra.mrb[0].mxu0 %v79
  %v123 = vpop.f32.mrb[0].mxu0
  %v124 = vadd.f32 0.0, %v123
  %v125 = vpop.f32.mrb[0].mxu0
  %v126 = vpop.f32.mrb[0].mxu0
  %v127 = vpop.f32.mrb[0].mxu0
  %128 = vdwg.mxu0
  %v130 = vunpack.c.l.b16 %v17
  %v131 = vpack.c.b16 %v130, %v130
  %v138 = vunpack.c.l.b16 %v18
  %v139 = vunpack.c.l.b16 %v19
  %v140 = vunpack.c.l.b16 %v20
  %v141 = vunpack.c.l.b16 %v21
  %v142 = vunpack.c.l.b16 %v22
  %v143 = vunpack.c.l.b16 %v23
  %v144 = vpack.c.b16 %v139, %v138
  %v145 = vpack.c.b16 %v141, %v140
  %v146 = vpack.c.b16 %v143, %v142
  %v150 = vsel %vm74, %v38, 0
  %v153 = vsel %vm74, %v131, 0
  %155 = vmatprep.subr.bf16.mxu0 0
  %156 = vmatpush1.bf16.msra.mxu0 %v144
  %157 = vmatprep.subr.bf16.mxu0 0
  %158 = vmatpush1.bf16.msra.mxu0 %v145
  %159 = vmatprep.subr.bf16.mxu0 0
  %160 = vmatpush1.bf16.msra.mxu0 %v146
  %161 = vmatprep.subr.bf16.mxu0 0
  %162 = vmatpush1.bf16.msra.mxu0 0
  %163 = vmatprep.subr.bf16.mxu0 0
  %164 = vmatpush1.bf16.msra.mxu0 0
  %165 = vmatprep.subr.bf16.mxu0 0
  %166 = vmatpush1.bf16.msra.mxu0 0
  %167 = vmatprep.subr.bf16.mxu0 0
  %168 = vmatpush1.bf16.msra.mxu0 0
  %169 = vmatprep.subr.bf16.mxu0 0
  %170 = vmatpush1.bf16.msra.mxu0 0
  %171 = vmatprep.subr.bf16.mxu0 0
  %172 = vmatpush1.bf16.msra.mxu0 0
  %173 = vmatprep.subr.bf16.mxu0 0
  %174 = vmatpush1.bf16.msra.mxu0 0
  %175 = vmatprep.subr.bf16.mxu0 0
  %176 = vmatpush1.bf16.msra.mxu0 0
  %177 = vmatprep.subr.bf16.mxu0 0
  %178 = vmatpush1.bf16.msra.mxu0 0
  %179 = vmatprep.subr.bf16.mxu0 0
  %180 = vmatpush1.bf16.msra.mxu0 0
  %181 = vmatprep.subr.bf16.mxu0 0
  %182 = vmatpush1.bf16.msra.mxu0 0
  %183 = vmatprep.subr.bf16.mxu0 0
  %184 = vmatpush1.bf16.msra.mxu0 0
  %185 = vmatprep.subr.bf16.mxu0 0
  %186 = vmatpush1.bf16.msra.mxu0 0
  %187 = vmatprep.mubr.bf16.mxu0 0
  %188 = vmatmul.mubr.bf16.gmra.mrb[0].mxu0 %v150
  %v189 = vpop.f32.mrb[0].mxu0
  %v190 = vadd.f32 %v116, %v189
  %v191 = vpop.f32.mrb[0].mxu0
  %v192 = vpop.f32.mrb[0].mxu0
  %v193 = vadd.f32 %v119, %v192
  %v194 = vpop.f32.mrb[0].mxu0
  %195 = vmatprep.mubr.bf16.mxu0 0
  %196 = vmatmul.mubr.bf16.gmra.mrb[0].mxu0 %v153
  %v197 = vpop.f32.mrb[0].mxu0
  %v198 = vadd.f32 %v124, %v197
  %v199 = vpop.f32.mrb[0].mxu0
  %v200 = vpop.f32.mrb[0].mxu0
  %v201 = vpop.f32.mrb[0].mxu0
  %202 = vdwg.mxu0
  %v203 = vld [vmem:[%s0] sm:$0xc]
  %v204 = vld [vmem:[%s0 + $0x4] sm:$0xf]
  %v205 = vld [vmem:[%s0 + $0x8] sm:$0xf]
  %v206 = vld [vmem:[%s0 + $0xc] sm:$0x1]
  %s207 = scalar_lea.vmem %s1, 48
  %v208 = vld [vmem:[%s207] sm:$0xf]
  %v209 = vld [vmem:[%s207 + $0x4] sm:$0xf]
  %v210 = vld [vmem:[%s207 + $0x8] sm:$0xf]
  %v211 = vld [vmem:[%s207 + $0xc] sm:$0xf]
  %v212 = vld [vmem:[%s207 + $0x10] sm:$0xf]
  %v213 = vld [vmem:[%s207 + $0x14] sm:$0xf]
  %v218 = vunpack.c.l.b16 %v203
  %v219 = vunpack.c.l.b16 %v204
  %v220 = vunpack.c.l.b16 %v205
  %v221 = vunpack.c.l.b16 %v206
  %v222 = vpack.c.b16 %v219, %v218
  %v223 = vpack.c.b16 %v221, %v220
  %vm224 = vsmask.f32 5376
  %v226 = vshrl.u32 %v222, 16
  %v228 = vrot.slane %v226, 2
  %v229 = vshll.u32 %v222, 16
  %v231 = vrot.slane %v229, 3
  %v232 = vor.u32 %v228, %v231
  %v234 = vshrl.u32 %v223, 16
  %v236 = vrot.slane %v234, 2
  %v237 = vshll.u32 %v223, 16
  %v239 = vrot.slane %v237, 3
  %v240 = vor.u32 %v236, %v239
  %v241 = vsel %vm224, %v232, %v240
  %v248 = vunpack.c.l.b16 %v208
  %v249 = vunpack.c.l.b16 %v209
  %v250 = vunpack.c.l.b16 %v210
  %v251 = vunpack.c.l.b16 %v211
  %v252 = vunpack.c.l.b16 %v212
  %v253 = vunpack.c.l.b16 %v213
  %v254 = vpack.c.b16 %v249, %v248
  %v255 = vpack.c.b16 %v251, %v250
  %v256 = vpack.c.b16 %v253, %v252
  %v261 = vsel %vm74, %v241, 0
  %v264 = vsel %vm74, %v240, 0
  %266 = vmatprep.subr.bf16.mxu0 0
  %267 = vmatpush1.bf16.msra.mxu0 %v254
  %268 = vmatprep.subr.bf16.mxu0 0
  %269 = vmatpush1.bf16.msra.mxu0 %v255
  %270 = vmatprep.subr.bf16.mxu0 0
  %271 = vmatpush1.bf16.msra.mxu0 %v256
  %272 = vmatprep.subr.bf16.mxu0 0
  %273 = vmatpush1.bf16.msra.mxu0 0
  %274 = vmatprep.subr.bf16.mxu0 0
  %275 = vmatpush1.bf16.msra.mxu0 0
  %276 = vmatprep.subr.bf16.mxu0 0
  %277 = vmatpush1.bf16.msra.mxu0 0
  %278 = vmatprep.subr.bf16.mxu0 0
  %279 = vmatpush1.bf16.msra.mxu0 0
  %280 = vmatprep.subr.bf16.mxu0 0
  %281 = vmatpush1.bf16.msra.mxu0 0
  %282 = vmatprep.subr.bf16.mxu0 0
  %283 = vmatpush1.bf16.msra.mxu0 0
  %284 = vmatprep.subr.bf16.mxu0 0
  %285 = vmatpush1.bf16.msra.mxu0 0
  %286 = vmatprep.subr.bf16.mxu0 0
  %287 = vmatpush1.bf16.msra.mxu0 0
  %288 = vmatprep.subr.bf16.mxu0 0
  %289 = vmatpush1.bf16.msra.mxu0 0
  %290 = vmatprep.subr.bf16.mxu0 0
  %291 = vmatpush1.bf16.msra.mxu0 0
  %292 = vmatprep.subr.bf16.mxu0 0
  %293 = vmatpush1.bf16.msra.mxu0 0
  %294 = vmatprep.subr.bf16.mxu0 0
  %295 = vmatpush1.bf16.msra.mxu0 0
  %296 = vmatprep.subr.bf16.mxu0 0
  %297 = vmatpush1.bf16.msra.mxu0 0
  %298 = vmatprep.mubr.bf16.mxu0 0
  %299 = vmatmul.mubr.bf16.gmra.mrb[0].mxu0 %v261
  %v300 = vpop.f32.mrb[0].mxu0
  %v301 = vadd.f32 0.0, %v300
  %v302 = vpop.f32.mrb[0].mxu0
  %v303 = vpop.f32.mrb[0].mxu0
  %v304 = vadd.f32 0.0, %v303
  %v305 = vpop.f32.mrb[0].mxu0
  %306 = vmatprep.mubr.bf16.mxu0 0
  %307 = vmatmul.mubr.bf16.gmra.mrb[0].mxu0 %v264
  %v308 = vpop.f32.mrb[0].mxu0
  %v309 = vadd.f32 0.0, %v308
  %v310 = vpop.f32.mrb[0].mxu0
  %v311 = vpop.f32.mrb[0].mxu0
  %v312 = vpop.f32.mrb[0].mxu0
  %313 = vdwg.mxu0
  %v314 = vadd.f32 %v190, %v301
  %v315 = vadd.f32 %v193, %v304
  %v316 = vadd.f32 %v198, %v309
  %v317 = vld [vmem:[%s0] sm:$0x8]
  %s318 = scalar_lea.vmem %s1, 72
  %v319 = vld [vmem:[%s318] sm:$0xf]
  %v320 = vld [vmem:[%s318 + $0x4] sm:$0xf]
  %v321 = vld [vmem:[%s318 + $0x8] sm:$0xf]
  %v322 = vld [vmem:[%s318 + $0xc] sm:$0xf]
  %v323 = vld [vmem:[%s318 + $0x10] sm:$0xf]
  %v324 = vld [vmem:[%s318 + $0x14] sm:$0xf]
  %v326 = vunpack.c.l.b16 %v317
  %v327 = vpack.c.b16 %v219, %v326
  %vm328 = vcmask 1044480
  %v329 = vrot.slane %v327, 3
  %v330 = vrot.slane %v223, 3
  %v331 = vsel %vm328, %v329, %v330
  %v338 = vunpack.c.l.b16 %v319
  %v339 = vunpack.c.l.b16 %v320
  %v340 = vunpack.c.l.b16 %v321
  %v341 = vunpack.c.l.b16 %v322
  %v342 = vunpack.c.l.b16 %v323
  %v343 = vunpack.c.l.b16 %v324
  %v344 = vpack.c.b16 %v339, %v338
  %v345 = vpack.c.b16 %v341, %v340
  %v346 = vpack.c.b16 %v343, %v342
  %v351 = vsel %vm74, %v331, 0
  %v354 = vsel %vm74, %v330, 0
  %356 = vmatprep.subr.bf16.mxu0 0
  %357 = vmatpush1.bf16.msra.mxu0 %v344
  %358 = vmatprep.subr.bf16.mxu0 0
  %359 = vmatpush1.bf16.msra.mxu0 %v345
  %360 = vmatprep.subr.bf16.mxu0 0
  %361 = vmatpush1.bf16.msra.mxu0 %v346
  %362 = vmatprep.subr.bf16.mxu0 0
  %363 = vmatpush1.bf16.msra.mxu0 0
  %364 = vmatprep.subr.bf16.mxu0 0
  %365 = vmatpush1.bf16.msra.mxu0 0
  %366 = vmatprep.subr.bf16.mxu0 0
  %367 = vmatpush1.bf16.msra.mxu0 0
  %368 = vmatprep.subr.bf16.mxu0 0
  %369 = vmatpush1.bf16.msra.mxu0 0
  %370 = vmatprep.subr.bf16.mxu0 0
  %371 = vmatpush1.bf16.msra.mxu0 0
  %372 = vmatprep.subr.bf16.mxu0 0
  %373 = vmatpush1.bf16.msra.mxu0 0
  %374 = vmatprep.subr.bf16.mxu0 0
  %375 = vmatpush1.bf16.msra.mxu0 0
  %376 = vmatprep.subr.bf16.mxu0 0
  %377 = vmatpush1.bf16.msra.mxu0 0
  %378 = vmatprep.subr.bf16.mxu0 0
  %379 = vmatpush1.bf16.msra.mxu0 0
  %380 = vmatprep.subr.bf16.mxu0 0
  %381 = vmatpush1.bf16.msra.mxu0 0
  %382 = vmatprep.subr.bf16.mxu0 0
  %383 = vmatpush1.bf16.msra.mxu0 0
  %384 = vmatprep.subr.bf16.mxu0 0
  %385 = vmatpush1.bf16.msra.mxu0 0
  %386 = vmatprep.subr.bf16.mxu0 0
  %387 = vmatpush1.bf16.msra.mxu0 0
  %388 = vmatprep.mubr.bf16.mxu0 0
  %389 = vmatmul.mubr.bf16.gmra.mrb[0].mxu0 %v351
  %v390 = vpop.f32.mrb[0].mxu0
  %v391 = vadd.f32 0.0, %v390
  %v392 = vpop.f32.mrb[0].mxu0
  %v393 = vpop.f32.mrb[0].mxu0
  %v394 = vadd.f32 0.0, %v393
  %v395 = vpop.f32.mrb[0].mxu0
  %396 = vmatprep.mubr.bf16.mxu0 0
  %397 = vmatmul.mubr.bf16.gmra.mrb[0].mxu0 %v354
  %v398 = vpop.f32.mrb[0].mxu0
  %v399 = vadd.f32 0.0, %v398
  %v400 = vpop.f32.mrb[0].mxu0
  %v401 = vpop.f32.mrb[0].mxu0
  %v402 = vpop.f32.mrb[0].mxu0
  %403 = vdwg.mxu0
  %v404 = vadd.f32 %v314, %v391
  %v405 = vadd.f32 %v315, %v394
  %v406 = vadd.f32 %v316, %v399
  %v407 = vld [vmem:[%s2] sm:$0x1]
  %v409 = vlaneseq
  %v410 = vshrl.u32 %v409, 7
  %v411 = vsub.s32 0, %v410
  %v412 = vrot.slane %v407, %v411
  %v414 = vadd.f32 %v404, %v412
  %v415 = vadd.f32 %v405, %v412
  %v416 = vadd.f32 %v406, %v412
  %v417 = vmax.f32 %v414, 0.0
  %v418 = vmax.f32 %v415, 0.0
  %v419 = vmax.f32 %v416, 0.0
  %v420 = vpack.c.bf16 %v418, %v417
  %v421 = vpack.c.bf16 %v419, %v419
  %v424 = vunpack.c.l.b16 %v420
  %v425 = vunpack.c.h.b16 %v420
  %v426 = vunpack.c.l.b16 %v421
  %v427 = vpack.c.b16 %v424, %v424
  %v428 = vpack.c.b16 %v425, %v425
  %v429 = vpack.c.b16 %v426, %v426
  %vm433 = vcmask 257024
  %434 = vst.msk [vmem:[%s3] sm:$0xf] %vm433, %v427
  %435 = vst.msk [vmem:[%s3 + $0x4] sm:$0xf] %vm433, %v428
  %vm436 = vcmask 254976
  %437 = vst.msk [vmem:[%s3 + $0x8] sm:$0x3] %vm436, %v429
  %s438 = scalar_lea.vmem %s0, 16
  %v439 = vld [vmem:[%s438] sm:$0xf]
  %v440 = vld [vmem:[%s438 + $0x4] sm:$0xf]
  %v441 = vld [vmem:[%s438 + $0x8] sm:$0x3]
  %v442 = vld [vmem:[%s1] sm:$0xf]
  %v443 = vld [vmem:[%s1 + $0x4] sm:$0xf]
  %v444 = vld [vmem:[%s1 + $0x8] sm:$0xf]
  %v445 = vld [vmem:[%s1 + $0xc] sm:$0xf]
  %v446 = vld [vmem:[%s1 + $0x10] sm:$0xf]
  %v447 = vld [vmem:[%s1 + $0x14] sm:$0xf]
  %v448 = vld [vmem:[%s438 + $0x8] sm:$0x7]
  %v449 = vld [vmem:[%s25] sm:$0xf]
  %v450 = vld [vmem:[%s25 + $0x4] sm:$0xf]
  %v451 = vld [vmem:[%s25 + $0x8] sm:$0xf]
  %v452 = vld [vmem:[%s25 + $0xc] sm:$0xf]
  %v453 = vld [vmem:[%s25 + $0x10] sm:$0xf]
  %v454 = vld [vmem:[%s25 + $0x14] sm:$0xf]
  %v458 = vunpack.c.l.b16 %v439
  %v459 = vunpack.c.l.b16 %v440
  %v460 = vunpack.c.l.b16 %v448
  %v461 = vpack.c.b16 %v459, %v458
  %v462 = vpack.c.b16 %v460, %v460
  %v464 = vshrl.u32 %v461, 16
  %v466 = vshll.u32 %v461, 16
  %v468 = vrot.slane %v466, 1
  %v469 = vor.u32 %v464, %v468
  %v471 = vshll.u32 %v462, 16
  %v473 = vrot.slane %v471, 1
  %v474 = vsel %vm40, %v469, %v473
  %v475 = vshrl.u32 %v462, 16
  %v477 = vor.u32 %v475, %v473
  %v484 = vunpack.c.l.b16 %v449
  %v485 = vunpack.c.l.b16 %v450
  %v486 = vunpack.c.l.b16 %v451
  %v487 = vunpack.c.l.b16 %v452
  %v488 = vunpack.c.l.b16 %v453
  %v489 = vunpack.c.l.b16 %v454
  %v490 = vpack.c.b16 %v485, %v484
  %v491 = vpack.c.b16 %v487, %v486
  %v492 = vpack.c.b16 %v489, %v488
  %v497 = vsel %vm74, %v474, 0
  %v500 = vsel %vm74, %v477, 0
  %502 = vmatprep.subr.bf16.mxu0 0
  %503 = vmatpush1.bf16.msra.mxu0 %v490
  %504 = vmatprep.subr.bf16.mxu0 0
  %505 = vmatpush1.bf16.msra.mxu0 %v491
  %506 = vmatprep.subr.bf16.mxu0 0
  %507 = vmatpush1.bf16.msra.mxu0 %v492
  %508 = vmatprep.subr.bf16.mxu0 0
  %509 = vmatpush1.bf16.msra.mxu0 0
  %510 = vmatprep.subr.bf16.mxu0 0
  %511 = vmatpush1.bf16.msra.mxu0 0
  %512 = vmatprep.subr.bf16.mxu0 0
  %513 = vmatpush1.bf16.msra.mxu0 0
  %514 = vmatprep.subr.bf16.mxu0 0
  %515 = vmatpush1.bf16.msra.mxu0 0
  %516 = vmatprep.subr.bf16.mxu0 0
  %517 = vmatpush1.bf16.msra.mxu0 0
  %518 = vmatprep.subr.bf16.mxu0 0
  %519 = vmatpush1.bf16.msra.mxu0 0
  %520 = vmatprep.subr.bf16.mxu0 0
  %521 = vmatpush1.bf16.msra.mxu0 0
  %522 = vmatprep.subr.bf16.mxu0 0
  %523 = vmatpush1.bf16.msra.mxu0 0
  %524 = vmatprep.subr.bf16.mxu0 0
  %525 = vmatpush1.bf16.msra.mxu0 0
  %526 = vmatprep.subr.bf16.mxu0 0
  %527 = vmatpush1.bf16.msra.mxu0 0
  %528 = vmatprep.subr.bf16.mxu0 0
  %529 = vmatpush1.bf16.msra.mxu0 0
  %530 = vmatprep.subr.bf16.mxu0 0
  %531 = vmatpush1.bf16.msra.mxu0 0
  %532 = vmatprep.subr.bf16.mxu0 0
  %533 = vmatpush1.bf16.msra.mxu0 0
  %534 = vmatprep.mubr.bf16.mxu0 0
  %535 = vmatmul.mubr.bf16.gmra.mrb[0].mxu0 %v497
  %v536 = vpop.f32.mrb[0].mxu0
  %v537 = vadd.f32 0.0, %v536
  %v538 = vpop.f32.mrb[0].mxu0
  %v539 = vpop.f32.mrb[0].mxu0
  %v540 = vadd.f32 0.0, %v539
  %v541 = vpop.f32.mrb[0].mxu0
  %542 = vmatprep.mubr.bf16.mxu0 0
  %543 = vmatmul.mubr.bf16.gmra.mrb[0].mxu0 %v500
  %v544 = vpop.f32.mrb[0].mxu0
  %v545 = vadd.f32 0.0, %v544
  %v546 = vpop.f32.mrb[0].mxu0
  %v547 = vpop.f32.mrb[0].mxu0
  %v548 = vpop.f32.mrb[0].mxu0
  %549 = vdwg.mxu0
  %v551 = vunpack.c.l.b16 %v441
  %v552 = vpack.c.b16 %v551, %v551
  %v559 = vunpack.c.l.b16 %v442
  %v560 = vunpack.c.l.b16 %v443
  %v561 = vunpack.c.l.b16 %v444
  %v562 = vunpack.c.l.b16 %v445
  %v563 = vunpack.c.l.b16 %v446
  %v564 = vunpack.c.l.b16 %v447
  %v565 = vpack.c.b16 %v560, %v559
  %v566 = vpack.c.b16 %v562, %v561
  %v567 = vpack.c.b16 %v564, %v563
  %v571 = vsel %vm74, %v461, 0
  %v574 = vsel %vm74, %v552, 0
  %576 = vmatprep.subr.bf16.mxu0 0
  %577 = vmatpush1.bf16.msra.mxu0 %v565
  %578 = vmatprep.subr.bf16.mxu0 0
  %579 = vmatpush1.bf16.msra.mxu0 %v566
  %580 = vmatprep.subr.bf16.mxu0 0
  %581 = vmatpush1.bf16.msra.mxu0 %v567
  %582 = vmatprep.subr.bf16.mxu0 0
  %583 = vmatpush1.bf16.msra.mxu0 0
  %584 = vmatprep.subr.bf16.mxu0 0
  %585 = vmatpush1.bf16.msra.mxu0 0
  %586 = vmatprep.subr.bf16.mxu0 0
  %587 = vmatpush1.bf16.msra.mxu0 0
  %588 = vmatprep.subr.bf16.mxu0 0
  %589 = vmatpush1.bf16.msra.mxu0 0
  %590 = vmatprep.subr.bf16.mxu0 0
  %591 = vmatpush1.bf16.msra.mxu0 0
  %592 = vmatprep.subr.bf16.mxu0 0
  %593 = vmatpush1.bf16.msra.mxu0 0
  %594 = vmatprep.subr.bf16.mxu0 0
  %595 = vmatpush1.bf16.msra.mxu0 0
  %596 = vmatprep.subr.bf16.mxu0 0
  %597 = vmatpush1.bf16.msra.mxu0 0
  %598 = vmatprep.subr.bf16.mxu0 0
  %599 = vmatpush1.bf16.msra.mxu0 0
  %600 = vmatprep.subr.bf16.mxu0 0
  %601 = vmatpush1.bf16.msra.mxu0 0
  %602 = vmatprep.subr.bf16.mxu0 0
  %603 = vmatpush1.bf16.msra.mxu0 0
  %604 = vmatprep.subr.bf16.mxu0 0
  %605 = vmatpush1.bf16.msra.mxu0 0
  %606 = vmatprep.subr.bf16.mxu0 0
  %607 = vmatpush1.bf16.msra.mxu0 0
  %608 = vmatprep.mubr.bf16.mxu0 0
  %609 = vmatmul.mubr.bf16.gmra.mrb[0].mxu0 %v571
  %v610 = vpop.f32.mrb[0].mxu0
  %v611 = vadd.f32 %v537, %v610
  %v612 = vpop.f32.mrb[0].mxu0
  %v613 = vpop.f32.mrb[0].mxu0
  %v614 = vadd.f32 %v540, %v613
  %v615 = vpop.f32.mrb[0].mxu0
  %616 = vmatprep.mubr.bf16.mxu0 0
  %617 = vmatmul.mubr.bf16.gmra.mrb[0].mxu0 %v574
  %v618 = vpop.f32.mrb[0].mxu0
  %v619 = vadd.f32 %v545, %v618
  %v620 = vpop.f32.mrb[0].mxu0
  %v621 = vpop.f32.mrb[0].mxu0
  %v622 = vpop.f32.mrb[0].mxu0
  %623 = vdwg.mxu0
  %v624 = vld [vmem:[%s438] sm:$0xc]
  %v625 = vld [vmem:[%s438 + $0x4] sm:$0xf]
  %v626 = vld [vmem:[%s438 + $0x8] sm:$0xf]
  %v627 = vld [vmem:[%s438 + $0xc] sm:$0x1]
  %v628 = vld [vmem:[%s207] sm:$0xf]
  %v629 = vld [vmem:[%s207 + $0x4] sm:$0xf]
  %v630 = vld [vmem:[%s207 + $0x8] sm:$0xf]
  %v631 = vld [vmem:[%s207 + $0xc] sm:$0xf]
  %v632 = vld [vmem:[%s207 + $0x10] sm:$0xf]
  %v633 = vld [vmem:[%s207 + $0x14] sm:$0xf]
  %v638 = vunpack.c.l.b16 %v624
  %v639 = vunpack.c.l.b16 %v625
  %v640 = vunpack.c.l.b16 %v626
  %v641 = vunpack.c.l.b16 %v627
  %v642 = vpack.c.b16 %v639, %v638
  %v643 = vpack.c.b16 %v641, %v640
  %v645 = vshrl.u32 %v642, 16
  %v647 = vrot.slane %v645, 2
  %v648 = vshll.u32 %v642, 16
  %v650 = vrot.slane %v648, 3
  %v651 = vor.u32 %v647, %v650
  %v653 = vshrl.u32 %v643, 16
  %v655 = vrot.slane %v653, 2
  %v656 = vshll.u32 %v643, 16
  %v658 = vrot.slane %v656, 3
  %v659 = vor.u32 %v655, %v658
  %v660 = vsel %vm224, %v651, %v659
  %v667 = vunpack.c.l.b16 %v628
  %v668 = vunpack.c.l.b16 %v629
  %v669 = vunpack.c.l.b16 %v630
  %v670 = vunpack.c.l.b16 %v631
  %v671 = vunpack.c.l.b16 %v632
  %v672 = vunpack.c.l.b16 %v633
  %v673 = vpack.c.b16 %v668, %v667
  %v674 = vpack.c.b16 %v670, %v669
  %v675 = vpack.c.b16 %v672, %v671
  %v680 = vsel %vm74, %v660, 0
  %v683 = vsel %vm74, %v659, 0
  %685 = vmatprep.subr.bf16.mxu0 0
  %686 = vmatpush1.bf16.msra.mxu0 %v673
  %687 = vmatprep.subr.bf16.mxu0 0
  %688 = vmatpush1.bf16.msra.mxu0 %v674
  %689 = vmatprep.subr.bf16.mxu0 0
  %690 = vmatpush1.bf16.msra.mxu0 %v675
  %691 = vmatprep.subr.bf16.mxu0 0
  %692 = vmatpush1.bf16.msra.mxu0 0
  %693 = vmatprep.subr.bf16.mxu0 0
  %694 = vmatpush1.bf16.msra.mxu0 0
  %695 = vmatprep.subr.bf16.mxu0 0
  %696 = vmatpush1.bf16.msra.mxu0 0
  %697 = vmatprep.subr.bf16.mxu0 0
  %698 = vmatpush1.bf16.msra.mxu0 0
  %699 = vmatprep.subr.bf16.mxu0 0
  %700 = vmatpush1.bf16.msra.mxu0 0
  %701 = vmatprep.subr.bf16.mxu0 0
  %702 = vmatpush1.bf16.msra.mxu0 0
  %703 = vmatprep.subr.bf16.mxu0 0
  %704 = vmatpush1.bf16.msra.mxu0 0
  %705 = vmatprep.subr.bf16.mxu0 0
  %706 = vmatpush1.bf16.msra.mxu0 0
  %707 = vmatprep.subr.bf16.mxu0 0
  %708 = vmatpush1.bf16.msra.mxu0 0
  %709 = vmatprep.subr.bf16.mxu0 0
  %710 = vmatpush1.bf16.msra.mxu0 0
  %711 = vmatprep.subr.bf16.mxu0 0
  %712 = vmatpush1.bf16.msra.mxu0 0
  %713 = vmatprep.subr.bf16.mxu0 0
  %714 = vmatpush1.bf16.msra.mxu0 0
  %715 = vmatprep.subr.bf16.mxu0 0
  %716 = vmatpush1.bf16.msra.mxu0 0
  %717 = vmatprep.mubr.bf16.mxu0 0
  %718 = vmatmul.mubr.bf16.gmra.mrb[0].mxu0 %v680
  %v719 = vpop.f32.mrb[0].mxu0
  %v720 = vadd.f32 0.0, %v719
  %v721 = vpop.f32.mrb[0].mxu0
  %v722 = vpop.f32.mrb[0].mxu0
  %v723 = vadd.f32 0.0, %v722
  %v724 = vpop.f32.mrb[0].mxu0
  %725 = vmatprep.mubr.bf16.mxu0 0
  %726 = vmatmul.mubr.bf16.gmra.mrb[0].mxu0 %v683
  %v727 = vpop.f32.mrb[0].mxu0
  %v728 = vadd.f32 0.0, %v727
  %v729 = vpop.f32.mrb[0].mxu0
  %v730 = vpop.f32.mrb[0].mxu0
  %v731 = vpop.f32.mrb[0].mxu0
  %732 = vdwg.mxu0
  %v733 = vadd.f32 %v611, %v720
  %v734 = vadd.f32 %v614, %v723
  %v735 = vadd.f32 %v619, %v728
  %v736 = vld [vmem:[%s438] sm:$0x8]
  %v737 = vld [vmem:[%s318] sm:$0xf]
  %v738 = vld [vmem:[%s318 + $0x4] sm:$0xf]
  %v739 = vld [vmem:[%s318 + $0x8] sm:$0xf]
  %v740 = vld [vmem:[%s318 + $0xc] sm:$0xf]
  %v741 = vld [vmem:[%s318 + $0x10] sm:$0xf]
  %v742 = vld [vmem:[%s318 + $0x14] sm:$0xf]
  %v744 = vunpack.c.l.b16 %v736
  %v745 = vpack.c.b16 %v639, %v744
  %v746 = vrot.slane %v745, 3
  %v747 = vrot.slane %v643, 3
  %v748 = vsel %vm328, %v746, %v747
  %v755 = vunpack.c.l.b16 %v737
  %v756 = vunpack.c.l.b16 %v738
  %v757 = vunpack.c.l.b16 %v739
  %v758 = vunpack.c.l.b16 %v740
  %v759 = vunpack.c.l.b16 %v741
  %v760 = vunpack.c.l.b16 %v742
  %v761 = vpack.c.b16 %v756, %v755
  %v762 = vpack.c.b16 %v758, %v757
  %v763 = vpack.c.b16 %v760, %v759
  %v768 = vsel %vm74, %v748, 0
  %v771 = vsel %vm74, %v747, 0
  %773 = vmatprep.subr.bf16.mxu0 0
  %774 = vmatpush1.bf16.msra.mxu0 %v761
  %775 = vmatprep.subr.bf16.mxu0 0
  %776 = vmatpush1.bf16.msra.mxu0 %v762
  %777 = vmatprep.subr.bf16.mxu0 0
  %778 = vmatpush1.bf16.msra.mxu0 %v763
  %779 = vmatprep.subr.bf16.mxu0 0
  %780 = vmatpush1.bf16.msra.mxu0 0
  %781 = vmatprep.subr.bf16.mxu0 0
  %782 = vmatpush1.bf16.msra.mxu0 0
  %783 = vmatprep.subr.bf16.mxu0 0
  %784 = vmatpush1.bf16.msra.mxu0 0
  %785 = vmatprep.subr.bf16.mxu0 0
  %786 = vmatpush1.bf16.msra.mxu0 0
  %787 = vmatprep.subr.bf16.mxu0 0
  %788 = vmatpush1.bf16.msra.mxu0 0
  %789 = vmatprep.subr.bf16.mxu0 0
  %790 = vmatpush1.bf16.msra.mxu0 0
  %791 = vmatprep.subr.bf16.mxu0 0
  %792 = vmatpush1.bf16.msra.mxu0 0
  %793 = vmatprep.subr.bf16.mxu0 0
  %794 = vmatpush1.bf16.msra.mxu0 0
  %795 = vmatprep.subr.bf16.mxu0 0
  %796 = vmatpush1.bf16.msra.mxu0 0
  %797 = vmatprep.subr.bf16.mxu0 0
  %798 = vmatpush1.bf16.msra.mxu0 0
  %799 = vmatprep.subr.bf16.mxu0 0
  %800 = vmatpush1.bf16.msra.mxu0 0
  %801 = vmatprep.subr.bf16.mxu0 0
  %802 = vmatpush1.bf16.msra.mxu0 0
  %803 = vmatprep.subr.bf16.mxu0 0
  %804 = vmatpush1.bf16.msra.mxu0 0
  %805 = vmatprep.mubr.bf16.mxu0 0
  %806 = vmatmul.mubr.bf16.gmra.mrb[0].mxu0 %v768
  %v807 = vpop.f32.mrb[0].mxu0
  %v808 = vadd.f32 0.0, %v807
  %v809 = vpop.f32.mrb[0].mxu0
  %v810 = vpop.f32.mrb[0].mxu0
  %v811 = vadd.f32 0.0, %v810
  %v812 = vpop.f32.mrb[0].mxu0
  %813 = vmatprep.mubr.bf16.mxu0 0
  %814 = vmatmul.mubr.bf16.gmra.mrb[0].mxu0 %v771
  %v815 = vpop.f32.mrb[0].mxu0
  %v816 = vadd.f32 0.0, %v815
  %v817 = vpop.f32.mrb[0].mxu0
  %v818 = vpop.f32.mrb[0].mxu0
  %v819 = vpop.f32.mrb[0].mxu0
  %820 = vdwg.mxu0
  %v821 = vadd.f32 %v733, %v808
  %v822 = vadd.f32 %v734, %v811
  %v823 = vadd.f32 %v735, %v816
  %v824 = vld [vmem:[%s2] sm:$0x1]
  %v826 = vlaneseq
  %v827 = vshrl.u32 %v826, 7
  %v828 = vsub.s32 0, %v827
  %v829 = vrot.slane %v824, %v828
  %v831 = vadd.f32 %v821, %v829
  %v832 = vadd.f32 %v822, %v829
  %v833 = vadd.f32 %v823, %v829
  %v834 = vmax.f32 %v831, 0.0
  %v835 = vmax.f32 %v832, 0.0
  %v836 = vmax.f32 %v833, 0.0
  %v837 = vpack.c.bf16 %v835, %v834
  %v838 = vpack.c.bf16 %v836, %v836
  %v841 = vunpack.c.l.b16 %v837
  %v842 = vunpack.c.h.b16 %v837
  %v843 = vunpack.c.l.b16 %v838
  %v844 = vpack.c.b16 %v841, %v841
  %v845 = vpack.c.b16 %v842, %v842
  %v846 = vpack.c.b16 %v843, %v843
  %s850 = scalar_lea.vmem %s3, 12
  %851 = vst.msk [vmem:[%s850] sm:$0xf] %vm433, %v844
  %852 = vst.msk [vmem:[%s850 + $0x4] sm:$0xf] %vm433, %v845
  %853 = vst.msk [vmem:[%s850 + $0x8] sm:$0x3] %vm436, %v846
  %s854 = scalar_lea.vmem %s0, 32
  %v855 = vld [vmem:[%s854] sm:$0xf]
  %v856 = vld [vmem:[%s854 + $0x4] sm:$0xf]
  %v857 = vld [vmem:[%s854 + $0x8] sm:$0x3]
  %v858 = vld [vmem:[%s1] sm:$0xf]
  %v859 = vld [vmem:[%s1 + $0x4] sm:$0xf]
  %v860 = vld [vmem:[%s1 + $0x8] sm:$0xf]
  %v861 = vld [vmem:[%s1 + $0xc] sm:$0xf]
  %v862 = vld [vmem:[%s1 + $0x10] sm:$0xf]
  %v863 = vld [vmem:[%s1 + $0x14] sm:$0xf]
  %v864 = vld [vmem:[%s854 + $0x8] sm:$0x7]
  %v865 = vld [vmem:[%s25] sm:$0xf]
  %v866 = vld [vmem:[%s25 + $0x4] sm:$0xf]
  %v867 = vld [vmem:[%s25 + $0x8] sm:$0xf]
  %v868 = vld [vmem:[%s25 + $0xc] sm:$0xf]
  %v869 = vld [vmem:[%s25 + $0x10] sm:$0xf]
  %v870 = vld [vmem:[%s25 + $0x14] sm:$0xf]
  %v874 = vunpack.c.l.b16 %v855
  %v875 = vunpack.c.l.b16 %v856
  %v876 = vunpack.c.l.b16 %v864
  %v877 = vpack.c.b16 %v875, %v874
  %v878 = vpack.c.b16 %v876, %v876
  %v880 = vshrl.u32 %v877, 16
  %v882 = vshll.u32 %v877, 16
  %v884 = vrot.slane %v882, 1
  %v885 = vor.u32 %v880, %v884
  %v887 = vshll.u32 %v878, 16
  %v889 = vrot.slane %v887, 1
  %v890 = vsel %vm40, %v885, %v889
  %v891 = vshrl.u32 %v878, 16
  %v893 = vor.u32 %v891, %v889
  %v900 = vunpack.c.l.b16 %v865
  %v901 = vunpack.c.l.b16 %v866
  %v902 = vunpack.c.l.b16 %v867
  %v903 = vunpack.c.l.b16 %v868
  %v904 = vunpack.c.l.b16 %v869
  %v905 = vunpack.c.l.b16 %v870
  %v906 = vpack.c.b16 %v901, %v900
  %v907 = vpack.c.b16 %v903, %v902
  %v908 = vpack.c.b16 %v905, %v904
  %v913 = vsel %vm74, %v890, 0
  %v916 = vsel %vm74, %v893, 0
  %918 = vmatprep.subr.bf16.mxu0 0
  %919 = vmatpush1.bf16.msra.mxu0 %v906
  %920 = vmatprep.subr.bf16.mxu0 0
  %921 = vmatpush1.bf16.msra.mxu0 %v907
  %922 = vmatprep.subr.bf16.mxu0 0
  %923 = vmatpush1.bf16.msra.mxu0 %v908
  %924 = vmatprep.subr.bf16.mxu0 0
  %925 = vmatpush1.bf16.msra.mxu0 0
  %926 = vmatprep.subr.bf16.mxu0 0
  %927 = vmatpush1.bf16.msra.mxu0 0
  %928 = vmatprep.subr.bf16.mxu0 0
  %929 = vmatpush1.bf16.msra.mxu0 0
  %930 = vmatprep.subr.bf16.mxu0 0
  %931 = vmatpush1.bf16.msra.mxu0 0
  %932 = vmatprep.subr.bf16.mxu0 0
  %933 = vmatpush1.bf16.msra.mxu0 0
  %934 = vmatprep.subr.bf16.mxu0 0
  %935 = vmatpush1.bf16.msra.mxu0 0
  %936 = vmatprep.subr.bf16.mxu0 0
  %937 = vmatpush1.bf16.msra.mxu0 0
  %938 = vmatprep.subr.bf16.mxu0 0
  %939 = vmatpush1.bf16.msra.mxu0 0
  %940 = vmatprep.subr.bf16.mxu0 0
  %941 = vmatpush1.bf16.msra.mxu0 0
  %942 = vmatprep.subr.bf16.mxu0 0
  %943 = vmatpush1.bf16.msra.mxu0 0
  %944 = vmatprep.subr.bf16.mxu0 0
  %945 = vmatpush1.bf16.msra.mxu0 0
  %946 = vmatprep.subr.bf16.mxu0 0
  %947 = vmatpush1.bf16.msra.mxu0 0
  %948 = vmatprep.subr.bf16.mxu0 0
  %949 = vmatpush1.bf16.msra.mxu0 0
  %950 = vmatprep.mubr.bf16.mxu0 0
  %951 = vmatmul.mubr.bf16.gmra.mrb[0].mxu0 %v913
  %v952 = vpop.f32.mrb[0].mxu0
  %v953 = vadd.f32 0.0, %v952
  %v954 = vpop.f32.mrb[0].mxu0
  %v955 = vpop.f32.mrb[0].mxu0
  %v956 = vadd.f32 0.0, %v955
  %v957 = vpop.f32.mrb[0].mxu0
  %958 = vmatprep.mubr.bf16.mxu0 0
  %959 = vmatmul.mubr.bf16.gmra.mrb[0].mxu0 %v916
  %v960 = vpop.f32.mrb[0].mxu0
  %v961 = vadd.f32 0.0, %v960
  %v962 = vpop.f32.mrb[0].mxu0
  %v963 = vpop.f32.mrb[0].mxu0
  %v964 = vpop.f32.mrb[0].mxu0
  %965 = vdwg.mxu0
  %v967 = vunpack.c.l.b16 %v857
  %v968 = vpack.c.b16 %v967, %v967
  %v975 = vunpack.c.l.b16 %v858
  %v976 = vunpack.c.l.b16 %v859
  %v977 = vunpack.c.l.b16 %v860
  %v978 = vunpack.c.l.b16 %v861
  %v979 = vunpack.c.l.b16 %v862
  %v980 = vunpack.c.l.b16 %v863
  %v981 = vpack.c.b16 %v976, %v975
  %v982 = vpack.c.b16 %v978, %v977
  %v983 = vpack.c.b16 %v980, %v979
  %v987 = vsel %vm74, %v877, 0
  %v990 = vsel %vm74, %v968, 0
  %992 = vmatprep.subr.bf16.mxu0 0
  %993 = vmatpush1.bf16.msra.mxu0 %v981
  %994 = vmatprep.subr.bf16.mxu0 0
  %995 = vmatpush1.bf16.msra.mxu0 %v982
  %996 = vmatprep.subr.bf16.mxu0 0
  %997 = vmatpush1.bf16.msra.mxu0 %v983
  %998 = vmatprep.subr.bf16.mxu0 0
  %999 = vmatpush1.bf16.msra.mxu0 0
  %1000 = vmatprep.subr.bf16.mxu0 0
  %1001 = vmatpush1.bf16.msra.mxu0 0
  %1002 = vmatprep.subr.bf16.mxu0 0
  %1003 = vmatpush1.bf16.msra.mxu0 0
  %1004 = vmatprep.subr.bf16.mxu0 0
  %1005 = vmatpush1.bf16.msra.mxu0 0
  %1006 = vmatprep.subr.bf16.mxu0 0
  %1007 = vmatpush1.bf16.msra.mxu0 0
  %1008 = vmatprep.subr.bf16.mxu0 0
  %1009 = vmatpush1.bf16.msra.mxu0 0
  %1010 = vmatprep.subr.bf16.mxu0 0
  %1011 = vmatpush1.bf16.msra.mxu0 0
  %1012 = vmatprep.subr.bf16.mxu0 0
  %1013 = vmatpush1.bf16.msra.mxu0 0
  %1014 = vmatprep.subr.bf16.mxu0 0
  %1015 = vmatpush1.bf16.msra.mxu0 0
  %1016 = vmatprep.subr.bf16.mxu0 0
  %1017 = vmatpush1.bf16.msra.mxu0 0
  %1018 = vmatprep.subr.bf16.mxu0 0
  %1019 = vmatpush1.bf16.msra.mxu0 0
  %1020 = vmatprep.subr.bf16.mxu0 0
  %1021 = vmatpush1.bf16.msra.mxu0 0
  %1022 = vmatprep.subr.bf16.mxu0 0
  %1023 = vmatpush1.bf16.msra.mxu0 0
  %1024 = vmatprep.mubr.bf16.mxu0 0
  %1025 = vmatmul.mubr.bf16.gmra.mrb[0].mxu0 %v987
  %v1026 = vpop.f32.mrb[0].mxu0
  %v1027 = vadd.f32 %v953, %v1026
  %v1028 = vpop.f32.mrb[0].mxu0
  %v1029 = vpop.f32.mrb[0].mxu0
  %v1030 = vadd.f32 %v956, %v1029
  %v1031 = vpop.f32.mrb[0].mxu0
  %1032 = vmatprep.mubr.bf16.mxu0 0
  %1033 = vmatmul.mubr.bf16.gmra.mrb[0].mxu0 %v990
  %v1034 = vpop.f32.mrb[0].mxu0
  %v1035 = vadd.f32 %v961, %v1034
  %v1036 = vpop.f32.mrb[0].mxu0
  %v1037 = vpop.f32.mrb[0].mxu0
  %v1038 = vpop.f32.mrb[0].mxu0
  %1039 = vdwg.mxu0
  %v1040 = vld [vmem:[%s854] sm:$0xc]
  %v1041 = vld [vmem:[%s854 + $0x4] sm:$0xf]
  %v1042 = vld [vmem:[%s854 + $0x8] sm:$0xf]
  %v1043 = vld [vmem:[%s854 + $0xc] sm:$0x1]
  %v1044 = vld [vmem:[%s207] sm:$0xf]
  %v1045 = vld [vmem:[%s207 + $0x4] sm:$0xf]
  %v1046 = vld [vmem:[%s207 + $0x8] sm:$0xf]
  %v1047 = vld [vmem:[%s207 + $0xc] sm:$0xf]
  %v1048 = vld [vmem:[%s207 + $0x10] sm:$0xf]
  %v1049 = vld [vmem:[%s207 + $0x14] sm:$0xf]
  %v1054 = vunpack.c.l.b16 %v1040
  %v1055 = vunpack.c.l.b16 %v1041
  %v1056 = vunpack.c.l.b16 %v1042
  %v1057 = vunpack.c.l.b16 %v1043
  %v1058 = vpack.c.b16 %v1055, %v1054
  %v1059 = vpack.c.b16 %v1057, %v1056
  %v1061 = vshrl.u32 %v1058, 16
  %v1063 = vrot.slane %v1061, 2
  %v1064 = vshll.u32 %v1058, 16
  %v1066 = vrot.slane %v1064, 3
  %v1067 = vor.u32 %v1063, %v1066
  %v1069 = vshrl.u32 %v1059, 16
  %v1071 = vrot.slane %v1069, 2
  %v1072 = vshll.u32 %v1059, 16
  %v1074 = vrot.slane %v1072, 3
  %v1075 = vor.u32 %v1071, %v1074
  %v1076 = vsel %vm224, %v1067, %v1075
  %v1083 = vunpack.c.l.b16 %v1044
  %v1084 = vunpack.c.l.b16 %v1045
  %v1085 = vunpack.c.l.b16 %v1046
  %v1086 = vunpack.c.l.b16 %v1047
  %v1087 = vunpack.c.l.b16 %v1048
  %v1088 = vunpack.c.l.b16 %v1049
  %v1089 = vpack.c.b16 %v1084, %v1083
  %v1090 = vpack.c.b16 %v1086, %v1085
  %v1091 = vpack.c.b16 %v1088, %v1087
  %v1096 = vsel %vm74, %v1076, 0
  %v1099 = vsel %vm74, %v1075, 0
  %1101 = vmatprep.subr.bf16.mxu0 0
  %1102 = vmatpush1.bf16.msra.mxu0 %v1089
  %1103 = vmatprep.subr.bf16.mxu0 0
  %1104 = vmatpush1.bf16.msra.mxu0 %v1090
  %1105 = vmatprep.subr.bf16.mxu0 0
  %1106 = vmatpush1.bf16.msra.mxu0 %v1091
  %1107 = vmatprep.subr.bf16.mxu0 0
  %1108 = vmatpush1.bf16.msra.mxu0 0
  %1109 = vmatprep.subr.bf16.mxu0 0
  %1110 = vmatpush1.bf16.msra.mxu0 0
  %1111 = vmatprep.subr.bf16.mxu0 0
  %1112 = vmatpush1.bf16.msra.mxu0 0
  %1113 = vmatprep.subr.bf16.mxu0 0
  %1114 = vmatpush1.bf16.msra.mxu0 0
  %1115 = vmatprep.subr.bf16.mxu0 0
  %1116 = vmatpush1.bf16.msra.mxu0 0
  %1117 = vmatprep.subr.bf16.mxu0 0
  %1118 = vmatpush1.bf16.msra.mxu0 0
  %1119 = vmatprep.subr.bf16.mxu0 0
  %1120 = vmatpush1.bf16.msra.mxu0 0
  %1121 = vmatprep.subr.bf16.mxu0 0
  %1122 = vmatpush1.bf16.msra.mxu0 0
  %1123 = vmatprep.subr.bf16.mxu0 0
  %1124 = vmatpush1.bf16.msra.mxu0 0
  %1125 = vmatprep.subr.bf16.mxu0 0
  %1126 = vmatpush1.bf16.msra.mxu0 0
  %1127 = vmatprep.subr.bf16.mxu0 0
  %1128 = vmatpush1.bf16.msra.mxu0 0
  %1129 = vmatprep.subr.bf16.mxu0 0
  %1130 = vmatpush1.bf16.msra.mxu0 0
  %1131 = vmatprep.subr.bf16.mxu0 0
  %1132 = vmatpush1.bf16.msra.mxu0 0
  %1133 = vmatprep.mubr.bf16.mxu0 0
  %1134 = vmatmul.mubr.bf16.gmra.mrb[0].mxu0 %v1096
  %v1135 = vpop.f32.mrb[0].mxu0
  %v1136 = vadd.f32 0.0, %v1135
  %v1137 = vpop.f32.mrb[0].mxu0
  %v1138 = vpop.f32.mrb[0].mxu0
  %v1139 = vadd.f32 0.0, %v1138
  %v1140 = vpop.f32.mrb[0].mxu0
  %1141 = vmatprep.mubr.bf16.mxu0 0
  %1142 = vmatmul.mubr.bf16.gmra.mrb[0].mxu0 %v1099
  %v1143 = vpop.f32.mrb[0].mxu0
  %v1144 = vadd.f32 0.0, %v1143
  %v1145 = vpop.f32.mrb[0].mxu0
  %v1146 = vpop.f32.mrb[0].mxu0
  %v1147 = vpop.f32.mrb[0].mxu0
  %1148 = vdwg.mxu0
  %v1149 = vadd.f32 %v1027, %v1136
  %v1150 = vadd.f32 %v1030, %v1139
  %v1151 = vadd.f32 %v1035, %v1144
  %v1152 = vld [vmem:[%s854] sm:$0x8]
  %v1153 = vld [vmem:[%s318] sm:$0xf]
  %v1154 = vld [vmem:[%s318 + $0x4] sm:$0xf]
  %v1155 = vld [vmem:[%s318 + $0x8] sm:$0xf]
  %v1156 = vld [vmem:[%s318 + $0xc] sm:$0xf]
  %v1157 = vld [vmem:[%s318 + $0x10] sm:$0xf]
  %v1158 = vld [vmem:[%s318 + $0x14] sm:$0xf]
  %v1160 = vunpack.c.l.b16 %v1152
  %v1161 = vpack.c.b16 %v1055, %v1160
  %v1162 = vrot.slane %v1161, 3
  %v1163 = vrot.slane %v1059, 3
  %v1164 = vsel %vm328, %v1162, %v1163
  %v1171 = vunpack.c.l.b16 %v1153
  %v1172 = vunpack.c.l.b16 %v1154
  %v1173 = vunpack.c.l.b16 %v1155
  %v1174 = vunpack.c.l.b16 %v1156
  %v1175 = vunpack.c.l.b16 %v1157
  %v1176 = vunpack.c.l.b16 %v1158
  %v1177 = vpack.c.b16 %v1172, %v1171
  %v1178 = vpack.c.b16 %v1174, %v1173
  %v1179 = vpack.c.b16 %v1176, %v1175
  %v1184 = vsel %vm74, %v1164, 0
  %v1187 = vsel %vm74, %v1163, 0
  %1189 = vmatprep.subr.bf16.mxu0 0
  %1190 = vmatpush1.bf16.msra.mxu0 %v1177
  %1191 = vmatprep.subr.bf16.mxu0 0
  %1192 = vmatpush1.bf16.msra.mxu0 %v1178
  %1193 = vmatprep.subr.bf16.mxu0 0
  %1194 = vmatpush1.bf16.msra.mxu0 %v1179
  %1195 = vmatprep.subr.bf16.mxu0 0
  %1196 = vmatpush1.bf16.msra.mxu0 0
  %1197 = vmatprep.subr.bf16.mxu0 0
  %1198 = vmatpush1.bf16.msra.mxu0 0
  %1199 = vmatprep.subr.bf16.mxu0 0
  %1200 = vmatpush1.bf16.msra.mxu0 0
  %1201 = vmatprep.subr.bf16.mxu0 0
  %1202 = vmatpush1.bf16.msra.mxu0 0
  %1203 = vmatprep.subr.bf16.mxu0 0
  %1204 = vmatpush1.bf16.msra.mxu0 0
  %1205 = vmatprep.subr.bf16.mxu0 0
  %1206 = vmatpush1.bf16.msra.mxu0 0
  %1207 = vmatprep.subr.bf16.mxu0 0
  %1208 = vmatpush1.bf16.msra.mxu0 0
  %1209 = vmatprep.subr.bf16.mxu0 0
  %1210 = vmatpush1.bf16.msra.mxu0 0
  %1211 = vmatprep.subr.bf16.mxu0 0
  %1212 = vmatpush1.bf16.msra.mxu0 0
  %1213 = vmatprep.subr.bf16.mxu0 0
  %1214 = vmatpush1.bf16.msra.mxu0 0
  %1215 = vmatprep.subr.bf16.mxu0 0
  %1216 = vmatpush1.bf16.msra.mxu0 0
  %1217 = vmatprep.subr.bf16.mxu0 0
  %1218 = vmatpush1.bf16.msra.mxu0 0
  %1219 = vmatprep.subr.bf16.mxu0 0
  %1220 = vmatpush1.bf16.msra.mxu0 0
  %1221 = vmatprep.mubr.bf16.mxu0 0
  %1222 = vmatmul.mubr.bf16.gmra.mrb[0].mxu0 %v1184
  %v1223 = vpop.f32.mrb[0].mxu0
  %v1224 = vadd.f32 0.0, %v1223
  %v1225 = vpop.f32.mrb[0].mxu0
  %v1226 = vpop.f32.mrb[0].mxu0
  %v1227 = vadd.f32 0.0, %v1226
  %v1228 = vpop.f32.mrb[0].mxu0
  %1229 = vmatprep.mubr.bf16.mxu0 0
  %1230 = vmatmul.mubr.bf16.gmra.mrb[0].mxu0 %v1187
  %v1231 = vpop.f32.mrb[0].mxu0
  %v1232 = vadd.f32 0.0, %v1231
  %v1233 = vpop.f32.mrb[0].mxu0
  %v1234 = vpop.f32.mrb[0].mxu0
  %v1235 = vpop.f32.mrb[0].mxu0
  %1236 = vdwg.mxu0
  %v1237 = vadd.f32 %v1149, %v1224
  %v1238 = vadd.f32 %v1150, %v1227
  %v1239 = vadd.f32 %v1151, %v1232
  %v1240 = vld [vmem:[%s2] sm:$0x1]
  %v1242 = vlaneseq
  %v1243 = vshrl.u32 %v1242, 7
  %v1244 = vsub.s32 0, %v1243
  %v1245 = vrot.slane %v1240, %v1244
  %v1247 = vadd.f32 %v1237, %v1245
  %v1248 = vadd.f32 %v1238, %v1245
  %v1249 = vadd.f32 %v1239, %v1245
  %v1250 = vmax.f32 %v1247, 0.0
  %v1251 = vmax.f32 %v1248, 0.0
  %v1252 = vmax.f32 %v1249, 0.0
  %v1253 = vpack.c.bf16 %v1251, %v1250
  %v1254 = vpack.c.bf16 %v1252, %v1252
  %v1257 = vunpack.c.l.b16 %v1253
  %v1258 = vunpack.c.h.b16 %v1253
  %v1259 = vunpack.c.l.b16 %v1254
  %v1260 = vpack.c.b16 %v1257, %v1257
  %v1261 = vpack.c.b16 %v1258, %v1258
  %v1262 = vpack.c.b16 %v1259, %v1259
  %s1266 = scalar_lea.vmem %s3, 24
  %1267 = vst.msk [vmem:[%s1266] sm:$0xf] %vm433, %v1260
  %1268 = vst.msk [vmem:[%s1266 + $0x4] sm:$0xf] %vm433, %v1261
  %1269 = vst.msk [vmem:[%s1266 + $0x8] sm:$0x3] %vm436, %v1262
  %s1270 = scalar_lea.vmem %s0, 48
  %v1271 = vld [vmem:[%s1270] sm:$0xf]
  %v1272 = vld [vmem:[%s1270 + $0x4] sm:$0xf]
  %v1273 = vld [vmem:[%s1270 + $0x8] sm:$0x3]
  %v1274 = vld [vmem:[%s1] sm:$0xf]
  %v1275 = vld [vmem:[%s1 + $0x4] sm:$0xf]
  %v1276 = vld [vmem:[%s1 + $0x8] sm:$0xf]
  %v1277 = vld [vmem:[%s1 + $0xc] sm:$0xf]
  %v1278 = vld [vmem:[%s1 + $0x10] sm:$0xf]
  %v1279 = vld [vmem:[%s1 + $0x14] sm:$0xf]
  %v1280 = vld [vmem:[%s1270 + $0x8] sm:$0x7]
  %v1281 = vld [vmem:[%s25] sm:$0xf]
  %v1282 = vld [vmem:[%s25 + $0x4] sm:$0xf]
  %v1283 = vld [vmem:[%s25 + $0x8] sm:$0xf]
  %v1284 = vld [vmem:[%s25 + $0xc] sm:$0xf]
  %v1285 = vld [vmem:[%s25 + $0x10] sm:$0xf]
  %v1286 = vld [vmem:[%s25 + $0x14] sm:$0xf]
  %v1290 = vunpack.c.l.b16 %v1271
  %v1291 = vunpack.c.l.b16 %v1272
  %v1292 = vunpack.c.l.b16 %v1280
  %v1293 = vpack.c.b16 %v1291, %v1290
  %v1294 = vpack.c.b16 %v1292, %v1292
  %v1296 = vshrl.u32 %v1293, 16
  %v1298 = vshll.u32 %v1293, 16
  %v1300 = vrot.slane %v1298, 1
  %v1301 = vor.u32 %v1296, %v1300
  %v1303 = vshll.u32 %v1294, 16
  %v1305 = vrot.slane %v1303, 1
  %v1306 = vsel %vm40, %v1301, %v1305
  %v1307 = vshrl.u32 %v1294, 16
  %v1309 = vor.u32 %v1307, %v1305
  %v1316 = vunpack.c.l.b16 %v1281
  %v1317 = vunpack.c.l.b16 %v1282
  %v1318 = vunpack.c.l.b16 %v1283
  %v1319 = vunpack.c.l.b16 %v1284
  %v1320 = vunpack.c.l.b16 %v1285
  %v1321 = vunpack.c.l.b16 %v1286
  %v1322 = vpack.c.b16 %v1317, %v1316
  %v1323 = vpack.c.b16 %v1319, %v1318
  %v1324 = vpack.c.b16 %v1321, %v1320
  %v1329 = vsel %vm74, %v1306, 0
  %v1332 = vsel %vm74, %v1309, 0
  %1334 = vmatprep.subr.bf16.mxu0 0
  %1335 = vmatpush1.bf16.msra.mxu0 %v1322
  %1336 = vmatprep.subr.bf16.mxu0 0
  %1337 = vmatpush1.bf16.msra.mxu0 %v1323
  %1338 = vmatprep.subr.bf16.mxu0 0
  %1339 = vmatpush1.bf16.msra.mxu0 %v1324
  %1340 = vmatprep.subr.bf16.mxu0 0
  %1341 = vmatpush1.bf16.msra.mxu0 0
  %1342 = vmatprep.subr.bf16.mxu0 0
  %1343 = vmatpush1.bf16.msra.mxu0 0
  %1344 = vmatprep.subr.bf16.mxu0 0
  %1345 = vmatpush1.bf16.msra.mxu0 0
  %1346 = vmatprep.subr.bf16.mxu0 0
  %1347 = vmatpush1.bf16.msra.mxu0 0
  %1348 = vmatprep.subr.bf16.mxu0 0
  %1349 = vmatpush1.bf16.msra.mxu0 0
  %1350 = vmatprep.subr.bf16.mxu0 0
  %1351 = vmatpush1.bf16.msra.mxu0 0
  %1352 = vmatprep.subr.bf16.mxu0 0
  %1353 = vmatpush1.bf16.msra.mxu0 0
  %1354 = vmatprep.subr.bf16.mxu0 0
  %1355 = vmatpush1.bf16.msra.mxu0 0
  %1356 = vmatprep.subr.bf16.mxu0 0
  %1357 = vmatpush1.bf16.msra.mxu0 0
  %1358 = vmatprep.subr.bf16.mxu0 0
  %1359 = vmatpush1.bf16.msra.mxu0 0
  %1360 = vmatprep.subr.bf16.mxu0 0
  %1361 = vmatpush1.bf16.msra.mxu0 0
  %1362 = vmatprep.subr.bf16.mxu0 0
  %1363 = vmatpush1.bf16.msra.mxu0 0
  %1364 = vmatprep.subr.bf16.mxu0 0
  %1365 = vmatpush1.bf16.msra.mxu0 0
  %1366 = vmatprep.mubr.bf16.mxu0 0
  %1367 = vmatmul.mubr.bf16.gmra.mrb[0].mxu0 %v1329
  %v1368 = vpop.f32.mrb[0].mxu0
  %v1369 = vadd.f32 0.0, %v1368
  %v1370 = vpop.f32.mrb[0].mxu0
  %v1371 = vpop.f32.mrb[0].mxu0
  %v1372 = vadd.f32 0.0, %v1371
  %v1373 = vpop.f32.mrb[0].mxu0
  %1374 = vmatprep.mubr.bf16.mxu0 0
  %1375 = vmatmul.mubr.bf16.gmra.mrb[0].mxu0 %v1332
  %v1376 = vpop.f32.mrb[0].mxu0
  %v1377 = vadd.f32 0.0, %v1376
  %v1378 = vpop.f32.mrb[0].mxu0
  %v1379 = vpop.f32.mrb[0].mxu0
  %v1380 = vpop.f32.mrb[0].mxu0
  %1381 = vdwg.mxu0
  %v1383 = vunpack.c.l.b16 %v1273
  %v1384 = vpack.c.b16 %v1383, %v1383
  %v1391 = vunpack.c.l.b16 %v1274
  %v1392 = vunpack.c.l.b16 %v1275
  %v1393 = vunpack.c.l.b16 %v1276
  %v1394 = vunpack.c.l.b16 %v1277
  %v1395 = vunpack.c.l.b16 %v1278
  %v1396 = vunpack.c.l.b16 %v1279
  %v1397 = vpack.c.b16 %v1392, %v1391
  %v1398 = vpack.c.b16 %v1394, %v1393
  %v1399 = vpack.c.b16 %v1396, %v1395
  %v1403 = vsel %vm74, %v1293, 0
  %v1406 = vsel %vm74, %v1384, 0
  %1408 = vmatprep.subr.bf16.mxu0 0
  %1409 = vmatpush1.bf16.msra.mxu0 %v1397
  %1410 = vmatprep.subr.bf16.mxu0 0
  %1411 = vmatpush1.bf16.msra.mxu0 %v1398
  %1412 = vmatprep.subr.bf16.mxu0 0
  %1413 = vmatpush1.bf16.msra.mxu0 %v1399
  %1414 = vmatprep.subr.bf16.mxu0 0
  %1415 = vmatpush1.bf16.msra.mxu0 0
  %1416 = vmatprep.subr.bf16.mxu0 0
  %1417 = vmatpush1.bf16.msra.mxu0 0
  %1418 = vmatprep.subr.bf16.mxu0 0
  %1419 = vmatpush1.bf16.msra.mxu0 0
  %1420 = vmatprep.subr.bf16.mxu0 0
  %1421 = vmatpush1.bf16.msra.mxu0 0
  %1422 = vmatprep.subr.bf16.mxu0 0
  %1423 = vmatpush1.bf16.msra.mxu0 0
  %1424 = vmatprep.subr.bf16.mxu0 0
  %1425 = vmatpush1.bf16.msra.mxu0 0
  %1426 = vmatprep.subr.bf16.mxu0 0
  %1427 = vmatpush1.bf16.msra.mxu0 0
  %1428 = vmatprep.subr.bf16.mxu0 0
  %1429 = vmatpush1.bf16.msra.mxu0 0
  %1430 = vmatprep.subr.bf16.mxu0 0
  %1431 = vmatpush1.bf16.msra.mxu0 0
  %1432 = vmatprep.subr.bf16.mxu0 0
  %1433 = vmatpush1.bf16.msra.mxu0 0
  %1434 = vmatprep.subr.bf16.mxu0 0
  %1435 = vmatpush1.bf16.msra.mxu0 0
  %1436 = vmatprep.subr.bf16.mxu0 0
  %1437 = vmatpush1.bf16.msra.mxu0 0
  %1438 = vmatprep.subr.bf16.mxu0 0
  %1439 = vmatpush1.bf16.msra.mxu0 0
  %1440 = vmatprep.mubr.bf16.mxu0 0
  %1441 = vmatmul.mubr.bf16.gmra.mrb[0].mxu0 %v1403
  %v1442 = vpop.f32.mrb[0].mxu0
  %v1443 = vadd.f32 %v1369, %v1442
  %v1444 = vpop.f32.mrb[0].mxu0
  %v1445 = vpop.f32.mrb[0].mxu0
  %v1446 = vadd.f32 %v1372, %v1445
  %v1447 = vpop.f32.mrb[0].mxu0
  %1448 = vmatprep.mubr.bf16.mxu0 0
  %1449 = vmatmul.mubr.bf16.gmra.mrb[0].mxu0 %v1406
  %v1450 = vpop.f32.mrb[0].mxu0
  %v1451 = vadd.f32 %v1377, %v1450
  %v1452 = vpop.f32.mrb[0].mxu0
  %v1453 = vpop.f32.mrb[0].mxu0
  %v1454 = vpop.f32.mrb[0].mxu0
  %1455 = vdwg.mxu0
  %v1456 = vld [vmem:[%s1270] sm:$0xc]
  %v1457 = vld [vmem:[%s1270 + $0x4] sm:$0xf]
  %v1458 = vld [vmem:[%s1270 + $0x8] sm:$0xf]
  %v1459 = vld [vmem:[%s1270 + $0xc] sm:$0x1]
  %v1460 = vld [vmem:[%s207] sm:$0xf]
  %v1461 = vld [vmem:[%s207 + $0x4] sm:$0xf]
  %v1462 = vld [vmem:[%s207 + $0x8] sm:$0xf]
  %v1463 = vld [vmem:[%s207 + $0xc] sm:$0xf]
  %v1464 = vld [vmem:[%s207 + $0x10] sm:$0xf]
  %v1465 = vld [vmem:[%s207 + $0x14] sm:$0xf]
  %v1470 = vunpack.c.l.b16 %v1456
  %v1471 = vunpack.c.l.b16 %v1457
  %v1472 = vunpack.c.l.b16 %v1458
  %v1473 = vunpack.c.l.b16 %v1459
  %v1474 = vpack.c.b16 %v1471, %v1470
  %v1475 = vpack.c.b16 %v1473, %v1472
  %v1477 = vshrl.u32 %v1474, 16
  %v1479 = vrot.slane %v1477, 2
  %v1480 = vshll.u32 %v1474, 16
  %v1482 = vrot.slane %v1480, 3
  %v1483 = vor.u32 %v1479, %v1482
  %v1485 = vshrl.u32 %v1475, 16
  %v1487 = vrot.slane %v1485, 2
  %v1488 = vshll.u32 %v1475, 16
  %v1490 = vrot.slane %v1488, 3
  %v1491 = vor.u32 %v1487, %v1490
  %v1492 = vsel %vm224, %v1483, %v1491
  %v1499 = vunpack.c.l.b16 %v1460
  %v1500 = vunpack.c.l.b16 %v1461
  %v1501 = vunpack.c.l.b16 %v1462
  %v1502 = vunpack.c.l.b16 %v1463
  %v1503 = vunpack.c.l.b16 %v1464
  %v1504 = vunpack.c.l.b16 %v1465
  %v1505 = vpack.c.b16 %v1500, %v1499
  %v1506 = vpack.c.b16 %v1502, %v1501
  %v1507 = vpack.c.b16 %v1504, %v1503
  %v1512 = vsel %vm74, %v1492, 0
  %v1515 = vsel %vm74, %v1491, 0
  %1517 = vmatprep.subr.bf16.mxu0 0
  %1518 = vmatpush1.bf16.msra.mxu0 %v1505
  %1519 = vmatprep.subr.bf16.mxu0 0
  %1520 = vmatpush1.bf16.msra.mxu0 %v1506
  %1521 = vmatprep.subr.bf16.mxu0 0
  %1522 = vmatpush1.bf16.msra.mxu0 %v1507
  %1523 = vmatprep.subr.bf16.mxu0 0
  %1524 = vmatpush1.bf16.msra.mxu0 0
  %1525 = vmatprep.subr.bf16.mxu0 0
  %1526 = vmatpush1.bf16.msra.mxu0 0
  %1527 = vmatprep.subr.bf16.mxu0 0
  %1528 = vmatpush1.bf16.msra.mxu0 0
  %1529 = vmatprep.subr.bf16.mxu0 0
  %1530 = vmatpush1.bf16.msra.mxu0 0
  %1531 = vmatprep.subr.bf16.mxu0 0
  %1532 = vmatpush1.bf16.msra.mxu0 0
  %1533 = vmatprep.subr.bf16.mxu0 0
  %1534 = vmatpush1.bf16.msra.mxu0 0
  %1535 = vmatprep.subr.bf16.mxu0 0
  %1536 = vmatpush1.bf16.msra.mxu0 0
  %1537 = vmatprep.subr.bf16.mxu0 0
  %1538 = vmatpush1.bf16.msra.mxu0 0
  %1539 = vmatprep.subr.bf16.mxu0 0
  %1540 = vmatpush1.bf16.msra.mxu0 0
  %1541 = vmatprep.subr.bf16.mxu0 0
  %1542 = vmatpush1.bf16.msra.mxu0 0
  %1543 = vmatprep.subr.bf16.mxu0 0
  %1544 = vmatpush1.bf16.msra.mxu0 0
  %1545 = vmatprep.subr.bf16.mxu0 0
  %1546 = vmatpush1.bf16.msra.mxu0 0
  %1547 = vmatprep.subr.bf16.mxu0 0
  %1548 = vmatpush1.bf16.msra.mxu0 0
  %1549 = vmatprep.mubr.bf16.mxu0 0
  %1550 = vmatmul.mubr.bf16.gmra.mrb[0].mxu0 %v1512
  %v1551 = vpop.f32.mrb[0].mxu0
  %v1552 = vadd.f32 0.0, %v1551
  %v1553 = vpop.f32.mrb[0].mxu0
  %v1554 = vpop.f32.mrb[0].mxu0
  %v1555 = vadd.f32 0.0, %v1554
  %v1556 = vpop.f32.mrb[0].mxu0
  %1557 = vmatprep.mubr.bf16.mxu0 0
  %1558 = vmatmul.mubr.bf16.gmra.mrb[0].mxu0 %v1515
  %v1559 = vpop.f32.mrb[0].mxu0
  %v1560 = vadd.f32 0.0, %v1559
  %v1561 = vpop.f32.mrb[0].mxu0
  %v1562 = vpop.f32.mrb[0].mxu0
  %v1563 = vpop.f32.mrb[0].mxu0
  %1564 = vdwg.mxu0
  %v1565 = vadd.f32 %v1443, %v1552
  %v1566 = vadd.f32 %v1446, %v1555
  %v1567 = vadd.f32 %v1451, %v1560
  %v1568 = vld [vmem:[%s1270] sm:$0x8]
  %v1569 = vld [vmem:[%s318] sm:$0xf]
  %v1570 = vld [vmem:[%s318 + $0x4] sm:$0xf]
  %v1571 = vld [vmem:[%s318 + $0x8] sm:$0xf]
  %v1572 = vld [vmem:[%s318 + $0xc] sm:$0xf]
  %v1573 = vld [vmem:[%s318 + $0x10] sm:$0xf]
  %v1574 = vld [vmem:[%s318 + $0x14] sm:$0xf]
  %v1576 = vunpack.c.l.b16 %v1568
  %v1577 = vpack.c.b16 %v1471, %v1576
  %v1578 = vrot.slane %v1577, 3
  %v1579 = vrot.slane %v1475, 3
  %v1580 = vsel %vm328, %v1578, %v1579
  %v1587 = vunpack.c.l.b16 %v1569
  %v1588 = vunpack.c.l.b16 %v1570
  %v1589 = vunpack.c.l.b16 %v1571
  %v1590 = vunpack.c.l.b16 %v1572
  %v1591 = vunpack.c.l.b16 %v1573
  %v1592 = vunpack.c.l.b16 %v1574
  %v1593 = vpack.c.b16 %v1588, %v1587
  %v1594 = vpack.c.b16 %v1590, %v1589
  %v1595 = vpack.c.b16 %v1592, %v1591
  %v1600 = vsel %vm74, %v1580, 0
  %v1603 = vsel %vm74, %v1579, 0
  %1605 = vmatprep.subr.bf16.mxu0 0
  %1606 = vmatpush1.bf16.msra.mxu0 %v1593
  %1607 = vmatprep.subr.bf16.mxu0 0
  %1608 = vmatpush1.bf16.msra.mxu0 %v1594
  %1609 = vmatprep.subr.bf16.mxu0 0
  %1610 = vmatpush1.bf16.msra.mxu0 %v1595
  %1611 = vmatprep.subr.bf16.mxu0 0
  %1612 = vmatpush1.bf16.msra.mxu0 0
  %1613 = vmatprep.subr.bf16.mxu0 0
  %1614 = vmatpush1.bf16.msra.mxu0 0
  %1615 = vmatprep.subr.bf16.mxu0 0
  %1616 = vmatpush1.bf16.msra.mxu0 0
  %1617 = vmatprep.subr.bf16.mxu0 0
  %1618 = vmatpush1.bf16.msra.mxu0 0
  %1619 = vmatprep.subr.bf16.mxu0 0
  %1620 = vmatpush1.bf16.msra.mxu0 0
  %1621 = vmatprep.subr.bf16.mxu0 0
  %1622 = vmatpush1.bf16.msra.mxu0 0
  %1623 = vmatprep.subr.bf16.mxu0 0
  %1624 = vmatpush1.bf16.msra.mxu0 0
  %1625 = vmatprep.subr.bf16.mxu0 0
  %1626 = vmatpush1.bf16.msra.mxu0 0
  %1627 = vmatprep.subr.bf16.mxu0 0
  %1628 = vmatpush1.bf16.msra.mxu0 0
  %1629 = vmatprep.subr.bf16.mxu0 0
  %1630 = vmatpush1.bf16.msra.mxu0 0
  %1631 = vmatprep.subr.bf16.mxu0 0
  %1632 = vmatpush1.bf16.msra.mxu0 0
  %1633 = vmatprep.subr.bf16.mxu0 0
  %1634 = vmatpush1.bf16.msra.mxu0 0
  %1635 = vmatprep.subr.bf16.mxu0 0
  %1636 = vmatpush1.bf16.msra.mxu0 0
  %1637 = vmatprep.mubr.bf16.mxu0 0
  %1638 = vmatmul.mubr.bf16.gmra.mrb[0].mxu0 %v1600
  %v1639 = vpop.f32.mrb[0].mxu0
  %v1640 = vadd.f32 0.0, %v1639
  %v1641 = vpop.f32.mrb[0].mxu0
  %v1642 = vpop.f32.mrb[0].mxu0
  %v1643 = vadd.f32 0.0, %v1642
  %v1644 = vpop.f32.mrb[0].mxu0
  %1645 = vmatprep.mubr.bf16.mxu0 0
  %1646 = vmatmul.mubr.bf16.gmra.mrb[0].mxu0 %v1603
  %v1647 = vpop.f32.mrb[0].mxu0
  %v1648 = vadd.f32 0.0, %v1647
  %v1649 = vpop.f32.mrb[0].mxu0
  %v1650 = vpop.f32.mrb[0].mxu0
  %v1651 = vpop.f32.mrb[0].mxu0
  %1652 = vdwg.mxu0
  %v1653 = vadd.f32 %v1565, %v1640
  %v1654 = vadd.f32 %v1566, %v1643
  %v1655 = vadd.f32 %v1567, %v1648
  %v1656 = vld [vmem:[%s2] sm:$0x1]
  %v1658 = vlaneseq
  %v1659 = vshrl.u32 %v1658, 7
  %v1660 = vsub.s32 0, %v1659
  %v1661 = vrot.slane %v1656, %v1660
  %v1663 = vadd.f32 %v1653, %v1661
  %v1664 = vadd.f32 %v1654, %v1661
  %v1665 = vadd.f32 %v1655, %v1661
  %v1666 = vmax.f32 %v1663, 0.0
  %v1667 = vmax.f32 %v1664, 0.0
  %v1668 = vmax.f32 %v1665, 0.0
  %v1669 = vpack.c.bf16 %v1667, %v1666
  %v1670 = vpack.c.bf16 %v1668, %v1668
  %v1673 = vunpack.c.l.b16 %v1669
  %v1674 = vunpack.c.h.b16 %v1669
  %v1675 = vunpack.c.l.b16 %v1670
  %v1676 = vpack.c.b16 %v1673, %v1673
  %v1677 = vpack.c.b16 %v1674, %v1674
  %v1678 = vpack.c.b16 %v1675, %v1675
  %s1682 = scalar_lea.vmem %s3, 36
  %1683 = vst.msk [vmem:[%s1682] sm:$0xf] %vm433, %v1676
  %1684 = vst.msk [vmem:[%s1682 + $0x4] sm:$0xf] %vm433, %v1677
  %1685 = vst.msk [vmem:[%s1682 + $0x8] sm:$0x3] %vm436, %v1678
  // Predicated region
  $region14: #{contrastive_qf_forward.7} parent=0 // pred_check
    _
  $region15: #{contrastive_qf_forward.7} parent=0 // pred_check_branch
    %1687 = sbr.rel (0) target = $region17
  $region16: #{contrastive_qf_forward.7} parent=0 // pred_region
    _
  $region17: #{contrastive_qf_forward.7} parent=0 // pred_fallthru
    _
  // Predicated region
  $region18: #{contrastive_qf_forward.7} parent=0 // pred_check
    _
  $region19: #{contrastive_qf_forward.7} parent=0 // pred_check_branch
    %1689 = sbr.rel (0) target = $region21
  $region20: #{contrastive_qf_forward.7} parent=0 // pred_region
    _
  $region21: #{contrastive_qf_forward.7} parent=0 // pred_fallthru
    _

// kernel: contrastive_qf_forward.8
$region0: #{contrastive_qf_forward.8}
  #allocation0 [shape = 'u32[]', space=smem, size = 0x4, offset = 0x4, fixed_abs, tag = 'smem constant byte address 0x4 - core index']
  #allocation1 [shape = 'u32[144,128]{1,0:T(1,128)}', space=vmem, size = 0x12000, scoped, tag = 'internal scratch']
  %s0 = inlined_call_operand.vmem [shape: bf16[4,16,128], index: 0, kind: input, shape index: {}]
  %s1 = inlined_call_operand.vmem [shape: bf16[4,128,64], index: 1, kind: input, shape index: {}]
  %s2 = inlined_call_operand.vmem [shape: f32[1,64], index: 2, kind: input, shape index: {}]
  %s3 = inlined_call_operand.vmem [shape: bf16[4,6,64], index: 3, kind: output, shape index: {}]
  %s4 = sld [smem:[#allocation0]]
  $region22: #{contrastive_qf_forward.8} parent=0
    _
  %s6 = ssub.s32 1, %s4
  %s7 = scalar_select 0, %s6, %s4
  // Predicated region
  $region2: #{contrastive_qf_forward.8} parent=0 // pred_check
    _
  $region3: #{contrastive_qf_forward.8} parent=0 // pred_check_branch
    %9 = sbr.rel (0) target = $region5
  $region4: #{contrastive_qf_forward.8} parent=0 // pred_region
    _
  $region5: #{contrastive_qf_forward.8} parent=0 // pred_fallthru
    _
  // Predicated region
  $region6: #{contrastive_qf_forward.8} parent=0 // pred_check
    _
  $region7: #{contrastive_qf_forward.8} parent=0 // pred_check_branch
    %11 = sbr.rel (0) target = $region9
  $region8: #{contrastive_qf_forward.8} parent=0 // pred_region
    _
  $region9: #{contrastive_qf_forward.8} parent=0 // pred_fallthru
    _
  // Predicated region
  $region10: #{contrastive_qf_forward.8} parent=0 // pred_check
    _
  $region11: #{contrastive_qf_forward.8} parent=0 // pred_check_branch
    %13 = sbr.rel (0) target = $region13
  $region12: #{contrastive_qf_forward.8} parent=0 // pred_region
    _
  $region13: #{contrastive_qf_forward.8} parent=0 // pred_fallthru
    _
  %v15 = vld [vmem:[%s0] sm:$0x7]
  %v16 = vld [vmem:[%s1] sm:$0xf]
  %v17 = vld [vmem:[%s1 + $0x4] sm:$0xf]
  %v18 = vld [vmem:[%s1 + $0x8] sm:$0xf]
  %v19 = vld [vmem:[%s1 + $0xc] sm:$0xf]
  %v20 = vld [vmem:[%s1 + $0x10] sm:$0xf]
  %v21 = vld [vmem:[%s1 + $0x14] sm:$0xf]
  %v22 = vld [vmem:[%s1 + $0x18] sm:$0xf]
  %v23 = vld [vmem:[%s1 + $0x1c] sm:$0xf]
  %v24 = vld [vmem:[%s1 + $0x20] sm:$0xf]
  %v25 = vld [vmem:[%s1 + $0x24] sm:$0xf]
  %v26 = vld [vmem:[%s1 + $0x28] sm:$0xf]
  %v27 = vld [vmem:[%s1 + $0x2c] sm:$0xf]
  %v28 = vld [vmem:[%s1 + $0x30] sm:$0xf]
  %v29 = vld [vmem:[%s1 + $0x34] sm:$0xf]
  %v30 = vld [vmem:[%s1 + $0x38] sm:$0xf]
  %v31 = vld [vmem:[%s1 + $0x3c] sm:$0xf]
  %v32 = vld [vmem:[%s0] sm:$0xf]
  %s33 = scalar_lea.vmem %s1, 64
  %v34 = vld [vmem:[%s33] sm:$0xf]
  %v35 = vld [vmem:[%s33 + $0x4] sm:$0xf]
  %v36 = vld [vmem:[%s33 + $0x8] sm:$0xf]
  %v37 = vld [vmem:[%s33 + $0xc] sm:$0xf]
  %v38 = vld [vmem:[%s33 + $0x10] sm:$0xf]
  %v39 = vld [vmem:[%s33 + $0x14] sm:$0xf]
  %v40 = vld [vmem:[%s33 + $0x18] sm:$0xf]
  %v41 = vld [vmem:[%s33 + $0x1c] sm:$0xf]
  %v42 = vld [vmem:[%s33 + $0x20] sm:$0xf]
  %v43 = vld [vmem:[%s33 + $0x24] sm:$0xf]
  %v44 = vld [vmem:[%s33 + $0x28] sm:$0xf]
  %v45 = vld [vmem:[%s33 + $0x2c] sm:$0xf]
  %v46 = vld [vmem:[%s33 + $0x30] sm:$0xf]
  %v47 = vld [vmem:[%s33 + $0x34] sm:$0xf]
  %v48 = vld [vmem:[%s33 + $0x38] sm:$0xf]
  %v49 = vld [vmem:[%s33 + $0x3c] sm:$0xf]
  %v51 = vunpack.c.l.b16 %v32
  %v52 = vpack.c.b16 %v51, %v51
  %v54 = vshrl.u32 %v52, 16
  %v56 = vshll.u32 %v52, 16
  %v58 = vrot.slane %v56, 1
  %v59 = vor.u32 %v54, %v58
  %v77 = vunpack.c.l.b16 %v34
  %v78 = vunpack.c.l.b16 %v35
  %v79 = vunpack.c.l.b16 %v36
  %v80 = vunpack.c.l.b16 %v37
  %v81 = vunpack.c.l.b16 %v38
  %v82 = vunpack.c.l.b16 %v39
  %v83 = vunpack.c.l.b16 %v40
  %v84 = vunpack.c.l.b16 %v41
  %v85 = vunpack.c.l.b16 %v42
  %v86 = vunpack.c.l.b16 %v43
  %v87 = vunpack.c.l.b16 %v44
  %v88 = vunpack.c.l.b16 %v45
  %v89 = vunpack.c.l.b16 %v46
  %v90 = vunpack.c.l.b16 %v47
  %v91 = vunpack.c.l.b16 %v48
  %v92 = vunpack.c.l.b16 %v49
  %v93 = vpack.c.b16 %v78, %v77
  %v94 = vpack.c.b16 %v80, %v79
  %v95 = vpack.c.b16 %v82, %v81
  %v96 = vpack.c.b16 %v84, %v83
  %v97 = vpack.c.b16 %v86, %v85
  %v98 = vpack.c.b16 %v88, %v87
  %v99 = vpack.c.b16 %v90, %v89
  %v100 = vpack.c.b16 %v92, %v91
  %109 = vmatprep.subr.bf16.mxu0 0
  %110 = vmatpush1.bf16.msra.mxu0 %v93
  %111 = vmatprep.subr.bf16.mxu0 0
  %112 = vmatpush1.bf16.msra.mxu0 %v94
  %113 = vmatprep.subr.bf16.mxu0 0
  %114 = vmatpush1.bf16.msra.mxu0 %v95
  %115 = vmatprep.subr.bf16.mxu0 0
  %116 = vmatpush1.bf16.msra.mxu0 %v96
  %117 = vmatprep.subr.bf16.mxu0 0
  %118 = vmatpush1.bf16.msra.mxu0 %v97
  %119 = vmatprep.subr.bf16.mxu0 0
  %120 = vmatpush1.bf16.msra.mxu0 %v98
  %121 = vmatprep.subr.bf16.mxu0 0
  %122 = vmatpush1.bf16.msra.mxu0 %v99
  %123 = vmatprep.subr.bf16.mxu0 0
  %124 = vmatpush1.bf16.msra.mxu0 %v100
  %125 = vmatprep.subr.bf16.mxu0 0
  %126 = vmatpush1.bf16.msra.mxu0 0
  %127 = vmatprep.subr.bf16.mxu0 0
  %128 = vmatpush1.bf16.msra.mxu0 0
  %129 = vmatprep.subr.bf16.mxu0 0
  %130 = vmatpush1.bf16.msra.mxu0 0
  %131 = vmatprep.subr.bf16.mxu0 0
  %132 = vmatpush1.bf16.msra.mxu0 0
  %133 = vmatprep.subr.bf16.mxu0 0
  %134 = vmatpush1.bf16.msra.mxu0 0
  %135 = vmatprep.subr.bf16.mxu0 0
  %136 = vmatpush1.bf16.msra.mxu0 0
  %137 = vmatprep.subr.bf16.mxu0 0
  %138 = vmatpush1.bf16.msra.mxu0 0
  %139 = vmatprep.subr.bf16.mxu0 0
  %140 = vmatpush1.bf16.msra.mxu0 0
  %141 = vmatprep.mubr.bf16.mxu0 0
  %142 = vmatmul.mubr.bf16.gmra.mrb[0].mxu0 %v59
  %v143 = vpop.f32.mrb[0].mxu0
  %v144 = vadd.f32 0.0, %v143
  %v145 = vpop.f32.mrb[0].mxu0
  %v146 = vpop.f32.mrb[0].mxu0
  %v147 = vpop.f32.mrb[0].mxu0
  %148 = vdwg.mxu0
  %v165 = vunpack.c.l.b16 %v16
  %v166 = vunpack.c.l.b16 %v17
  %v167 = vunpack.c.l.b16 %v18
  %v168 = vunpack.c.l.b16 %v19
  %v169 = vunpack.c.l.b16 %v20
  %v170 = vunpack.c.l.b16 %v21
  %v171 = vunpack.c.l.b16 %v22
  %v172 = vunpack.c.l.b16 %v23
  %v173 = vunpack.c.l.b16 %v24
  %v174 = vunpack.c.l.b16 %v25
  %v175 = vunpack.c.l.b16 %v26
  %v176 = vunpack.c.l.b16 %v27
  %v177 = vunpack.c.l.b16 %v28
  %v178 = vunpack.c.l.b16 %v29
  %v179 = vunpack.c.l.b16 %v30
  %v180 = vunpack.c.l.b16 %v31
  %v181 = vpack.c.b16 %v166, %v165
  %v182 = vpack.c.b16 %v168, %v167
  %v183 = vpack.c.b16 %v170, %v169
  %v184 = vpack.c.b16 %v172, %v171
  %v185 = vpack.c.b16 %v174, %v173
  %v186 = vpack.c.b16 %v176, %v175
  %v187 = vpack.c.b16 %v178, %v177
  %v188 = vpack.c.b16 %v180, %v179
  %197 = vmatprep.subr.bf16.mxu0 0
  %198 = vmatpush1.bf16.msra.mxu0 %v181
  %199 = vmatprep.subr.bf16.mxu0 0
  %200 = vmatpush1.bf16.msra.mxu0 %v182
  %201 = vmatprep.subr.bf16.mxu0 0
  %202 = vmatpush1.bf16.msra.mxu0 %v183
  %203 = vmatprep.subr.bf16.mxu0 0
  %204 = vmatpush1.bf16.msra.mxu0 %v184
  %205 = vmatprep.subr.bf16.mxu0 0
  %206 = vmatpush1.bf16.msra.mxu0 %v185
  %207 = vmatprep.subr.bf16.mxu0 0
  %208 = vmatpush1.bf16.msra.mxu0 %v186
  %209 = vmatprep.subr.bf16.mxu0 0
  %210 = vmatpush1.bf16.msra.mxu0 %v187
  %211 = vmatprep.subr.bf16.mxu0 0
  %212 = vmatpush1.bf16.msra.mxu0 %v188
  %213 = vmatprep.subr.bf16.mxu0 0
  %214 = vmatpush1.bf16.msra.mxu0 0
  %215 = vmatprep.subr.bf16.mxu0 0
  %216 = vmatpush1.bf16.msra.mxu0 0
  %217 = vmatprep.subr.bf16.mxu0 0
  %218 = vmatpush1.bf16.msra.mxu0 0
  %219 = vmatprep.subr.bf16.mxu0 0
  %220 = vmatpush1.bf16.msra.mxu0 0
  %221 = vmatprep.subr.bf16.mxu0 0
  %222 = vmatpush1.bf16.msra.mxu0 0
  %223 = vmatprep.subr.bf16.mxu0 0
  %224 = vmatpush1.bf16.msra.mxu0 0
  %225 = vmatprep.subr.bf16.mxu0 0
  %226 = vmatpush1.bf16.msra.mxu0 0
  %227 = vmatprep.subr.bf16.mxu0 0
  %228 = vmatpush1.bf16.msra.mxu0 0
  %229 = vmatprep.mubr.bf16.mxu0 0
  %230 = vmatmul.mubr.bf16.gmra.mrb[0].mxu0 %v15
  %v231 = vpop.f32.mrb[0].mxu0
  %v232 = vadd.f32 %v144, %v231
  %v233 = vpop.f32.mrb[0].mxu0
  %v234 = vpop.f32.mrb[0].mxu0
  %v235 = vpop.f32.mrb[0].mxu0
  %236 = vdwg.mxu0
  %v237 = vld [vmem:[%s0] sm:$0xe]
  %v238 = vld [vmem:[%s0 + $0x4] sm:$0x1]
  %s239 = scalar_lea.vmem %s1, 128
  %v240 = vld [vmem:[%s239] sm:$0xf]
  %v241 = vld [vmem:[%s239 + $0x4] sm:$0xf]
  %v242 = vld [vmem:[%s239 + $0x8] sm:$0xf]
  %v243 = vld [vmem:[%s239 + $0xc] sm:$0xf]
  %v244 = vld [vmem:[%s239 + $0x10] sm:$0xf]
  %v245 = vld [vmem:[%s239 + $0x14] sm:$0xf]
  %v246 = vld [vmem:[%s239 + $0x18] sm:$0xf]
  %v247 = vld [vmem:[%s239 + $0x1c] sm:$0xf]
  %v248 = vld [vmem:[%s239 + $0x20] sm:$0xf]
  %v249 = vld [vmem:[%s239 + $0x24] sm:$0xf]
  %v250 = vld [vmem:[%s239 + $0x28] sm:$0xf]
  %v251 = vld [vmem:[%s239 + $0x2c] sm:$0xf]
  %v252 = vld [vmem:[%s239 + $0x30] sm:$0xf]
  %v253 = vld [vmem:[%s239 + $0x34] sm:$0xf]
  %v254 = vld [vmem:[%s239 + $0x38] sm:$0xf]
  %v255 = vld [vmem:[%s239 + $0x3c] sm:$0xf]
  %v258 = vunpack.c.l.b16 %v237
  %v259 = vunpack.c.l.b16 %v238
  %v260 = vpack.c.b16 %v259, %v258
  %v262 = vshrl.u32 %v260, 16
  %v264 = vrot.slane %v262, 1
  %v265 = vshll.u32 %v260, 16
  %v267 = vrot.slane %v265, 2
  %v268 = vor.u32 %v264, %v267
  %v286 = vunpack.c.l.b16 %v240
  %v287 = vunpack.c.l.b16 %v241
  %v288 = vunpack.c.l.b16 %v242
  %v289 = vunpack.c.l.b16 %v243
  %v290 = vunpack.c.l.b16 %v244
  %v291 = vunpack.c.l.b16 %v245
  %v292 = vunpack.c.l.b16 %v246
  %v293 = vunpack.c.l.b16 %v247
  %v294 = vunpack.c.l.b16 %v248
  %v295 = vunpack.c.l.b16 %v249
  %v296 = vunpack.c.l.b16 %v250
  %v297 = vunpack.c.l.b16 %v251
  %v298 = vunpack.c.l.b16 %v252
  %v299 = vunpack.c.l.b16 %v253
  %v300 = vunpack.c.l.b16 %v254
  %v301 = vunpack.c.l.b16 %v255
  %v302 = vpack.c.b16 %v287, %v286
  %v303 = vpack.c.b16 %v289, %v288
  %v304 = vpack.c.b16 %v291, %v290
  %v305 = vpack.c.b16 %v293, %v292
  %v306 = vpack.c.b16 %v295, %v294
  %v307 = vpack.c.b16 %v297, %v296
  %v308 = vpack.c.b16 %v299, %v298
  %v309 = vpack.c.b16 %v301, %v300
  %318 = vmatprep.subr.bf16.mxu0 0
  %319 = vmatpush1.bf16.msra.mxu0 %v302
  %320 = vmatprep.subr.bf16.mxu0 0
  %321 = vmatpush1.bf16.msra.mxu0 %v303
  %322 = vmatprep.subr.bf16.mxu0 0
  %323 = vmatpush1.bf16.msra.mxu0 %v304
  %324 = vmatprep.subr.bf16.mxu0 0
  %325 = vmatpush1.bf16.msra.mxu0 %v305
  %326 = vmatprep.subr.bf16.mxu0 0
  %327 = vmatpush1.bf16.msra.mxu0 %v306
  %328 = vmatprep.subr.bf16.mxu0 0
  %329 = vmatpush1.bf16.msra.mxu0 %v307
  %330 = vmatprep.subr.bf16.mxu0 0
  %331 = vmatpush1.bf16.msra.mxu0 %v308
  %332 = vmatprep.subr.bf16.mxu0 0
  %333 = vmatpush1.bf16.msra.mxu0 %v309
  %334 = vmatprep.subr.bf16.mxu0 0
  %335 = vmatpush1.bf16.msra.mxu0 0
  %336 = vmatprep.subr.bf16.mxu0 0
  %337 = vmatpush1.bf16.msra.mxu0 0
  %338 = vmatprep.subr.bf16.mxu0 0
  %339 = vmatpush1.bf16.msra.mxu0 0
  %340 = vmatprep.subr.bf16.mxu0 0
  %341 = vmatpush1.bf16.msra.mxu0 0
  %342 = vmatprep.subr.bf16.mxu0 0
  %343 = vmatpush1.bf16.msra.mxu0 0
  %344 = vmatprep.subr.bf16.mxu0 0
  %345 = vmatpush1.bf16.msra.mxu0 0
  %346 = vmatprep.subr.bf16.mxu0 0
  %347 = vmatpush1.bf16.msra.mxu0 0
  %348 = vmatprep.subr.bf16.mxu0 0
  %349 = vmatpush1.bf16.msra.mxu0 0
  %350 = vmatprep.mubr.bf16.mxu0 0
  %351 = vmatmul.mubr.bf16.gmra.mrb[0].mxu0 %v268
  %v352 = vpop.f32.mrb[0].mxu0
  %v353 = vadd.f32 0.0, %v352
  %v354 = vpop.f32.mrb[0].mxu0
  %v355 = vpop.f32.mrb[0].mxu0
  %v356 = vpop.f32.mrb[0].mxu0
  %357 = vdwg.mxu0
  %v358 = vadd.f32 %v232, %v353
  %v359 = vld [vmem:[%s0] sm:$0xc]
  %s360 = scalar_lea.vmem %s1, 192
  %v361 = vld [vmem:[%s360] sm:$0xf]
  %v362 = vld [vmem:[%s360 + $0x4] sm:$0xf]
  %v363 = vld [vmem:[%s360 + $0x8] sm:$0xf]
  %v364 = vld [vmem:[%s360 + $0xc] sm:$0xf]
  %v365 = vld [vmem:[%s360 + $0x10] sm:$0xf]
  %v366 = vld [vmem:[%s360 + $0x14] sm:$0xf]
  %v367 = vld [vmem:[%s360 + $0x18] sm:$0xf]
  %v368 = vld [vmem:[%s360 + $0x1c] sm:$0xf]
  %v369 = vld [vmem:[%s360 + $0x20] sm:$0xf]
  %v370 = vld [vmem:[%s360 + $0x24] sm:$0xf]
  %v371 = vld [vmem:[%s360 + $0x28] sm:$0xf]
  %v372 = vld [vmem:[%s360 + $0x2c] sm:$0xf]
  %v373 = vld [vmem:[%s360 + $0x30] sm:$0xf]
  %v374 = vld [vmem:[%s360 + $0x34] sm:$0xf]
  %v375 = vld [vmem:[%s360 + $0x38] sm:$0xf]
  %v376 = vld [vmem:[%s360 + $0x3c] sm:$0xf]
  %v378 = vunpack.c.l.b16 %v359
  %v379 = vpack.c.b16 %v259, %v378
  %v380 = vrot.slane %v379, 2
  %v398 = vunpack.c.l.b16 %v361
  %v399 = vunpack.c.l.b16 %v362
  %v400 = vunpack.c.l.b16 %v363
  %v401 = vunpack.c.l.b16 %v364
  %v402 = vunpack.c.l.b16 %v365
  %v403 = vunpack.c.l.b16 %v366
  %v404 = vunpack.c.l.b16 %v367
  %v405 = vunpack.c.l.b16 %v368
  %v406 = vunpack.c.l.b16 %v369
  %v407 = vunpack.c.l.b16 %v370
  %v408 = vunpack.c.l.b16 %v371
  %v409 = vunpack.c.l.b16 %v372
  %v410 = vunpack.c.l.b16 %v373
  %v411 = vunpack.c.l.b16 %v374
  %v412 = vunpack.c.l.b16 %v375
  %v413 = vunpack.c.l.b16 %v376
  %v414 = vpack.c.b16 %v399, %v398
  %v415 = vpack.c.b16 %v401, %v400
  %v416 = vpack.c.b16 %v403, %v402
  %v417 = vpack.c.b16 %v405, %v404
  %v418 = vpack.c.b16 %v407, %v406
  %v419 = vpack.c.b16 %v409, %v408
  %v420 = vpack.c.b16 %v411, %v410
  %v421 = vpack.c.b16 %v413, %v412
  %430 = vmatprep.subr.bf16.mxu0 0
  %431 = vmatpush1.bf16.msra.mxu0 %v414
  %432 = vmatprep.subr.bf16.mxu0 0
  %433 = vmatpush1.bf16.msra.mxu0 %v415
  %434 = vmatprep.subr.bf16.mxu0 0
  %435 = vmatpush1.bf16.msra.mxu0 %v416
  %436 = vmatprep.subr.bf16.mxu0 0
  %437 = vmatpush1.bf16.msra.mxu0 %v417
  %438 = vmatprep.subr.bf16.mxu0 0
  %439 = vmatpush1.bf16.msra.mxu0 %v418
  %440 = vmatprep.subr.bf16.mxu0 0
  %441 = vmatpush1.bf16.msra.mxu0 %v419
  %442 = vmatprep.subr.bf16.mxu0 0
  %443 = vmatpush1.bf16.msra.mxu0 %v420
  %444 = vmatprep.subr.bf16.mxu0 0
  %445 = vmatpush1.bf16.msra.mxu0 %v421
  %446 = vmatprep.subr.bf16.mxu0 0
  %447 = vmatpush1.bf16.msra.mxu0 0
  %448 = vmatprep.subr.bf16.mxu0 0
  %449 = vmatpush1.bf16.msra.mxu0 0
  %450 = vmatprep.subr.bf16.mxu0 0
  %451 = vmatpush1.bf16.msra.mxu0 0
  %452 = vmatprep.subr.bf16.mxu0 0
  %453 = vmatpush1.bf16.msra.mxu0 0
  %454 = vmatprep.subr.bf16.mxu0 0
  %455 = vmatpush1.bf16.msra.mxu0 0
  %456 = vmatprep.subr.bf16.mxu0 0
  %457 = vmatpush1.bf16.msra.mxu0 0
  %458 = vmatprep.subr.bf16.mxu0 0
  %459 = vmatpush1.bf16.msra.mxu0 0
  %460 = vmatprep.subr.bf16.mxu0 0
  %461 = vmatpush1.bf16.msra.mxu0 0
  %462 = vmatprep.mubr.bf16.mxu0 0
  %463 = vmatmul.mubr.bf16.gmra.mrb[0].mxu0 %v380
  %v464 = vpop.f32.mrb[0].mxu0
  %v465 = vadd.f32 0.0, %v464
  %v466 = vpop.f32.mrb[0].mxu0
  %v467 = vpop.f32.mrb[0].mxu0
  %v468 = vpop.f32.mrb[0].mxu0
  %469 = vdwg.mxu0
  %v470 = vadd.f32 %v358, %v465
  %v471 = vld [vmem:[%s2] sm:$0x1]
  %v473 = vlaneseq
  %v474 = vshrl.u32 %v473, 7
  %v475 = vsub.s32 0, %v474
  %v476 = vrot.slane %v471, %v475
  %v478 = vadd.f32 %v470, %v476
  %v479 = vmax.f32 %v478, 0.0
  %v480 = vpack.c.bf16 %v479, %v479
  %vm481 = vcmask 518144
  %482 = vst.msk [vmem:[%s3] sm:$0x7] %vm481, %v480
  %s483 = scalar_lea.vmem %s0, 8
  %v484 = vld [vmem:[%s483] sm:$0x7]
  %v485 = vld [vmem:[%s1] sm:$0xf]
  %v486 = vld [vmem:[%s1 + $0x4] sm:$0xf]
  %v487 = vld [vmem:[%s1 + $0x8] sm:$0xf]
  %v488 = vld [vmem:[%s1 + $0xc] sm:$0xf]
  %v489 = vld [vmem:[%s1 + $0x10] sm:$0xf]
  %v490 = vld [vmem:[%s1 + $0x14] sm:$0xf]
  %v491 = vld [vmem:[%s1 + $0x18] sm:$0xf]
  %v492 = vld [vmem:[%s1 + $0x1c] sm:$0xf]
  %v493 = vld [vmem:[%s1 + $0x20] sm:$0xf]
  %v494 = vld [vmem:[%s1 + $0x24] sm:$0xf]
  %v495 = vld [vmem:[%s1 + $0x28] sm:$0xf]
  %v496 = vld [vmem:[%s1 + $0x2c] sm:$0xf]
  %v497 = vld [vmem:[%s1 + $0x30] sm:$0xf]
  %v498 = vld [vmem:[%s1 + $0x34] sm:$0xf]
  %v499 = vld [vmem:[%s1 + $0x38] sm:$0xf]
  %v500 = vld [vmem:[%s1 + $0x3c] sm:$0xf]
  %v501 = vld [vmem:[%s483] sm:$0xf]
  %v502 = vld [vmem:[%s33] sm:$0xf]
  %v503 = vld [vmem:[%s33 + $0x4] sm:$0xf]
  %v504 = vld [vmem:[%s33 + $0x8] sm:$0xf]
  %v505 = vld [vmem:[%s33 + $0xc] sm:$0xf]
  %v506 = vld [vmem:[%s33 + $0x10] sm:$0xf]
  %v507 = vld [vmem:[%s33 + $0x14] sm:$0xf]
  %v508 = vld [vmem:[%s33 + $0x18] sm:$0xf]
  %v509 = vld [vmem:[%s33 + $0x1c] sm:$0xf]
  %v510 = vld [vmem:[%s33 + $0x20] sm:$0xf]
  %v511 = vld [vmem:[%s33 + $0x24] sm:$0xf]
  %v512 = vld [vmem:[%s33 + $0x28] sm:$0xf]
  %v513 = vld [vmem:[%s33 + $0x2c] sm:$0xf]
  %v514 = vld [vmem:[%s33 + $0x30] sm:$0xf]
  %v515 = vld [vmem:[%s33 + $0x34] sm:$0xf]
  %v516 = vld [vmem:[%s33 + $0x38] sm:$0xf]
  %v517 = vld [vmem:[%s33 + $0x3c] sm:$0xf]
  %v519 = vunpack.c.l.b16 %v501
  %v520 = vpack.c.b16 %v519, %v519
  %v522 = vshrl.u32 %v520, 16
  %v524 = vshll.u32 %v520, 16
  %v526 = vrot.slane %v524, 1
  %v527 = vor.u32 %v522, %v526
  %v545 = vunpack.c.l.b16 %v502
  %v546 = vunpack.c.l.b16 %v503
  %v547 = vunpack.c.l.b16 %v504
  %v548 = vunpack.c.l.b16 %v505
  %v549 = vunpack.c.l.b16 %v506
  %v550 = vunpack.c.l.b16 %v507
  %v551 = vunpack.c.l.b16 %v508
  %v552 = vunpack.c.l.b16 %v509
  %v553 = vunpack.c.l.b16 %v510
  %v554 = vunpack.c.l.b16 %v511
  %v555 = vunpack.c.l.b16 %v512
  %v556 = vunpack.c.l.b16 %v513
  %v557 = vunpack.c.l.b16 %v514
  %v558 = vunpack.c.l.b16 %v515
  %v559 = vunpack.c.l.b16 %v516
  %v560 = vunpack.c.l.b16 %v517
  %v561 = vpack.c.b16 %v546, %v545
  %v562 = vpack.c.b16 %v548, %v547
  %v563 = vpack.c.b16 %v550, %v549
  %v564 = vpack.c.b16 %v552, %v551
  %v565 = vpack.c.b16 %v554, %v553
  %v566 = vpack.c.b16 %v556, %v555
  %v567 = vpack.c.b16 %v558, %v557
  %v568 = vpack.c.b16 %v560, %v559
  %577 = vmatprep.subr.bf16.mxu0 0
  %578 = vmatpush1.bf16.msra.mxu0 %v561
  %579 = vmatprep.subr.bf16.mxu0 0
  %580 = vmatpush1.bf16.msra.mxu0 %v562
  %581 = vmatprep.subr.bf16.mxu0 0
  %582 = vmatpush1.bf16.msra.mxu0 %v563
  %583 = vmatprep.subr.bf16.mxu0 0
  %584 = vmatpush1.bf16.msra.mxu0 %v564
  %585 = vmatprep.subr.bf16.mxu0 0
  %586 = vmatpush1.bf16.msra.mxu0 %v565
  %587 = vmatprep.subr.bf16.mxu0 0
  %588 = vmatpush1.bf16.msra.mxu0 %v566
  %589 = vmatprep.subr.bf16.mxu0 0
  %590 = vmatpush1.bf16.msra.mxu0 %v567
  %591 = vmatprep.subr.bf16.mxu0 0
  %592 = vmatpush1.bf16.msra.mxu0 %v568
  %593 = vmatprep.subr.bf16.mxu0 0
  %594 = vmatpush1.bf16.msra.mxu0 0
  %595 = vmatprep.subr.bf16.mxu0 0
  %596 = vmatpush1.bf16.msra.mxu0 0
  %597 = vmatprep.subr.bf16.mxu0 0
  %598 = vmatpush1.bf16.msra.mxu0 0
  %599 = vmatprep.subr.bf16.mxu0 0
  %600 = vmatpush1.bf16.msra.mxu0 0
  %601 = vmatprep.subr.bf16.mxu0 0
  %602 = vmatpush1.bf16.msra.mxu0 0
  %603 = vmatprep.subr.bf16.mxu0 0
  %604 = vmatpush1.bf16.msra.mxu0 0
  %605 = vmatprep.subr.bf16.mxu0 0
  %606 = vmatpush1.bf16.msra.mxu0 0
  %607 = vmatprep.subr.bf16.mxu0 0
  %608 = vmatpush1.bf16.msra.mxu0 0
  %609 = vmatprep.mubr.bf16.mxu0 0
  %610 = vmatmul.mubr.bf16.gmra.mrb[0].mxu0 %v527
  %v611 = vpop.f32.mrb[0].mxu0
  %v612 = vadd.f32 0.0, %v611
  %v613 = vpop.f32.mrb[0].mxu0
  %v614 = vpop.f32.mrb[0].mxu0
  %v615 = vpop.f32.mrb[0].mxu0
  %616 = vdwg.mxu0
  %v633 = vunpack.c.l.b16 %v485
  %v634 = vunpack.c.l.b16 %v486
  %v635 = vunpack.c.l.b16 %v487
  %v636 = vunpack.c.l.b16 %v488
  %v637 = vunpack.c.l.b16 %v489
  %v638 = vunpack.c.l.b16 %v490
  %v639 = vunpack.c.l.b16 %v491
  %v640 = vunpack.c.l.b16 %v492
  %v641 = vunpack.c.l.b16 %v493
  %v642 = vunpack.c.l.b16 %v494
  %v643 = vunpack.c.l.b16 %v495
  %v644 = vunpack.c.l.b16 %v496
  %v645 = vunpack.c.l.b16 %v497
  %v646 = vunpack.c.l.b16 %v498
  %v647 = vunpack.c.l.b16 %v499
  %v648 = vunpack.c.l.b16 %v500
  %v649 = vpack.c.b16 %v634, %v633
  %v650 = vpack.c.b16 %v636, %v635
  %v651 = vpack.c.b16 %v638, %v637
  %v652 = vpack.c.b16 %v640, %v639
  %v653 = vpack.c.b16 %v642, %v641
  %v654 = vpack.c.b16 %v644, %v643
  %v655 = vpack.c.b16 %v646, %v645
  %v656 = vpack.c.b16 %v648, %v647
  %665 = vmatprep.subr.bf16.mxu0 0
  %666 = vmatpush1.bf16.msra.mxu0 %v649
  %667 = vmatprep.subr.bf16.mxu0 0
  %668 = vmatpush1.bf16.msra.mxu0 %v650
  %669 = vmatprep.subr.bf16.mxu0 0
  %670 = vmatpush1.bf16.msra.mxu0 %v651
  %671 = vmatprep.subr.bf16.mxu0 0
  %672 = vmatpush1.bf16.msra.mxu0 %v652
  %673 = vmatprep.subr.bf16.mxu0 0
  %674 = vmatpush1.bf16.msra.mxu0 %v653
  %675 = vmatprep.subr.bf16.mxu0 0
  %676 = vmatpush1.bf16.msra.mxu0 %v654
  %677 = vmatprep.subr.bf16.mxu0 0
  %678 = vmatpush1.bf16.msra.mxu0 %v655
  %679 = vmatprep.subr.bf16.mxu0 0
  %680 = vmatpush1.bf16.msra.mxu0 %v656
  %681 = vmatprep.subr.bf16.mxu0 0
  %682 = vmatpush1.bf16.msra.mxu0 0
  %683 = vmatprep.subr.bf16.mxu0 0
  %684 = vmatpush1.bf16.msra.mxu0 0
  %685 = vmatprep.subr.bf16.mxu0 0
  %686 = vmatpush1.bf16.msra.mxu0 0
  %687 = vmatprep.subr.bf16.mxu0 0
  %688 = vmatpush1.bf16.msra.mxu0 0
  %689 = vmatprep.subr.bf16.mxu0 0
  %690 = vmatpush1.bf16.msra.mxu0 0
  %691 = vmatprep.subr.bf16.mxu0 0
  %692 = vmatpush1.bf16.msra.mxu0 0
  %693 = vmatprep.subr.bf16.mxu0 0
  %694 = vmatpush1.bf16.msra.mxu0 0
  %695 = vmatprep.subr.bf16.mxu0 0
  %696 = vmatpush1.bf16.msra.mxu0 0
  %697 = vmatprep.mubr.bf16.mxu0 0
  %698 = vmatmul.mubr.bf16.gmra.mrb[0].mxu0 %v484
  %v699 = vpop.f32.mrb[0].mxu0
  %v700 = vadd.f32 %v612, %v699
  %v701 = vpop.f32.mrb[0].mxu0
  %v702 = vpop.f32.mrb[0].mxu0
  %v703 = vpop.f32.mrb[0].mxu0
  %704 = vdwg.mxu0
  %v705 = vld [vmem:[%s483] sm:$0xe]
  %v706 = vld [vmem:[%s483 + $0x4] sm:$0x1]
  %v707 = vld [vmem:[%s239] sm:$0xf]
  %v708 = vld [vmem:[%s239 + $0x4] sm:$0xf]
  %v709 = vld [vmem:[%s239 + $0x8] sm:$0xf]
  %v710 = vld [vmem:[%s239 + $0xc] sm:$0xf]
  %v711 = vld [vmem:[%s239 + $0x10] sm:$0xf]
  %v712 = vld [vmem:[%s239 + $0x14] sm:$0xf]
  %v713 = vld [vmem:[%s239 + $0x18] sm:$0xf]
  %v714 = vld [vmem:[%s239 + $0x1c] sm:$0xf]
  %v715 = vld [vmem:[%s239 + $0x20] sm:$0xf]
  %v716 = vld [vmem:[%s239 + $0x24] sm:$0xf]
  %v717 = vld [vmem:[%s239 + $0x28] sm:$0xf]
  %v718 = vld [vmem:[%s239 + $0x2c] sm:$0xf]
  %v719 = vld [vmem:[%s239 + $0x30] sm:$0xf]
  %v720 = vld [vmem:[%s239 + $0x34] sm:$0xf]
  %v721 = vld [vmem:[%s239 + $0x38] sm:$0xf]
  %v722 = vld [vmem:[%s239 + $0x3c] sm:$0xf]
  %v725 = vunpack.c.l.b16 %v705
  %v726 = vunpack.c.l.b16 %v706
  %v727 = vpack.c.b16 %v726, %v725
  %v729 = vshrl.u32 %v727, 16
  %v731 = vrot.slane %v729, 1
  %v732 = vshll.u32 %v727, 16
  %v734 = vrot.slane %v732, 2
  %v735 = vor.u32 %v731, %v734
  %v753 = vunpack.c.l.b16 %v707
  %v754 = vunpack.c.l.b16 %v708
  %v755 = vunpack.c.l.b16 %v709
  %v756 = vunpack.c.l.b16 %v710
  %v757 = vunpack.c.l.b16 %v711
  %v758 = vunpack.c.l.b16 %v712
  %v759 = vunpack.c.l.b16 %v713
  %v760 = vunpack.c.l.b16 %v714
  %v761 = vunpack.c.l.b16 %v715
  %v762 = vunpack.c.l.b16 %v716
  %v763 = vunpack.c.l.b16 %v717
  %v764 = vunpack.c.l.b16 %v718
  %v765 = vunpack.c.l.b16 %v719
  %v766 = vunpack.c.l.b16 %v720
  %v767 = vunpack.c.l.b16 %v721
  %v768 = vunpack.c.l.b16 %v722
  %v769 = vpack.c.b16 %v754, %v753
  %v770 = vpack.c.b16 %v756, %v755
  %v771 = vpack.c.b16 %v758, %v757
  %v772 = vpack.c.b16 %v760, %v759
  %v773 = vpack.c.b16 %v762, %v761
  %v774 = vpack.c.b16 %v764, %v763
  %v775 = vpack.c.b16 %v766, %v765
  %v776 = vpack.c.b16 %v768, %v767
  %785 = vmatprep.subr.bf16.mxu0 0
  %786 = vmatpush1.bf16.msra.mxu0 %v769
  %787 = vmatprep.subr.bf16.mxu0 0
  %788 = vmatpush1.bf16.msra.mxu0 %v770
  %789 = vmatprep.subr.bf16.mxu0 0
  %790 = vmatpush1.bf16.msra.mxu0 %v771
  %791 = vmatprep.subr.bf16.mxu0 0
  %792 = vmatpush1.bf16.msra.mxu0 %v772
  %793 = vmatprep.subr.bf16.mxu0 0
  %794 = vmatpush1.bf16.msra.mxu0 %v773
  %795 = vmatprep.subr.bf16.mxu0 0
  %796 = vmatpush1.bf16.msra.mxu0 %v774
  %797 = vmatprep.subr.bf16.mxu0 0
  %798 = vmatpush1.bf16.msra.mxu0 %v775
  %799 = vmatprep.subr.bf16.mxu0 0
  %800 = vmatpush1.bf16.msra.mxu0 %v776
  %801 = vmatprep.subr.bf16.mxu0 0
  %802 = vmatpush1.bf16.msra.mxu0 0
  %803 = vmatprep.subr.bf16.mxu0 0
  %804 = vmatpush1.bf16.msra.mxu0 0
  %805 = vmatprep.subr.bf16.mxu0 0
  %806 = vmatpush1.bf16.msra.mxu0 0
  %807 = vmatprep.subr.bf16.mxu0 0
  %808 = vmatpush1.bf16.msra.mxu0 0
  %809 = vmatprep.subr.bf16.mxu0 0
  %810 = vmatpush1.bf16.msra.mxu0 0
  %811 = vmatprep.subr.bf16.mxu0 0
  %812 = vmatpush1.bf16.msra.mxu0 0
  %813 = vmatprep.subr.bf16.mxu0 0
  %814 = vmatpush1.bf16.msra.mxu0 0
  %815 = vmatprep.subr.bf16.mxu0 0
  %816 = vmatpush1.bf16.msra.mxu0 0
  %817 = vmatprep.mubr.bf16.mxu0 0
  %818 = vmatmul.mubr.bf16.gmra.mrb[0].mxu0 %v735
  %v819 = vpop.f32.mrb[0].mxu0
  %v820 = vadd.f32 0.0, %v819
  %v821 = vpop.f32.mrb[0].mxu0
  %v822 = vpop.f32.mrb[0].mxu0
  %v823 = vpop.f32.mrb[0].mxu0
  %824 = vdwg.mxu0
  %v825 = vadd.f32 %v700, %v820
  %v826 = vld [vmem:[%s483] sm:$0xc]
  %v827 = vld [vmem:[%s360] sm:$0xf]
  %v828 = vld [vmem:[%s360 + $0x4] sm:$0xf]
  %v829 = vld [vmem:[%s360 + $0x8] sm:$0xf]
  %v830 = vld [vmem:[%s360 + $0xc] sm:$0xf]
  %v831 = vld [vmem:[%s360 + $0x10] sm:$0xf]
  %v832 = vld [vmem:[%s360 + $0x14] sm:$0xf]
  %v833 = vld [vmem:[%s360 + $0x18] sm:$0xf]
  %v834 = vld [vmem:[%s360 + $0x1c] sm:$0xf]
  %v835 = vld [vmem:[%s360 + $0x20] sm:$0xf]
  %v836 = vld [vmem:[%s360 + $0x24] sm:$0xf]
  %v837 = vld [vmem:[%s360 + $0x28] sm:$0xf]
  %v838 = vld [vmem:[%s360 + $0x2c] sm:$0xf]
  %v839 = vld [vmem:[%s360 + $0x30] sm:$0xf]
  %v840 = vld [vmem:[%s360 + $0x34] sm:$0xf]
  %v841 = vld [vmem:[%s360 + $0x38] sm:$0xf]
  %v842 = vld [vmem:[%s360 + $0x3c] sm:$0xf]
  %v844 = vunpack.c.l.b16 %v826
  %v845 = vpack.c.b16 %v726, %v844
  %v846 = vrot.slane %v845, 2
  %v864 = vunpack.c.l.b16 %v827
  %v865 = vunpack.c.l.b16 %v828
  %v866 = vunpack.c.l.b16 %v829
  %v867 = vunpack.c.l.b16 %v830
  %v868 = vunpack.c.l.b16 %v831
  %v869 = vunpack.c.l.b16 %v832
  %v870 = vunpack.c.l.b16 %v833
  %v871 = vunpack.c.l.b16 %v834
  %v872 = vunpack.c.l.b16 %v835
  %v873 = vunpack.c.l.b16 %v836
  %v874 = vunpack.c.l.b16 %v837
  %v875 = vunpack.c.l.b16 %v838
  %v876 = vunpack.c.l.b16 %v839
  %v877 = vunpack.c.l.b16 %v840
  %v878 = vunpack.c.l.b16 %v841
  %v879 = vunpack.c.l.b16 %v842
  %v880 = vpack.c.b16 %v865, %v864
  %v881 = vpack.c.b16 %v867, %v866
  %v882 = vpack.c.b16 %v869, %v868
  %v883 = vpack.c.b16 %v871, %v870
  %v884 = vpack.c.b16 %v873, %v872
  %v885 = vpack.c.b16 %v875, %v874
  %v886 = vpack.c.b16 %v877, %v876
  %v887 = vpack.c.b16 %v879, %v878
  %896 = vmatprep.subr.bf16.mxu0 0
  %897 = vmatpush1.bf16.msra.mxu0 %v880
  %898 = vmatprep.subr.bf16.mxu0 0
  %899 = vmatpush1.bf16.msra.mxu0 %v881
  %900 = vmatprep.subr.bf16.mxu0 0
  %901 = vmatpush1.bf16.msra.mxu0 %v882
  %902 = vmatprep.subr.bf16.mxu0 0
  %903 = vmatpush1.bf16.msra.mxu0 %v883
  %904 = vmatprep.subr.bf16.mxu0 0
  %905 = vmatpush1.bf16.msra.mxu0 %v884
  %906 = vmatprep.subr.bf16.mxu0 0
  %907 = vmatpush1.bf16.msra.mxu0 %v885
  %908 = vmatprep.subr.bf16.mxu0 0
  %909 = vmatpush1.bf16.msra.mxu0 %v886
  %910 = vmatprep.subr.bf16.mxu0 0
  %911 = vmatpush1.bf16.msra.mxu0 %v887
  %912 = vmatprep.subr.bf16.mxu0 0
  %913 = vmatpush1.bf16.msra.mxu0 0
  %914 = vmatprep.subr.bf16.mxu0 0
  %915 = vmatpush1.bf16.msra.mxu0 0
  %916 = vmatprep.subr.bf16.mxu0 0
  %917 = vmatpush1.bf16.msra.mxu0 0
  %918 = vmatprep.subr.bf16.mxu0 0
  %919 = vmatpush1.bf16.msra.mxu0 0
  %920 = vmatprep.subr.bf16.mxu0 0
  %921 = vmatpush1.bf16.msra.mxu0 0
  %922 = vmatprep.subr.bf16.mxu0 0
  %923 = vmatpush1.bf16.msra.mxu0 0
  %924 = vmatprep.subr.bf16.mxu0 0
  %925 = vmatpush1.bf16.msra.mxu0 0
  %926 = vmatprep.subr.bf16.mxu0 0
  %927 = vmatpush1.bf16.msra.mxu0 0
  %928 = vmatprep.mubr.bf16.mxu0 0
  %929 = vmatmul.mubr.bf16.gmra.mrb[0].mxu0 %v846
  %v930 = vpop.f32.mrb[0].mxu0
  %v931 = vadd.f32 0.0, %v930
  %v932 = vpop.f32.mrb[0].mxu0
  %v933 = vpop.f32.mrb[0].mxu0
  %v934 = vpop.f32.mrb[0].mxu0
  %935 = vdwg.mxu0
  %v936 = vadd.f32 %v825, %v931
  %v937 = vld [vmem:[%s2] sm:$0x1]
  %v939 = vlaneseq
  %v940 = vshrl.u32 %v939, 7
  %v941 = vsub.s32 0, %v940
  %v942 = vrot.slane %v937, %v941
  %v944 = vadd.f32 %v936, %v942
  %v945 = vmax.f32 %v944, 0.0
  %v946 = vpack.c.bf16 %v945, %v945
  %s947 = scalar_lea.vmem %s3, 4
  %948 = vst.msk [vmem:[%s947] sm:$0x7] %vm481, %v946
  %s949 = scalar_lea.vmem %s0, 16
  %v950 = vld [vmem:[%s949] sm:$0x7]
  %v951 = vld [vmem:[%s1] sm:$0xf]
  %v952 = vld [vmem:[%s1 + $0x4] sm:$0xf]
  %v953 = vld [vmem:[%s1 + $0x8] sm:$0xf]
  %v954 = vld [vmem:[%s1 + $0xc] sm:$0xf]
  %v955 = vld [vmem:[%s1 + $0x10] sm:$0xf]
  %v956 = vld [vmem:[%s1 + $0x14] sm:$0xf]
  %v957 = vld [vmem:[%s1 + $0x18] sm:$0xf]
  %v958 = vld [vmem:[%s1 + $0x1c] sm:$0xf]
  %v959 = vld [vmem:[%s1 + $0x20] sm:$0xf]
  %v960 = vld [vmem:[%s1 + $0x24] sm:$0xf]
  %v961 = vld [vmem:[%s1 + $0x28] sm:$0xf]
  %v962 = vld [vmem:[%s1 + $0x2c] sm:$0xf]
  %v963 = vld [vmem:[%s1 + $0x30] sm:$0xf]
  %v964 = vld [vmem:[%s1 + $0x34] sm:$0xf]
  %v965 = vld [vmem:[%s1 + $0x38] sm:$0xf]
  %v966 = vld [vmem:[%s1 + $0x3c] sm:$0xf]
  %v967 = vld [vmem:[%s949] sm:$0xf]
  %v968 = vld [vmem:[%s33] sm:$0xf]
  %v969 = vld [vmem:[%s33 + $0x4] sm:$0xf]
  %v970 = vld [vmem:[%s33 + $0x8] sm:$0xf]
  %v971 = vld [vmem:[%s33 + $0xc] sm:$0xf]
  %v972 = vld [vmem:[%s33 + $0x10] sm:$0xf]
  %v973 = vld [vmem:[%s33 + $0x14] sm:$0xf]
  %v974 = vld [vmem:[%s33 + $0x18] sm:$0xf]
  %v975 = vld [vmem:[%s33 + $0x1c] sm:$0xf]
  %v976 = vld [vmem:[%s33 + $0x20] sm:$0xf]
  %v977 = vld [vmem:[%s33 + $0x24] sm:$0xf]
  %v978 = vld [vmem:[%s33 + $0x28] sm:$0xf]
  %v979 = vld [vmem:[%s33 + $0x2c] sm:$0xf]
  %v980 = vld [vmem:[%s33 + $0x30] sm:$0xf]
  %v981 = vld [vmem:[%s33 + $0x34] sm:$0xf]
  %v982 = vld [vmem:[%s33 + $0x38] sm:$0xf]
  %v983 = vld [vmem:[%s33 + $0x3c] sm:$0xf]
  %v985 = vunpack.c.l.b16 %v967
  %v986 = vpack.c.b16 %v985, %v985
  %v988 = vshrl.u32 %v986, 16
  %v990 = vshll.u32 %v986, 16
  %v992 = vrot.slane %v990, 1
  %v993 = vor.u32 %v988, %v992
  %v1011 = vunpack.c.l.b16 %v968
  %v1012 = vunpack.c.l.b16 %v969
  %v1013 = vunpack.c.l.b16 %v970
  %v1014 = vunpack.c.l.b16 %v971
  %v1015 = vunpack.c.l.b16 %v972
  %v1016 = vunpack.c.l.b16 %v973
  %v1017 = vunpack.c.l.b16 %v974
  %v1018 = vunpack.c.l.b16 %v975
  %v1019 = vunpack.c.l.b16 %v976
  %v1020 = vunpack.c.l.b16 %v977
  %v1021 = vunpack.c.l.b16 %v978
  %v1022 = vunpack.c.l.b16 %v979
  %v1023 = vunpack.c.l.b16 %v980
  %v1024 = vunpack.c.l.b16 %v981
  %v1025 = vunpack.c.l.b16 %v982
  %v1026 = vunpack.c.l.b16 %v983
  %v1027 = vpack.c.b16 %v1012, %v1011
  %v1028 = vpack.c.b16 %v1014, %v1013
  %v1029 = vpack.c.b16 %v1016, %v1015
  %v1030 = vpack.c.b16 %v1018, %v1017
  %v1031 = vpack.c.b16 %v1020, %v1019
  %v1032 = vpack.c.b16 %v1022, %v1021
  %v1033 = vpack.c.b16 %v1024, %v1023
  %v1034 = vpack.c.b16 %v1026, %v1025
  %1043 = vmatprep.subr.bf16.mxu0 0
  %1044 = vmatpush1.bf16.msra.mxu0 %v1027
  %1045 = vmatprep.subr.bf16.mxu0 0
  %1046 = vmatpush1.bf16.msra.mxu0 %v1028
  %1047 = vmatprep.subr.bf16.mxu0 0
  %1048 = vmatpush1.bf16.msra.mxu0 %v1029
  %1049 = vmatprep.subr.bf16.mxu0 0
  %1050 = vmatpush1.bf16.msra.mxu0 %v1030
  %1051 = vmatprep.subr.bf16.mxu0 0
  %1052 = vmatpush1.bf16.msra.mxu0 %v1031
  %1053 = vmatprep.subr.bf16.mxu0 0
  %1054 = vmatpush1.bf16.msra.mxu0 %v1032
  %1055 = vmatprep.subr.bf16.mxu0 0
  %1056 = vmatpush1.bf16.msra.mxu0 %v1033
  %1057 = vmatprep.subr.bf16.mxu0 0
  %1058 = vmatpush1.bf16.msra.mxu0 %v1034
  %1059 = vmatprep.subr.bf16.mxu0 0
  %1060 = vmatpush1.bf16.msra.mxu0 0
  %1061 = vmatprep.subr.bf16.mxu0 0
  %1062 = vmatpush1.bf16.msra.mxu0 0
  %1063 = vmatprep.subr.bf16.mxu0 0
  %1064 = vmatpush1.bf16.msra.mxu0 0
  %1065 = vmatprep.subr.bf16.mxu0 0
  %1066 = vmatpush1.bf16.msra.mxu0 0
  %1067 = vmatprep.subr.bf16.mxu0 0
  %1068 = vmatpush1.bf16.msra.mxu0 0
  %1069 = vmatprep.subr.bf16.mxu0 0
  %1070 = vmatpush1.bf16.msra.mxu0 0
  %1071 = vmatprep.subr.bf16.mxu0 0
  %1072 = vmatpush1.bf16.msra.mxu0 0
  %1073 = vmatprep.subr.bf16.mxu0 0
  %1074 = vmatpush1.bf16.msra.mxu0 0
  %1075 = vmatprep.mubr.bf16.mxu0 0
  %1076 = vmatmul.mubr.bf16.gmra.mrb[0].mxu0 %v993
  %v1077 = vpop.f32.mrb[0].mxu0
  %v1078 = vadd.f32 0.0, %v1077
  %v1079 = vpop.f32.mrb[0].mxu0
  %v1080 = vpop.f32.mrb[0].mxu0
  %v1081 = vpop.f32.mrb[0].mxu0
  %1082 = vdwg.mxu0
  %v1099 = vunpack.c.l.b16 %v951
  %v1100 = vunpack.c.l.b16 %v952
  %v1101 = vunpack.c.l.b16 %v953
  %v1102 = vunpack.c.l.b16 %v954
  %v1103 = vunpack.c.l.b16 %v955
  %v1104 = vunpack.c.l.b16 %v956
  %v1105 = vunpack.c.l.b16 %v957
  %v1106 = vunpack.c.l.b16 %v958
  %v1107 = vunpack.c.l.b16 %v959
  %v1108 = vunpack.c.l.b16 %v960
  %v1109 = vunpack.c.l.b16 %v961
  %v1110 = vunpack.c.l.b16 %v962
  %v1111 = vunpack.c.l.b16 %v963
  %v1112 = vunpack.c.l.b16 %v964
  %v1113 = vunpack.c.l.b16 %v965
  %v1114 = vunpack.c.l.b16 %v966
  %v1115 = vpack.c.b16 %v1100, %v1099
  %v1116 = vpack.c.b16 %v1102, %v1101
  %v1117 = vpack.c.b16 %v1104, %v1103
  %v1118 = vpack.c.b16 %v1106, %v1105
  %v1119 = vpack.c.b16 %v1108, %v1107
  %v1120 = vpack.c.b16 %v1110, %v1109
  %v1121 = vpack.c.b16 %v1112, %v1111
  %v1122 = vpack.c.b16 %v1114, %v1113
  %1131 = vmatprep.subr.bf16.mxu0 0
  %1132 = vmatpush1.bf16.msra.mxu0 %v1115
  %1133 = vmatprep.subr.bf16.mxu0 0
  %1134 = vmatpush1.bf16.msra.mxu0 %v1116
  %1135 = vmatprep.subr.bf16.mxu0 0
  %1136 = vmatpush1.bf16.msra.mxu0 %v1117
  %1137 = vmatprep.subr.bf16.mxu0 0
  %1138 = vmatpush1.bf16.msra.mxu0 %v1118
  %1139 = vmatprep.subr.bf16.mxu0 0
  %1140 = vmatpush1.bf16.msra.mxu0 %v1119
  %1141 = vmatprep.subr.bf16.mxu0 0
  %1142 = vmatpush1.bf16.msra.mxu0 %v1120
  %1143 = vmatprep.subr.bf16.mxu0 0
  %1144 = vmatpush1.bf16.msra.mxu0 %v1121
  %1145 = vmatprep.subr.bf16.mxu0 0
  %1146 = vmatpush1.bf16.msra.mxu0 %v1122
  %1147 = vmatprep.subr.bf16.mxu0 0
  %1148 = vmatpush1.bf16.msra.mxu0 0
  %1149 = vmatprep.subr.bf16.mxu0 0
  %1150 = vmatpush1.bf16.msra.mxu0 0
  %1151 = vmatprep.subr.bf16.mxu0 0
  %1152 = vmatpush1.bf16.msra.mxu0 0
  %1153 = vmatprep.subr.bf16.mxu0 0
  %1154 = vmatpush1.bf16.msra.mxu0 0
  %1155 = vmatprep.subr.bf16.mxu0 0
  %1156 = vmatpush1.bf16.msra.mxu0 0
  %1157 = vmatprep.subr.bf16.mxu0 0
  %1158 = vmatpush1.bf16.msra.mxu0 0
  %1159 = vmatprep.subr.bf16.mxu0 0
  %1160 = vmatpush1.bf16.msra.mxu0 0
  %1161 = vmatprep.subr.bf16.mxu0 0
  %1162 = vmatpush1.bf16.msra.mxu0 0
  %1163 = vmatprep.mubr.bf16.mxu0 0
  %1164 = vmatmul.mubr.bf16.gmra.mrb[0].mxu0 %v950
  %v1165 = vpop.f32.mrb[0].mxu0
  %v1166 = vadd.f32 %v1078, %v1165
  %v1167 = vpop.f32.mrb[0].mxu0
  %v1168 = vpop.f32.mrb[0].mxu0
  %v1169 = vpop.f32.mrb[0].mxu0
  %1170 = vdwg.mxu0
  %v1171 = vld [vmem:[%s949] sm:$0xe]
  %v1172 = vld [vmem:[%s949 + $0x4] sm:$0x1]
  %v1173 = vld [vmem:[%s239] sm:$0xf]
  %v1174 = vld [vmem:[%s239 + $0x4] sm:$0xf]
  %v1175 = vld [vmem:[%s239 + $0x8] sm:$0xf]
  %v1176 = vld [vmem:[%s239 + $0xc] sm:$0xf]
  %v1177 = vld [vmem:[%s239 + $0x10] sm:$0xf]
  %v1178 = vld [vmem:[%s239 + $0x14] sm:$0xf]
  %v1179 = vld [vmem:[%s239 + $0x18] sm:$0xf]
  %v1180 = vld [vmem:[%s239 + $0x1c] sm:$0xf]
  %v1181 = vld [vmem:[%s239 + $0x20] sm:$0xf]
  %v1182 = vld [vmem:[%s239 + $0x24] sm:$0xf]
  %v1183 = vld [vmem:[%s239 + $0x28] sm:$0xf]
  %v1184 = vld [vmem:[%s239 + $0x2c] sm:$0xf]
  %v1185 = vld [vmem:[%s239 + $0x30] sm:$0xf]
  %v1186 = vld [vmem:[%s239 + $0x34] sm:$0xf]
  %v1187 = vld [vmem:[%s239 + $0x38] sm:$0xf]
  %v1188 = vld [vmem:[%s239 + $0x3c] sm:$0xf]
  %v1191 = vunpack.c.l.b16 %v1171
  %v1192 = vunpack.c.l.b16 %v1172
  %v1193 = vpack.c.b16 %v1192, %v1191
  %v1195 = vshrl.u32 %v1193, 16
  %v1197 = vrot.slane %v1195, 1
  %v1198 = vshll.u32 %v1193, 16
  %v1200 = vrot.slane %v1198, 2
  %v1201 = vor.u32 %v1197, %v1200
  %v1219 = vunpack.c.l.b16 %v1173
  %v1220 = vunpack.c.l.b16 %v1174
  %v1221 = vunpack.c.l.b16 %v1175
  %v1222 = vunpack.c.l.b16 %v1176
  %v1223 = vunpack.c.l.b16 %v1177
  %v1224 = vunpack.c.l.b16 %v1178
  %v1225 = vunpack.c.l.b16 %v1179
  %v1226 = vunpack.c.l.b16 %v1180
  %v1227 = vunpack.c.l.b16 %v1181
  %v1228 = vunpack.c.l.b16 %v1182
  %v1229 = vunpack.c.l.b16 %v1183
  %v1230 = vunpack.c.l.b16 %v1184
  %v1231 = vunpack.c.l.b16 %v1185
  %v1232 = vunpack.c.l.b16 %v1186
  %v1233 = vunpack.c.l.b16 %v1187
  %v1234 = vunpack.c.l.b16 %v1188
  %v1235 = vpack.c.b16 %v1220, %v1219
  %v1236 = vpack.c.b16 %v1222, %v1221
  %v1237 = vpack.c.b16 %v1224, %v1223
  %v1238 = vpack.c.b16 %v1226, %v1225
  %v1239 = vpack.c.b16 %v1228, %v1227
  %v1240 = vpack.c.b16 %v1230, %v1229
  %v1241 = vpack.c.b16 %v1232, %v1231
  %v1242 = vpack.c.b16 %v1234, %v1233
  %1251 = vmatprep.subr.bf16.mxu0 0
  %1252 = vmatpush1.bf16.msra.mxu0 %v1235
  %1253 = vmatprep.subr.bf16.mxu0 0
  %1254 = vmatpush1.bf16.msra.mxu0 %v1236
  %1255 = vmatprep.subr.bf16.mxu0 0
  %1256 = vmatpush1.bf16.msra.mxu0 %v1237
  %1257 = vmatprep.subr.bf16.mxu0 0
  %1258 = vmatpush1.bf16.msra.mxu0 %v1238
  %1259 = vmatprep.subr.bf16.mxu0 0
  %1260 = vmatpush1.bf16.msra.mxu0 %v1239
  %1261 = vmatprep.subr.bf16.mxu0 0
  %1262 = vmatpush1.bf16.msra.mxu0 %v1240
  %1263 = vmatprep.subr.bf16.mxu0 0
  %1264 = vmatpush1.bf16.msra.mxu0 %v1241
  %1265 = vmatprep.subr.bf16.mxu0 0
  %1266 = vmatpush1.bf16.msra.mxu0 %v1242
  %1267 = vmatprep.subr.bf16.mxu0 0
  %1268 = vmatpush1.bf16.msra.mxu0 0
  %1269 = vmatprep.subr.bf16.mxu0 0
  %1270 = vmatpush1.bf16.msra.mxu0 0
  %1271 = vmatprep.subr.bf16.mxu0 0
  %1272 = vmatpush1.bf16.msra.mxu0 0
  %1273 = vmatprep.subr.bf16.mxu0 0
  %1274 = vmatpush1.bf16.msra.mxu0 0
  %1275 = vmatprep.subr.bf16.mxu0 0
  %1276 = vmatpush1.bf16.msra.mxu0 0
  %1277 = vmatprep.subr.bf16.mxu0 0
  %1278 = vmatpush1.bf16.msra.mxu0 0
  %1279 = vmatprep.subr.bf16.mxu0 0
  %1280 = vmatpush1.bf16.msra.mxu0 0
  %1281 = vmatprep.subr.bf16.mxu0 0
  %1282 = vmatpush1.bf16.msra.mxu0 0
  %1283 = vmatprep.mubr.bf16.mxu0 0
  %1284 = vmatmul.mubr.bf16.gmra.mrb[0].mxu0 %v1201
  %v1285 = vpop.f32.mrb[0].mxu0
  %v1286 = vadd.f32 0.0, %v1285
  %v1287 = vpop.f32.mrb[0].mxu0
  %v1288 = vpop.f32.mrb[0].mxu0
  %v1289 = vpop.f32.mrb[0].mxu0
  %1290 = vdwg.mxu0
  %v1291 = vadd.f32 %v1166, %v1286
  %v1292 = vld [vmem:[%s949] sm:$0xc]
  %v1293 = vld [vmem:[%s360] sm:$0xf]
  %v1294 = vld [vmem:[%s360 + $0x4] sm:$0xf]
  %v1295 = vld [vmem:[%s360 + $0x8] sm:$0xf]
  %v1296 = vld [vmem:[%s360 + $0xc] sm:$0xf]
  %v1297 = vld [vmem:[%s360 + $0x10] sm:$0xf]
  %v1298 = vld [vmem:[%s360 + $0x14] sm:$0xf]
  %v1299 = vld [vmem:[%s360 + $0x18] sm:$0xf]
  %v1300 = vld [vmem:[%s360 + $0x1c] sm:$0xf]
  %v1301 = vld [vmem:[%s360 + $0x20] sm:$0xf]
  %v1302 = vld [vmem:[%s360 + $0x24] sm:$0xf]
  %v1303 = vld [vmem:[%s360 + $0x28] sm:$0xf]
  %v1304 = vld [vmem:[%s360 + $0x2c] sm:$0xf]
  %v1305 = vld [vmem:[%s360 + $0x30] sm:$0xf]
  %v1306 = vld [vmem:[%s360 + $0x34] sm:$0xf]
  %v1307 = vld [vmem:[%s360 + $0x38] sm:$0xf]
  %v1308 = vld [vmem:[%s360 + $0x3c] sm:$0xf]
  %v1310 = vunpack.c.l.b16 %v1292
  %v1311 = vpack.c.b16 %v1192, %v1310
  %v1312 = vrot.slane %v1311, 2
  %v1330 = vunpack.c.l.b16 %v1293
  %v1331 = vunpack.c.l.b16 %v1294
  %v1332 = vunpack.c.l.b16 %v1295
  %v1333 = vunpack.c.l.b16 %v1296
  %v1334 = vunpack.c.l.b16 %v1297
  %v1335 = vunpack.c.l.b16 %v1298
  %v1336 = vunpack.c.l.b16 %v1299
  %v1337 = vunpack.c.l.b16 %v1300
  %v1338 = vunpack.c.l.b16 %v1301
  %v1339 = vunpack.c.l.b16 %v1302
  %v1340 = vunpack.c.l.b16 %v1303
  %v1341 = vunpack.c.l.b16 %v1304
  %v1342 = vunpack.c.l.b16 %v1305
  %v1343 = vunpack.c.l.b16 %v1306
  %v1344 = vunpack.c.l.b16 %v1307
  %v1345 = vunpack.c.l.b16 %v1308
  %v1346 = vpack.c.b16 %v1331, %v1330
  %v1347 = vpack.c.b16 %v1333, %v1332
  %v1348 = vpack.c.b16 %v1335, %v1334
  %v1349 = vpack.c.b16 %v1337, %v1336
  %v1350 = vpack.c.b16 %v1339, %v1338
  %v1351 = vpack.c.b16 %v1341, %v1340
  %v1352 = vpack.c.b16 %v1343, %v1342
  %v1353 = vpack.c.b16 %v1345, %v1344
  %1362 = vmatprep.subr.bf16.mxu0 0
  %1363 = vmatpush1.bf16.msra.mxu0 %v1346
  %1364 = vmatprep.subr.bf16.mxu0 0
  %1365 = vmatpush1.bf16.msra.mxu0 %v1347
  %1366 = vmatprep.subr.bf16.mxu0 0
  %1367 = vmatpush1.bf16.msra.mxu0 %v1348
  %1368 = vmatprep.subr.bf16.mxu0 0
  %1369 = vmatpush1.bf16.msra.mxu0 %v1349
  %1370 = vmatprep.subr.bf16.mxu0 0
  %1371 = vmatpush1.bf16.msra.mxu0 %v1350
  %1372 = vmatprep.subr.bf16.mxu0 0
  %1373 = vmatpush1.bf16.msra.mxu0 %v1351
  %1374 = vmatprep.subr.bf16.mxu0 0
  %1375 = vmatpush1.bf16.msra.mxu0 %v1352
  %1376 = vmatprep.subr.bf16.mxu0 0
  %1377 = vmatpush1.bf16.msra.mxu0 %v1353
  %1378 = vmatprep.subr.bf16.mxu0 0
  %1379 = vmatpush1.bf16.msra.mxu0 0
  %1380 = vmatprep.subr.bf16.mxu0 0
  %1381 = vmatpush1.bf16.msra.mxu0 0
  %1382 = vmatprep.subr.bf16.mxu0 0
  %1383 = vmatpush1.bf16.msra.mxu0 0
  %1384 = vmatprep.subr.bf16.mxu0 0
  %1385 = vmatpush1.bf16.msra.mxu0 0
  %1386 = vmatprep.subr.bf16.mxu0 0
  %1387 = vmatpush1.bf16.msra.mxu0 0
  %1388 = vmatprep.subr.bf16.mxu0 0
  %1389 = vmatpush1.bf16.msra.mxu0 0
  %1390 = vmatprep.subr.bf16.mxu0 0
  %1391 = vmatpush1.bf16.msra.mxu0 0
  %1392 = vmatprep.subr.bf16.mxu0 0
  %1393 = vmatpush1.bf16.msra.mxu0 0
  %1394 = vmatprep.mubr.bf16.mxu0 0
  %1395 = vmatmul.mubr.bf16.gmra.mrb[0].mxu0 %v1312
  %v1396 = vpop.f32.mrb[0].mxu0
  %v1397 = vadd.f32 0.0, %v1396
  %v1398 = vpop.f32.mrb[0].mxu0
  %v1399 = vpop.f32.mrb[0].mxu0
  %v1400 = vpop.f32.mrb[0].mxu0
  %1401 = vdwg.mxu0
  %v1402 = vadd.f32 %v1291, %v1397
  %v1403 = vld [vmem:[%s2] sm:$0x1]
  %v1405 = vlaneseq
  %v1406 = vshrl.u32 %v1405, 7
  %v1407 = vsub.s32 0, %v1406
  %v1408 = vrot.slane %v1403, %v1407
  %v1410 = vadd.f32 %v1402, %v1408
  %v1411 = vmax.f32 %v1410, 0.0
  %v1412 = vpack.c.bf16 %v1411, %v1411
  %s1413 = scalar_lea.vmem %s3, 8
  %1414 = vst.msk [vmem:[%s1413] sm:$0x7] %vm481, %v1412
  %s1415 = scalar_lea.vmem %s0, 24
  %v1416 = vld [vmem:[%s1415] sm:$0x7]
  %v1417 = vld [vmem:[%s1] sm:$0xf]
  %v1418 = vld [vmem:[%s1 + $0x4] sm:$0xf]
  %v1419 = vld [vmem:[%s1 + $0x8] sm:$0xf]
  %v1420 = vld [vmem:[%s1 + $0xc] sm:$0xf]
  %v1421 = vld [vmem:[%s1 + $0x10] sm:$0xf]
  %v1422 = vld [vmem:[%s1 + $0x14] sm:$0xf]
  %v1423 = vld [vmem:[%s1 + $0x18] sm:$0xf]
  %v1424 = vld [vmem:[%s1 + $0x1c] sm:$0xf]
  %v1425 = vld [vmem:[%s1 + $0x20] sm:$0xf]
  %v1426 = vld [vmem:[%s1 + $0x24] sm:$0xf]
  %v1427 = vld [vmem:[%s1 + $0x28] sm:$0xf]
  %v1428 = vld [vmem:[%s1 + $0x2c] sm:$0xf]
  %v1429 = vld [vmem:[%s1 + $0x30] sm:$0xf]
  %v1430 = vld [vmem:[%s1 + $0x34] sm:$0xf]
  %v1431 = vld [vmem:[%s1 + $0x38] sm:$0xf]
  %v1432 = vld [vmem:[%s1 + $0x3c] sm:$0xf]
  %v1433 = vld [vmem:[%s1415] sm:$0xf]
  %v1434 = vld [vmem:[%s33] sm:$0xf]
  %v1435 = vld [vmem:[%s33 + $0x4] sm:$0xf]
  %v1436 = vld [vmem:[%s33 + $0x8] sm:$0xf]
  %v1437 = vld [vmem:[%s33 + $0xc] sm:$0xf]
  %v1438 = vld [vmem:[%s33 + $0x10] sm:$0xf]
  %v1439 = vld [vmem:[%s33 + $0x14] sm:$0xf]
  %v1440 = vld [vmem:[%s33 + $0x18] sm:$0xf]
  %v1441 = vld [vmem:[%s33 + $0x1c] sm:$0xf]
  %v1442 = vld [vmem:[%s33 + $0x20] sm:$0xf]
  %v1443 = vld [vmem:[%s33 + $0x24] sm:$0xf]
  %v1444 = vld [vmem:[%s33 + $0x28] sm:$0xf]
  %v1445 = vld [vmem:[%s33 + $0x2c] sm:$0xf]
  %v1446 = vld [vmem:[%s33 + $0x30] sm:$0xf]
  %v1447 = vld [vmem:[%s33 + $0x34] sm:$0xf]
  %v1448 = vld [vmem:[%s33 + $0x38] sm:$0xf]
  %v1449 = vld [vmem:[%s33 + $0x3c] sm:$0xf]
  %v1451 = vunpack.c.l.b16 %v1433
  %v1452 = vpack.c.b16 %v1451, %v1451
  %v1454 = vshrl.u32 %v1452, 16
  %v1456 = vshll.u32 %v1452, 16
  %v1458 = vrot.slane %v1456, 1
  %v1459 = vor.u32 %v1454, %v1458
  %v1477 = vunpack.c.l.b16 %v1434
  %v1478 = vunpack.c.l.b16 %v1435
  %v1479 = vunpack.c.l.b16 %v1436
  %v1480 = vunpack.c.l.b16 %v1437
  %v1481 = vunpack.c.l.b16 %v1438
  %v1482 = vunpack.c.l.b16 %v1439
  %v1483 = vunpack.c.l.b16 %v1440
  %v1484 = vunpack.c.l.b16 %v1441
  %v1485 = vunpack.c.l.b16 %v1442
  %v1486 = vunpack.c.l.b16 %v1443
  %v1487 = vunpack.c.l.b16 %v1444
  %v1488 = vunpack.c.l.b16 %v1445
  %v1489 = vunpack.c.l.b16 %v1446
  %v1490 = vunpack.c.l.b16 %v1447
  %v1491 = vunpack.c.l.b16 %v1448
  %v1492 = vunpack.c.l.b16 %v1449
  %v1493 = vpack.c.b16 %v1478, %v1477
  %v1494 = vpack.c.b16 %v1480, %v1479
  %v1495 = vpack.c.b16 %v1482, %v1481
  %v1496 = vpack.c.b16 %v1484, %v1483
  %v1497 = vpack.c.b16 %v1486, %v1485
  %v1498 = vpack.c.b16 %v1488, %v1487
  %v1499 = vpack.c.b16 %v1490, %v1489
  %v1500 = vpack.c.b16 %v1492, %v1491
  %1509 = vmatprep.subr.bf16.mxu0 0
  %1510 = vmatpush1.bf16.msra.mxu0 %v1493
  %1511 = vmatprep.subr.bf16.mxu0 0
  %1512 = vmatpush1.bf16.msra.mxu0 %v1494
  %1513 = vmatprep.subr.bf16.mxu0 0
  %1514 = vmatpush1.bf16.msra.mxu0 %v1495
  %1515 = vmatprep.subr.bf16.mxu0 0
  %1516 = vmatpush1.bf16.msra.mxu0 %v1496
  %1517 = vmatprep.subr.bf16.mxu0 0
  %1518 = vmatpush1.bf16.msra.mxu0 %v1497
  %1519 = vmatprep.subr.bf16.mxu0 0
  %1520 = vmatpush1.bf16.msra.mxu0 %v1498
  %1521 = vmatprep.subr.bf16.mxu0 0
  %1522 = vmatpush1.bf16.msra.mxu0 %v1499
  %1523 = vmatprep.subr.bf16.mxu0 0
  %1524 = vmatpush1.bf16.msra.mxu0 %v1500
  %1525 = vmatprep.subr.bf16.mxu0 0
  %1526 = vmatpush1.bf16.msra.mxu0 0
  %1527 = vmatprep.subr.bf16.mxu0 0
  %1528 = vmatpush1.bf16.msra.mxu0 0
  %1529 = vmatprep.subr.bf16.mxu0 0
  %1530 = vmatpush1.bf16.msra.mxu0 0
  %1531 = vmatprep.subr.bf16.mxu0 0
  %1532 = vmatpush1.bf16.msra.mxu0 0
  %1533 = vmatprep.subr.bf16.mxu0 0
  %1534 = vmatpush1.bf16.msra.mxu0 0
  %1535 = vmatprep.subr.bf16.mxu0 0
  %1536 = vmatpush1.bf16.msra.mxu0 0
  %1537 = vmatprep.subr.bf16.mxu0 0
  %1538 = vmatpush1.bf16.msra.mxu0 0
  %1539 = vmatprep.subr.bf16.mxu0 0
  %1540 = vmatpush1.bf16.msra.mxu0 0
  %1541 = vmatprep.mubr.bf16.mxu0 0
  %1542 = vmatmul.mubr.bf16.gmra.mrb[0].mxu0 %v1459
  %v1543 = vpop.f32.mrb[0].mxu0
  %v1544 = vadd.f32 0.0, %v1543
  %v1545 = vpop.f32.mrb[0].mxu0
  %v1546 = vpop.f32.mrb[0].mxu0
  %v1547 = vpop.f32.mrb[0].mxu0
  %1548 = vdwg.mxu0
  %v1565 = vunpack.c.l.b16 %v1417
  %v1566 = vunpack.c.l.b16 %v1418
  %v1567 = vunpack.c.l.b16 %v1419
  %v1568 = vunpack.c.l.b16 %v1420
  %v1569 = vunpack.c.l.b16 %v1421
  %v1570 = vunpack.c.l.b16 %v1422
  %v1571 = vunpack.c.l.b16 %v1423
  %v1572 = vunpack.c.l.b16 %v1424
  %v1573 = vunpack.c.l.b16 %v1425
  %v1574 = vunpack.c.l.b16 %v1426
  %v1575 = vunpack.c.l.b16 %v1427
  %v1576 = vunpack.c.l.b16 %v1428
  %v1577 = vunpack.c.l.b16 %v1429
  %v1578 = vunpack.c.l.b16 %v1430
  %v1579 = vunpack.c.l.b16 %v1431
  %v1580 = vunpack.c.l.b16 %v1432
  %v1581 = vpack.c.b16 %v1566, %v1565
  %v1582 = vpack.c.b16 %v1568, %v1567
  %v1583 = vpack.c.b16 %v1570, %v1569
  %v1584 = vpack.c.b16 %v1572, %v1571
  %v1585 = vpack.c.b16 %v1574, %v1573
  %v1586 = vpack.c.b16 %v1576, %v1575
  %v1587 = vpack.c.b16 %v1578, %v1577
  %v1588 = vpack.c.b16 %v1580, %v1579
  %1597 = vmatprep.subr.bf16.mxu0 0
  %1598 = vmatpush1.bf16.msra.mxu0 %v1581
  %1599 = vmatprep.subr.bf16.mxu0 0
  %1600 = vmatpush1.bf16.msra.mxu0 %v1582
  %1601 = vmatprep.subr.bf16.mxu0 0
  %1602 = vmatpush1.bf16.msra.mxu0 %v1583
  %1603 = vmatprep.subr.bf16.mxu0 0
  %1604 = vmatpush1.bf16.msra.mxu0 %v1584
  %1605 = vmatprep.subr.bf16.mxu0 0
  %1606 = vmatpush1.bf16.msra.mxu0 %v1585
  %1607 = vmatprep.subr.bf16.mxu0 0
  %1608 = vmatpush1.bf16.msra.mxu0 %v1586
  %1609 = vmatprep.subr.bf16.mxu0 0
  %1610 = vmatpush1.bf16.msra.mxu0 %v1587
  %1611 = vmatprep.subr.bf16.mxu0 0
  %1612 = vmatpush1.bf16.msra.mxu0 %v1588
  %1613 = vmatprep.subr.bf16.mxu0 0
  %1614 = vmatpush1.bf16.msra.mxu0 0
  %1615 = vmatprep.subr.bf16.mxu0 0
  %1616 = vmatpush1.bf16.msra.mxu0 0
  %1617 = vmatprep.subr.bf16.mxu0 0
  %1618 = vmatpush1.bf16.msra.mxu0 0
  %1619 = vmatprep.subr.bf16.mxu0 0
  %1620 = vmatpush1.bf16.msra.mxu0 0
  %1621 = vmatprep.subr.bf16.mxu0 0
  %1622 = vmatpush1.bf16.msra.mxu0 0
  %1623 = vmatprep.subr.bf16.mxu0 0
  %1624 = vmatpush1.bf16.msra.mxu0 0
  %1625 = vmatprep.subr.bf16.mxu0 0
  %1626 = vmatpush1.bf16.msra.mxu0 0
  %1627 = vmatprep.subr.bf16.mxu0 0
  %1628 = vmatpush1.bf16.msra.mxu0 0
  %1629 = vmatprep.mubr.bf16.mxu0 0
  %1630 = vmatmul.mubr.bf16.gmra.mrb[0].mxu0 %v1416
  %v1631 = vpop.f32.mrb[0].mxu0
  %v1632 = vadd.f32 %v1544, %v1631
  %v1633 = vpop.f32.mrb[0].mxu0
  %v1634 = vpop.f32.mrb[0].mxu0
  %v1635 = vpop.f32.mrb[0].mxu0
  %1636 = vdwg.mxu0
  %v1637 = vld [vmem:[%s1415] sm:$0xe]
  %v1638 = vld [vmem:[%s1415 + $0x4] sm:$0x1]
  %v1639 = vld [vmem:[%s239] sm:$0xf]
  %v1640 = vld [vmem:[%s239 + $0x4] sm:$0xf]
  %v1641 = vld [vmem:[%s239 + $0x8] sm:$0xf]
  %v1642 = vld [vmem:[%s239 + $0xc] sm:$0xf]
  %v1643 = vld [vmem:[%s239 + $0x10] sm:$0xf]
  %v1644 = vld [vmem:[%s239 + $0x14] sm:$0xf]
  %v1645 = vld [vmem:[%s239 + $0x18] sm:$0xf]
  %v1646 = vld [vmem:[%s239 + $0x1c] sm:$0xf]
  %v1647 = vld [vmem:[%s239 + $0x20] sm:$0xf]
  %v1648 = vld [vmem:[%s239 + $0x24] sm:$0xf]
  %v1649 = vld [vmem:[%s239 + $0x28] sm:$0xf]
  %v1650 = vld [vmem:[%s239 + $0x2c] sm:$0xf]
  %v1651 = vld [vmem:[%s239 + $0x30] sm:$0xf]
  %v1652 = vld [vmem:[%s239 + $0x34] sm:$0xf]
  %v1653 = vld [vmem:[%s239 + $0x38] sm:$0xf]
  %v1654 = vld [vmem:[%s239 + $0x3c] sm:$0xf]
  %v1657 = vunpack.c.l.b16 %v1637
  %v1658 = vunpack.c.l.b16 %v1638
  %v1659 = vpack.c.b16 %v1658, %v1657
  %v1661 = vshrl.u32 %v1659, 16
  %v1663 = vrot.slane %v1661, 1
  %v1664 = vshll.u32 %v1659, 16
  %v1666 = vrot.slane %v1664, 2
  %v1667 = vor.u32 %v1663, %v1666
  %v1685 = vunpack.c.l.b16 %v1639
  %v1686 = vunpack.c.l.b16 %v1640
  %v1687 = vunpack.c.l.b16 %v1641
  %v1688 = vunpack.c.l.b16 %v1642
  %v1689 = vunpack.c.l.b16 %v1643
  %v1690 = vunpack.c.l.b16 %v1644
  %v1691 = vunpack.c.l.b16 %v1645
  %v1692 = vunpack.c.l.b16 %v1646
  %v1693 = vunpack.c.l.b16 %v1647
  %v1694 = vunpack.c.l.b16 %v1648
  %v1695 = vunpack.c.l.b16 %v1649
  %v1696 = vunpack.c.l.b16 %v1650
  %v1697 = vunpack.c.l.b16 %v1651
  %v1698 = vunpack.c.l.b16 %v1652
  %v1699 = vunpack.c.l.b16 %v1653
  %v1700 = vunpack.c.l.b16 %v1654
  %v1701 = vpack.c.b16 %v1686, %v1685
  %v1702 = vpack.c.b16 %v1688, %v1687
  %v1703 = vpack.c.b16 %v1690, %v1689
  %v1704 = vpack.c.b16 %v1692, %v1691
  %v1705 = vpack.c.b16 %v1694, %v1693
  %v1706 = vpack.c.b16 %v1696, %v1695
  %v1707 = vpack.c.b16 %v1698, %v1697
  %v1708 = vpack.c.b16 %v1700, %v1699
  %1717 = vmatprep.subr.bf16.mxu0 0
  %1718 = vmatpush1.bf16.msra.mxu0 %v1701
  %1719 = vmatprep.subr.bf16.mxu0 0
  %1720 = vmatpush1.bf16.msra.mxu0 %v1702
  %1721 = vmatprep.subr.bf16.mxu0 0
  %1722 = vmatpush1.bf16.msra.mxu0 %v1703
  %1723 = vmatprep.subr.bf16.mxu0 0
  %1724 = vmatpush1.bf16.msra.mxu0 %v1704
  %1725 = vmatprep.subr.bf16.mxu0 0
  %1726 = vmatpush1.bf16.msra.mxu0 %v1705
  %1727 = vmatprep.subr.bf16.mxu0 0
  %1728 = vmatpush1.bf16.msra.mxu0 %v1706
  %1729 = vmatprep.subr.bf16.mxu0 0
  %1730 = vmatpush1.bf16.msra.mxu0 %v1707
  %1731 = vmatprep.subr.bf16.mxu0 0
  %1732 = vmatpush1.bf16.msra.mxu0 %v1708
  %1733 = vmatprep.subr.bf16.mxu0 0
  %1734 = vmatpush1.bf16.msra.mxu0 0
  %1735 = vmatprep.subr.bf16.mxu0 0
  %1736 = vmatpush1.bf16.msra.mxu0 0
  %1737 = vmatprep.subr.bf16.mxu0 0
  %1738 = vmatpush1.bf16.msra.mxu0 0
  %1739 = vmatprep.subr.bf16.mxu0 0
  %1740 = vmatpush1.bf16.msra.mxu0 0
  %1741 = vmatprep.subr.bf16.mxu0 0
  %1742 = vmatpush1.bf16.msra.mxu0 0
  %1743 = vmatprep.subr.bf16.mxu0 0
  %1744 = vmatpush1.bf16.msra.mxu0 0
  %1745 = vmatprep.subr.bf16.mxu0 0
  %1746 = vmatpush1.bf16.msra.mxu0 0
  %1747 = vmatprep.subr.bf16.mxu0 0
  %1748 = vmatpush1.bf16.msra.mxu0 0
  %1749 = vmatprep.mubr.bf16.mxu0 0
  %1750 = vmatmul.mubr.bf16.gmra.mrb[0].mxu0 %v1667
  %v1751 = vpop.f32.mrb[0].mxu0
  %v1752 = vadd.f32 0.0, %v1751
  %v1753 = vpop.f32.mrb[0].mxu0
  %v1754 = vpop.f32.mrb[0].mxu0
  %v1755 = vpop.f32.mrb[0].mxu0
  %1756 = vdwg.mxu0
  %v1757 = vadd.f32 %v1632, %v1752
  %v1758 = vld [vmem:[%s1415] sm:$0xc]
  %v1759 = vld [vmem:[%s360] sm:$0xf]
  %v1760 = vld [vmem:[%s360 + $0x4] sm:$0xf]
  %v1761 = vld [vmem:[%s360 + $0x8] sm:$0xf]
  %v1762 = vld [vmem:[%s360 + $0xc] sm:$0xf]
  %v1763 = vld [vmem:[%s360 + $0x10] sm:$0xf]
  %v1764 = vld [vmem:[%s360 + $0x14] sm:$0xf]
  %v1765 = vld [vmem:[%s360 + $0x18] sm:$0xf]
  %v1766 = vld [vmem:[%s360 + $0x1c] sm:$0xf]
  %v1767 = vld [vmem:[%s360 + $0x20] sm:$0xf]
  %v1768 = vld [vmem:[%s360 + $0x24] sm:$0xf]
  %v1769 = vld [vmem:[%s360 + $0x28] sm:$0xf]
  %v1770 = vld [vmem:[%s360 + $0x2c] sm:$0xf]
  %v1771 = vld [vmem:[%s360 + $0x30] sm:$0xf]
  %v1772 = vld [vmem:[%s360 + $0x34] sm:$0xf]
  %v1773 = vld [vmem:[%s360 + $0x38] sm:$0xf]
  %v1774 = vld [vmem:[%s360 + $0x3c] sm:$0xf]
  %v1776 = vunpack.c.l.b16 %v1758
  %v1777 = vpack.c.b16 %v1658, %v1776
  %v1778 = vrot.slane %v1777, 2
  %v1796 = vunpack.c.l.b16 %v1759
  %v1797 = vunpack.c.l.b16 %v1760
  %v1798 = vunpack.c.l.b16 %v1761
  %v1799 = vunpack.c.l.b16 %v1762
  %v1800 = vunpack.c.l.b16 %v1763
  %v1801 = vunpack.c.l.b16 %v1764
  %v1802 = vunpack.c.l.b16 %v1765
  %v1803 = vunpack.c.l.b16 %v1766
  %v1804 = vunpack.c.l.b16 %v1767
  %v1805 = vunpack.c.l.b16 %v1768
  %v1806 = vunpack.c.l.b16 %v1769
  %v1807 = vunpack.c.l.b16 %v1770
  %v1808 = vunpack.c.l.b16 %v1771
  %v1809 = vunpack.c.l.b16 %v1772
  %v1810 = vunpack.c.l.b16 %v1773
  %v1811 = vunpack.c.l.b16 %v1774
  %v1812 = vpack.c.b16 %v1797, %v1796
  %v1813 = vpack.c.b16 %v1799, %v1798
  %v1814 = vpack.c.b16 %v1801, %v1800
  %v1815 = vpack.c.b16 %v1803, %v1802
  %v1816 = vpack.c.b16 %v1805, %v1804
  %v1817 = vpack.c.b16 %v1807, %v1806
  %v1818 = vpack.c.b16 %v1809, %v1808
  %v1819 = vpack.c.b16 %v1811, %v1810
  %1828 = vmatprep.subr.bf16.mxu0 0
  %1829 = vmatpush1.bf16.msra.mxu0 %v1812
  %1830 = vmatprep.subr.bf16.mxu0 0
  %1831 = vmatpush1.bf16.msra.mxu0 %v1813
  %1832 = vmatprep.subr.bf16.mxu0 0
  %1833 = vmatpush1.bf16.msra.mxu0 %v1814
  %1834 = vmatprep.subr.bf16.mxu0 0
  %1835 = vmatpush1.bf16.msra.mxu0 %v1815
  %1836 = vmatprep.subr.bf16.mxu0 0
  %1837 = vmatpush1.bf16.msra.mxu0 %v1816
  %1838 = vmatprep.subr.bf16.mxu0 0
  %1839 = vmatpush1.bf16.msra.mxu0 %v1817
  %1840 = vmatprep.subr.bf16.mxu0 0
  %1841 = vmatpush1.bf16.msra.mxu0 %v1818
  %1842 = vmatprep.subr.bf16.mxu0 0
  %1843 = vmatpush1.bf16.msra.mxu0 %v1819
  %1844 = vmatprep.subr.bf16.mxu0 0
  %1845 = vmatpush1.bf16.msra.mxu0 0
  %1846 = vmatprep.subr.bf16.mxu0 0
  %1847 = vmatpush1.bf16.msra.mxu0 0
  %1848 = vmatprep.subr.bf16.mxu0 0
  %1849 = vmatpush1.bf16.msra.mxu0 0
  %1850 = vmatprep.subr.bf16.mxu0 0
  %1851 = vmatpush1.bf16.msra.mxu0 0
  %1852 = vmatprep.subr.bf16.mxu0 0
  %1853 = vmatpush1.bf16.msra.mxu0 0
  %1854 = vmatprep.subr.bf16.mxu0 0
  %1855 = vmatpush1.bf16.msra.mxu0 0
  %1856 = vmatprep.subr.bf16.mxu0 0
  %1857 = vmatpush1.bf16.msra.mxu0 0
  %1858 = vmatprep.subr.bf16.mxu0 0
  %1859 = vmatpush1.bf16.msra.mxu0 0
  %1860 = vmatprep.mubr.bf16.mxu0 0
  %1861 = vmatmul.mubr.bf16.gmra.mrb[0].mxu0 %v1778
  %v1862 = vpop.f32.mrb[0].mxu0
  %v1863 = vadd.f32 0.0, %v1862
  %v1864 = vpop.f32.mrb[0].mxu0
  %v1865 = vpop.f32.mrb[0].mxu0
  %v1866 = vpop.f32.mrb[0].mxu0
  %1867 = vdwg.mxu0
  %v1868 = vadd.f32 %v1757, %v1863
  %v1869 = vld [vmem:[%s2] sm:$0x1]
  %v1871 = vlaneseq
  %v1872 = vshrl.u32 %v1871, 7
  %v1873 = vsub.s32 0, %v1872
  %v1874 = vrot.slane %v1869, %v1873
  %v1876 = vadd.f32 %v1868, %v1874
  %v1877 = vmax.f32 %v1876, 0.0
  %v1878 = vpack.c.bf16 %v1877, %v1877
  %s1879 = scalar_lea.vmem %s3, 12
  %1880 = vst.msk [vmem:[%s1879] sm:$0x7] %vm481, %v1878
  // Predicated region
  $region14: #{contrastive_qf_forward.8} parent=0 // pred_check
    _
  $region15: #{contrastive_qf_forward.8} parent=0 // pred_check_branch
    %1882 = sbr.rel (0) target = $region17
  $region16: #{contrastive_qf_forward.8} parent=0 // pred_region
    _
  $region17: #{contrastive_qf_forward.8} parent=0 // pred_fallthru
    _
  // Predicated region
  $region18: #{contrastive_qf_forward.8} parent=0 // pred_check
    _
  $region19: #{contrastive_qf_forward.8} parent=0 // pred_check_branch
    %1884 = sbr.rel (0) target = $region21
  $region20: #{contrastive_qf_forward.8} parent=0 // pred_region
    _
  $region21: #{contrastive_qf_forward.8} parent=0 // pred_fallthru
    _

// kernel: contrastive_qf_forward.9
$region0: #{contrastive_qf_forward.9}
  #allocation0 [shape = 'u32[]', space=smem, size = 0x4, offset = 0x4, fixed_abs, tag = 'smem constant byte address 0x4 - core index']
  #allocation1 [shape = 'u32[144,128]{1,0:T(1,128)}', space=vmem, size = 0x12000, scoped, tag = 'internal scratch']
  %s0 = inlined_call_operand.vmem [shape: bf16[4,24,64], index: 0, kind: input, shape index: {}]
  %s1 = inlined_call_operand.vmem [shape: bf16[9,64,64], index: 1, kind: input, shape index: {}]
  %s2 = inlined_call_operand.vmem [shape: f32[1,64], index: 2, kind: input, shape index: {}]
  %s3 = inlined_call_operand.vmem [shape: bf16[4,8,64], index: 3, kind: output, shape index: {}]
  %s4 = sld [smem:[#allocation0]]
  $region22: #{contrastive_qf_forward.9} parent=0
    _
  %s6 = ssub.s32 1, %s4
  %s7 = scalar_select 0, %s6, %s4
  // Predicated region
  $region2: #{contrastive_qf_forward.9} parent=0 // pred_check
    _
  $region3: #{contrastive_qf_forward.9} parent=0 // pred_check_branch
    %9 = sbr.rel (0) target = $region5
  $region4: #{contrastive_qf_forward.9} parent=0 // pred_region
    _
  $region5: #{contrastive_qf_forward.9} parent=0 // pred_fallthru
    _
  // Predicated region
  $region6: #{contrastive_qf_forward.9} parent=0 // pred_check
    _
  $region7: #{contrastive_qf_forward.9} parent=0 // pred_check_branch
    %11 = sbr.rel (0) target = $region9
  $region8: #{contrastive_qf_forward.9} parent=0 // pred_region
    _
  $region9: #{contrastive_qf_forward.9} parent=0 // pred_fallthru
    _
  // Predicated region
  $region10: #{contrastive_qf_forward.9} parent=0 // pred_check
    _
  $region11: #{contrastive_qf_forward.9} parent=0 // pred_check_branch
    %13 = sbr.rel (0) target = $region13
  $region12: #{contrastive_qf_forward.9} parent=0 // pred_region
    _
  $region13: #{contrastive_qf_forward.9} parent=0 // pred_fallthru
    _
  %v15 = vld [vmem:[%s0] sm:$0xf]
  %v16 = vld [vmem:[%s1] sm:$0xf]
  %v17 = vld [vmem:[%s1 + $0x4] sm:$0xf]
  %v18 = vld [vmem:[%s1 + $0x8] sm:$0xf]
  %v19 = vld [vmem:[%s1 + $0xc] sm:$0xf]
  %v20 = vld [vmem:[%s1 + $0x10] sm:$0xf]
  %v21 = vld [vmem:[%s1 + $0x14] sm:$0xf]
  %v22 = vld [vmem:[%s1 + $0x18] sm:$0xf]
  %v23 = vld [vmem:[%s1 + $0x1c] sm:$0xf]
  %v24 = vld [vmem:[%s0 + $0x4] sm:$0x1]
  %s25 = scalar_lea.vmem %s1, 32
  %v26 = vld [vmem:[%s25] sm:$0xf]
  %v27 = vld [vmem:[%s25 + $0x4] sm:$0xf]
  %v28 = vld [vmem:[%s25 + $0x8] sm:$0xf]
  %v29 = vld [vmem:[%s25 + $0xc] sm:$0xf]
  %v30 = vld [vmem:[%s25 + $0x10] sm:$0xf]
  %v31 = vld [vmem:[%s25 + $0x14] sm:$0xf]
  %v32 = vld [vmem:[%s25 + $0x18] sm:$0xf]
  %v33 = vld [vmem:[%s25 + $0x1c] sm:$0xf]
  %v36 = vunpack.c.l.b16 %v15
  %v37 = vunpack.c.l.b16 %v24
  %v38 = vpack.c.b16 %v37, %v36
  %v40 = vshrl.u32 %v38, 16
  %v42 = vshll.u32 %v38, 16
  %v44 = vrot.slane %v42, 1
  %v45 = vor.u32 %v40, %v44
  %v54 = vunpack.c.l.b16 %v26
  %v55 = vunpack.c.l.b16 %v27
  %v56 = vunpack.c.l.b16 %v28
  %v57 = vunpack.c.l.b16 %v29
  %v58 = vunpack.c.l.b16 %v30
  %v59 = vunpack.c.l.b16 %v31
  %v60 = vunpack.c.l.b16 %v32
  %v61 = vunpack.c.l.b16 %v33
  %v62 = vpack.c.b16 %v55, %v54
  %v63 = vpack.c.b16 %v57, %v56
  %v64 = vpack.c.b16 %v59, %v58
  %v65 = vpack.c.b16 %v61, %v60
  %vm70 = vcmask 523264
  %v72 = vsel %vm70, %v45, 0
  %74 = vmatprep.subr.bf16.mxu0 0
  %75 = vmatpush1.bf16.msra.mxu0 %v62
  %76 = vmatprep.subr.bf16.mxu0 0
  %77 = vmatpush1.bf16.msra.mxu0 %v63
  %78 = vmatprep.subr.bf16.mxu0 0
  %79 = vmatpush1.bf16.msra.mxu0 %v64
  %80 = vmatprep.subr.bf16.mxu0 0
  %81 = vmatpush1.bf16.msra.mxu0 %v65
  %82 = vmatprep.subr.bf16.mxu0 0
  %83 = vmatpush1.bf16.msra.mxu0 0
  %84 = vmatprep.subr.bf16.mxu0 0
  %85 = vmatpush1.bf16.msra.mxu0 0
  %86 = vmatprep.subr.bf16.mxu0 0
  %87 = vmatpush1.bf16.msra.mxu0 0
  %88 = vmatprep.subr.bf16.mxu0 0
  %89 = vmatpush1.bf16.msra.mxu0 0
  %90 = vmatprep.subr.bf16.mxu0 0
  %91 = vmatpush1.bf16.msra.mxu0 0
  %92 = vmatprep.subr.bf16.mxu0 0
  %93 = vmatpush1.bf16.msra.mxu0 0
  %94 = vmatprep.subr.bf16.mxu0 0
  %95 = vmatpush1.bf16.msra.mxu0 0
  %96 = vmatprep.subr.bf16.mxu0 0
  %97 = vmatpush1.bf16.msra.mxu0 0
  %98 = vmatprep.subr.bf16.mxu0 0
  %99 = vmatpush1.bf16.msra.mxu0 0
  %100 = vmatprep.subr.bf16.mxu0 0
  %101 = vmatpush1.bf16.msra.mxu0 0
  %102 = vmatprep.subr.bf16.mxu0 0
  %103 = vmatpush1.bf16.msra.mxu0 0
  %104 = vmatprep.subr.bf16.mxu0 0
  %105 = vmatpush1.bf16.msra.mxu0 0
  %106 = vmatprep.mubr.bf16.mxu0 0
  %107 = vmatmul.mubr.bf16.gmra.mrb[0].mxu0 %v72
  %v108 = vpop.f32.mrb[0].mxu0
  %v109 = vadd.f32 0.0, %v108
  %v110 = vpop.f32.mrb[0].mxu0
  %v111 = vpop.f32.mrb[0].mxu0
  %v112 = vpop.f32.mrb[0].mxu0
  %113 = vdwg.mxu0
  %v122 = vunpack.c.l.b16 %v16
  %v123 = vunpack.c.l.b16 %v17
  %v124 = vunpack.c.l.b16 %v18
  %v125 = vunpack.c.l.b16 %v19
  %v126 = vunpack.c.l.b16 %v20
  %v127 = vunpack.c.l.b16 %v21
  %v128 = vunpack.c.l.b16 %v22
  %v129 = vunpack.c.l.b16 %v23
  %v130 = vpack.c.b16 %v123, %v122
  %v131 = vpack.c.b16 %v125, %v124
  %v132 = vpack.c.b16 %v127, %v126
  %v133 = vpack.c.b16 %v129, %v128
  %v139 = vsel %vm70, %v15, 0
  %141 = vmatprep.subr.bf16.mxu0 0
  %142 = vmatpush1.bf16.msra.mxu0 %v130
  %143 = vmatprep.subr.bf16.mxu0 0
  %144 = vmatpush1.bf16.msra.mxu0 %v131
  %145 = vmatprep.subr.bf16.mxu0 0
  %146 = vmatpush1.bf16.msra.mxu0 %v132
  %147 = vmatprep.subr.bf16.mxu0 0
  %148 = vmatpush1.bf16.msra.mxu0 %v133
  %149 = vmatprep.subr.bf16.mxu0 0
  %150 = vmatpush1.bf16.msra.mxu0 0
  %151 = vmatprep.subr.bf16.mxu0 0
  %152 = vmatpush1.bf16.msra.mxu0 0
  %153 = vmatprep.subr.bf16.mxu0 0
  %154 = vmatpush1.bf16.msra.mxu0 0
  %155 = vmatprep.subr.bf16.mxu0 0
  %156 = vmatpush1.bf16.msra.mxu0 0
  %157 = vmatprep.subr.bf16.mxu0 0
  %158 = vmatpush1.bf16.msra.mxu0 0
  %159 = vmatprep.subr.bf16.mxu0 0
  %160 = vmatpush1.bf16.msra.mxu0 0
  %161 = vmatprep.subr.bf16.mxu0 0
  %162 = vmatpush1.bf16.msra.mxu0 0
  %163 = vmatprep.subr.bf16.mxu0 0
  %164 = vmatpush1.bf16.msra.mxu0 0
  %165 = vmatprep.subr.bf16.mxu0 0
  %166 = vmatpush1.bf16.msra.mxu0 0
  %167 = vmatprep.subr.bf16.mxu0 0
  %168 = vmatpush1.bf16.msra.mxu0 0
  %169 = vmatprep.subr.bf16.mxu0 0
  %170 = vmatpush1.bf16.msra.mxu0 0
  %171 = vmatprep.subr.bf16.mxu0 0
  %172 = vmatpush1.bf16.msra.mxu0 0
  %173 = vmatprep.mubr.bf16.mxu0 0
  %174 = vmatmul.mubr.bf16.gmra.mrb[0].mxu0 %v139
  %v175 = vpop.f32.mrb[0].mxu0
  %v176 = vadd.f32 %v109, %v175
  %v177 = vpop.f32.mrb[0].mxu0
  %v178 = vpop.f32.mrb[0].mxu0
  %v179 = vpop.f32.mrb[0].mxu0
  %180 = vdwg.mxu0
  %v181 = vld [vmem:[%s0] sm:$0xe]
  %s182 = scalar_lea.vmem %s1, 64
  %v183 = vld [vmem:[%s182] sm:$0xf]
  %v184 = vld [vmem:[%s182 + $0x4] sm:$0xf]
  %v185 = vld [vmem:[%s182 + $0x8] sm:$0xf]
  %v186 = vld [vmem:[%s182 + $0xc] sm:$0xf]
  %v187 = vld [vmem:[%s182 + $0x10] sm:$0xf]
  %v188 = vld [vmem:[%s182 + $0x14] sm:$0xf]
  %v189 = vld [vmem:[%s182 + $0x18] sm:$0xf]
  %v190 = vld [vmem:[%s182 + $0x1c] sm:$0xf]
  %v192 = vunpack.c.l.b16 %v181
  %v193 = vpack.c.b16 %v37, %v192
  %v194 = vrot.slane %v193, 1
  %v203 = vunpack.c.l.b16 %v183
  %v204 = vunpack.c.l.b16 %v184
  %v205 = vunpack.c.l.b16 %v185
  %v206 = vunpack.c.l.b16 %v186
  %v207 = vunpack.c.l.b16 %v187
  %v208 = vunpack.c.l.b16 %v188
  %v209 = vunpack.c.l.b16 %v189
  %v210 = vunpack.c.l.b16 %v190
  %v211 = vpack.c.b16 %v204, %v203
  %v212 = vpack.c.b16 %v206, %v205
  %v213 = vpack.c.b16 %v208, %v207
  %v214 = vpack.c.b16 %v210, %v209
  %v220 = vsel %vm70, %v194, 0
  %222 = vmatprep.subr.bf16.mxu0 0
  %223 = vmatpush1.bf16.msra.mxu0 %v211
  %224 = vmatprep.subr.bf16.mxu0 0
  %225 = vmatpush1.bf16.msra.mxu0 %v212
  %226 = vmatprep.subr.bf16.mxu0 0
  %227 = vmatpush1.bf16.msra.mxu0 %v213
  %228 = vmatprep.subr.bf16.mxu0 0
  %229 = vmatpush1.bf16.msra.mxu0 %v214
  %230 = vmatprep.subr.bf16.mxu0 0
  %231 = vmatpush1.bf16.msra.mxu0 0
  %232 = vmatprep.subr.bf16.mxu0 0
  %233 = vmatpush1.bf16.msra.mxu0 0
  %234 = vmatprep.subr.bf16.mxu0 0
  %235 = vmatpush1.bf16.msra.mxu0 0
  %236 = vmatprep.subr.bf16.mxu0 0
  %237 = vmatpush1.bf16.msra.mxu0 0
  %238 = vmatprep.subr.bf16.mxu0 0
  %239 = vmatpush1.bf16.msra.mxu0 0
  %240 = vmatprep.subr.bf16.mxu0 0
  %241 = vmatpush1.bf16.msra.mxu0 0
  %242 = vmatprep.subr.bf16.mxu0 0
  %243 = vmatpush1.bf16.msra.mxu0 0
  %244 = vmatprep.subr.bf16.mxu0 0
  %245 = vmatpush1.bf16.msra.mxu0 0
  %246 = vmatprep.subr.bf16.mxu0 0
  %247 = vmatpush1.bf16.msra.mxu0 0
  %248 = vmatprep.subr.bf16.mxu0 0
  %249 = vmatpush1.bf16.msra.mxu0 0
  %250 = vmatprep.subr.bf16.mxu0 0
  %251 = vmatpush1.bf16.msra.mxu0 0
  %252 = vmatprep.subr.bf16.mxu0 0
  %253 = vmatpush1.bf16.msra.mxu0 0
  %254 = vmatprep.mubr.bf16.mxu0 0
  %255 = vmatmul.mubr.bf16.gmra.mrb[0].mxu0 %v220
  %v256 = vpop.f32.mrb[0].mxu0
  %v257 = vadd.f32 0.0, %v256
  %v258 = vpop.f32.mrb[0].mxu0
  %v259 = vpop.f32.mrb[0].mxu0
  %v260 = vpop.f32.mrb[0].mxu0
  %261 = vdwg.mxu0
  %v262 = vadd.f32 %v176, %v257
  %v263 = vld [vmem:[%s0] sm:$0xc]
  %v264 = vld [vmem:[%s0 + $0x4] sm:$0x3]
  %s265 = scalar_lea.vmem %s1, 96
  %v266 = vld [vmem:[%s265] sm:$0xf]
  %v267 = vld [vmem:[%s265 + $0x4] sm:$0xf]
  %v268 = vld [vmem:[%s265 + $0x8] sm:$0xf]
  %v269 = vld [vmem:[%s265 + $0xc] sm:$0xf]
  %v270 = vld [vmem:[%s265 + $0x10] sm:$0xf]
  %v271 = vld [vmem:[%s265 + $0x14] sm:$0xf]
  %v272 = vld [vmem:[%s265 + $0x18] sm:$0xf]
  %v273 = vld [vmem:[%s265 + $0x1c] sm:$0xf]
  %v276 = vunpack.c.l.b16 %v263
  %v277 = vunpack.c.l.b16 %v264
  %v278 = vpack.c.b16 %v277, %v276
  %v279 = vrot.slane %v278, 2
  %v288 = vunpack.c.l.b16 %v266
  %v289 = vunpack.c.l.b16 %v267
  %v290 = vunpack.c.l.b16 %v268
  %v291 = vunpack.c.l.b16 %v269
  %v292 = vunpack.c.l.b16 %v270
  %v293 = vunpack.c.l.b16 %v271
  %v294 = vunpack.c.l.b16 %v272
  %v295 = vunpack.c.l.b16 %v273
  %v296 = vpack.c.b16 %v289, %v288
  %v297 = vpack.c.b16 %v291, %v290
  %v298 = vpack.c.b16 %v293, %v292
  %v299 = vpack.c.b16 %v295, %v294
  %v305 = vsel %vm70, %v279, 0
  %307 = vmatprep.subr.bf16.mxu0 0
  %308 = vmatpush1.bf16.msra.mxu0 %v296
  %309 = vmatprep.subr.bf16.mxu0 0
  %310 = vmatpush1.bf16.msra.mxu0 %v297
  %311 = vmatprep.subr.bf16.mxu0 0
  %312 = vmatpush1.bf16.msra.mxu0 %v298
  %313 = vmatprep.subr.bf16.mxu0 0
  %314 = vmatpush1.bf16.msra.mxu0 %v299
  %315 = vmatprep.subr.bf16.mxu0 0
  %316 = vmatpush1.bf16.msra.mxu0 0
  %317 = vmatprep.subr.bf16.mxu0 0
  %318 = vmatpush1.bf16.msra.mxu0 0
  %319 = vmatprep.subr.bf16.mxu0 0
  %320 = vmatpush1.bf16.msra.mxu0 0
  %321 = vmatprep.subr.bf16.mxu0 0
  %322 = vmatpush1.bf16.msra.mxu0 0
  %323 = vmatprep.subr.bf16.mxu0 0
  %324 = vmatpush1.bf16.msra.mxu0 0
  %325 = vmatprep.subr.bf16.mxu0 0
  %326 = vmatpush1.bf16.msra.mxu0 0
  %327 = vmatprep.subr.bf16.mxu0 0
  %328 = vmatpush1.bf16.msra.mxu0 0
  %329 = vmatprep.subr.bf16.mxu0 0
  %330 = vmatpush1.bf16.msra.mxu0 0
  %331 = vmatprep.subr.bf16.mxu0 0
  %332 = vmatpush1.bf16.msra.mxu0 0
  %333 = vmatprep.subr.bf16.mxu0 0
  %334 = vmatpush1.bf16.msra.mxu0 0
  %335 = vmatprep.subr.bf16.mxu0 0
  %336 = vmatpush1.bf16.msra.mxu0 0
  %337 = vmatprep.subr.bf16.mxu0 0
  %338 = vmatpush1.bf16.msra.mxu0 0
  %339 = vmatprep.mubr.bf16.mxu0 0
  %340 = vmatmul.mubr.bf16.gmra.mrb[0].mxu0 %v305
  %v341 = vpop.f32.mrb[0].mxu0
  %v342 = vadd.f32 0.0, %v341
  %v343 = vpop.f32.mrb[0].mxu0
  %v344 = vpop.f32.mrb[0].mxu0
  %v345 = vpop.f32.mrb[0].mxu0
  %346 = vdwg.mxu0
  %v347 = vadd.f32 %v262, %v342
  %v348 = vld [vmem:[%s0 + $0x4] sm:$0x7]
  %s349 = scalar_lea.vmem %s1, 128
  %v350 = vld [vmem:[%s349] sm:$0xf]
  %v351 = vld [vmem:[%s349 + $0x4] sm:$0xf]
  %v352 = vld [vmem:[%s349 + $0x8] sm:$0xf]
  %v353 = vld [vmem:[%s349 + $0xc] sm:$0xf]
  %v354 = vld [vmem:[%s349 + $0x10] sm:$0xf]
  %v355 = vld [vmem:[%s349 + $0x14] sm:$0xf]
  %v356 = vld [vmem:[%s349 + $0x18] sm:$0xf]
  %v357 = vld [vmem:[%s349 + $0x1c] sm:$0xf]
  %v359 = vunpack.c.l.b16 %v348
  %v360 = vpack.c.b16 %v359, %v276
  %v362 = vshrl.u32 %v360, 16
  %v364 = vrot.slane %v362, 2
  %v365 = vshll.u32 %v360, 16
  %v367 = vrot.slane %v365, 3
  %v368 = vor.u32 %v364, %v367
  %v377 = vunpack.c.l.b16 %v350
  %v378 = vunpack.c.l.b16 %v351
  %v379 = vunpack.c.l.b16 %v352
  %v380 = vunpack.c.l.b16 %v353
  %v381 = vunpack.c.l.b16 %v354
  %v382 = vunpack.c.l.b16 %v355
  %v383 = vunpack.c.l.b16 %v356
  %v384 = vunpack.c.l.b16 %v357
  %v385 = vpack.c.b16 %v378, %v377
  %v386 = vpack.c.b16 %v380, %v379
  %v387 = vpack.c.b16 %v382, %v381
  %v388 = vpack.c.b16 %v384, %v383
  %v394 = vsel %vm70, %v368, 0
  %396 = vmatprep.subr.bf16.mxu0 0
  %397 = vmatpush1.bf16.msra.mxu0 %v385
  %398 = vmatprep.subr.bf16.mxu0 0
  %399 = vmatpush1.bf16.msra.mxu0 %v386
  %400 = vmatprep.subr.bf16.mxu0 0
  %401 = vmatpush1.bf16.msra.mxu0 %v387
  %402 = vmatprep.subr.bf16.mxu0 0
  %403 = vmatpush1.bf16.msra.mxu0 %v388
  %404 = vmatprep.subr.bf16.mxu0 0
  %405 = vmatpush1.bf16.msra.mxu0 0
  %406 = vmatprep.subr.bf16.mxu0 0
  %407 = vmatpush1.bf16.msra.mxu0 0
  %408 = vmatprep.subr.bf16.mxu0 0
  %409 = vmatpush1.bf16.msra.mxu0 0
  %410 = vmatprep.subr.bf16.mxu0 0
  %411 = vmatpush1.bf16.msra.mxu0 0
  %412 = vmatprep.subr.bf16.mxu0 0
  %413 = vmatpush1.bf16.msra.mxu0 0
  %414 = vmatprep.subr.bf16.mxu0 0
  %415 = vmatpush1.bf16.msra.mxu0 0
  %416 = vmatprep.subr.bf16.mxu0 0
  %417 = vmatpush1.bf16.msra.mxu0 0
  %418 = vmatprep.subr.bf16.mxu0 0
  %419 = vmatpush1.bf16.msra.mxu0 0
  %420 = vmatprep.subr.bf16.mxu0 0
  %421 = vmatpush1.bf16.msra.mxu0 0
  %422 = vmatprep.subr.bf16.mxu0 0
  %423 = vmatpush1.bf16.msra.mxu0 0
  %424 = vmatprep.subr.bf16.mxu0 0
  %425 = vmatpush1.bf16.msra.mxu0 0
  %426 = vmatprep.subr.bf16.mxu0 0
  %427 = vmatpush1.bf16.msra.mxu0 0
  %428 = vmatprep.mubr.bf16.mxu0 0
  %429 = vmatmul.mubr.bf16.gmra.mrb[0].mxu0 %v394
  %v430 = vpop.f32.mrb[0].mxu0
  %v431 = vadd.f32 0.0, %v430
  %v432 = vpop.f32.mrb[0].mxu0
  %v433 = vpop.f32.mrb[0].mxu0
  %v434 = vpop.f32.mrb[0].mxu0
  %435 = vdwg.mxu0
  %v436 = vadd.f32 %v347, %v431
  %v437 = vld [vmem:[%s0] sm:$0x8]
  %s438 = scalar_lea.vmem %s1, 160
  %v439 = vld [vmem:[%s438] sm:$0xf]
  %v440 = vld [vmem:[%s438 + $0x4] sm:$0xf]
  %v441 = vld [vmem:[%s438 + $0x8] sm:$0xf]
  %v442 = vld [vmem:[%s438 + $0xc] sm:$0xf]
  %v443 = vld [vmem:[%s438 + $0x10] sm:$0xf]
  %v444 = vld [vmem:[%s438 + $0x14] sm:$0xf]
  %v445 = vld [vmem:[%s438 + $0x18] sm:$0xf]
  %v446 = vld [vmem:[%s438 + $0x1c] sm:$0xf]
  %v448 = vunpack.c.l.b16 %v437
  %v449 = vpack.c.b16 %v359, %v448
  %v450 = vrot.slane %v449, 3
  %v459 = vunpack.c.l.b16 %v439
  %v460 = vunpack.c.l.b16 %v440
  %v461 = vunpack.c.l.b16 %v441
  %v462 = vunpack.c.l.b16 %v442
  %v463 = vunpack.c.l.b16 %v443
  %v464 = vunpack.c.l.b16 %v444
  %v465 = vunpack.c.l.b16 %v445
  %v466 = vunpack.c.l.b16 %v446
  %v467 = vpack.c.b16 %v460, %v459
  %v468 = vpack.c.b16 %v462, %v461
  %v469 = vpack.c.b16 %v464, %v463
  %v470 = vpack.c.b16 %v466, %v465
  %v476 = vsel %vm70, %v450, 0
  %478 = vmatprep.subr.bf16.mxu0 0
  %479 = vmatpush1.bf16.msra.mxu0 %v467
  %480 = vmatprep.subr.bf16.mxu0 0
  %481 = vmatpush1.bf16.msra.mxu0 %v468
  %482 = vmatprep.subr.bf16.mxu0 0
  %483 = vmatpush1.bf16.msra.mxu0 %v469
  %484 = vmatprep.subr.bf16.mxu0 0
  %485 = vmatpush1.bf16.msra.mxu0 %v470
  %486 = vmatprep.subr.bf16.mxu0 0
  %487 = vmatpush1.bf16.msra.mxu0 0
  %488 = vmatprep.subr.bf16.mxu0 0
  %489 = vmatpush1.bf16.msra.mxu0 0
  %490 = vmatprep.subr.bf16.mxu0 0
  %491 = vmatpush1.bf16.msra.mxu0 0
  %492 = vmatprep.subr.bf16.mxu0 0
  %493 = vmatpush1.bf16.msra.mxu0 0
  %494 = vmatprep.subr.bf16.mxu0 0
  %495 = vmatpush1.bf16.msra.mxu0 0
  %496 = vmatprep.subr.bf16.mxu0 0
  %497 = vmatpush1.bf16.msra.mxu0 0
  %498 = vmatprep.subr.bf16.mxu0 0
  %499 = vmatpush1.bf16.msra.mxu0 0
  %500 = vmatprep.subr.bf16.mxu0 0
  %501 = vmatpush1.bf16.msra.mxu0 0
  %502 = vmatprep.subr.bf16.mxu0 0
  %503 = vmatpush1.bf16.msra.mxu0 0
  %504 = vmatprep.subr.bf16.mxu0 0
  %505 = vmatpush1.bf16.msra.mxu0 0
  %506 = vmatprep.subr.bf16.mxu0 0
  %507 = vmatpush1.bf16.msra.mxu0 0
  %508 = vmatprep.subr.bf16.mxu0 0
  %509 = vmatpush1.bf16.msra.mxu0 0
  %510 = vmatprep.mubr.bf16.mxu0 0
  %511 = vmatmul.mubr.bf16.gmra.mrb[0].mxu0 %v476
  %v512 = vpop.f32.mrb[0].mxu0
  %v513 = vadd.f32 0.0, %v512
  %v514 = vpop.f32.mrb[0].mxu0
  %v515 = vpop.f32.mrb[0].mxu0
  %v516 = vpop.f32.mrb[0].mxu0
  %517 = vdwg.mxu0
  %v518 = vadd.f32 %v436, %v513
  %v519 = vld [vmem:[%s0 + $0x4] sm:$0xf]
  %s520 = scalar_lea.vmem %s1, 192
  %v521 = vld [vmem:[%s520] sm:$0xf]
  %v522 = vld [vmem:[%s520 + $0x4] sm:$0xf]
  %v523 = vld [vmem:[%s520 + $0x8] sm:$0xf]
  %v524 = vld [vmem:[%s520 + $0xc] sm:$0xf]
  %v525 = vld [vmem:[%s520 + $0x10] sm:$0xf]
  %v526 = vld [vmem:[%s520 + $0x14] sm:$0xf]
  %v527 = vld [vmem:[%s520 + $0x18] sm:$0xf]
  %v528 = vld [vmem:[%s520 + $0x1c] sm:$0xf]
  %v537 = vunpack.c.l.b16 %v521
  %v538 = vunpack.c.l.b16 %v522
  %v539 = vunpack.c.l.b16 %v523
  %v540 = vunpack.c.l.b16 %v524
  %v541 = vunpack.c.l.b16 %v525
  %v542 = vunpack.c.l.b16 %v526
  %v543 = vunpack.c.l.b16 %v527
  %v544 = vunpack.c.l.b16 %v528
  %v545 = vpack.c.b16 %v538, %v537
  %v546 = vpack.c.b16 %v540, %v539
  %v547 = vpack.c.b16 %v542, %v541
  %v548 = vpack.c.b16 %v544, %v543
  %v554 = vsel %vm70, %v519, 0
  %556 = vmatprep.subr.bf16.mxu0 0
  %557 = vmatpush1.bf16.msra.mxu0 %v545
  %558 = vmatprep.subr.bf16.mxu0 0
  %559 = vmatpush1.bf16.msra.mxu0 %v546
  %560 = vmatprep.subr.bf16.mxu0 0
  %561 = vmatpush1.bf16.msra.mxu0 %v547
  %562 = vmatprep.subr.bf16.mxu0 0
  %563 = vmatpush1.bf16.msra.mxu0 %v548
  %564 = vmatprep.subr.bf16.mxu0 0
  %565 = vmatpush1.bf16.msra.mxu0 0
  %566 = vmatprep.subr.bf16.mxu0 0
  %567 = vmatpush1.bf16.msra.mxu0 0
  %568 = vmatprep.subr.bf16.mxu0 0
  %569 = vmatpush1.bf16.msra.mxu0 0
  %570 = vmatprep.subr.bf16.mxu0 0
  %571 = vmatpush1.bf16.msra.mxu0 0
  %572 = vmatprep.subr.bf16.mxu0 0
  %573 = vmatpush1.bf16.msra.mxu0 0
  %574 = vmatprep.subr.bf16.mxu0 0
  %575 = vmatpush1.bf16.msra.mxu0 0
  %576 = vmatprep.subr.bf16.mxu0 0
  %577 = vmatpush1.bf16.msra.mxu0 0
  %578 = vmatprep.subr.bf16.mxu0 0
  %579 = vmatpush1.bf16.msra.mxu0 0
  %580 = vmatprep.subr.bf16.mxu0 0
  %581 = vmatpush1.bf16.msra.mxu0 0
  %582 = vmatprep.subr.bf16.mxu0 0
  %583 = vmatpush1.bf16.msra.mxu0 0
  %584 = vmatprep.subr.bf16.mxu0 0
  %585 = vmatpush1.bf16.msra.mxu0 0
  %586 = vmatprep.subr.bf16.mxu0 0
  %587 = vmatpush1.bf16.msra.mxu0 0
  %588 = vmatprep.mubr.bf16.mxu0 0
  %589 = vmatmul.mubr.bf16.gmra.mrb[0].mxu0 %v554
  %v590 = vpop.f32.mrb[0].mxu0
  %v591 = vadd.f32 0.0, %v590
  %v592 = vpop.f32.mrb[0].mxu0
  %v593 = vpop.f32.mrb[0].mxu0
  %v594 = vpop.f32.mrb[0].mxu0
  %595 = vdwg.mxu0
  %v596 = vadd.f32 %v518, %v591
  %v597 = vld [vmem:[%s0 + $0x4] sm:$0xf]
  %v598 = vld [vmem:[%s0 + $0x8] sm:$0x1]
  %s599 = scalar_lea.vmem %s1, 224
  %v600 = vld [vmem:[%s599] sm:$0xf]
  %v601 = vld [vmem:[%s599 + $0x4] sm:$0xf]
  %v602 = vld [vmem:[%s599 + $0x8] sm:$0xf]
  %v603 = vld [vmem:[%s599 + $0xc] sm:$0xf]
  %v604 = vld [vmem:[%s599 + $0x10] sm:$0xf]
  %v605 = vld [vmem:[%s599 + $0x14] sm:$0xf]
  %v606 = vld [vmem:[%s599 + $0x18] sm:$0xf]
  %v607 = vld [vmem:[%s599 + $0x1c] sm:$0xf]
  %v610 = vunpack.c.l.b16 %v597
  %v611 = vunpack.c.l.b16 %v598
  %v612 = vpack.c.b16 %v611, %v610
  %v614 = vshrl.u32 %v612, 16
  %v616 = vshll.u32 %v612, 16
  %v618 = vrot.slane %v616, 1
  %v619 = vor.u32 %v614, %v618
  %v628 = vunpack.c.l.b16 %v600
  %v629 = vunpack.c.l.b16 %v601
  %v630 = vunpack.c.l.b16 %v602
  %v631 = vunpack.c.l.b16 %v603
  %v632 = vunpack.c.l.b16 %v604
  %v633 = vunpack.c.l.b16 %v605
  %v634 = vunpack.c.l.b16 %v606
  %v635 = vunpack.c.l.b16 %v607
  %v636 = vpack.c.b16 %v629, %v628
  %v637 = vpack.c.b16 %v631, %v630
  %v638 = vpack.c.b16 %v633, %v632
  %v639 = vpack.c.b16 %v635, %v634
  %v645 = vsel %vm70, %v619, 0
  %647 = vmatprep.subr.bf16.mxu0 0
  %648 = vmatpush1.bf16.msra.mxu0 %v636
  %649 = vmatprep.subr.bf16.mxu0 0
  %650 = vmatpush1.bf16.msra.mxu0 %v637
  %651 = vmatprep.subr.bf16.mxu0 0
  %652 = vmatpush1.bf16.msra.mxu0 %v638
  %653 = vmatprep.subr.bf16.mxu0 0
  %654 = vmatpush1.bf16.msra.mxu0 %v639
  %655 = vmatprep.subr.bf16.mxu0 0
  %656 = vmatpush1.bf16.msra.mxu0 0
  %657 = vmatprep.subr.bf16.mxu0 0
  %658 = vmatpush1.bf16.msra.mxu0 0
  %659 = vmatprep.subr.bf16.mxu0 0
  %660 = vmatpush1.bf16.msra.mxu0 0
  %661 = vmatprep.subr.bf16.mxu0 0
  %662 = vmatpush1.bf16.msra.mxu0 0
  %663 = vmatprep.subr.bf16.mxu0 0
  %664 = vmatpush1.bf16.msra.mxu0 0
  %665 = vmatprep.subr.bf16.mxu0 0
  %666 = vmatpush1.bf16.msra.mxu0 0
  %667 = vmatprep.subr.bf16.mxu0 0
  %668 = vmatpush1.bf16.msra.mxu0 0
  %669 = vmatprep.subr.bf16.mxu0 0
  %670 = vmatpush1.bf16.msra.mxu0 0
  %671 = vmatprep.subr.bf16.mxu0 0
  %672 = vmatpush1.bf16.msra.mxu0 0
  %673 = vmatprep.subr.bf16.mxu0 0
  %674 = vmatpush1.bf16.msra.mxu0 0
  %675 = vmatprep.subr.bf16.mxu0 0
  %676 = vmatpush1.bf16.msra.mxu0 0
  %677 = vmatprep.subr.bf16.mxu0 0
  %678 = vmatpush1.bf16.msra.mxu0 0
  %679 = vmatprep.mubr.bf16.mxu0 0
  %680 = vmatmul.mubr.bf16.gmra.mrb[0].mxu0 %v645
  %v681 = vpop.f32.mrb[0].mxu0
  %v682 = vadd.f32 0.0, %v681
  %v683 = vpop.f32.mrb[0].mxu0
  %v684 = vpop.f32.mrb[0].mxu0
  %v685 = vpop.f32.mrb[0].mxu0
  %686 = vdwg.mxu0
  %v687 = vadd.f32 %v596, %v682
  %v688 = vld [vmem:[%s0 + $0x4] sm:$0xe]
  %s689 = scalar_lea.vmem %s1, 256
  %v690 = vld [vmem:[%s689] sm:$0xf]
  %v691 = vld [vmem:[%s689 + $0x4] sm:$0xf]
  %v692 = vld [vmem:[%s689 + $0x8] sm:$0xf]
  %v693 = vld [vmem:[%s689 + $0xc] sm:$0xf]
  %v694 = vld [vmem:[%s689 + $0x10] sm:$0xf]
  %v695 = vld [vmem:[%s689 + $0x14] sm:$0xf]
  %v696 = vld [vmem:[%s689 + $0x18] sm:$0xf]
  %v697 = vld [vmem:[%s689 + $0x1c] sm:$0xf]
  %v699 = vunpack.c.l.b16 %v688
  %v700 = vpack.c.b16 %v611, %v699
  %v701 = vrot.slane %v700, 1
  %v710 = vunpack.c.l.b16 %v690
  %v711 = vunpack.c.l.b16 %v691
  %v712 = vunpack.c.l.b16 %v692
  %v713 = vunpack.c.l.b16 %v693
  %v714 = vunpack.c.l.b16 %v694
  %v715 = vunpack.c.l.b16 %v695
  %v716 = vunpack.c.l.b16 %v696
  %v717 = vunpack.c.l.b16 %v697
  %v718 = vpack.c.b16 %v711, %v710
  %v719 = vpack.c.b16 %v713, %v712
  %v720 = vpack.c.b16 %v715, %v714
  %v721 = vpack.c.b16 %v717, %v716
  %v727 = vsel %vm70, %v701, 0
  %729 = vmatprep.subr.bf16.mxu0 0
  %730 = vmatpush1.bf16.msra.mxu0 %v718
  %731 = vmatprep.subr.bf16.mxu0 0
  %732 = vmatpush1.bf16.msra.mxu0 %v719
  %733 = vmatprep.subr.bf16.mxu0 0
  %734 = vmatpush1.bf16.msra.mxu0 %v720
  %735 = vmatprep.subr.bf16.mxu0 0
  %736 = vmatpush1.bf16.msra.mxu0 %v721
  %737 = vmatprep.subr.bf16.mxu0 0
  %738 = vmatpush1.bf16.msra.mxu0 0
  %739 = vmatprep.subr.bf16.mxu0 0
  %740 = vmatpush1.bf16.msra.mxu0 0
  %741 = vmatprep.subr.bf16.mxu0 0
  %742 = vmatpush1.bf16.msra.mxu0 0
  %743 = vmatprep.subr.bf16.mxu0 0
  %744 = vmatpush1.bf16.msra.mxu0 0
  %745 = vmatprep.subr.bf16.mxu0 0
  %746 = vmatpush1.bf16.msra.mxu0 0
  %747 = vmatprep.subr.bf16.mxu0 0
  %748 = vmatpush1.bf16.msra.mxu0 0
  %749 = vmatprep.subr.bf16.mxu0 0
  %750 = vmatpush1.bf16.msra.mxu0 0
  %751 = vmatprep.subr.bf16.mxu0 0
  %752 = vmatpush1.bf16.msra.mxu0 0
  %753 = vmatprep.subr.bf16.mxu0 0
  %754 = vmatpush1.bf16.msra.mxu0 0
  %755 = vmatprep.subr.bf16.mxu0 0
  %756 = vmatpush1.bf16.msra.mxu0 0
  %757 = vmatprep.subr.bf16.mxu0 0
  %758 = vmatpush1.bf16.msra.mxu0 0
  %759 = vmatprep.subr.bf16.mxu0 0
  %760 = vmatpush1.bf16.msra.mxu0 0
  %761 = vmatprep.mubr.bf16.mxu0 0
  %762 = vmatmul.mubr.bf16.gmra.mrb[0].mxu0 %v727
  %v763 = vpop.f32.mrb[0].mxu0
  %v764 = vadd.f32 0.0, %v763
  %v765 = vpop.f32.mrb[0].mxu0
  %v766 = vpop.f32.mrb[0].mxu0
  %v767 = vpop.f32.mrb[0].mxu0
  %768 = vdwg.mxu0
  %v769 = vadd.f32 %v687, %v764
  %v770 = vld [vmem:[%s2] sm:$0x1]
  %v772 = vlaneseq
  %v773 = vshrl.u32 %v772, 7
  %v774 = vsub.s32 0, %v773
  %v775 = vrot.slane %v770, %v774
  %v777 = vadd.f32 %v769, %v775
  %v778 = vmax.f32 %v777, 0.0
  %v779 = vpack.c.bf16 %v778, %v778
  %vm780 = vcmask 519168
  %781 = vst.msk [vmem:[%s3] sm:$0xf] %vm780, %v779
  %s782 = scalar_lea.vmem %s0, 12
  %v783 = vld [vmem:[%s782] sm:$0xf]
  %v784 = vld [vmem:[%s1] sm:$0xf]
  %v785 = vld [vmem:[%s1 + $0x4] sm:$0xf]
  %v786 = vld [vmem:[%s1 + $0x8] sm:$0xf]
  %v787 = vld [vmem:[%s1 + $0xc] sm:$0xf]
  %v788 = vld [vmem:[%s1 + $0x10] sm:$0xf]
  %v789 = vld [vmem:[%s1 + $0x14] sm:$0xf]
  %v790 = vld [vmem:[%s1 + $0x18] sm:$0xf]
  %v791 = vld [vmem:[%s1 + $0x1c] sm:$0xf]
  %v792 = vld [vmem:[%s782 + $0x4] sm:$0x1]
  %v793 = vld [vmem:[%s25] sm:$0xf]
  %v794 = vld [vmem:[%s25 + $0x4] sm:$0xf]
  %v795 = vld [vmem:[%s25 + $0x8] sm:$0xf]
  %v796 = vld [vmem:[%s25 + $0xc] sm:$0xf]
  %v797 = vld [vmem:[%s25 + $0x10] sm:$0xf]
  %v798 = vld [vmem:[%s25 + $0x14] sm:$0xf]
  %v799 = vld [vmem:[%s25 + $0x18] sm:$0xf]
  %v800 = vld [vmem:[%s25 + $0x1c] sm:$0xf]
  %v803 = vunpack.c.l.b16 %v783
  %v804 = vunpack.c.l.b16 %v792
  %v805 = vpack.c.b16 %v804, %v803
  %v807 = vshrl.u32 %v805, 16
  %v809 = vshll.u32 %v805, 16
  %v811 = vrot.slane %v809, 1
  %v812 = vor.u32 %v807, %v811
  %v821 = vunpack.c.l.b16 %v793
  %v822 = vunpack.c.l.b16 %v794
  %v823 = vunpack.c.l.b16 %v795
  %v824 = vunpack.c.l.b16 %v796
  %v825 = vunpack.c.l.b16 %v797
  %v826 = vunpack.c.l.b16 %v798
  %v827 = vunpack.c.l.b16 %v799
  %v828 = vunpack.c.l.b16 %v800
  %v829 = vpack.c.b16 %v822, %v821
  %v830 = vpack.c.b16 %v824, %v823
  %v831 = vpack.c.b16 %v826, %v825
  %v832 = vpack.c.b16 %v828, %v827
  %v838 = vsel %vm70, %v812, 0
  %840 = vmatprep.subr.bf16.mxu0 0
  %841 = vmatpush1.bf16.msra.mxu0 %v829
  %842 = vmatprep.subr.bf16.mxu0 0
  %843 = vmatpush1.bf16.msra.mxu0 %v830
  %844 = vmatprep.subr.bf16.mxu0 0
  %845 = vmatpush1.bf16.msra.mxu0 %v831
  %846 = vmatprep.subr.bf16.mxu0 0
  %847 = vmatpush1.bf16.msra.mxu0 %v832
  %848 = vmatprep.subr.bf16.mxu0 0
  %849 = vmatpush1.bf16.msra.mxu0 0
  %850 = vmatprep.subr.bf16.mxu0 0
  %851 = vmatpush1.bf16.msra.mxu0 0
  %852 = vmatprep.subr.bf16.mxu0 0
  %853 = vmatpush1.bf16.msra.mxu0 0
  %854 = vmatprep.subr.bf16.mxu0 0
  %855 = vmatpush1.bf16.msra.mxu0 0
  %856 = vmatprep.subr.bf16.mxu0 0
  %857 = vmatpush1.bf16.msra.mxu0 0
  %858 = vmatprep.subr.bf16.mxu0 0
  %859 = vmatpush1.bf16.msra.mxu0 0
  %860 = vmatprep.subr.bf16.mxu0 0
  %861 = vmatpush1.bf16.msra.mxu0 0
  %862 = vmatprep.subr.bf16.mxu0 0
  %863 = vmatpush1.bf16.msra.mxu0 0
  %864 = vmatprep.subr.bf16.mxu0 0
  %865 = vmatpush1.bf16.msra.mxu0 0
  %866 = vmatprep.subr.bf16.mxu0 0
  %867 = vmatpush1.bf16.msra.mxu0 0
  %868 = vmatprep.subr.bf16.mxu0 0
  %869 = vmatpush1.bf16.msra.mxu0 0
  %870 = vmatprep.subr.bf16.mxu0 0
  %871 = vmatpush1.bf16.msra.mxu0 0
  %872 = vmatprep.mubr.bf16.mxu0 0
  %873 = vmatmul.mubr.bf16.gmra.mrb[0].mxu0 %v838
  %v874 = vpop.f32.mrb[0].mxu0
  %v875 = vadd.f32 0.0, %v874
  %v876 = vpop.f32.mrb[0].mxu0
  %v877 = vpop.f32.mrb[0].mxu0
  %v878 = vpop.f32.mrb[0].mxu0
  %879 = vdwg.mxu0
  %v888 = vunpack.c.l.b16 %v784
  %v889 = vunpack.c.l.b16 %v785
  %v890 = vunpack.c.l.b16 %v786
  %v891 = vunpack.c.l.b16 %v787
  %v892 = vunpack.c.l.b16 %v788
  %v893 = vunpack.c.l.b16 %v789
  %v894 = vunpack.c.l.b16 %v790
  %v895 = vunpack.c.l.b16 %v791
  %v896 = vpack.c.b16 %v889, %v888
  %v897 = vpack.c.b16 %v891, %v890
  %v898 = vpack.c.b16 %v893, %v892
  %v899 = vpack.c.b16 %v895, %v894
  %v905 = vsel %vm70, %v783, 0
  %907 = vmatprep.subr.bf16.mxu0 0
  %908 = vmatpush1.bf16.msra.mxu0 %v896
  %909 = vmatprep.subr.bf16.mxu0 0
  %910 = vmatpush1.bf16.msra.mxu0 %v897
  %911 = vmatprep.subr.bf16.mxu0 0
  %912 = vmatpush1.bf16.msra.mxu0 %v898
  %913 = vmatprep.subr.bf16.mxu0 0
  %914 = vmatpush1.bf16.msra.mxu0 %v899
  %915 = vmatprep.subr.bf16.mxu0 0
  %916 = vmatpush1.bf16.msra.mxu0 0
  %917 = vmatprep.subr.bf16.mxu0 0
  %918 = vmatpush1.bf16.msra.mxu0 0
  %919 = vmatprep.subr.bf16.mxu0 0
  %920 = vmatpush1.bf16.msra.mxu0 0
  %921 = vmatprep.subr.bf16.mxu0 0
  %922 = vmatpush1.bf16.msra.mxu0 0
  %923 = vmatprep.subr.bf16.mxu0 0
  %924 = vmatpush1.bf16.msra.mxu0 0
  %925 = vmatprep.subr.bf16.mxu0 0
  %926 = vmatpush1.bf16.msra.mxu0 0
  %927 = vmatprep.subr.bf16.mxu0 0
  %928 = vmatpush1.bf16.msra.mxu0 0
  %929 = vmatprep.subr.bf16.mxu0 0
  %930 = vmatpush1.bf16.msra.mxu0 0
  %931 = vmatprep.subr.bf16.mxu0 0
  %932 = vmatpush1.bf16.msra.mxu0 0
  %933 = vmatprep.subr.bf16.mxu0 0
  %934 = vmatpush1.bf16.msra.mxu0 0
  %935 = vmatprep.subr.bf16.mxu0 0
  %936 = vmatpush1.bf16.msra.mxu0 0
  %937 = vmatprep.subr.bf16.mxu0 0
  %938 = vmatpush1.bf16.msra.mxu0 0
  %939 = vmatprep.mubr.bf16.mxu0 0
  %940 = vmatmul.mubr.bf16.gmra.mrb[0].mxu0 %v905
  %v941 = vpop.f32.mrb[0].mxu0
  %v942 = vadd.f32 %v875, %v941
  %v943 = vpop.f32.mrb[0].mxu0
  %v944 = vpop.f32.mrb[0].mxu0
  %v945 = vpop.f32.mrb[0].mxu0
  %946 = vdwg.mxu0
  %v947 = vld [vmem:[%s782] sm:$0xe]
  %v948 = vld [vmem:[%s182] sm:$0xf]
  %v949 = vld [vmem:[%s182 + $0x4] sm:$0xf]
  %v950 = vld [vmem:[%s182 + $0x8] sm:$0xf]
  %v951 = vld [vmem:[%s182 + $0xc] sm:$0xf]
  %v952 = vld [vmem:[%s182 + $0x10] sm:$0xf]
  %v953 = vld [vmem:[%s182 + $0x14] sm:$0xf]
  %v954 = vld [vmem:[%s182 + $0x18] sm:$0xf]
  %v955 = vld [vmem:[%s182 + $0x1c] sm:$0xf]
  %v957 = vunpack.c.l.b16 %v947
  %v958 = vpack.c.b16 %v804, %v957
  %v959 = vrot.slane %v958, 1
  %v968 = vunpack.c.l.b16 %v948
  %v969 = vunpack.c.l.b16 %v949
  %v970 = vunpack.c.l.b16 %v950
  %v971 = vunpack.c.l.b16 %v951
  %v972 = vunpack.c.l.b16 %v952
  %v973 = vunpack.c.l.b16 %v953
  %v974 = vunpack.c.l.b16 %v954
  %v975 = vunpack.c.l.b16 %v955
  %v976 = vpack.c.b16 %v969, %v968
  %v977 = vpack.c.b16 %v971, %v970
  %v978 = vpack.c.b16 %v973, %v972
  %v979 = vpack.c.b16 %v975, %v974
  %v985 = vsel %vm70, %v959, 0
  %987 = vmatprep.subr.bf16.mxu0 0
  %988 = vmatpush1.bf16.msra.mxu0 %v976
  %989 = vmatprep.subr.bf16.mxu0 0
  %990 = vmatpush1.bf16.msra.mxu0 %v977
  %991 = vmatprep.subr.bf16.mxu0 0
  %992 = vmatpush1.bf16.msra.mxu0 %v978
  %993 = vmatprep.subr.bf16.mxu0 0
  %994 = vmatpush1.bf16.msra.mxu0 %v979
  %995 = vmatprep.subr.bf16.mxu0 0
  %996 = vmatpush1.bf16.msra.mxu0 0
  %997 = vmatprep.subr.bf16.mxu0 0
  %998 = vmatpush1.bf16.msra.mxu0 0
  %999 = vmatprep.subr.bf16.mxu0 0
  %1000 = vmatpush1.bf16.msra.mxu0 0
  %1001 = vmatprep.subr.bf16.mxu0 0
  %1002 = vmatpush1.bf16.msra.mxu0 0
  %1003 = vmatprep.subr.bf16.mxu0 0
  %1004 = vmatpush1.bf16.msra.mxu0 0
  %1005 = vmatprep.subr.bf16.mxu0 0
  %1006 = vmatpush1.bf16.msra.mxu0 0
  %1007 = vmatprep.subr.bf16.mxu0 0
  %1008 = vmatpush1.bf16.msra.mxu0 0
  %1009 = vmatprep.subr.bf16.mxu0 0
  %1010 = vmatpush1.bf16.msra.mxu0 0
  %1011 = vmatprep.subr.bf16.mxu0 0
  %1012 = vmatpush1.bf16.msra.mxu0 0
  %1013 = vmatprep.subr.bf16.mxu0 0
  %1014 = vmatpush1.bf16.msra.mxu0 0
  %1015 = vmatprep.subr.bf16.mxu0 0
  %1016 = vmatpush1.bf16.msra.mxu0 0
  %1017 = vmatprep.subr.bf16.mxu0 0
  %1018 = vmatpush1.bf16.msra.mxu0 0
  %1019 = vmatprep.mubr.bf16.mxu0 0
  %1020 = vmatmul.mubr.bf16.gmra.mrb[0].mxu0 %v985
  %v1021 = vpop.f32.mrb[0].mxu0
  %v1022 = vadd.f32 0.0, %v1021
  %v1023 = vpop.f32.mrb[0].mxu0
  %v1024 = vpop.f32.mrb[0].mxu0
  %v1025 = vpop.f32.mrb[0].mxu0
  %1026 = vdwg.mxu0
  %v1027 = vadd.f32 %v942, %v1022
  %v1028 = vld [vmem:[%s782] sm:$0xc]
  %v1029 = vld [vmem:[%s782 + $0x4] sm:$0x3]
  %v1030 = vld [vmem:[%s265] sm:$0xf]
  %v1031 = vld [vmem:[%s265 + $0x4] sm:$0xf]
  %v1032 = vld [vmem:[%s265 + $0x8] sm:$0xf]
  %v1033 = vld [vmem:[%s265 + $0xc] sm:$0xf]
  %v1034 = vld [vmem:[%s265 + $0x10] sm:$0xf]
  %v1035 = vld [vmem:[%s265 + $0x14] sm:$0xf]
  %v1036 = vld [vmem:[%s265 + $0x18] sm:$0xf]
  %v1037 = vld [vmem:[%s265 + $0x1c] sm:$0xf]
  %v1040 = vunpack.c.l.b16 %v1028
  %v1041 = vunpack.c.l.b16 %v1029
  %v1042 = vpack.c.b16 %v1041, %v1040
  %v1043 = vrot.slane %v1042, 2
  %v1052 = vunpack.c.l.b16 %v1030
  %v1053 = vunpack.c.l.b16 %v1031
  %v1054 = vunpack.c.l.b16 %v1032
  %v1055 = vunpack.c.l.b16 %v1033
  %v1056 = vunpack.c.l.b16 %v1034
  %v1057 = vunpack.c.l.b16 %v1035
  %v1058 = vunpack.c.l.b16 %v1036
  %v1059 = vunpack.c.l.b16 %v1037
  %v1060 = vpack.c.b16 %v1053, %v1052
  %v1061 = vpack.c.b16 %v1055, %v1054
  %v1062 = vpack.c.b16 %v1057, %v1056
  %v1063 = vpack.c.b16 %v1059, %v1058
  %v1069 = vsel %vm70, %v1043, 0
  %1071 = vmatprep.subr.bf16.mxu0 0
  %1072 = vmatpush1.bf16.msra.mxu0 %v1060
  %1073 = vmatprep.subr.bf16.mxu0 0
  %1074 = vmatpush1.bf16.msra.mxu0 %v1061
  %1075 = vmatprep.subr.bf16.mxu0 0
  %1076 = vmatpush1.bf16.msra.mxu0 %v1062
  %1077 = vmatprep.subr.bf16.mxu0 0
  %1078 = vmatpush1.bf16.msra.mxu0 %v1063
  %1079 = vmatprep.subr.bf16.mxu0 0
  %1080 = vmatpush1.bf16.msra.mxu0 0
  %1081 = vmatprep.subr.bf16.mxu0 0
  %1082 = vmatpush1.bf16.msra.mxu0 0
  %1083 = vmatprep.subr.bf16.mxu0 0
  %1084 = vmatpush1.bf16.msra.mxu0 0
  %1085 = vmatprep.subr.bf16.mxu0 0
  %1086 = vmatpush1.bf16.msra.mxu0 0
  %1087 = vmatprep.subr.bf16.mxu0 0
  %1088 = vmatpush1.bf16.msra.mxu0 0
  %1089 = vmatprep.subr.bf16.mxu0 0
  %1090 = vmatpush1.bf16.msra.mxu0 0
  %1091 = vmatprep.subr.bf16.mxu0 0
  %1092 = vmatpush1.bf16.msra.mxu0 0
  %1093 = vmatprep.subr.bf16.mxu0 0
  %1094 = vmatpush1.bf16.msra.mxu0 0
  %1095 = vmatprep.subr.bf16.mxu0 0
  %1096 = vmatpush1.bf16.msra.mxu0 0
  %1097 = vmatprep.subr.bf16.mxu0 0
  %1098 = vmatpush1.bf16.msra.mxu0 0
  %1099 = vmatprep.subr.bf16.mxu0 0
  %1100 = vmatpush1.bf16.msra.mxu0 0
  %1101 = vmatprep.subr.bf16.mxu0 0
  %1102 = vmatpush1.bf16.msra.mxu0 0
  %1103 = vmatprep.mubr.bf16.mxu0 0
  %1104 = vmatmul.mubr.bf16.gmra.mrb[0].mxu0 %v1069
  %v1105 = vpop.f32.mrb[0].mxu0
  %v1106 = vadd.f32 0.0, %v1105
  %v1107 = vpop.f32.mrb[0].mxu0
  %v1108 = vpop.f32.mrb[0].mxu0
  %v1109 = vpop.f32.mrb[0].mxu0
  %1110 = vdwg.mxu0
  %v1111 = vadd.f32 %v1027, %v1106
  %v1112 = vld [vmem:[%s782 + $0x4] sm:$0x7]
  %v1113 = vld [vmem:[%s349] sm:$0xf]
  %v1114 = vld [vmem:[%s349 + $0x4] sm:$0xf]
  %v1115 = vld [vmem:[%s349 + $0x8] sm:$0xf]
  %v1116 = vld [vmem:[%s349 + $0xc] sm:$0xf]
  %v1117 = vld [vmem:[%s349 + $0x10] sm:$0xf]
  %v1118 = vld [vmem:[%s349 + $0x14] sm:$0xf]
  %v1119 = vld [vmem:[%s349 + $0x18] sm:$0xf]
  %v1120 = vld [vmem:[%s349 + $0x1c] sm:$0xf]
  %v1122 = vunpack.c.l.b16 %v1112
  %v1123 = vpack.c.b16 %v1122, %v1040
  %v1125 = vshrl.u32 %v1123, 16
  %v1127 = vrot.slane %v1125, 2
  %v1128 = vshll.u32 %v1123, 16
  %v1130 = vrot.slane %v1128, 3
  %v1131 = vor.u32 %v1127, %v1130
  %v1140 = vunpack.c.l.b16 %v1113
  %v1141 = vunpack.c.l.b16 %v1114
  %v1142 = vunpack.c.l.b16 %v1115
  %v1143 = vunpack.c.l.b16 %v1116
  %v1144 = vunpack.c.l.b16 %v1117
  %v1145 = vunpack.c.l.b16 %v1118
  %v1146 = vunpack.c.l.b16 %v1119
  %v1147 = vunpack.c.l.b16 %v1120
  %v1148 = vpack.c.b16 %v1141, %v1140
  %v1149 = vpack.c.b16 %v1143, %v1142
  %v1150 = vpack.c.b16 %v1145, %v1144
  %v1151 = vpack.c.b16 %v1147, %v1146
  %v1157 = vsel %vm70, %v1131, 0
  %1159 = vmatprep.subr.bf16.mxu0 0
  %1160 = vmatpush1.bf16.msra.mxu0 %v1148
  %1161 = vmatprep.subr.bf16.mxu0 0
  %1162 = vmatpush1.bf16.msra.mxu0 %v1149
  %1163 = vmatprep.subr.bf16.mxu0 0
  %1164 = vmatpush1.bf16.msra.mxu0 %v1150
  %1165 = vmatprep.subr.bf16.mxu0 0
  %1166 = vmatpush1.bf16.msra.mxu0 %v1151
  %1167 = vmatprep.subr.bf16.mxu0 0
  %1168 = vmatpush1.bf16.msra.mxu0 0
  %1169 = vmatprep.subr.bf16.mxu0 0
  %1170 = vmatpush1.bf16.msra.mxu0 0
  %1171 = vmatprep.subr.bf16.mxu0 0
  %1172 = vmatpush1.bf16.msra.mxu0 0
  %1173 = vmatprep.subr.bf16.mxu0 0
  %1174 = vmatpush1.bf16.msra.mxu0 0
  %1175 = vmatprep.subr.bf16.mxu0 0
  %1176 = vmatpush1.bf16.msra.mxu0 0
  %1177 = vmatprep.subr.bf16.mxu0 0
  %1178 = vmatpush1.bf16.msra.mxu0 0
  %1179 = vmatprep.subr.bf16.mxu0 0
  %1180 = vmatpush1.bf16.msra.mxu0 0
  %1181 = vmatprep.subr.bf16.mxu0 0
  %1182 = vmatpush1.bf16.msra.mxu0 0
  %1183 = vmatprep.subr.bf16.mxu0 0
  %1184 = vmatpush1.bf16.msra.mxu0 0
  %1185 = vmatprep.subr.bf16.mxu0 0
  %1186 = vmatpush1.bf16.msra.mxu0 0
  %1187 = vmatprep.subr.bf16.mxu0 0
  %1188 = vmatpush1.bf16.msra.mxu0 0
  %1189 = vmatprep.subr.bf16.mxu0 0
  %1190 = vmatpush1.bf16.msra.mxu0 0
  %1191 = vmatprep.mubr.bf16.mxu0 0
  %1192 = vmatmul.mubr.bf16.gmra.mrb[0].mxu0 %v1157
  %v1193 = vpop.f32.mrb[0].mxu0
  %v1194 = vadd.f32 0.0, %v1193
  %v1195 = vpop.f32.mrb[0].mxu0
  %v1196 = vpop.f32.mrb[0].mxu0
  %v1197 = vpop.f32.mrb[0].mxu0
  %1198 = vdwg.mxu0
  %v1199 = vadd.f32 %v1111, %v1194
  %v1200 = vld [vmem:[%s782] sm:$0x8]
  %v1201 = vld [vmem:[%s438] sm:$0xf]
  %v1202 = vld [vmem:[%s438 + $0x4] sm:$0xf]
  %v1203 = vld [vmem:[%s438 + $0x8] sm:$0xf]
  %v1204 = vld [vmem:[%s438 + $0xc] sm:$0xf]
  %v1205 = vld [vmem:[%s438 + $0x10] sm:$0xf]
  %v1206 = vld [vmem:[%s438 + $0x14] sm:$0xf]
  %v1207 = vld [vmem:[%s438 + $0x18] sm:$0xf]
  %v1208 = vld [vmem:[%s438 + $0x1c] sm:$0xf]
  %v1210 = vunpack.c.l.b16 %v1200
  %v1211 = vpack.c.b16 %v1122, %v1210
  %v1212 = vrot.slane %v1211, 3
  %v1221 = vunpack.c.l.b16 %v1201
  %v1222 = vunpack.c.l.b16 %v1202
  %v1223 = vunpack.c.l.b16 %v1203
  %v1224 = vunpack.c.l.b16 %v1204
  %v1225 = vunpack.c.l.b16 %v1205
  %v1226 = vunpack.c.l.b16 %v1206
  %v1227 = vunpack.c.l.b16 %v1207
  %v1228 = vunpack.c.l.b16 %v1208
  %v1229 = vpack.c.b16 %v1222, %v1221
  %v1230 = vpack.c.b16 %v1224, %v1223
  %v1231 = vpack.c.b16 %v1226, %v1225
  %v1232 = vpack.c.b16 %v1228, %v1227
  %v1238 = vsel %vm70, %v1212, 0
  %1240 = vmatprep.subr.bf16.mxu0 0
  %1241 = vmatpush1.bf16.msra.mxu0 %v1229
  %1242 = vmatprep.subr.bf16.mxu0 0
  %1243 = vmatpush1.bf16.msra.mxu0 %v1230
  %1244 = vmatprep.subr.bf16.mxu0 0
  %1245 = vmatpush1.bf16.msra.mxu0 %v1231
  %1246 = vmatprep.subr.bf16.mxu0 0
  %1247 = vmatpush1.bf16.msra.mxu0 %v1232
  %1248 = vmatprep.subr.bf16.mxu0 0
  %1249 = vmatpush1.bf16.msra.mxu0 0
  %1250 = vmatprep.subr.bf16.mxu0 0
  %1251 = vmatpush1.bf16.msra.mxu0 0
  %1252 = vmatprep.subr.bf16.mxu0 0
  %1253 = vmatpush1.bf16.msra.mxu0 0
  %1254 = vmatprep.subr.bf16.mxu0 0
  %1255 = vmatpush1.bf16.msra.mxu0 0
  %1256 = vmatprep.subr.bf16.mxu0 0
  %1257 = vmatpush1.bf16.msra.mxu0 0
  %1258 = vmatprep.subr.bf16.mxu0 0
  %1259 = vmatpush1.bf16.msra.mxu0 0
  %1260 = vmatprep.subr.bf16.mxu0 0
  %1261 = vmatpush1.bf16.msra.mxu0 0
  %1262 = vmatprep.subr.bf16.mxu0 0
  %1263 = vmatpush1.bf16.msra.mxu0 0
  %1264 = vmatprep.subr.bf16.mxu0 0
  %1265 = vmatpush1.bf16.msra.mxu0 0
  %1266 = vmatprep.subr.bf16.mxu0 0
  %1267 = vmatpush1.bf16.msra.mxu0 0
  %1268 = vmatprep.subr.bf16.mxu0 0
  %1269 = vmatpush1.bf16.msra.mxu0 0
  %1270 = vmatprep.subr.bf16.mxu0 0
  %1271 = vmatpush1.bf16.msra.mxu0 0
  %1272 = vmatprep.mubr.bf16.mxu0 0
  %1273 = vmatmul.mubr.bf16.gmra.mrb[0].mxu0 %v1238
  %v1274 = vpop.f32.mrb[0].mxu0
  %v1275 = vadd.f32 0.0, %v1274
  %v1276 = vpop.f32.mrb[0].mxu0
  %v1277 = vpop.f32.mrb[0].mxu0
  %v1278 = vpop.f32.mrb[0].mxu0
  %1279 = vdwg.mxu0
  %v1280 = vadd.f32 %v1199, %v1275
  %v1281 = vld [vmem:[%s782 + $0x4] sm:$0xf]
  %v1282 = vld [vmem:[%s520] sm:$0xf]
  %v1283 = vld [vmem:[%s520 + $0x4] sm:$0xf]
  %v1284 = vld [vmem:[%s520 + $0x8] sm:$0xf]
  %v1285 = vld [vmem:[%s520 + $0xc] sm:$0xf]
  %v1286 = vld [vmem:[%s520 + $0x10] sm:$0xf]
  %v1287 = vld [vmem:[%s520 + $0x14] sm:$0xf]
  %v1288 = vld [vmem:[%s520 + $0x18] sm:$0xf]
  %v1289 = vld [vmem:[%s520 + $0x1c] sm:$0xf]
  %v1298 = vunpack.c.l.b16 %v1282
  %v1299 = vunpack.c.l.b16 %v1283
  %v1300 = vunpack.c.l.b16 %v1284
  %v1301 = vunpack.c.l.b16 %v1285
  %v1302 = vunpack.c.l.b16 %v1286
  %v1303 = vunpack.c.l.b16 %v1287
  %v1304 = vunpack.c.l.b16 %v1288
  %v1305 = vunpack.c.l.b16 %v1289
  %v1306 = vpack.c.b16 %v1299, %v1298
  %v1307 = vpack.c.b16 %v1301, %v1300
  %v1308 = vpack.c.b16 %v1303, %v1302
  %v1309 = vpack.c.b16 %v1305, %v1304
  %v1315 = vsel %vm70, %v1281, 0
  %1317 = vmatprep.subr.bf16.mxu0 0
  %1318 = vmatpush1.bf16.msra.mxu0 %v1306
  %1319 = vmatprep.subr.bf16.mxu0 0
  %1320 = vmatpush1.bf16.msra.mxu0 %v1307
  %1321 = vmatprep.subr.bf16.mxu0 0
  %1322 = vmatpush1.bf16.msra.mxu0 %v1308
  %1323 = vmatprep.subr.bf16.mxu0 0
  %1324 = vmatpush1.bf16.msra.mxu0 %v1309
  %1325 = vmatprep.subr.bf16.mxu0 0
  %1326 = vmatpush1.bf16.msra.mxu0 0
  %1327 = vmatprep.subr.bf16.mxu0 0
  %1328 = vmatpush1.bf16.msra.mxu0 0
  %1329 = vmatprep.subr.bf16.mxu0 0
  %1330 = vmatpush1.bf16.msra.mxu0 0
  %1331 = vmatprep.subr.bf16.mxu0 0
  %1332 = vmatpush1.bf16.msra.mxu0 0
  %1333 = vmatprep.subr.bf16.mxu0 0
  %1334 = vmatpush1.bf16.msra.mxu0 0
  %1335 = vmatprep.subr.bf16.mxu0 0
  %1336 = vmatpush1.bf16.msra.mxu0 0
  %1337 = vmatprep.subr.bf16.mxu0 0
  %1338 = vmatpush1.bf16.msra.mxu0 0
  %1339 = vmatprep.subr.bf16.mxu0 0
  %1340 = vmatpush1.bf16.msra.mxu0 0
  %1341 = vmatprep.subr.bf16.mxu0 0
  %1342 = vmatpush1.bf16.msra.mxu0 0
  %1343 = vmatprep.subr.bf16.mxu0 0
  %1344 = vmatpush1.bf16.msra.mxu0 0
  %1345 = vmatprep.subr.bf16.mxu0 0
  %1346 = vmatpush1.bf16.msra.mxu0 0
  %1347 = vmatprep.subr.bf16.mxu0 0
  %1348 = vmatpush1.bf16.msra.mxu0 0
  %1349 = vmatprep.mubr.bf16.mxu0 0
  %1350 = vmatmul.mubr.bf16.gmra.mrb[0].mxu0 %v1315
  %v1351 = vpop.f32.mrb[0].mxu0
  %v1352 = vadd.f32 0.0, %v1351
  %v1353 = vpop.f32.mrb[0].mxu0
  %v1354 = vpop.f32.mrb[0].mxu0
  %v1355 = vpop.f32.mrb[0].mxu0
  %1356 = vdwg.mxu0
  %v1357 = vadd.f32 %v1280, %v1352
  %v1358 = vld [vmem:[%s782 + $0x4] sm:$0xf]
  %v1359 = vld [vmem:[%s782 + $0x8] sm:$0x1]
  %v1360 = vld [vmem:[%s599] sm:$0xf]
  %v1361 = vld [vmem:[%s599 + $0x4] sm:$0xf]
  %v1362 = vld [vmem:[%s599 + $0x8] sm:$0xf]
  %v1363 = vld [vmem:[%s599 + $0xc] sm:$0xf]
  %v1364 = vld [vmem:[%s599 + $0x10] sm:$0xf]
  %v1365 = vld [vmem:[%s599 + $0x14] sm:$0xf]
  %v1366 = vld [vmem:[%s599 + $0x18] sm:$0xf]
  %v1367 = vld [vmem:[%s599 + $0x1c] sm:$0xf]
  %v1370 = vunpack.c.l.b16 %v1358
  %v1371 = vunpack.c.l.b16 %v1359
  %v1372 = vpack.c.b16 %v1371, %v1370
  %v1374 = vshrl.u32 %v1372, 16
  %v1376 = vshll.u32 %v1372, 16
  %v1378 = vrot.slane %v1376, 1
  %v1379 = vor.u32 %v1374, %v1378
  %v1388 = vunpack.c.l.b16 %v1360
  %v1389 = vunpack.c.l.b16 %v1361
  %v1390 = vunpack.c.l.b16 %v1362
  %v1391 = vunpack.c.l.b16 %v1363
  %v1392 = vunpack.c.l.b16 %v1364
  %v1393 = vunpack.c.l.b16 %v1365
  %v1394 = vunpack.c.l.b16 %v1366
  %v1395 = vunpack.c.l.b16 %v1367
  %v1396 = vpack.c.b16 %v1389, %v1388
  %v1397 = vpack.c.b16 %v1391, %v1390
  %v1398 = vpack.c.b16 %v1393, %v1392
  %v1399 = vpack.c.b16 %v1395, %v1394
  %v1405 = vsel %vm70, %v1379, 0
  %1407 = vmatprep.subr.bf16.mxu0 0
  %1408 = vmatpush1.bf16.msra.mxu0 %v1396
  %1409 = vmatprep.subr.bf16.mxu0 0
  %1410 = vmatpush1.bf16.msra.mxu0 %v1397
  %1411 = vmatprep.subr.bf16.mxu0 0
  %1412 = vmatpush1.bf16.msra.mxu0 %v1398
  %1413 = vmatprep.subr.bf16.mxu0 0
  %1414 = vmatpush1.bf16.msra.mxu0 %v1399
  %1415 = vmatprep.subr.bf16.mxu0 0
  %1416 = vmatpush1.bf16.msra.mxu0 0
  %1417 = vmatprep.subr.bf16.mxu0 0
  %1418 = vmatpush1.bf16.msra.mxu0 0
  %1419 = vmatprep.subr.bf16.mxu0 0
  %1420 = vmatpush1.bf16.msra.mxu0 0
  %1421 = vmatprep.subr.bf16.mxu0 0
  %1422 = vmatpush1.bf16.msra.mxu0 0
  %1423 = vmatprep.subr.bf16.mxu0 0
  %1424 = vmatpush1.bf16.msra.mxu0 0
  %1425 = vmatprep.subr.bf16.mxu0 0
  %1426 = vmatpush1.bf16.msra.mxu0 0
  %1427 = vmatprep.subr.bf16.mxu0 0
  %1428 = vmatpush1.bf16.msra.mxu0 0
  %1429 = vmatprep.subr.bf16.mxu0 0
  %1430 = vmatpush1.bf16.msra.mxu0 0
  %1431 = vmatprep.subr.bf16.mxu0 0
  %1432 = vmatpush1.bf16.msra.mxu0 0
  %1433 = vmatprep.subr.bf16.mxu0 0
  %1434 = vmatpush1.bf16.msra.mxu0 0
  %1435 = vmatprep.subr.bf16.mxu0 0
  %1436 = vmatpush1.bf16.msra.mxu0 0
  %1437 = vmatprep.subr.bf16.mxu0 0
  %1438 = vmatpush1.bf16.msra.mxu0 0
  %1439 = vmatprep.mubr.bf16.mxu0 0
  %1440 = vmatmul.mubr.bf16.gmra.mrb[0].mxu0 %v1405
  %v1441 = vpop.f32.mrb[0].mxu0
  %v1442 = vadd.f32 0.0, %v1441
  %v1443 = vpop.f32.mrb[0].mxu0
  %v1444 = vpop.f32.mrb[0].mxu0
  %v1445 = vpop.f32.mrb[0].mxu0
  %1446 = vdwg.mxu0
  %v1447 = vadd.f32 %v1357, %v1442
  %v1448 = vld [vmem:[%s782 + $0x4] sm:$0xe]
  %v1449 = vld [vmem:[%s689] sm:$0xf]
  %v1450 = vld [vmem:[%s689 + $0x4] sm:$0xf]
  %v1451 = vld [vmem:[%s689 + $0x8] sm:$0xf]
  %v1452 = vld [vmem:[%s689 + $0xc] sm:$0xf]
  %v1453 = vld [vmem:[%s689 + $0x10] sm:$0xf]
  %v1454 = vld [vmem:[%s689 + $0x14] sm:$0xf]
  %v1455 = vld [vmem:[%s689 + $0x18] sm:$0xf]
  %v1456 = vld [vmem:[%s689 + $0x1c] sm:$0xf]
  %v1458 = vunpack.c.l.b16 %v1448
  %v1459 = vpack.c.b16 %v1371, %v1458
  %v1460 = vrot.slane %v1459, 1
  %v1469 = vunpack.c.l.b16 %v1449
  %v1470 = vunpack.c.l.b16 %v1450
  %v1471 = vunpack.c.l.b16 %v1451
  %v1472 = vunpack.c.l.b16 %v1452
  %v1473 = vunpack.c.l.b16 %v1453
  %v1474 = vunpack.c.l.b16 %v1454
  %v1475 = vunpack.c.l.b16 %v1455
  %v1476 = vunpack.c.l.b16 %v1456
  %v1477 = vpack.c.b16 %v1470, %v1469
  %v1478 = vpack.c.b16 %v1472, %v1471
  %v1479 = vpack.c.b16 %v1474, %v1473
  %v1480 = vpack.c.b16 %v1476, %v1475
  %v1486 = vsel %vm70, %v1460, 0
  %1488 = vmatprep.subr.bf16.mxu0 0
  %1489 = vmatpush1.bf16.msra.mxu0 %v1477
  %1490 = vmatprep.subr.bf16.mxu0 0
  %1491 = vmatpush1.bf16.msra.mxu0 %v1478
  %1492 = vmatprep.subr.bf16.mxu0 0
  %1493 = vmatpush1.bf16.msra.mxu0 %v1479
  %1494 = vmatprep.subr.bf16.mxu0 0
  %1495 = vmatpush1.bf16.msra.mxu0 %v1480
  %1496 = vmatprep.subr.bf16.mxu0 0
  %1497 = vmatpush1.bf16.msra.mxu0 0
  %1498 = vmatprep.subr.bf16.mxu0 0
  %1499 = vmatpush1.bf16.msra.mxu0 0
  %1500 = vmatprep.subr.bf16.mxu0 0
  %1501 = vmatpush1.bf16.msra.mxu0 0
  %1502 = vmatprep.subr.bf16.mxu0 0
  %1503 = vmatpush1.bf16.msra.mxu0 0
  %1504 = vmatprep.subr.bf16.mxu0 0
  %1505 = vmatpush1.bf16.msra.mxu0 0
  %1506 = vmatprep.subr.bf16.mxu0 0
  %1507 = vmatpush1.bf16.msra.mxu0 0
  %1508 = vmatprep.subr.bf16.mxu0 0
  %1509 = vmatpush1.bf16.msra.mxu0 0
  %1510 = vmatprep.subr.bf16.mxu0 0
  %1511 = vmatpush1.bf16.msra.mxu0 0
  %1512 = vmatprep.subr.bf16.mxu0 0
  %1513 = vmatpush1.bf16.msra.mxu0 0
  %1514 = vmatprep.subr.bf16.mxu0 0
  %1515 = vmatpush1.bf16.msra.mxu0 0
  %1516 = vmatprep.subr.bf16.mxu0 0
  %1517 = vmatpush1.bf16.msra.mxu0 0
  %1518 = vmatprep.subr.bf16.mxu0 0
  %1519 = vmatpush1.bf16.msra.mxu0 0
  %1520 = vmatprep.mubr.bf16.mxu0 0
  %1521 = vmatmul.mubr.bf16.gmra.mrb[0].mxu0 %v1486
  %v1522 = vpop.f32.mrb[0].mxu0
  %v1523 = vadd.f32 0.0, %v1522
  %v1524 = vpop.f32.mrb[0].mxu0
  %v1525 = vpop.f32.mrb[0].mxu0
  %v1526 = vpop.f32.mrb[0].mxu0
  %1527 = vdwg.mxu0
  %v1528 = vadd.f32 %v1447, %v1523
  %v1529 = vld [vmem:[%s2] sm:$0x1]
  %v1531 = vlaneseq
  %v1532 = vshrl.u32 %v1531, 7
  %v1533 = vsub.s32 0, %v1532
  %v1534 = vrot.slane %v1529, %v1533
  %v1536 = vadd.f32 %v1528, %v1534
  %v1537 = vmax.f32 %v1536, 0.0
  %v1538 = vpack.c.bf16 %v1537, %v1537
  %s1539 = scalar_lea.vmem %s3, 4
  %1540 = vst.msk [vmem:[%s1539] sm:$0xf] %vm780, %v1538
  %s1541 = scalar_lea.vmem %s0, 24
  %v1542 = vld [vmem:[%s1541] sm:$0xf]
  %v1543 = vld [vmem:[%s1] sm:$0xf]
  %v1544 = vld [vmem:[%s1 + $0x4] sm:$0xf]
  %v1545 = vld [vmem:[%s1 + $0x8] sm:$0xf]
  %v1546 = vld [vmem:[%s1 + $0xc] sm:$0xf]
  %v1547 = vld [vmem:[%s1 + $0x10] sm:$0xf]
  %v1548 = vld [vmem:[%s1 + $0x14] sm:$0xf]
  %v1549 = vld [vmem:[%s1 + $0x18] sm:$0xf]
  %v1550 = vld [vmem:[%s1 + $0x1c] sm:$0xf]
  %v1551 = vld [vmem:[%s1541 + $0x4] sm:$0x1]
  %v1552 = vld [vmem:[%s25] sm:$0xf]
  %v1553 = vld [vmem:[%s25 + $0x4] sm:$0xf]
  %v1554 = vld [vmem:[%s25 + $0x8] sm:$0xf]
  %v1555 = vld [vmem:[%s25 + $0xc] sm:$0xf]
  %v1556 = vld [vmem:[%s25 + $0x10] sm:$0xf]
  %v1557 = vld [vmem:[%s25 + $0x14] sm:$0xf]
  %v1558 = vld [vmem:[%s25 + $0x18] sm:$0xf]
  %v1559 = vld [vmem:[%s25 + $0x1c] sm:$0xf]
  %v1562 = vunpack.c.l.b16 %v1542
  %v1563 = vunpack.c.l.b16 %v1551
  %v1564 = vpack.c.b16 %v1563, %v1562
  %v1566 = vshrl.u32 %v1564, 16
  %v1568 = vshll.u32 %v1564, 16
  %v1570 = vrot.slane %v1568, 1
  %v1571 = vor.u32 %v1566, %v1570
  %v1580 = vunpack.c.l.b16 %v1552
  %v1581 = vunpack.c.l.b16 %v1553
  %v1582 = vunpack.c.l.b16 %v1554
  %v1583 = vunpack.c.l.b16 %v1555
  %v1584 = vunpack.c.l.b16 %v1556
  %v1585 = vunpack.c.l.b16 %v1557
  %v1586 = vunpack.c.l.b16 %v1558
  %v1587 = vunpack.c.l.b16 %v1559
  %v1588 = vpack.c.b16 %v1581, %v1580
  %v1589 = vpack.c.b16 %v1583, %v1582
  %v1590 = vpack.c.b16 %v1585, %v1584
  %v1591 = vpack.c.b16 %v1587, %v1586
  %v1597 = vsel %vm70, %v1571, 0
  %1599 = vmatprep.subr.bf16.mxu0 0
  %1600 = vmatpush1.bf16.msra.mxu0 %v1588
  %1601 = vmatprep.subr.bf16.mxu0 0
  %1602 = vmatpush1.bf16.msra.mxu0 %v1589
  %1603 = vmatprep.subr.bf16.mxu0 0
  %1604 = vmatpush1.bf16.msra.mxu0 %v1590
  %1605 = vmatprep.subr.bf16.mxu0 0
  %1606 = vmatpush1.bf16.msra.mxu0 %v1591
  %1607 = vmatprep.subr.bf16.mxu0 0
  %1608 = vmatpush1.bf16.msra.mxu0 0
  %1609 = vmatprep.subr.bf16.mxu0 0
  %1610 = vmatpush1.bf16.msra.mxu0 0
  %1611 = vmatprep.subr.bf16.mxu0 0
  %1612 = vmatpush1.bf16.msra.mxu0 0
  %1613 = vmatprep.subr.bf16.mxu0 0
  %1614 = vmatpush1.bf16.msra.mxu0 0
  %1615 = vmatprep.subr.bf16.mxu0 0
  %1616 = vmatpush1.bf16.msra.mxu0 0
  %1617 = vmatprep.subr.bf16.mxu0 0
  %1618 = vmatpush1.bf16.msra.mxu0 0
  %1619 = vmatprep.subr.bf16.mxu0 0
  %1620 = vmatpush1.bf16.msra.mxu0 0
  %1621 = vmatprep.subr.bf16.mxu0 0
  %1622 = vmatpush1.bf16.msra.mxu0 0
  %1623 = vmatprep.subr.bf16.mxu0 0
  %1624 = vmatpush1.bf16.msra.mxu0 0
  %1625 = vmatprep.subr.bf16.mxu0 0
  %1626 = vmatpush1.bf16.msra.mxu0 0
  %1627 = vmatprep.subr.bf16.mxu0 0
  %1628 = vmatpush1.bf16.msra.mxu0 0
  %1629 = vmatprep.subr.bf16.mxu0 0
  %1630 = vmatpush1.bf16.msra.mxu0 0
  %1631 = vmatprep.mubr.bf16.mxu0 0
  %1632 = vmatmul.mubr.bf16.gmra.mrb[0].mxu0 %v1597
  %v1633 = vpop.f32.mrb[0].mxu0
  %v1634 = vadd.f32 0.0, %v1633
  %v1635 = vpop.f32.mrb[0].mxu0
  %v1636 = vpop.f32.mrb[0].mxu0
  %v1637 = vpop.f32.mrb[0].mxu0
  %1638 = vdwg.mxu0
  %v1647 = vunpack.c.l.b16 %v1543
  %v1648 = vunpack.c.l.b16 %v1544
  %v1649 = vunpack.c.l.b16 %v1545
  %v1650 = vunpack.c.l.b16 %v1546
  %v1651 = vunpack.c.l.b16 %v1547
  %v1652 = vunpack.c.l.b16 %v1548
  %v1653 = vunpack.c.l.b16 %v1549
  %v1654 = vunpack.c.l.b16 %v1550
  %v1655 = vpack.c.b16 %v1648, %v1647
  %v1656 = vpack.c.b16 %v1650, %v1649
  %v1657 = vpack.c.b16 %v1652, %v1651
  %v1658 = vpack.c.b16 %v1654, %v1653
  %v1664 = vsel %vm70, %v1542, 0
  %1666 = vmatprep.subr.bf16.mxu0 0
  %1667 = vmatpush1.bf16.msra.mxu0 %v1655
  %1668 = vmatprep.subr.bf16.mxu0 0
  %1669 = vmatpush1.bf16.msra.mxu0 %v1656
  %1670 = vmatprep.subr.bf16.mxu0 0
  %1671 = vmatpush1.bf16.msra.mxu0 %v1657
  %1672 = vmatprep.subr.bf16.mxu0 0
  %1673 = vmatpush1.bf16.msra.mxu0 %v1658
  %1674 = vmatprep.subr.bf16.mxu0 0
  %1675 = vmatpush1.bf16.msra.mxu0 0
  %1676 = vmatprep.subr.bf16.mxu0 0
  %1677 = vmatpush1.bf16.msra.mxu0 0
  %1678 = vmatprep.subr.bf16.mxu0 0
  %1679 = vmatpush1.bf16.msra.mxu0 0
  %1680 = vmatprep.subr.bf16.mxu0 0
  %1681 = vmatpush1.bf16.msra.mxu0 0
  %1682 = vmatprep.subr.bf16.mxu0 0
  %1683 = vmatpush1.bf16.msra.mxu0 0
  %1684 = vmatprep.subr.bf16.mxu0 0
  %1685 = vmatpush1.bf16.msra.mxu0 0
  %1686 = vmatprep.subr.bf16.mxu0 0
  %1687 = vmatpush1.bf16.msra.mxu0 0
  %1688 = vmatprep.subr.bf16.mxu0 0
  %1689 = vmatpush1.bf16.msra.mxu0 0
  %1690 = vmatprep.subr.bf16.mxu0 0
  %1691 = vmatpush1.bf16.msra.mxu0 0
  %1692 = vmatprep.subr.bf16.mxu0 0
  %1693 = vmatpush1.bf16.msra.mxu0 0
  %1694 = vmatprep.subr.bf16.mxu0 0
  %1695 = vmatpush1.bf16.msra.mxu0 0
  %1696 = vmatprep.subr.bf16.mxu0 0
  %1697 = vmatpush1.bf16.msra.mxu0 0
  %1698 = vmatprep.mubr.bf16.mxu0 0
  %1699 = vmatmul.mubr.bf16.gmra.mrb[0].mxu0 %v1664
  %v1700 = vpop.f32.mrb[0].mxu0
  %v1701 = vadd.f32 %v1634, %v1700
  %v1702 = vpop.f32.mrb[0].mxu0
  %v1703 = vpop.f32.mrb[0].mxu0
  %v1704 = vpop.f32.mrb[0].mxu0
  %1705 = vdwg.mxu0
  %v1706 = vld [vmem:[%s1541] sm:$0xe]
  %v1707 = vld [vmem:[%s182] sm:$0xf]
  %v1708 = vld [vmem:[%s182 + $0x4] sm:$0xf]
  %v1709 = vld [vmem:[%s182 + $0x8] sm:$0xf]
  %v1710 = vld [vmem:[%s182 + $0xc] sm:$0xf]
  %v1711 = vld [vmem:[%s182 + $0x10] sm:$0xf]
  %v1712 = vld [vmem:[%s182 + $0x14] sm:$0xf]
  %v1713 = vld [vmem:[%s182 + $0x18] sm:$0xf]
  %v1714 = vld [vmem:[%s182 + $0x1c] sm:$0xf]
  %v1716 = vunpack.c.l.b16 %v1706
  %v1717 = vpack.c.b16 %v1563, %v1716
  %v1718 = vrot.slane %v1717, 1
  %v1727 = vunpack.c.l.b16 %v1707
  %v1728 = vunpack.c.l.b16 %v1708
  %v1729 = vunpack.c.l.b16 %v1709
  %v1730 = vunpack.c.l.b16 %v1710
  %v1731 = vunpack.c.l.b16 %v1711
  %v1732 = vunpack.c.l.b16 %v1712
  %v1733 = vunpack.c.l.b16 %v1713
  %v1734 = vunpack.c.l.b16 %v1714
  %v1735 = vpack.c.b16 %v1728, %v1727
  %v1736 = vpack.c.b16 %v1730, %v1729
  %v1737 = vpack.c.b16 %v1732, %v1731
  %v1738 = vpack.c.b16 %v1734, %v1733
  %v1744 = vsel %vm70, %v1718, 0
  %1746 = vmatprep.subr.bf16.mxu0 0
  %1747 = vmatpush1.bf16.msra.mxu0 %v1735
  %1748 = vmatprep.subr.bf16.mxu0 0
  %1749 = vmatpush1.bf16.msra.mxu0 %v1736
  %1750 = vmatprep.subr.bf16.mxu0 0
  %1751 = vmatpush1.bf16.msra.mxu0 %v1737
  %1752 = vmatprep.subr.bf16.mxu0 0
  %1753 = vmatpush1.bf16.msra.mxu0 %v1738
  %1754 = vmatprep.subr.bf16.mxu0 0
  %1755 = vmatpush1.bf16.msra.mxu0 0
  %1756 = vmatprep.subr.bf16.mxu0 0
  %1757 = vmatpush1.bf16.msra.mxu0 0
  %1758 = vmatprep.subr.bf16.mxu0 0
  %1759 = vmatpush1.bf16.msra.mxu0 0
  %1760 = vmatprep.subr.bf16.mxu0 0
  %1761 = vmatpush1.bf16.msra.mxu0 0
  %1762 = vmatprep.subr.bf16.mxu0 0
  %1763 = vmatpush1.bf16.msra.mxu0 0
  %1764 = vmatprep.subr.bf16.mxu0 0
  %1765 = vmatpush1.bf16.msra.mxu0 0
  %1766 = vmatprep.subr.bf16.mxu0 0
  %1767 = vmatpush1.bf16.msra.mxu0 0
  %1768 = vmatprep.subr.bf16.mxu0 0
  %1769 = vmatpush1.bf16.msra.mxu0 0
  %1770 = vmatprep.subr.bf16.mxu0 0
  %1771 = vmatpush1.bf16.msra.mxu0 0
  %1772 = vmatprep.subr.bf16.mxu0 0
  %1773 = vmatpush1.bf16.msra.mxu0 0
  %1774 = vmatprep.subr.bf16.mxu0 0
  %1775 = vmatpush1.bf16.msra.mxu0 0
  %1776 = vmatprep.subr.bf16.mxu0 0
  %1777 = vmatpush1.bf16.msra.mxu0 0
  %1778 = vmatprep.mubr.bf16.mxu0 0
  %1779 = vmatmul.mubr.bf16.gmra.mrb[0].mxu0 %v1744
  %v1780 = vpop.f32.mrb[0].mxu0
  %v1781 = vadd.f32 0.0, %v1780
  %v1782 = vpop.f32.mrb[0].mxu0
  %v1783 = vpop.f32.mrb[0].mxu0
  %v1784 = vpop.f32.mrb[0].mxu0
  %1785 = vdwg.mxu0
  %v1786 = vadd.f32 %v1701, %v1781
  %v1787 = vld [vmem:[%s1541] sm:$0xc]
  %v1788 = vld [vmem:[%s1541 + $0x4] sm:$0x3]
  %v1789 = vld [vmem:[%s265] sm:$0xf]
  %v1790 = vld [vmem:[%s265 + $0x4] sm:$0xf]
  %v1791 = vld [vmem:[%s265 + $0x8] sm:$0xf]
  %v1792 = vld [vmem:[%s265 + $0xc] sm:$0xf]
  %v1793 = vld [vmem:[%s265 + $0x10] sm:$0xf]
  %v1794 = vld [vmem:[%s265 + $0x14] sm:$0xf]
  %v1795 = vld [vmem:[%s265 + $0x18] sm:$0xf]
  %v1796 = vld [vmem:[%s265 + $0x1c] sm:$0xf]
  %v1799 = vunpack.c.l.b16 %v1787
  %v1800 = vunpack.c.l.b16 %v1788
  %v1801 = vpack.c.b16 %v1800, %v1799
  %v1802 = vrot.slane %v1801, 2
  %v1811 = vunpack.c.l.b16 %v1789
  %v1812 = vunpack.c.l.b16 %v1790
  %v1813 = vunpack.c.l.b16 %v1791
  %v1814 = vunpack.c.l.b16 %v1792
  %v1815 = vunpack.c.l.b16 %v1793
  %v1816 = vunpack.c.l.b16 %v1794
  %v1817 = vunpack.c.l.b16 %v1795
  %v1818 = vunpack.c.l.b16 %v1796
  %v1819 = vpack.c.b16 %v1812, %v1811
  %v1820 = vpack.c.b16 %v1814, %v1813
  %v1821 = vpack.c.b16 %v1816, %v1815
  %v1822 = vpack.c.b16 %v1818, %v1817
  %v1828 = vsel %vm70, %v1802, 0
  %1830 = vmatprep.subr.bf16.mxu0 0
  %1831 = vmatpush1.bf16.msra.mxu0 %v1819
  %1832 = vmatprep.subr.bf16.mxu0 0
  %1833 = vmatpush1.bf16.msra.mxu0 %v1820
  %1834 = vmatprep.subr.bf16.mxu0 0
  %1835 = vmatpush1.bf16.msra.mxu0 %v1821
  %1836 = vmatprep.subr.bf16.mxu0 0
  %1837 = vmatpush1.bf16.msra.mxu0 %v1822
  %1838 = vmatprep.subr.bf16.mxu0 0
  %1839 = vmatpush1.bf16.msra.mxu0 0
  %1840 = vmatprep.subr.bf16.mxu0 0
  %1841 = vmatpush1.bf16.msra.mxu0 0
  %1842 = vmatprep.subr.bf16.mxu0 0
  %1843 = vmatpush1.bf16.msra.mxu0 0
  %1844 = vmatprep.subr.bf16.mxu0 0
  %1845 = vmatpush1.bf16.msra.mxu0 0
  %1846 = vmatprep.subr.bf16.mxu0 0
  %1847 = vmatpush1.bf16.msra.mxu0 0
  %1848 = vmatprep.subr.bf16.mxu0 0
  %1849 = vmatpush1.bf16.msra.mxu0 0
  %1850 = vmatprep.subr.bf16.mxu0 0
  %1851 = vmatpush1.bf16.msra.mxu0 0
  %1852 = vmatprep.subr.bf16.mxu0 0
  %1853 = vmatpush1.bf16.msra.mxu0 0
  %1854 = vmatprep.subr.bf16.mxu0 0
  %1855 = vmatpush1.bf16.msra.mxu0 0
  %1856 = vmatprep.subr.bf16.mxu0 0
  %1857 = vmatpush1.bf16.msra.mxu0 0
  %1858 = vmatprep.subr.bf16.mxu0 0
  %1859 = vmatpush1.bf16.msra.mxu0 0
  %1860 = vmatprep.subr.bf16.mxu0 0
  %1861 = vmatpush1.bf16.msra.mxu0 0
  %1862 = vmatprep.mubr.bf16.mxu0 0
  %1863 = vmatmul.mubr.bf16.gmra.mrb[0].mxu0 %v1828
  %v1864 = vpop.f32.mrb[0].mxu0
  %v1865 = vadd.f32 0.0, %v1864
  %v1866 = vpop.f32.mrb[0].mxu0
  %v1867 = vpop.f32.mrb[0].mxu0
  %v1868 = vpop.f32.mrb[0].mxu0
  %1869 = vdwg.mxu0
  %v1870 = vadd.f32 %v1786, %v1865
  %v1871 = vld [vmem:[%s1541 + $0x4] sm:$0x7]
  %v1872 = vld [vmem:[%s349] sm:$0xf]
  %v1873 = vld [vmem:[%s349 + $0x4] sm:$0xf]
  %v1874 = vld [vmem:[%s349 + $0x8] sm:$0xf]
  %v1875 = vld [vmem:[%s349 + $0xc] sm:$0xf]
  %v1876 = vld [vmem:[%s349 + $0x10] sm:$0xf]
  %v1877 = vld [vmem:[%s349 + $0x14] sm:$0xf]
  %v1878 = vld [vmem:[%s349 + $0x18] sm:$0xf]
  %v1879 = vld [vmem:[%s349 + $0x1c] sm:$0xf]
  %v1881 = vunpack.c.l.b16 %v1871
  %v1882 = vpack.c.b16 %v1881, %v1799
  %v1884 = vshrl.u32 %v1882, 16
  %v1886 = vrot.slane %v1884, 2
  %v1887 = vshll.u32 %v1882, 16
  %v1889 = vrot.slane %v1887, 3
  %v1890 = vor.u32 %v1886, %v1889
  %v1899 = vunpack.c.l.b16 %v1872
  %v1900 = vunpack.c.l.b16 %v1873
  %v1901 = vunpack.c.l.b16 %v1874
  %v1902 = vunpack.c.l.b16 %v1875
  %v1903 = vunpack.c.l.b16 %v1876
  %v1904 = vunpack.c.l.b16 %v1877
  %v1905 = vunpack.c.l.b16 %v1878
  %v1906 = vunpack.c.l.b16 %v1879
  %v1907 = vpack.c.b16 %v1900, %v1899
  %v1908 = vpack.c.b16 %v1902, %v1901
  %v1909 = vpack.c.b16 %v1904, %v1903
  %v1910 = vpack.c.b16 %v1906, %v1905
  %v1916 = vsel %vm70, %v1890, 0
  %1918 = vmatprep.subr.bf16.mxu0 0
  %1919 = vmatpush1.bf16.msra.mxu0 %v1907
  %1920 = vmatprep.subr.bf16.mxu0 0
  %1921 = vmatpush1.bf16.msra.mxu0 %v1908
  %1922 = vmatprep.subr.bf16.mxu0 0
  %1923 = vmatpush1.bf16.msra.mxu0 %v1909
  %1924 = vmatprep.subr.bf16.mxu0 0
  %1925 = vmatpush1.bf16.msra.mxu0 %v1910
  %1926 = vmatprep.subr.bf16.mxu0 0
  %1927 = vmatpush1.bf16.msra.mxu0 0
  %1928 = vmatprep.subr.bf16.mxu0 0
  %1929 = vmatpush1.bf16.msra.mxu0 0
  %1930 = vmatprep.subr.bf16.mxu0 0
  %1931 = vmatpush1.bf16.msra.mxu0 0
  %1932 = vmatprep.subr.bf16.mxu0 0
  %1933 = vmatpush1.bf16.msra.mxu0 0
  %1934 = vmatprep.subr.bf16.mxu0 0
  %1935 = vmatpush1.bf16.msra.mxu0 0
  %1936 = vmatprep.subr.bf16.mxu0 0
  %1937 = vmatpush1.bf16.msra.mxu0 0
  %1938 = vmatprep.subr.bf16.mxu0 0
  %1939 = vmatpush1.bf16.msra.mxu0 0
  %1940 = vmatprep.subr.bf16.mxu0 0
  %1941 = vmatpush1.bf16.msra.mxu0 0
  %1942 = vmatprep.subr.bf16.mxu0 0
  %1943 = vmatpush1.bf16.msra.mxu0 0
  %1944 = vmatprep.subr.bf16.mxu0 0
  %1945 = vmatpush1.bf16.msra.mxu0 0
  %1946 = vmatprep.subr.bf16.mxu0 0
  %1947 = vmatpush1.bf16.msra.mxu0 0
  %1948 = vmatprep.subr.bf16.mxu0 0
  %1949 = vmatpush1.bf16.msra.mxu0 0
  %1950 = vmatprep.mubr.bf16.mxu0 0
  %1951 = vmatmul.mubr.bf16.gmra.mrb[0].mxu0 %v1916
  %v1952 = vpop.f32.mrb[0].mxu0
  %v1953 = vadd.f32 0.0, %v1952
  %v1954 = vpop.f32.mrb[0].mxu0
  %v1955 = vpop.f32.mrb[0].mxu0
  %v1956 = vpop.f32.mrb[0].mxu0
  %1957 = vdwg.mxu0
  %v1958 = vadd.f32 %v1870, %v1953
  %v1959 = vld [vmem:[%s1541] sm:$0x8]
  %v1960 = vld [vmem:[%s438] sm:$0xf]
  %v1961 = vld [vmem:[%s438 + $0x4] sm:$0xf]
  %v1962 = vld [vmem:[%s438 + $0x8] sm:$0xf]
  %v1963 = vld [vmem:[%s438 + $0xc] sm:$0xf]
  %v1964 = vld [vmem:[%s438 + $0x10] sm:$0xf]
  %v1965 = vld [vmem:[%s438 + $0x14] sm:$0xf]
  %v1966 = vld [vmem:[%s438 + $0x18] sm:$0xf]
  %v1967 = vld [vmem:[%s438 + $0x1c] sm:$0xf]
  %v1969 = vunpack.c.l.b16 %v1959
  %v1970 = vpack.c.b16 %v1881, %v1969
  %v1971 = vrot.slane %v1970, 3
  %v1980 = vunpack.c.l.b16 %v1960
  %v1981 = vunpack.c.l.b16 %v1961
  %v1982 = vunpack.c.l.b16 %v1962
  %v1983 = vunpack.c.l.b16 %v1963
  %v1984 = vunpack.c.l.b16 %v1964
  %v1985 = vunpack.c.l.b16 %v1965
  %v1986 = vunpack.c.l.b16 %v1966
  %v1987 = vunpack.c.l.b16 %v1967
  %v1988 = vpack.c.b16 %v1981, %v1980
  %v1989 = vpack.c.b16 %v1983, %v1982
  %v1990 = vpack.c.b16 %v1985, %v1984
  %v1991 = vpack.c.b16 %v1987, %v1986
  %v1997 = vsel %vm70, %v1971, 0
  %1999 = vmatprep.subr.bf16.mxu0 0
  %2000 = vmatpush1.bf16.msra.mxu0 %v1988
  %2001 = vmatprep.subr.bf16.mxu0 0
  %2002 = vmatpush1.bf16.msra.mxu0 %v1989
  %2003 = vmatprep.subr.bf16.mxu0 0
  %2004 = vmatpush1.bf16.msra.mxu0 %v1990
  %2005 = vmatprep.subr.bf16.mxu0 0
  %2006 = vmatpush1.bf16.msra.mxu0 %v1991
  %2007 = vmatprep.subr.bf16.mxu0 0
  %2008 = vmatpush1.bf16.msra.mxu0 0
  %2009 = vmatprep.subr.bf16.mxu0 0
  %2010 = vmatpush1.bf16.msra.mxu0 0
  %2011 = vmatprep.subr.bf16.mxu0 0
  %2012 = vmatpush1.bf16.msra.mxu0 0
  %2013 = vmatprep.subr.bf16.mxu0 0
  %2014 = vmatpush1.bf16.msra.mxu0 0
  %2015 = vmatprep.subr.bf16.mxu0 0
  %2016 = vmatpush1.bf16.msra.mxu0 0
  %2017 = vmatprep.subr.bf16.mxu0 0
  %2018 = vmatpush1.bf16.msra.mxu0 0
  %2019 = vmatprep.subr.bf16.mxu0 0
  %2020 = vmatpush1.bf16.msra.mxu0 0
  %2021 = vmatprep.subr.bf16.mxu0 0
  %2022 = vmatpush1.bf16.msra.mxu0 0
  %2023 = vmatprep.subr.bf16.mxu0 0
  %2024 = vmatpush1.bf16.msra.mxu0 0
  %2025 = vmatprep.subr.bf16.mxu0 0
  %2026 = vmatpush1.bf16.msra.mxu0 0
  %2027 = vmatprep.subr.bf16.mxu0 0
  %2028 = vmatpush1.bf16.msra.mxu0 0
  %2029 = vmatprep.subr.bf16.mxu0 0
  %2030 = vmatpush1.bf16.msra.mxu0 0
  %2031 = vmatprep.mubr.bf16.mxu0 0
  %2032 = vmatmul.mubr.bf16.gmra.mrb[0].mxu0 %v1997
  %v2033 = vpop.f32.mrb[0].mxu0
  %v2034 = vadd.f32 0.0, %v2033
  %v2035 = vpop.f32.mrb[0].mxu0
  %v2036 = vpop.f32.mrb[0].mxu0
  %v2037 = vpop.f32.mrb[0].mxu0
  %2038 = vdwg.mxu0
  %v2039 = vadd.f32 %v1958, %v2034
  %v2040 = vld [vmem:[%s1541 + $0x4] sm:$0xf]
  %v2041 = vld [vmem:[%s520] sm:$0xf]
  %v2042 = vld [vmem:[%s520 + $0x4] sm:$0xf]
  %v2043 = vld [vmem:[%s520 + $0x8] sm:$0xf]
  %v2044 = vld [vmem:[%s520 + $0xc] sm:$0xf]
  %v2045 = vld [vmem:[%s520 + $0x10] sm:$0xf]
  %v2046 = vld [vmem:[%s520 + $0x14] sm:$0xf]
  %v2047 = vld [vmem:[%s520 + $0x18] sm:$0xf]
  %v2048 = vld [vmem:[%s520 + $0x1c] sm:$0xf]
  %v2057 = vunpack.c.l.b16 %v2041
  %v2058 = vunpack.c.l.b16 %v2042
  %v2059 = vunpack.c.l.b16 %v2043
  %v2060 = vunpack.c.l.b16 %v2044
  %v2061 = vunpack.c.l.b16 %v2045
  %v2062 = vunpack.c.l.b16 %v2046
  %v2063 = vunpack.c.l.b16 %v2047
  %v2064 = vunpack.c.l.b16 %v2048
  %v2065 = vpack.c.b16 %v2058, %v2057
  %v2066 = vpack.c.b16 %v2060, %v2059
  %v2067 = vpack.c.b16 %v2062, %v2061
  %v2068 = vpack.c.b16 %v2064, %v2063
  %v2074 = vsel %vm70, %v2040, 0
  %2076 = vmatprep.subr.bf16.mxu0 0
  %2077 = vmatpush1.bf16.msra.mxu0 %v2065
  %2078 = vmatprep.subr.bf16.mxu0 0
  %2079 = vmatpush1.bf16.msra.mxu0 %v2066
  %2080 = vmatprep.subr.bf16.mxu0 0
  %2081 = vmatpush1.bf16.msra.mxu0 %v2067
  %2082 = vmatprep.subr.bf16.mxu0 0
  %2083 = vmatpush1.bf16.msra.mxu0 %v2068
  %2084 = vmatprep.subr.bf16.mxu0 0
  %2085 = vmatpush1.bf16.msra.mxu0 0
  %2086 = vmatprep.subr.bf16.mxu0 0
  %2087 = vmatpush1.bf16.msra.mxu0 0
  %2088 = vmatprep.subr.bf16.mxu0 0
  %2089 = vmatpush1.bf16.msra.mxu0 0
  %2090 = vmatprep.subr.bf16.mxu0 0
  %2091 = vmatpush1.bf16.msra.mxu0 0
  %2092 = vmatprep.subr.bf16.mxu0 0
  %2093 = vmatpush1.bf16.msra.mxu0 0
  %2094 = vmatprep.subr.bf16.mxu0 0
  %2095 = vmatpush1.bf16.msra.mxu0 0
  %2096 = vmatprep.subr.bf16.mxu0 0
  %2097 = vmatpush1.bf16.msra.mxu0 0
  %2098 = vmatprep.subr.bf16.mxu0 0
  %2099 = vmatpush1.bf16.msra.mxu0 0
  %2100 = vmatprep.subr.bf16.mxu0 0
  %2101 = vmatpush1.bf16.msra.mxu0 0
  %2102 = vmatprep.subr.bf16.mxu0 0
  %2103 = vmatpush1.bf16.msra.mxu0 0
  %2104 = vmatprep.subr.bf16.mxu0 0
  %2105 = vmatpush1.bf16.msra.mxu0 0
  %2106 = vmatprep.subr.bf16.mxu0 0
  %2107 = vmatpush1.bf16.msra.mxu0 0
  %2108 = vmatprep.mubr.bf16.mxu0 0
  %2109 = vmatmul.mubr.bf16.gmra.mrb[0].mxu0 %v2074
  %v2110 = vpop.f32.mrb[0].mxu0
  %v2111 = vadd.f32 0.0, %v2110
  %v2112 = vpop.f32.mrb[0].mxu0
  %v2113 = vpop.f32.mrb[0].mxu0
  %v2114 = vpop.f32.mrb[0].mxu0
  %2115 = vdwg.mxu0
  %v2116 = vadd.f32 %v2039, %v2111
  %v2117 = vld [vmem:[%s1541 + $0x4] sm:$0xf]
  %v2118 = vld [vmem:[%s1541 + $0x8] sm:$0x1]
  %v2119 = vld [vmem:[%s599] sm:$0xf]
  %v2120 = vld [vmem:[%s599 + $0x4] sm:$0xf]
  %v2121 = vld [vmem:[%s599 + $0x8] sm:$0xf]
  %v2122 = vld [vmem:[%s599 + $0xc] sm:$0xf]
  %v2123 = vld [vmem:[%s599 + $0x10] sm:$0xf]
  %v2124 = vld [vmem:[%s599 + $0x14] sm:$0xf]
  %v2125 = vld [vmem:[%s599 + $0x18] sm:$0xf]
  %v2126 = vld [vmem:[%s599 + $0x1c] sm:$0xf]
  %v2129 = vunpack.c.l.b16 %v2117
  %v2130 = vunpack.c.l.b16 %v2118
  %v2131 = vpack.c.b16 %v2130, %v2129
  %v2133 = vshrl.u32 %v2131, 16
  %v2135 = vshll.u32 %v2131, 16
  %v2137 = vrot.slane %v2135, 1
  %v2138 = vor.u32 %v2133, %v2137
  %v2147 = vunpack.c.l.b16 %v2119
  %v2148 = vunpack.c.l.b16 %v2120
  %v2149 = vunpack.c.l.b16 %v2121
  %v2150 = vunpack.c.l.b16 %v2122
  %v2151 = vunpack.c.l.b16 %v2123
  %v2152 = vunpack.c.l.b16 %v2124
  %v2153 = vunpack.c.l.b16 %v2125
  %v2154 = vunpack.c.l.b16 %v2126
  %v2155 = vpack.c.b16 %v2148, %v2147
  %v2156 = vpack.c.b16 %v2150, %v2149
  %v2157 = vpack.c.b16 %v2152, %v2151
  %v2158 = vpack.c.b16 %v2154, %v2153
  %v2164 = vsel %vm70, %v2138, 0
  %2166 = vmatprep.subr.bf16.mxu0 0
  %2167 = vmatpush1.bf16.msra.mxu0 %v2155
  %2168 = vmatprep.subr.bf16.mxu0 0
  %2169 = vmatpush1.bf16.msra.mxu0 %v2156
  %2170 = vmatprep.subr.bf16.mxu0 0
  %2171 = vmatpush1.bf16.msra.mxu0 %v2157
  %2172 = vmatprep.subr.bf16.mxu0 0
  %2173 = vmatpush1.bf16.msra.mxu0 %v2158
  %2174 = vmatprep.subr.bf16.mxu0 0
  %2175 = vmatpush1.bf16.msra.mxu0 0
  %2176 = vmatprep.subr.bf16.mxu0 0
  %2177 = vmatpush1.bf16.msra.mxu0 0
  %2178 = vmatprep.subr.bf16.mxu0 0
  %2179 = vmatpush1.bf16.msra.mxu0 0
  %2180 = vmatprep.subr.bf16.mxu0 0
  %2181 = vmatpush1.bf16.msra.mxu0 0
  %2182 = vmatprep.subr.bf16.mxu0 0
  %2183 = vmatpush1.bf16.msra.mxu0 0
  %2184 = vmatprep.subr.bf16.mxu0 0
  %2185 = vmatpush1.bf16.msra.mxu0 0
  %2186 = vmatprep.subr.bf16.mxu0 0
  %2187 = vmatpush1.bf16.msra.mxu0 0
  %2188 = vmatprep.subr.bf16.mxu0 0
  %2189 = vmatpush1.bf16.msra.mxu0 0
  %2190 = vmatprep.subr.bf16.mxu0 0
  %2191 = vmatpush1.bf16.msra.mxu0 0
  %2192 = vmatprep.subr.bf16.mxu0 0
  %2193 = vmatpush1.bf16.msra.mxu0 0
  %2194 = vmatprep.subr.bf16.mxu0 0
  %2195 = vmatpush1.bf16.msra.mxu0 0
  %2196 = vmatprep.subr.bf16.mxu0 0
  %2197 = vmatpush1.bf16.msra.mxu0 0
  %2198 = vmatprep.mubr.bf16.mxu0 0
  %2199 = vmatmul.mubr.bf16.gmra.mrb[0].mxu0 %v2164
  %v2200 = vpop.f32.mrb[0].mxu0
  %v2201 = vadd.f32 0.0, %v2200
  %v2202 = vpop.f32.mrb[0].mxu0
  %v2203 = vpop.f32.mrb[0].mxu0
  %v2204 = vpop.f32.mrb[0].mxu0
  %2205 = vdwg.mxu0
  %v2206 = vadd.f32 %v2116, %v2201
  %v2207 = vld [vmem:[%s1541 + $0x4] sm:$0xe]
  %v2208 = vld [vmem:[%s689] sm:$0xf]
  %v2209 = vld [vmem:[%s689 + $0x4] sm:$0xf]
  %v2210 = vld [vmem:[%s689 + $0x8] sm:$0xf]
  %v2211 = vld [vmem:[%s689 + $0xc] sm:$0xf]
  %v2212 = vld [vmem:[%s689 + $0x10] sm:$0xf]
  %v2213 = vld [vmem:[%s689 + $0x14] sm:$0xf]
  %v2214 = vld [vmem:[%s689 + $0x18] sm:$0xf]
  %v2215 = vld [vmem:[%s689 + $0x1c] sm:$0xf]
  %v2217 = vunpack.c.l.b16 %v2207
  %v2218 = vpack.c.b16 %v2130, %v2217
  %v2219 = vrot.slane %v2218, 1
  %v2228 = vunpack.c.l.b16 %v2208
  %v2229 = vunpack.c.l.b16 %v2209
  %v2230 = vunpack.c.l.b16 %v2210
  %v2231 = vunpack.c.l.b16 %v2211
  %v2232 = vunpack.c.l.b16 %v2212
  %v2233 = vunpack.c.l.b16 %v2213
  %v2234 = vunpack.c.l.b16 %v2214
  %v2235 = vunpack.c.l.b16 %v2215
  %v2236 = vpack.c.b16 %v2229, %v2228
  %v2237 = vpack.c.b16 %v2231, %v2230
  %v2238 = vpack.c.b16 %v2233, %v2232
  %v2239 = vpack.c.b16 %v2235, %v2234
  %v2245 = vsel %vm70, %v2219, 0
  %2247 = vmatprep.subr.bf16.mxu0 0
  %2248 = vmatpush1.bf16.msra.mxu0 %v2236
  %2249 = vmatprep.subr.bf16.mxu0 0
  %2250 = vmatpush1.bf16.msra.mxu0 %v2237
  %2251 = vmatprep.subr.bf16.mxu0 0
  %2252 = vmatpush1.bf16.msra.mxu0 %v2238
  %2253 = vmatprep.subr.bf16.mxu0 0
  %2254 = vmatpush1.bf16.msra.mxu0 %v2239
  %2255 = vmatprep.subr.bf16.mxu0 0
  %2256 = vmatpush1.bf16.msra.mxu0 0
  %2257 = vmatprep.subr.bf16.mxu0 0
  %2258 = vmatpush1.bf16.msra.mxu0 0
  %2259 = vmatprep.subr.bf16.mxu0 0
  %2260 = vmatpush1.bf16.msra.mxu0 0
  %2261 = vmatprep.subr.bf16.mxu0 0
  %2262 = vmatpush1.bf16.msra.mxu0 0
  %2263 = vmatprep.subr.bf16.mxu0 0
  %2264 = vmatpush1.bf16.msra.mxu0 0
  %2265 = vmatprep.subr.bf16.mxu0 0
  %2266 = vmatpush1.bf16.msra.mxu0 0
  %2267 = vmatprep.subr.bf16.mxu0 0
  %2268 = vmatpush1.bf16.msra.mxu0 0
  %2269 = vmatprep.subr.bf16.mxu0 0
  %2270 = vmatpush1.bf16.msra.mxu0 0
  %2271 = vmatprep.subr.bf16.mxu0 0
  %2272 = vmatpush1.bf16.msra.mxu0 0
  %2273 = vmatprep.subr.bf16.mxu0 0
  %2274 = vmatpush1.bf16.msra.mxu0 0
  %2275 = vmatprep.subr.bf16.mxu0 0
  %2276 = vmatpush1.bf16.msra.mxu0 0
  %2277 = vmatprep.subr.bf16.mxu0 0
  %2278 = vmatpush1.bf16.msra.mxu0 0
  %2279 = vmatprep.mubr.bf16.mxu0 0
  %2280 = vmatmul.mubr.bf16.gmra.mrb[0].mxu0 %v2245
  %v2281 = vpop.f32.mrb[0].mxu0
  %v2282 = vadd.f32 0.0, %v2281
  %v2283 = vpop.f32.mrb[0].mxu0
  %v2284 = vpop.f32.mrb[0].mxu0
  %v2285 = vpop.f32.mrb[0].mxu0
  %2286 = vdwg.mxu0
  %v2287 = vadd.f32 %v2206, %v2282
  %v2288 = vld [vmem:[%s2] sm:$0x1]
  %v2290 = vlaneseq
  %v2291 = vshrl.u32 %v2290, 7
  %v2292 = vsub.s32 0, %v2291
  %v2293 = vrot.slane %v2288, %v2292
  %v2295 = vadd.f32 %v2287, %v2293
  %v2296 = vmax.f32 %v2295, 0.0
  %v2297 = vpack.c.bf16 %v2296, %v2296
  %s2298 = scalar_lea.vmem %s3, 8
  %2299 = vst.msk [vmem:[%s2298] sm:$0xf] %vm780, %v2297
  %s2300 = scalar_lea.vmem %s0, 36
  %v2301 = vld [vmem:[%s2300] sm:$0xf]
  %v2302 = vld [vmem:[%s1] sm:$0xf]
  %v2303 = vld [vmem:[%s1 + $0x4] sm:$0xf]
  %v2304 = vld [vmem:[%s1 + $0x8] sm:$0xf]
  %v2305 = vld [vmem:[%s1 + $0xc] sm:$0xf]
  %v2306 = vld [vmem:[%s1 + $0x10] sm:$0xf]
  %v2307 = vld [vmem:[%s1 + $0x14] sm:$0xf]
  %v2308 = vld [vmem:[%s1 + $0x18] sm:$0xf]
  %v2309 = vld [vmem:[%s1 + $0x1c] sm:$0xf]
  %v2310 = vld [vmem:[%s2300 + $0x4] sm:$0x1]
  %v2311 = vld [vmem:[%s25] sm:$0xf]
  %v2312 = vld [vmem:[%s25 + $0x4] sm:$0xf]
  %v2313 = vld [vmem:[%s25 + $0x8] sm:$0xf]
  %v2314 = vld [vmem:[%s25 + $0xc] sm:$0xf]
  %v2315 = vld [vmem:[%s25 + $0x10] sm:$0xf]
  %v2316 = vld [vmem:[%s25 + $0x14] sm:$0xf]
  %v2317 = vld [vmem:[%s25 + $0x18] sm:$0xf]
  %v2318 = vld [vmem:[%s25 + $0x1c] sm:$0xf]
  %v2321 = vunpack.c.l.b16 %v2301
  %v2322 = vunpack.c.l.b16 %v2310
  %v2323 = vpack.c.b16 %v2322, %v2321
  %v2325 = vshrl.u32 %v2323, 16
  %v2327 = vshll.u32 %v2323, 16
  %v2329 = vrot.slane %v2327, 1
  %v2330 = vor.u32 %v2325, %v2329
  %v2339 = vunpack.c.l.b16 %v2311
  %v2340 = vunpack.c.l.b16 %v2312
  %v2341 = vunpack.c.l.b16 %v2313
  %v2342 = vunpack.c.l.b16 %v2314
  %v2343 = vunpack.c.l.b16 %v2315
  %v2344 = vunpack.c.l.b16 %v2316
  %v2345 = vunpack.c.l.b16 %v2317
  %v2346 = vunpack.c.l.b16 %v2318
  %v2347 = vpack.c.b16 %v2340, %v2339
  %v2348 = vpack.c.b16 %v2342, %v2341
  %v2349 = vpack.c.b16 %v2344, %v2343
  %v2350 = vpack.c.b16 %v2346, %v2345
  %v2356 = vsel %vm70, %v2330, 0
  %2358 = vmatprep.subr.bf16.mxu0 0
  %2359 = vmatpush1.bf16.msra.mxu0 %v2347
  %2360 = vmatprep.subr.bf16.mxu0 0
  %2361 = vmatpush1.bf16.msra.mxu0 %v2348
  %2362 = vmatprep.subr.bf16.mxu0 0
  %2363 = vmatpush1.bf16.msra.mxu0 %v2349
  %2364 = vmatprep.subr.bf16.mxu0 0
  %2365 = vmatpush1.bf16.msra.mxu0 %v2350
  %2366 = vmatprep.subr.bf16.mxu0 0
  %2367 = vmatpush1.bf16.msra.mxu0 0
  %2368 = vmatprep.subr.bf16.mxu0 0
  %2369 = vmatpush1.bf16.msra.mxu0 0
  %2370 = vmatprep.subr.bf16.mxu0 0
  %2371 = vmatpush1.bf16.msra.mxu0 0
  %2372 = vmatprep.subr.bf16.mxu0 0
  %2373 = vmatpush1.bf16.msra.mxu0 0
  %2374 = vmatprep.subr.bf16.mxu0 0
  %2375 = vmatpush1.bf16.msra.mxu0 0
  %2376 = vmatprep.subr.bf16.mxu0 0
  %2377 = vmatpush1.bf16.msra.mxu0 0
  %2378 = vmatprep.subr.bf16.mxu0 0
  %2379 = vmatpush1.bf16.msra.mxu0 0
  %2380 = vmatprep.subr.bf16.mxu0 0
  %2381 = vmatpush1.bf16.msra.mxu0 0
  %2382 = vmatprep.subr.bf16.mxu0 0
  %2383 = vmatpush1.bf16.msra.mxu0 0
  %2384 = vmatprep.subr.bf16.mxu0 0
  %2385 = vmatpush1.bf16.msra.mxu0 0
  %2386 = vmatprep.subr.bf16.mxu0 0
  %2387 = vmatpush1.bf16.msra.mxu0 0
  %2388 = vmatprep.subr.bf16.mxu0 0
  %2389 = vmatpush1.bf16.msra.mxu0 0
  %2390 = vmatprep.mubr.bf16.mxu0 0
  %2391 = vmatmul.mubr.bf16.gmra.mrb[0].mxu0 %v2356
  %v2392 = vpop.f32.mrb[0].mxu0
  %v2393 = vadd.f32 0.0, %v2392
  %v2394 = vpop.f32.mrb[0].mxu0
  %v2395 = vpop.f32.mrb[0].mxu0
  %v2396 = vpop.f32.mrb[0].mxu0
  %2397 = vdwg.mxu0
  %v2406 = vunpack.c.l.b16 %v2302
  %v2407 = vunpack.c.l.b16 %v2303
  %v2408 = vunpack.c.l.b16 %v2304
  %v2409 = vunpack.c.l.b16 %v2305
  %v2410 = vunpack.c.l.b16 %v2306
  %v2411 = vunpack.c.l.b16 %v2307
  %v2412 = vunpack.c.l.b16 %v2308
  %v2413 = vunpack.c.l.b16 %v2309
  %v2414 = vpack.c.b16 %v2407, %v2406
  %v2415 = vpack.c.b16 %v2409, %v2408
  %v2416 = vpack.c.b16 %v2411, %v2410
  %v2417 = vpack.c.b16 %v2413, %v2412
  %v2423 = vsel %vm70, %v2301, 0
  %2425 = vmatprep.subr.bf16.mxu0 0
  %2426 = vmatpush1.bf16.msra.mxu0 %v2414
  %2427 = vmatprep.subr.bf16.mxu0 0
  %2428 = vmatpush1.bf16.msra.mxu0 %v2415
  %2429 = vmatprep.subr.bf16.mxu0 0
  %2430 = vmatpush1.bf16.msra.mxu0 %v2416
  %2431 = vmatprep.subr.bf16.mxu0 0
  %2432 = vmatpush1.bf16.msra.mxu0 %v2417
  %2433 = vmatprep.subr.bf16.mxu0 0
  %2434 = vmatpush1.bf16.msra.mxu0 0
  %2435 = vmatprep.subr.bf16.mxu0 0
  %2436 = vmatpush1.bf16.msra.mxu0 0
  %2437 = vmatprep.subr.bf16.mxu0 0
  %2438 = vmatpush1.bf16.msra.mxu0 0
  %2439 = vmatprep.subr.bf16.mxu0 0
  %2440 = vmatpush1.bf16.msra.mxu0 0
  %2441 = vmatprep.subr.bf16.mxu0 0
  %2442 = vmatpush1.bf16.msra.mxu0 0
  %2443 = vmatprep.subr.bf16.mxu0 0
  %2444 = vmatpush1.bf16.msra.mxu0 0
  %2445 = vmatprep.subr.bf16.mxu0 0
  %2446 = vmatpush1.bf16.msra.mxu0 0
  %2447 = vmatprep.subr.bf16.mxu0 0
  %2448 = vmatpush1.bf16.msra.mxu0 0
  %2449 = vmatprep.subr.bf16.mxu0 0
  %2450 = vmatpush1.bf16.msra.mxu0 0
  %2451 = vmatprep.subr.bf16.mxu0 0
  %2452 = vmatpush1.bf16.msra.mxu0 0
  %2453 = vmatprep.subr.bf16.mxu0 0
  %2454 = vmatpush1.bf16.msra.mxu0 0
  %2455 = vmatprep.subr.bf16.mxu0 0
  %2456 = vmatpush1.bf16.msra.mxu0 0
  %2457 = vmatprep.mubr.bf16.mxu0 0
  %2458 = vmatmul.mubr.bf16.gmra.mrb[0].mxu0 %v2423
  %v2459 = vpop.f32.mrb[0].mxu0
  %v2460 = vadd.f32 %v2393, %v2459
  %v2461 = vpop.f32.mrb[0].mxu0
  %v2462 = vpop.f32.mrb[0].mxu0
  %v2463 = vpop.f32.mrb[0].mxu0
  %2464 = vdwg.mxu0
  %v2465 = vld [vmem:[%s2300] sm:$0xe]
  %v2466 = vld [vmem:[%s182] sm:$0xf]
  %v2467 = vld [vmem:[%s182 + $0x4] sm:$0xf]
  %v2468 = vld [vmem:[%s182 + $0x8] sm:$0xf]
  %v2469 = vld [vmem:[%s182 + $0xc] sm:$0xf]
  %v2470 = vld [vmem:[%s182 + $0x10] sm:$0xf]
  %v2471 = vld [vmem:[%s182 + $0x14] sm:$0xf]
  %v2472 = vld [vmem:[%s182 + $0x18] sm:$0xf]
  %v2473 = vld [vmem:[%s182 + $0x1c] sm:$0xf]
  %v2475 = vunpack.c.l.b16 %v2465
  %v2476 = vpack.c.b16 %v2322, %v2475
  %v2477 = vrot.slane %v2476, 1
  %v2486 = vunpack.c.l.b16 %v2466
  %v2487 = vunpack.c.l.b16 %v2467
  %v2488 = vunpack.c.l.b16 %v2468
  %v2489 = vunpack.c.l.b16 %v2469
  %v2490 = vunpack.c.l.b16 %v2470
  %v2491 = vunpack.c.l.b16 %v2471
  %v2492 = vunpack.c.l.b16 %v2472
  %v2493 = vunpack.c.l.b16 %v2473
  %v2494 = vpack.c.b16 %v2487, %v2486
  %v2495 = vpack.c.b16 %v2489, %v2488
  %v2496 = vpack.c.b16 %v2491, %v2490
  %v2497 = vpack.c.b16 %v2493, %v2492
  %v2503 = vsel %vm70, %v2477, 0
  %2505 = vmatprep.subr.bf16.mxu0 0
  %2506 = vmatpush1.bf16.msra.mxu0 %v2494
  %2507 = vmatprep.subr.bf16.mxu0 0
  %2508 = vmatpush1.bf16.msra.mxu0 %v2495
  %2509 = vmatprep.subr.bf16.mxu0 0
  %2510 = vmatpush1.bf16.msra.mxu0 %v2496
  %2511 = vmatprep.subr.bf16.mxu0 0
  %2512 = vmatpush1.bf16.msra.mxu0 %v2497
  %2513 = vmatprep.subr.bf16.mxu0 0
  %2514 = vmatpush1.bf16.msra.mxu0 0
  %2515 = vmatprep.subr.bf16.mxu0 0
  %2516 = vmatpush1.bf16.msra.mxu0 0
  %2517 = vmatprep.subr.bf16.mxu0 0
  %2518 = vmatpush1.bf16.msra.mxu0 0
  %2519 = vmatprep.subr.bf16.mxu0 0
  %2520 = vmatpush1.bf16.msra.mxu0 0
  %2521 = vmatprep.subr.bf16.mxu0 0
  %2522 = vmatpush1.bf16.msra.mxu0 0
  %2523 = vmatprep.subr.bf16.mxu0 0
  %2524 = vmatpush1.bf16.msra.mxu0 0
  %2525 = vmatprep.subr.bf16.mxu0 0
  %2526 = vmatpush1.bf16.msra.mxu0 0
  %2527 = vmatprep.subr.bf16.mxu0 0
  %2528 = vmatpush1.bf16.msra.mxu0 0
  %2529 = vmatprep.subr.bf16.mxu0 0
  %2530 = vmatpush1.bf16.msra.mxu0 0
  %2531 = vmatprep.subr.bf16.mxu0 0
  %2532 = vmatpush1.bf16.msra.mxu0 0
  %2533 = vmatprep.subr.bf16.mxu0 0
  %2534 = vmatpush1.bf16.msra.mxu0 0
  %2535 = vmatprep.subr.bf16.mxu0 0
  %2536 = vmatpush1.bf16.msra.mxu0 0
  %2537 = vmatprep.mubr.bf16.mxu0 0
  %2538 = vmatmul.mubr.bf16.gmra.mrb[0].mxu0 %v2503
  %v2539 = vpop.f32.mrb[0].mxu0
  %v2540 = vadd.f32 0.0, %v2539
  %v2541 = vpop.f32.mrb[0].mxu0
  %v2542 = vpop.f32.mrb[0].mxu0
  %v2543 = vpop.f32.mrb[0].mxu0
  %2544 = vdwg.mxu0
  %v2545 = vadd.f32 %v2460, %v2540
  %v2546 = vld [vmem:[%s2300] sm:$0xc]
  %v2547 = vld [vmem:[%s2300 + $0x4] sm:$0x3]
  %v2548 = vld [vmem:[%s265] sm:$0xf]
  %v2549 = vld [vmem:[%s265 + $0x4] sm:$0xf]
  %v2550 = vld [vmem:[%s265 + $0x8] sm:$0xf]
  %v2551 = vld [vmem:[%s265 + $0xc] sm:$0xf]
  %v2552 = vld [vmem:[%s265 + $0x10] sm:$0xf]
  %v2553 = vld [vmem:[%s265 + $0x14] sm:$0xf]
  %v2554 = vld [vmem:[%s265 + $0x18] sm:$0xf]
  %v2555 = vld [vmem:[%s265 + $0x1c] sm:$0xf]
  %v2558 = vunpack.c.l.b16 %v2546
  %v2559 = vunpack.c.l.b16 %v2547
  %v2560 = vpack.c.b16 %v2559, %v2558
  %v2561 = vrot.slane %v2560, 2
  %v2570 = vunpack.c.l.b16 %v2548
  %v2571 = vunpack.c.l.b16 %v2549
  %v2572 = vunpack.c.l.b16 %v2550
  %v2573 = vunpack.c.l.b16 %v2551
  %v2574 = vunpack.c.l.b16 %v2552
  %v2575 = vunpack.c.l.b16 %v2553
  %v2576 = vunpack.c.l.b16 %v2554
  %v2577 = vunpack.c.l.b16 %v2555
  %v2578 = vpack.c.b16 %v2571, %v2570
  %v2579 = vpack.c.b16 %v2573, %v2572
  %v2580 = vpack.c.b16 %v2575, %v2574
  %v2581 = vpack.c.b16 %v2577, %v2576
  %v2587 = vsel %vm70, %v2561, 0
  %2589 = vmatprep.subr.bf16.mxu0 0
  %2590 = vmatpush1.bf16.msra.mxu0 %v2578
  %2591 = vmatprep.subr.bf16.mxu0 0
  %2592 = vmatpush1.bf16.msra.mxu0 %v2579
  %2593 = vmatprep.subr.bf16.mxu0 0
  %2594 = vmatpush1.bf16.msra.mxu0 %v2580
  %2595 = vmatprep.subr.bf16.mxu0 0
  %2596 = vmatpush1.bf16.msra.mxu0 %v2581
  %2597 = vmatprep.subr.bf16.mxu0 0
  %2598 = vmatpush1.bf16.msra.mxu0 0
  %2599 = vmatprep.subr.bf16.mxu0 0
  %2600 = vmatpush1.bf16.msra.mxu0 0
  %2601 = vmatprep.subr.bf16.mxu0 0
  %2602 = vmatpush1.bf16.msra.mxu0 0
  %2603 = vmatprep.subr.bf16.mxu0 0
  %2604 = vmatpush1.bf16.msra.mxu0 0
  %2605 = vmatprep.subr.bf16.mxu0 0
  %2606 = vmatpush1.bf16.msra.mxu0 0
  %2607 = vmatprep.subr.bf16.mxu0 0
  %2608 = vmatpush1.bf16.msra.mxu0 0
  %2609 = vmatprep.subr.bf16.mxu0 0
  %2610 = vmatpush1.bf16.msra.mxu0 0
  %2611 = vmatprep.subr.bf16.mxu0 0
  %2612 = vmatpush1.bf16.msra.mxu0 0
  %2613 = vmatprep.subr.bf16.mxu0 0
  %2614 = vmatpush1.bf16.msra.mxu0 0
  %2615 = vmatprep.subr.bf16.mxu0 0
  %2616 = vmatpush1.bf16.msra.mxu0 0
  %2617 = vmatprep.subr.bf16.mxu0 0
  %2618 = vmatpush1.bf16.msra.mxu0 0
  %2619 = vmatprep.subr.bf16.mxu0 0
  %2620 = vmatpush1.bf16.msra.mxu0 0
  %2621 = vmatprep.mubr.bf16.mxu0 0
  %2622 = vmatmul.mubr.bf16.gmra.mrb[0].mxu0 %v2587
  %v2623 = vpop.f32.mrb[0].mxu0
  %v2624 = vadd.f32 0.0, %v2623
  %v2625 = vpop.f32.mrb[0].mxu0
  %v2626 = vpop.f32.mrb[0].mxu0
  %v2627 = vpop.f32.mrb[0].mxu0
  %2628 = vdwg.mxu0
  %v2629 = vadd.f32 %v2545, %v2624
  %v2630 = vld [vmem:[%s2300 + $0x4] sm:$0x7]
  %v2631 = vld [vmem:[%s349] sm:$0xf]
  %v2632 = vld [vmem:[%s349 + $0x4] sm:$0xf]
  %v2633 = vld [vmem:[%s349 + $0x8] sm:$0xf]
  %v2634 = vld [vmem:[%s349 + $0xc] sm:$0xf]
  %v2635 = vld [vmem:[%s349 + $0x10] sm:$0xf]
  %v2636 = vld [vmem:[%s349 + $0x14] sm:$0xf]
  %v2637 = vld [vmem:[%s349 + $0x18] sm:$0xf]
  %v2638 = vld [vmem:[%s349 + $0x1c] sm:$0xf]
  %v2640 = vunpack.c.l.b16 %v2630
  %v2641 = vpack.c.b16 %v2640, %v2558
  %v2643 = vshrl.u32 %v2641, 16
  %v2645 = vrot.slane %v2643, 2
  %v2646 = vshll.u32 %v2641, 16
  %v2648 = vrot.slane %v2646, 3
  %v2649 = vor.u32 %v2645, %v2648
  %v2658 = vunpack.c.l.b16 %v2631
  %v2659 = vunpack.c.l.b16 %v2632
  %v2660 = vunpack.c.l.b16 %v2633
  %v2661 = vunpack.c.l.b16 %v2634
  %v2662 = vunpack.c.l.b16 %v2635
  %v2663 = vunpack.c.l.b16 %v2636
  %v2664 = vunpack.c.l.b16 %v2637
  %v2665 = vunpack.c.l.b16 %v2638
  %v2666 = vpack.c.b16 %v2659, %v2658
  %v2667 = vpack.c.b16 %v2661, %v2660
  %v2668 = vpack.c.b16 %v2663, %v2662
  %v2669 = vpack.c.b16 %v2665, %v2664
  %v2675 = vsel %vm70, %v2649, 0
  %2677 = vmatprep.subr.bf16.mxu0 0
  %2678 = vmatpush1.bf16.msra.mxu0 %v2666
  %2679 = vmatprep.subr.bf16.mxu0 0
  %2680 = vmatpush1.bf16.msra.mxu0 %v2667
  %2681 = vmatprep.subr.bf16.mxu0 0
  %2682 = vmatpush1.bf16.msra.mxu0 %v2668
  %2683 = vmatprep.subr.bf16.mxu0 0
  %2684 = vmatpush1.bf16.msra.mxu0 %v2669
  %2685 = vmatprep.subr.bf16.mxu0 0
  %2686 = vmatpush1.bf16.msra.mxu0 0
  %2687 = vmatprep.subr.bf16.mxu0 0
  %2688 = vmatpush1.bf16.msra.mxu0 0
  %2689 = vmatprep.subr.bf16.mxu0 0
  %2690 = vmatpush1.bf16.msra.mxu0 0
  %2691 = vmatprep.subr.bf16.mxu0 0
  %2692 = vmatpush1.bf16.msra.mxu0 0
  %2693 = vmatprep.subr.bf16.mxu0 0
  %2694 = vmatpush1.bf16.msra.mxu0 0
  %2695 = vmatprep.subr.bf16.mxu0 0
  %2696 = vmatpush1.bf16.msra.mxu0 0
  %2697 = vmatprep.subr.bf16.mxu0 0
  %2698 = vmatpush1.bf16.msra.mxu0 0
  %2699 = vmatprep.subr.bf16.mxu0 0
  %2700 = vmatpush1.bf16.msra.mxu0 0
  %2701 = vmatprep.subr.bf16.mxu0 0
  %2702 = vmatpush1.bf16.msra.mxu0 0
  %2703 = vmatprep.subr.bf16.mxu0 0
  %2704 = vmatpush1.bf16.msra.mxu0 0
  %2705 = vmatprep.subr.bf16.mxu0 0
  %2706 = vmatpush1.bf16.msra.mxu0 0
  %2707 = vmatprep.subr.bf16.mxu0 0
  %2708 = vmatpush1.bf16.msra.mxu0 0
  %2709 = vmatprep.mubr.bf16.mxu0 0
  %2710 = vmatmul.mubr.bf16.gmra.mrb[0].mxu0 %v2675
  %v2711 = vpop.f32.mrb[0].mxu0
  %v2712 = vadd.f32 0.0, %v2711
  %v2713 = vpop.f32.mrb[0].mxu0
  %v2714 = vpop.f32.mrb[0].mxu0
  %v2715 = vpop.f32.mrb[0].mxu0
  %2716 = vdwg.mxu0
  %v2717 = vadd.f32 %v2629, %v2712
  %v2718 = vld [vmem:[%s2300] sm:$0x8]
  %v2719 = vld [vmem:[%s438] sm:$0xf]
  %v2720 = vld [vmem:[%s438 + $0x4] sm:$0xf]
  %v2721 = vld [vmem:[%s438 + $0x8] sm:$0xf]
  %v2722 = vld [vmem:[%s438 + $0xc] sm:$0xf]
  %v2723 = vld [vmem:[%s438 + $0x10] sm:$0xf]
  %v2724 = vld [vmem:[%s438 + $0x14] sm:$0xf]
  %v2725 = vld [vmem:[%s438 + $0x18] sm:$0xf]
  %v2726 = vld [vmem:[%s438 + $0x1c] sm:$0xf]
  %v2728 = vunpack.c.l.b16 %v2718
  %v2729 = vpack.c.b16 %v2640, %v2728
  %v2730 = vrot.slane %v2729, 3
  %v2739 = vunpack.c.l.b16 %v2719
  %v2740 = vunpack.c.l.b16 %v2720
  %v2741 = vunpack.c.l.b16 %v2721
  %v2742 = vunpack.c.l.b16 %v2722
  %v2743 = vunpack.c.l.b16 %v2723
  %v2744 = vunpack.c.l.b16 %v2724
  %v2745 = vunpack.c.l.b16 %v2725
  %v2746 = vunpack.c.l.b16 %v2726
  %v2747 = vpack.c.b16 %v2740, %v2739
  %v2748 = vpack.c.b16 %v2742, %v2741
  %v2749 = vpack.c.b16 %v2744, %v2743
  %v2750 = vpack.c.b16 %v2746, %v2745
  %v2756 = vsel %vm70, %v2730, 0
  %2758 = vmatprep.subr.bf16.mxu0 0
  %2759 = vmatpush1.bf16.msra.mxu0 %v2747
  %2760 = vmatprep.subr.bf16.mxu0 0
  %2761 = vmatpush1.bf16.msra.mxu0 %v2748
  %2762 = vmatprep.subr.bf16.mxu0 0
  %2763 = vmatpush1.bf16.msra.mxu0 %v2749
  %2764 = vmatprep.subr.bf16.mxu0 0
  %2765 = vmatpush1.bf16.msra.mxu0 %v2750
  %2766 = vmatprep.subr.bf16.mxu0 0
  %2767 = vmatpush1.bf16.msra.mxu0 0
  %2768 = vmatprep.subr.bf16.mxu0 0
  %2769 = vmatpush1.bf16.msra.mxu0 0
  %2770 = vmatprep.subr.bf16.mxu0 0
  %2771 = vmatpush1.bf16.msra.mxu0 0
  %2772 = vmatprep.subr.bf16.mxu0 0
  %2773 = vmatpush1.bf16.msra.mxu0 0
  %2774 = vmatprep.subr.bf16.mxu0 0
  %2775 = vmatpush1.bf16.msra.mxu0 0
  %2776 = vmatprep.subr.bf16.mxu0 0
  %2777 = vmatpush1.bf16.msra.mxu0 0
  %2778 = vmatprep.subr.bf16.mxu0 0
  %2779 = vmatpush1.bf16.msra.mxu0 0
  %2780 = vmatprep.subr.bf16.mxu0 0
  %2781 = vmatpush1.bf16.msra.mxu0 0
  %2782 = vmatprep.subr.bf16.mxu0 0
  %2783 = vmatpush1.bf16.msra.mxu0 0
  %2784 = vmatprep.subr.bf16.mxu0 0
  %2785 = vmatpush1.bf16.msra.mxu0 0
  %2786 = vmatprep.subr.bf16.mxu0 0
  %2787 = vmatpush1.bf16.msra.mxu0 0
  %2788 = vmatprep.subr.bf16.mxu0 0
  %2789 = vmatpush1.bf16.msra.mxu0 0
  %2790 = vmatprep.mubr.bf16.mxu0 0
  %2791 = vmatmul.mubr.bf16.gmra.mrb[0].mxu0 %v2756
  %v2792 = vpop.f32.mrb[0].mxu0
  %v2793 = vadd.f32 0.0, %v2792
  %v2794 = vpop.f32.mrb[0].mxu0
  %v2795 = vpop.f32.mrb[0].mxu0
  %v2796 = vpop.f32.mrb[0].mxu0
  %2797 = vdwg.mxu0
  %v2798 = vadd.f32 %v2717, %v2793
  %v2799 = vld [vmem:[%s2300 + $0x4] sm:$0xf]
  %v2800 = vld [vmem:[%s520] sm:$0xf]
  %v2801 = vld [vmem:[%s520 + $0x4] sm:$0xf]
  %v2802 = vld [vmem:[%s520 + $0x8] sm:$0xf]
  %v2803 = vld [vmem:[%s520 + $0xc] sm:$0xf]
  %v2804 = vld [vmem:[%s520 + $0x10] sm:$0xf]
  %v2805 = vld [vmem:[%s520 + $0x14] sm:$0xf]
  %v2806 = vld [vmem:[%s520 + $0x18] sm:$0xf]
  %v2807 = vld [vmem:[%s520 + $0x1c] sm:$0xf]
  %v2816 = vunpack.c.l.b16 %v2800
  %v2817 = vunpack.c.l.b16 %v2801
  %v2818 = vunpack.c.l.b16 %v2802
  %v2819 = vunpack.c.l.b16 %v2803
  %v2820 = vunpack.c.l.b16 %v2804
  %v2821 = vunpack.c.l.b16 %v2805
  %v2822 = vunpack.c.l.b16 %v2806
  %v2823 = vunpack.c.l.b16 %v2807
  %v2824 = vpack.c.b16 %v2817, %v2816
  %v2825 = vpack.c.b16 %v2819, %v2818
  %v2826 = vpack.c.b16 %v2821, %v2820
  %v2827 = vpack.c.b16 %v2823, %v2822
  %v2833 = vsel %vm70, %v2799, 0
  %2835 = vmatprep.subr.bf16.mxu0 0
  %2836 = vmatpush1.bf16.msra.mxu0 %v2824
  %2837 = vmatprep.subr.bf16.mxu0 0
  %2838 = vmatpush1.bf16.msra.mxu0 %v2825
  %2839 = vmatprep.subr.bf16.mxu0 0
  %2840 = vmatpush1.bf16.msra.mxu0 %v2826
  %2841 = vmatprep.subr.bf16.mxu0 0
  %2842 = vmatpush1.bf16.msra.mxu0 %v2827
  %2843 = vmatprep.subr.bf16.mxu0 0
  %2844 = vmatpush1.bf16.msra.mxu0 0
  %2845 = vmatprep.subr.bf16.mxu0 0
  %2846 = vmatpush1.bf16.msra.mxu0 0
  %2847 = vmatprep.subr.bf16.mxu0 0
  %2848 = vmatpush1.bf16.msra.mxu0 0
  %2849 = vmatprep.subr.bf16.mxu0 0
  %2850 = vmatpush1.bf16.msra.mxu0 0
  %2851 = vmatprep.subr.bf16.mxu0 0
  %2852 = vmatpush1.bf16.msra.mxu0 0
  %2853 = vmatprep.subr.bf16.mxu0 0
  %2854 = vmatpush1.bf16.msra.mxu0 0
  %2855 = vmatprep.subr.bf16.mxu0 0
  %2856 = vmatpush1.bf16.msra.mxu0 0
  %2857 = vmatprep.subr.bf16.mxu0 0
  %2858 = vmatpush1.bf16.msra.mxu0 0
  %2859 = vmatprep.subr.bf16.mxu0 0
  %2860 = vmatpush1.bf16.msra.mxu0 0
  %2861 = vmatprep.subr.bf16.mxu0 0
  %2862 = vmatpush1.bf16.msra.mxu0 0
  %2863 = vmatprep.subr.bf16.mxu0 0
  %2864 = vmatpush1.bf16.msra.mxu0 0
  %2865 = vmatprep.subr.bf16.mxu0 0
  %2866 = vmatpush1.bf16.msra.mxu0 0
  %2867 = vmatprep.mubr.bf16.mxu0 0
  %2868 = vmatmul.mubr.bf16.gmra.mrb[0].mxu0 %v2833
  %v2869 = vpop.f32.mrb[0].mxu0
  %v2870 = vadd.f32 0.0, %v2869
  %v2871 = vpop.f32.mrb[0].mxu0
  %v2872 = vpop.f32.mrb[0].mxu0
  %v2873 = vpop.f32.mrb[0].mxu0
  %2874 = vdwg.mxu0
  %v2875 = vadd.f32 %v2798, %v2870
  %v2876 = vld [vmem:[%s2300 + $0x4] sm:$0xf]
  %v2877 = vld [vmem:[%s2300 + $0x8] sm:$0x1]
  %v2878 = vld [vmem:[%s599] sm:$0xf]
  %v2879 = vld [vmem:[%s599 + $0x4] sm:$0xf]
  %v2880 = vld [vmem:[%s599 + $0x8] sm:$0xf]
  %v2881 = vld [vmem:[%s599 + $0xc] sm:$0xf]
  %v2882 = vld [vmem:[%s599 + $0x10] sm:$0xf]
  %v2883 = vld [vmem:[%s599 + $0x14] sm:$0xf]
  %v2884 = vld [vmem:[%s599 + $0x18] sm:$0xf]
  %v2885 = vld [vmem:[%s599 + $0x1c] sm:$0xf]
  %v2888 = vunpack.c.l.b16 %v2876
  %v2889 = vunpack.c.l.b16 %v2877
  %v2890 = vpack.c.b16 %v2889, %v2888
  %v2892 = vshrl.u32 %v2890, 16
  %v2894 = vshll.u32 %v2890, 16
  %v2896 = vrot.slane %v2894, 1
  %v2897 = vor.u32 %v2892, %v2896
  %v2906 = vunpack.c.l.b16 %v2878
  %v2907 = vunpack.c.l.b16 %v2879
  %v2908 = vunpack.c.l.b16 %v2880
  %v2909 = vunpack.c.l.b16 %v2881
  %v2910 = vunpack.c.l.b16 %v2882
  %v2911 = vunpack.c.l.b16 %v2883
  %v2912 = vunpack.c.l.b16 %v2884
  %v2913 = vunpack.c.l.b16 %v2885
  %v2914 = vpack.c.b16 %v2907, %v2906
  %v2915 = vpack.c.b16 %v2909, %v2908
  %v2916 = vpack.c.b16 %v2911, %v2910
  %v2917 = vpack.c.b16 %v2913, %v2912
  %v2923 = vsel %vm70, %v2897, 0
  %2925 = vmatprep.subr.bf16.mxu0 0
  %2926 = vmatpush1.bf16.msra.mxu0 %v2914
  %2927 = vmatprep.subr.bf16.mxu0 0
  %2928 = vmatpush1.bf16.msra.mxu0 %v2915
  %2929 = vmatprep.subr.bf16.mxu0 0
  %2930 = vmatpush1.bf16.msra.mxu0 %v2916
  %2931 = vmatprep.subr.bf16.mxu0 0
  %2932 = vmatpush1.bf16.msra.mxu0 %v2917
  %2933 = vmatprep.subr.bf16.mxu0 0
  %2934 = vmatpush1.bf16.msra.mxu0 0
  %2935 = vmatprep.subr.bf16.mxu0 0
  %2936 = vmatpush1.bf16.msra.mxu0 0
  %2937 = vmatprep.subr.bf16.mxu0 0
  %2938 = vmatpush1.bf16.msra.mxu0 0
  %2939 = vmatprep.subr.bf16.mxu0 0
  %2940 = vmatpush1.bf16.msra.mxu0 0
  %2941 = vmatprep.subr.bf16.mxu0 0
  %2942 = vmatpush1.bf16.msra.mxu0 0
  %2943 = vmatprep.subr.bf16.mxu0 0
  %2944 = vmatpush1.bf16.msra.mxu0 0
  %2945 = vmatprep.subr.bf16.mxu0 0
  %2946 = vmatpush1.bf16.msra.mxu0 0
  %2947 = vmatprep.subr.bf16.mxu0 0
  %2948 = vmatpush1.bf16.msra.mxu0 0
  %2949 = vmatprep.subr.bf16.mxu0 0
  %2950 = vmatpush1.bf16.msra.mxu0 0
  %2951 = vmatprep.subr.bf16.mxu0 0
  %2952 = vmatpush1.bf16.msra.mxu0 0
  %2953 = vmatprep.subr.bf16.mxu0 0
  %2954 = vmatpush1.bf16.msra.mxu0 0
  %2955 = vmatprep.subr.bf16.mxu0 0
  %2956 = vmatpush1.bf16.msra.mxu0 0
  %2957 = vmatprep.mubr.bf16.mxu0 0
  %2958 = vmatmul.mubr.bf16.gmra.mrb[0].mxu0 %v2923
  %v2959 = vpop.f32.mrb[0].mxu0
  %v2960 = vadd.f32 0.0, %v2959
  %v2961 = vpop.f32.mrb[0].mxu0
  %v2962 = vpop.f32.mrb[0].mxu0
  %v2963 = vpop.f32.mrb[0].mxu0
  %2964 = vdwg.mxu0
  %v2965 = vadd.f32 %v2875, %v2960
  %v2966 = vld [vmem:[%s2300 + $0x4] sm:$0xe]
  %v2967 = vld [vmem:[%s689] sm:$0xf]
  %v2968 = vld [vmem:[%s689 + $0x4] sm:$0xf]
  %v2969 = vld [vmem:[%s689 + $0x8] sm:$0xf]
  %v2970 = vld [vmem:[%s689 + $0xc] sm:$0xf]
  %v2971 = vld [vmem:[%s689 + $0x10] sm:$0xf]
  %v2972 = vld [vmem:[%s689 + $0x14] sm:$0xf]
  %v2973 = vld [vmem:[%s689 + $0x18] sm:$0xf]
  %v2974 = vld [vmem:[%s689 + $0x1c] sm:$0xf]
  %v2976 = vunpack.c.l.b16 %v2966
  %v2977 = vpack.c.b16 %v2889, %v2976
  %v2978 = vrot.slane %v2977, 1
  %v2987 = vunpack.c.l.b16 %v2967
  %v2988 = vunpack.c.l.b16 %v2968
  %v2989 = vunpack.c.l.b16 %v2969
  %v2990 = vunpack.c.l.b16 %v2970
  %v2991 = vunpack.c.l.b16 %v2971
  %v2992 = vunpack.c.l.b16 %v2972
  %v2993 = vunpack.c.l.b16 %v2973
  %v2994 = vunpack.c.l.b16 %v2974
  %v2995 = vpack.c.b16 %v2988, %v2987
  %v2996 = vpack.c.b16 %v2990, %v2989
  %v2997 = vpack.c.b16 %v2992, %v2991
  %v2998 = vpack.c.b16 %v2994, %v2993
  %v3004 = vsel %vm70, %v2978, 0
  %3006 = vmatprep.subr.bf16.mxu0 0
  %3007 = vmatpush1.bf16.msra.mxu0 %v2995
  %3008 = vmatprep.subr.bf16.mxu0 0
  %3009 = vmatpush1.bf16.msra.mxu0 %v2996
  %3010 = vmatprep.subr.bf16.mxu0 0
  %3011 = vmatpush1.bf16.msra.mxu0 %v2997
  %3012 = vmatprep.subr.bf16.mxu0 0
  %3013 = vmatpush1.bf16.msra.mxu0 %v2998
  %3014 = vmatprep.subr.bf16.mxu0 0
  %3015 = vmatpush1.bf16.msra.mxu0 0
  %3016 = vmatprep.subr.bf16.mxu0 0
  %3017 = vmatpush1.bf16.msra.mxu0 0
  %3018 = vmatprep.subr.bf16.mxu0 0
  %3019 = vmatpush1.bf16.msra.mxu0 0
  %3020 = vmatprep.subr.bf16.mxu0 0
  %3021 = vmatpush1.bf16.msra.mxu0 0
  %3022 = vmatprep.subr.bf16.mxu0 0
  %3023 = vmatpush1.bf16.msra.mxu0 0
  %3024 = vmatprep.subr.bf16.mxu0 0
  %3025 = vmatpush1.bf16.msra.mxu0 0
  %3026 = vmatprep.subr.bf16.mxu0 0
  %3027 = vmatpush1.bf16.msra.mxu0 0
  %3028 = vmatprep.subr.bf16.mxu0 0
  %3029 = vmatpush1.bf16.msra.mxu0 0
  %3030 = vmatprep.subr.bf16.mxu0 0
  %3031 = vmatpush1.bf16.msra.mxu0 0
  %3032 = vmatprep.subr.bf16.mxu0 0
  %3033 = vmatpush1.bf16.msra.mxu0 0
  %3034 = vmatprep.subr.bf16.mxu0 0
  %3035 = vmatpush1.bf16.msra.mxu0 0
  %3036 = vmatprep.subr.bf16.mxu0 0
  %3037 = vmatpush1.bf16.msra.mxu0 0
  %3038 = vmatprep.mubr.bf16.mxu0 0
  %3039 = vmatmul.mubr.bf16.gmra.mrb[0].mxu0 %v3004
  %v3040 = vpop.f32.mrb[0].mxu0
  %v3041 = vadd.f32 0.0, %v3040
  %v3042 = vpop.f32.mrb[0].mxu0
  %v3043 = vpop.f32.mrb[0].mxu0
  %v3044 = vpop.f32.mrb[0].mxu0
  %3045 = vdwg.mxu0
  %v3046 = vadd.f32 %v2965, %v3041
  %v3047 = vld [vmem:[%s2] sm:$0x1]
  %v3049 = vlaneseq
  %v3050 = vshrl.u32 %v3049, 7
  %v3051 = vsub.s32 0, %v3050
  %v3052 = vrot.slane %v3047, %v3051
  %v3054 = vadd.f32 %v3046, %v3052
  %v3055 = vmax.f32 %v3054, 0.0
  %v3056 = vpack.c.bf16 %v3055, %v3055
  %s3057 = scalar_lea.vmem %s3, 12
  %3058 = vst.msk [vmem:[%s3057] sm:$0xf] %vm780, %v3056
  // Predicated region
  $region14: #{contrastive_qf_forward.9} parent=0 // pred_check
    _
  $region15: #{contrastive_qf_forward.9} parent=0 // pred_check_branch
    %3060 = sbr.rel (0) target = $region17
  $region16: #{contrastive_qf_forward.9} parent=0 // pred_region
    _
  $region17: #{contrastive_qf_forward.9} parent=0 // pred_fallthru
    _
  // Predicated region
  $region18: #{contrastive_qf_forward.9} parent=0 // pred_check
    _
  $region19: #{contrastive_qf_forward.9} parent=0 // pred_check_branch
    %3062 = sbr.rel (0) target = $region21
  $region20: #{contrastive_qf_forward.9} parent=0 // pred_region
    _
  $region21: #{contrastive_qf_forward.9} parent=0 // pred_fallthru
    _

// kernel: contrastive_qf_forward.11
$region0: #{contrastive_qf_forward.11}
  #allocation0 [shape = 'u32[]', space=smem, size = 0x4, offset = 0x4, fixed_abs, tag = 'smem constant byte address 0x4 - core index']
  #allocation1 [shape = 'u32[144,128]{1,0:T(1,128)}', space=vmem, size = 0x12000, scoped, tag = 'internal scratch']
  %s0 = inlined_call_operand.vmem [shape: bf16[2,256], index: 0, kind: input, shape index: {}]
  %s1 = inlined_call_operand.vmem [shape: bf16[256,64], index: 1, kind: input, shape index: {}]
  %s2 = inlined_call_operand.vmem [shape: f32[1,64], index: 2, kind: input, shape index: {}]
  %s3 = inlined_call_operand.vmem [shape: bf16[2,64], index: 3, kind: output, shape index: {}]
  %s4 = sld [smem:[#allocation0]]
  $region22: #{contrastive_qf_forward.11} parent=0
    _
  %s6 = ssub.s32 1, %s4
  %s7 = scalar_select 0, %s6, %s4
  // Predicated region
  $region2: #{contrastive_qf_forward.11} parent=0 // pred_check
    _
  $region3: #{contrastive_qf_forward.11} parent=0 // pred_check_branch
    %9 = sbr.rel (0) target = $region5
  $region4: #{contrastive_qf_forward.11} parent=0 // pred_region
    _
  $region5: #{contrastive_qf_forward.11} parent=0 // pred_fallthru
    _
  // Predicated region
  $region6: #{contrastive_qf_forward.11} parent=0 // pred_check
    _
  $region7: #{contrastive_qf_forward.11} parent=0 // pred_check_branch
    %11 = sbr.rel (0) target = $region9
  $region8: #{contrastive_qf_forward.11} parent=0 // pred_region
    _
  $region9: #{contrastive_qf_forward.11} parent=0 // pred_fallthru
    _
  // Predicated region
  $region10: #{contrastive_qf_forward.11} parent=0 // pred_check
    _
  $region11: #{contrastive_qf_forward.11} parent=0 // pred_check_branch
    %13 = sbr.rel (0) target = $region13
  $region12: #{contrastive_qf_forward.11} parent=0 // pred_region
    _
  $region13: #{contrastive_qf_forward.11} parent=0 // pred_fallthru
    _
  %v15 = vld [vmem:[%s0] sm:$0x3]
  %v16 = vld [vmem:[%s1] sm:$0xf]
  %v17 = vld [vmem:[%s1 + $0x4] sm:$0xf]
  %v18 = vld [vmem:[%s1 + $0x8] sm:$0xf]
  %v19 = vld [vmem:[%s1 + $0xc] sm:$0xf]
  %v20 = vld [vmem:[%s1 + $0x10] sm:$0xf]
  %v21 = vld [vmem:[%s1 + $0x14] sm:$0xf]
  %v22 = vld [vmem:[%s1 + $0x18] sm:$0xf]
  %v23 = vld [vmem:[%s1 + $0x1c] sm:$0xf]
  %v24 = vld [vmem:[%s1 + $0x20] sm:$0xf]
  %v25 = vld [vmem:[%s1 + $0x24] sm:$0xf]
  %v26 = vld [vmem:[%s1 + $0x28] sm:$0xf]
  %v27 = vld [vmem:[%s1 + $0x2c] sm:$0xf]
  %v28 = vld [vmem:[%s1 + $0x30] sm:$0xf]
  %v29 = vld [vmem:[%s1 + $0x34] sm:$0xf]
  %v30 = vld [vmem:[%s1 + $0x38] sm:$0xf]
  %v31 = vld [vmem:[%s1 + $0x3c] sm:$0xf]
  %v32 = vld [vmem:[%s1 + $0x40] sm:$0xf]
  %v33 = vld [vmem:[%s1 + $0x44] sm:$0xf]
  %v34 = vld [vmem:[%s1 + $0x48] sm:$0xf]
  %v35 = vld [vmem:[%s1 + $0x4c] sm:$0xf]
  %v36 = vld [vmem:[%s1 + $0x50] sm:$0xf]
  %v37 = vld [vmem:[%s1 + $0x54] sm:$0xf]
  %v38 = vld [vmem:[%s1 + $0x58] sm:$0xf]
  %v39 = vld [vmem:[%s1 + $0x5c] sm:$0xf]
  %v40 = vld [vmem:[%s1 + $0x60] sm:$0xf]
  %v41 = vld [vmem:[%s1 + $0x64] sm:$0xf]
  %v42 = vld [vmem:[%s1 + $0x68] sm:$0xf]
  %v43 = vld [vmem:[%s1 + $0x6c] sm:$0xf]
  %v44 = vld [vmem:[%s1 + $0x70] sm:$0xf]
  %v45 = vld [vmem:[%s1 + $0x74] sm:$0xf]
  %v46 = vld [vmem:[%s1 + $0x78] sm:$0xf]
  %v47 = vld [vmem:[%s1 + $0x7c] sm:$0xf]
  %v48 = vld [vmem:[%s2] sm:$0x1]
  %v50 = vlaneseq
  %v51 = vshrl.u32 %v50, 7
  %v52 = vsub.s32 0, %v51
  %v53 = vrot.slane %v48, %v52
  %v57 = vunpack.c.l.s4 1966171168
  %v58 = vunpack.c.0.s8 %v57
  %v59 = vlaneseq
  %v60 = vshrl.u32 %v59, 7
  %v61 = vsub.s32 %v58, %v60
  %v62 = vrot.slane %v15, %v61
  %v63 = vcombine.high %v62, %v62
  %v65 = vunpack.c.l.s4 1966171168
  %v66 = vunpack.c.0.s8 %v65
  %v67 = vlaneseq
  %v68 = vshrl.u32 %v67, 7
  %v69 = vsub.s32 %v66, %v68
  %v70 = vrot.slane %v62, %v69
  %v72 = vunpack.c.l.s4 1966171168
  %v73 = vunpack.c.0.s8 %v72
  %v74 = vlaneseq
  %v75 = vshrl.u32 %v74, 7
  %v76 = vsub.s32 %v73, %v75
  %v77 = vrot.slane %v63, %v76
  %v112 = vunpack.c.l.b16 %v16
  %v113 = vunpack.c.l.b16 %v17
  %v114 = vunpack.c.l.b16 %v18
  %v115 = vunpack.c.l.b16 %v19
  %v116 = vunpack.c.l.b16 %v20
  %v117 = vunpack.c.l.b16 %v21
  %v118 = vunpack.c.l.b16 %v22
  %v119 = vunpack.c.l.b16 %v23
  %v120 = vunpack.c.l.b16 %v24
  %v121 = vunpack.c.l.b16 %v25
  %v122 = vunpack.c.l.b16 %v26
  %v123 = vunpack.c.l.b16 %v27
  %v124 = vunpack.c.l.b16 %v28
  %v125 = vunpack.c.l.b16 %v29
  %v126 = vunpack.c.l.b16 %v30
  %v127 = vunpack.c.l.b16 %v31
  %v128 = vunpack.c.l.b16 %v32
  %v129 = vunpack.c.l.b16 %v33
  %v130 = vunpack.c.l.b16 %v34
  %v131 = vunpack.c.l.b16 %v35
  %v132 = vunpack.c.l.b16 %v36
  %v133 = vunpack.c.l.b16 %v37
  %v134 = vunpack.c.l.b16 %v38
  %v135 = vunpack.c.l.b16 %v39
  %v136 = vunpack.c.l.b16 %v40
  %v137 = vunpack.c.l.b16 %v41
  %v138 = vunpack.c.l.b16 %v42
  %v139 = vunpack.c.l.b16 %v43
  %v140 = vunpack.c.l.b16 %v44
  %v141 = vunpack.c.l.b16 %v45
  %v142 = vunpack.c.l.b16 %v46
  %v143 = vunpack.c.l.b16 %v47
  %v144 = vpack.c.b16 %v113, %v112
  %v145 = vpack.c.b16 %v115, %v114
  %v146 = vpack.c.b16 %v117, %v116
  %v147 = vpack.c.b16 %v119, %v118
  %v148 = vpack.c.b16 %v121, %v120
  %v149 = vpack.c.b16 %v123, %v122
  %v150 = vpack.c.b16 %v125, %v124
  %v151 = vpack.c.b16 %v127, %v126
  %v152 = vpack.c.b16 %v129, %v128
  %v153 = vpack.c.b16 %v131, %v130
  %v154 = vpack.c.b16 %v133, %v132
  %v155 = vpack.c.b16 %v135, %v134
  %v156 = vpack.c.b16 %v137, %v136
  %v157 = vpack.c.b16 %v139, %v138
  %v158 = vpack.c.b16 %v141, %v140
  %v159 = vpack.c.b16 %v143, %v142
  %176 = vmatprep.subr.bf16.mxu0 0
  %177 = vmatpush1.bf16.msra.mxu0 %v144
  %178 = vmatprep.subr.bf16.mxu0 0
  %179 = vmatpush1.bf16.msra.mxu0 %v145
  %180 = vmatprep.subr.bf16.mxu0 0
  %181 = vmatpush1.bf16.msra.mxu0 %v146
  %182 = vmatprep.subr.bf16.mxu0 0
  %183 = vmatpush1.bf16.msra.mxu0 %v147
  %184 = vmatprep.subr.bf16.mxu0 0
  %185 = vmatpush1.bf16.msra.mxu0 %v148
  %186 = vmatprep.subr.bf16.mxu0 0
  %187 = vmatpush1.bf16.msra.mxu0 %v149
  %188 = vmatprep.subr.bf16.mxu0 0
  %189 = vmatpush1.bf16.msra.mxu0 %v150
  %190 = vmatprep.subr.bf16.mxu0 0
  %191 = vmatpush1.bf16.msra.mxu0 %v151
  %192 = vmatprep.subr.bf16.mxu0 0
  %193 = vmatpush1.bf16.msra.mxu0 %v152
  %194 = vmatprep.subr.bf16.mxu0 0
  %195 = vmatpush1.bf16.msra.mxu0 %v153
  %196 = vmatprep.subr.bf16.mxu0 0
  %197 = vmatpush1.bf16.msra.mxu0 %v154
  %198 = vmatprep.subr.bf16.mxu0 0
  %199 = vmatpush1.bf16.msra.mxu0 %v155
  %200 = vmatprep.subr.bf16.mxu0 0
  %201 = vmatpush1.bf16.msra.mxu0 %v156
  %202 = vmatprep.subr.bf16.mxu0 0
  %203 = vmatpush1.bf16.msra.mxu0 %v157
  %204 = vmatprep.subr.bf16.mxu0 0
  %205 = vmatpush1.bf16.msra.mxu0 %v158
  %206 = vmatprep.subr.bf16.mxu0 0
  %207 = vmatpush1.bf16.msra.mxu0 %v159
  %208 = vmatprep.mubr.bf16.mxu0 %v77
  %209 = vmatmul.mubr.bf16.gmra.mrb[0].mxu0 %v70
  %v210 = vpop.f32.mrb[0].mxu0
  %v211 = vadd.f32 %v53, %v210
  %v212 = vpop.f32.mrb[0].mxu0
  %v213 = vpop.f32.mrb[0].mxu0
  %v214 = vpop.f32.mrb[0].mxu0
  %215 = vdwg.mxu0
  %v216 = vmax.f32 %v211, 0.0
  %v217 = vpack.c.bf16 %v216, %v216
  %vm218 = vcmask 516096
  %219 = vst.msk [vmem:[%s3] sm:$0x1] %vm218, %v217
  // Predicated region
  $region14: #{contrastive_qf_forward.11} parent=0 // pred_check
    _
  $region15: #{contrastive_qf_forward.11} parent=0 // pred_check_branch
    %221 = sbr.rel (0) target = $region17
  $region16: #{contrastive_qf_forward.11} parent=0 // pred_region
    _
  $region17: #{contrastive_qf_forward.11} parent=0 // pred_fallthru
    _
  // Predicated region
  $region18: #{contrastive_qf_forward.11} parent=0 // pred_check
    _
  $region19: #{contrastive_qf_forward.11} parent=0 // pred_check_branch
    %223 = sbr.rel (0) target = $region21
  $region20: #{contrastive_qf_forward.11} parent=0 // pred_region
    _
  $region21: #{contrastive_qf_forward.11} parent=0 // pred_fallthru
    _

// kernel: contrastive_qf_forward.10
$region0: #{contrastive_qf_forward.10}
  #allocation0 [shape = 'u32[]', space=smem, size = 0x4, offset = 0x4, fixed_abs, tag = 'smem constant byte address 0x4 - core index']
  #allocation1 [shape = 'u32[144,128]{1,0:T(1,128)}', space=vmem, size = 0x12000, scoped, tag = 'internal scratch']
  %s0 = inlined_call_operand.vmem [shape: bf16[2,260], index: 0, kind: input, shape index: {}]
  %s1 = inlined_call_operand.vmem [shape: bf16[260,64], index: 1, kind: input, shape index: {}]
  %s2 = inlined_call_operand.vmem [shape: f32[1,64], index: 2, kind: input, shape index: {}]
  %s3 = inlined_call_operand.vmem [shape: bf16[2,64], index: 3, kind: output, shape index: {}]
  %s4 = sld [smem:[#allocation0]]
  $region22: #{contrastive_qf_forward.10} parent=0
    _
  %s6 = ssub.s32 1, %s4
  %s7 = scalar_select 0, %s6, %s4
  // Predicated region
  $region2: #{contrastive_qf_forward.10} parent=0 // pred_check
    _
  $region3: #{contrastive_qf_forward.10} parent=0 // pred_check_branch
    %9 = sbr.rel (0) target = $region5
  $region4: #{contrastive_qf_forward.10} parent=0 // pred_region
    _
  $region5: #{contrastive_qf_forward.10} parent=0 // pred_fallthru
    _
  // Predicated region
  $region6: #{contrastive_qf_forward.10} parent=0 // pred_check
    _
  $region7: #{contrastive_qf_forward.10} parent=0 // pred_check_branch
    %11 = sbr.rel (0) target = $region9
  $region8: #{contrastive_qf_forward.10} parent=0 // pred_region
    _
  $region9: #{contrastive_qf_forward.10} parent=0 // pred_fallthru
    _
  // Predicated region
  $region10: #{contrastive_qf_forward.10} parent=0 // pred_check
    _
  $region11: #{contrastive_qf_forward.10} parent=0 // pred_check_branch
    %13 = sbr.rel (0) target = $region13
  $region12: #{contrastive_qf_forward.10} parent=0 // pred_region
    _
  $region13: #{contrastive_qf_forward.10} parent=0 // pred_fallthru
    _
  %v15 = vld [vmem:[%s0] sm:$0x7]
  %v16 = vld [vmem:[%s1] sm:$0xf]
  %v17 = vld [vmem:[%s1 + $0x4] sm:$0xf]
  %v18 = vld [vmem:[%s1 + $0x8] sm:$0xf]
  %v19 = vld [vmem:[%s1 + $0xc] sm:$0xf]
  %v20 = vld [vmem:[%s1 + $0x10] sm:$0xf]
  %v21 = vld [vmem:[%s1 + $0x14] sm:$0xf]
  %v22 = vld [vmem:[%s1 + $0x18] sm:$0xf]
  %v23 = vld [vmem:[%s1 + $0x1c] sm:$0xf]
  %v24 = vld [vmem:[%s1 + $0x20] sm:$0xf]
  %v25 = vld [vmem:[%s1 + $0x24] sm:$0xf]
  %v26 = vld [vmem:[%s1 + $0x28] sm:$0xf]
  %v27 = vld [vmem:[%s1 + $0x2c] sm:$0xf]
  %v28 = vld [vmem:[%s1 + $0x30] sm:$0xf]
  %v29 = vld [vmem:[%s1 + $0x34] sm:$0xf]
  %v30 = vld [vmem:[%s1 + $0x38] sm:$0xf]
  %v31 = vld [vmem:[%s1 + $0x3c] sm:$0xf]
  %v32 = vld [vmem:[%s1 + $0x40] sm:$0xf]
  %v33 = vld [vmem:[%s1 + $0x44] sm:$0xf]
  %v34 = vld [vmem:[%s1 + $0x48] sm:$0xf]
  %v35 = vld [vmem:[%s1 + $0x4c] sm:$0xf]
  %v36 = vld [vmem:[%s1 + $0x50] sm:$0xf]
  %v37 = vld [vmem:[%s1 + $0x54] sm:$0xf]
  %v38 = vld [vmem:[%s1 + $0x58] sm:$0xf]
  %v39 = vld [vmem:[%s1 + $0x5c] sm:$0xf]
  %v40 = vld [vmem:[%s1 + $0x60] sm:$0xf]
  %v41 = vld [vmem:[%s1 + $0x64] sm:$0xf]
  %v42 = vld [vmem:[%s1 + $0x68] sm:$0xf]
  %v43 = vld [vmem:[%s1 + $0x6c] sm:$0xf]
  %v44 = vld [vmem:[%s1 + $0x70] sm:$0xf]
  %v45 = vld [vmem:[%s1 + $0x74] sm:$0xf]
  %v46 = vld [vmem:[%s1 + $0x78] sm:$0xf]
  %v47 = vld [vmem:[%s1 + $0x7c] sm:$0xf]
  %v48 = vld [vmem:[%s1 + $0x80] sm:$0x3]
  %v49 = vld [vmem:[%s2] sm:$0x1]
  %v51 = vlaneseq
  %v52 = vshrl.u32 %v51, 7
  %v53 = vsub.s32 0, %v52
  %v54 = vrot.slane %v49, %v53
  %v58 = vunpack.c.l.s4 1966171168
  %v59 = vunpack.c.0.s8 %v58
  %v60 = vlaneseq
  %v61 = vshrl.u32 %v60, 7
  %v62 = vsub.s32 %v59, %v61
  %v63 = vrot.slane %v15, %v62
  %v64 = vcombine.high %v63, %v63
  %v66 = vunpack.c.l.s4 1966171168
  %v67 = vunpack.c.0.s8 %v66
  %v68 = vlaneseq
  %v69 = vshrl.u32 %v68, 7
  %v70 = vsub.s32 %v67, %v69
  %v71 = vrot.slane %v63, %v70
  %v73 = vunpack.c.l.s4 1966171168
  %v74 = vunpack.c.0.s8 %v73
  %v75 = vlaneseq
  %v76 = vshrl.u32 %v75, 7
  %v77 = vsub.s32 %v74, %v76
  %v78 = vrot.slane %v64, %v77
  %v79 = vcombine.high %v71, %v71
  %v115 = vunpack.c.l.b16 %v16
  %v116 = vunpack.c.l.b16 %v17
  %v117 = vunpack.c.l.b16 %v18
  %v118 = vunpack.c.l.b16 %v19
  %v119 = vunpack.c.l.b16 %v20
  %v120 = vunpack.c.l.b16 %v21
  %v121 = vunpack.c.l.b16 %v22
  %v122 = vunpack.c.l.b16 %v23
  %v123 = vunpack.c.l.b16 %v24
  %v124 = vunpack.c.l.b16 %v25
  %v125 = vunpack.c.l.b16 %v26
  %v126 = vunpack.c.l.b16 %v27
  %v127 = vunpack.c.l.b16 %v28
  %v128 = vunpack.c.l.b16 %v29
  %v129 = vunpack.c.l.b16 %v30
  %v130 = vunpack.c.l.b16 %v31
  %v131 = vunpack.c.l.b16 %v32
  %v132 = vunpack.c.l.b16 %v33
  %v133 = vunpack.c.l.b16 %v34
  %v134 = vunpack.c.l.b16 %v35
  %v135 = vunpack.c.l.b16 %v36
  %v136 = vunpack.c.l.b16 %v37
  %v137 = vunpack.c.l.b16 %v38
  %v138 = vunpack.c.l.b16 %v39
  %v139 = vunpack.c.l.b16 %v40
  %v140 = vunpack.c.l.b16 %v41
  %v141 = vunpack.c.l.b16 %v42
  %v142 = vunpack.c.l.b16 %v43
  %v143 = vunpack.c.l.b16 %v44
  %v144 = vunpack.c.l.b16 %v45
  %v145 = vunpack.c.l.b16 %v46
  %v146 = vunpack.c.l.b16 %v47
  %v147 = vunpack.c.l.b16 %v48
  %v148 = vpack.c.b16 %v116, %v115
  %v149 = vpack.c.b16 %v118, %v117
  %v150 = vpack.c.b16 %v120, %v119
  %v151 = vpack.c.b16 %v122, %v121
  %v152 = vpack.c.b16 %v124, %v123
  %v153 = vpack.c.b16 %v126, %v125
  %v154 = vpack.c.b16 %v128, %v127
  %v155 = vpack.c.b16 %v130, %v129
  %v156 = vpack.c.b16 %v132, %v131
  %v157 = vpack.c.b16 %v134, %v133
  %v158 = vpack.c.b16 %v136, %v135
  %v159 = vpack.c.b16 %v138, %v137
  %v160 = vpack.c.b16 %v140, %v139
  %v161 = vpack.c.b16 %v142, %v141
  %v162 = vpack.c.b16 %v144, %v143
  %v163 = vpack.c.b16 %v146, %v145
  %v164 = vpack.c.b16 %v147, %v147
  %vm181 = vcmask 31744
  %v183 = vsel %vm181, %v79, 0
  %vm185 = vcmask 1041408
  %v187 = vsel %vm185, %v164, 0
  %189 = vmatprep.subr.bf16.mxu0 0
  %190 = vmatpush1.bf16.msra.mxu0 %v148
  %191 = vmatprep.subr.bf16.mxu0 0
  %192 = vmatpush1.bf16.msra.mxu0 %v149
  %193 = vmatprep.subr.bf16.mxu0 0
  %194 = vmatpush1.bf16.msra.mxu0 %v150
  %195 = vmatprep.subr.bf16.mxu0 0
  %196 = vmatpush1.bf16.msra.mxu0 %v151
  %197 = vmatprep.subr.bf16.mxu0 0
  %198 = vmatpush1.bf16.msra.mxu0 %v152
  %199 = vmatprep.subr.bf16.mxu0 0
  %200 = vmatpush1.bf16.msra.mxu0 %v153
  %201 = vmatprep.subr.bf16.mxu0 0
  %202 = vmatpush1.bf16.msra.mxu0 %v154
  %203 = vmatprep.subr.bf16.mxu0 0
  %204 = vmatpush1.bf16.msra.mxu0 %v155
  %205 = vmatprep.subr.bf16.mxu0 0
  %206 = vmatpush1.bf16.msra.mxu0 %v156
  %207 = vmatprep.subr.bf16.mxu0 0
  %208 = vmatpush1.bf16.msra.mxu0 %v157
  %209 = vmatprep.subr.bf16.mxu0 0
  %210 = vmatpush1.bf16.msra.mxu0 %v158
  %211 = vmatprep.subr.bf16.mxu0 0
  %212 = vmatpush1.bf16.msra.mxu0 %v159
  %213 = vmatprep.subr.bf16.mxu0 0
  %214 = vmatpush1.bf16.msra.mxu0 %v160
  %215 = vmatprep.subr.bf16.mxu0 0
  %216 = vmatpush1.bf16.msra.mxu0 %v161
  %217 = vmatprep.subr.bf16.mxu0 0
  %218 = vmatpush1.bf16.msra.mxu0 %v162
  %219 = vmatprep.subr.bf16.mxu0 0
  %220 = vmatpush1.bf16.msra.mxu0 %v163
  %221 = vmatprep.mubr.bf16.mxu0 %v78
  %222 = vmatmul.mubr.bf16.gmra.mrb[0].mxu0 %v71
  %v223 = vpop.f32.mrb[0].mxu0
  %v224 = vadd.f32 %v54, %v223
  %v225 = vpop.f32.mrb[0].mxu0
  %v226 = vpop.f32.mrb[0].mxu0
  %v227 = vpop.f32.mrb[0].mxu0
  %228 = vdwg.mxu0
  %229 = vmatprep.subr.bf16.mxu0 0
  %230 = vmatpush1.bf16.msra.mxu0 %v187
  %231 = vmatprep.subr.bf16.mxu0 0
  %232 = vmatpush1.bf16.msra.mxu0 0
  %233 = vmatprep.subr.bf16.mxu0 0
  %234 = vmatpush1.bf16.msra.mxu0 0
  %235 = vmatprep.subr.bf16.mxu0 0
  %236 = vmatpush1.bf16.msra.mxu0 0
  %237 = vmatprep.subr.bf16.mxu0 0
  %238 = vmatpush1.bf16.msra.mxu0 0
  %239 = vmatprep.subr.bf16.mxu0 0
  %240 = vmatpush1.bf16.msra.mxu0 0
  %241 = vmatprep.subr.bf16.mxu0 0
  %242 = vmatpush1.bf16.msra.mxu0 0
  %243 = vmatprep.subr.bf16.mxu0 0
  %244 = vmatpush1.bf16.msra.mxu0 0
  %245 = vmatprep.subr.bf16.mxu0 0
  %246 = vmatpush1.bf16.msra.mxu0 0
  %247 = vmatprep.subr.bf16.mxu0 0
  %248 = vmatpush1.bf16.msra.mxu0 0
  %249 = vmatprep.subr.bf16.mxu0 0
  %250 = vmatpush1.bf16.msra.mxu0 0
  %251 = vmatprep.subr.bf16.mxu0 0
  %252 = vmatpush1.bf16.msra.mxu0 0
  %253 = vmatprep.subr.bf16.mxu0 0
  %254 = vmatpush1.bf16.msra.mxu0 0
  %255 = vmatprep.subr.bf16.mxu0 0
  %256 = vmatpush1.bf16.msra.mxu0 0
  %257 = vmatprep.subr.bf16.mxu0 0
  %258 = vmatpush1.bf16.msra.mxu0 0
  %259 = vmatprep.subr.bf16.mxu0 0
  %260 = vmatpush1.bf16.msra.mxu0 0
  %261 = vmatprep.mubr.bf16.mxu0 0
  %262 = vmatmul.mubr.bf16.gmra.mrb[0].mxu0 %v183
  %v263 = vpop.f32.mrb[0].mxu0
  %v264 = vadd.f32 %v224, %v263
  %v265 = vpop.f32.mrb[0].mxu0
  %v266 = vpop.f32.mrb[0].mxu0
  %v267 = vpop.f32.mrb[0].mxu0
  %268 = vdwg.mxu0
  %v269 = vmax.f32 %v264, 0.0
  %v270 = vpack.c.bf16 %v269, %v269
  %vm271 = vcmask 516096
  %272 = vst.msk [vmem:[%s3] sm:$0x1] %vm271, %v270
  // Predicated region
  $region14: #{contrastive_qf_forward.10} parent=0 // pred_check
    _
  $region15: #{contrastive_qf_forward.10} parent=0 // pred_check_branch
    %274 = sbr.rel (0) target = $region17
  $region16: #{contrastive_qf_forward.10} parent=0 // pred_region
    _
  $region17: #{contrastive_qf_forward.10} parent=0 // pred_fallthru
    _
  // Predicated region
  $region18: #{contrastive_qf_forward.10} parent=0 // pred_check
    _
  $region19: #{contrastive_qf_forward.10} parent=0 // pred_check_branch
    %276 = sbr.rel (0) target = $region21
  $region20: #{contrastive_qf_forward.10} parent=0 // pred_region
    _
  $region21: #{contrastive_qf_forward.10} parent=0 // pred_fallthru
    _

// kernel: contrastive_qf_forward.12
$region0: #{contrastive_qf_forward.12}
  #allocation0 [shape = 'u32[]', space=smem, size = 0x4, offset = 0x4, fixed_abs, tag = 'smem constant byte address 0x4 - core index']
  #allocation1 [shape = 'u32[144,128]{1,0:T(1,128)}', space=vmem, size = 0x12000, scoped, tag = 'internal scratch']
  %s0 = inlined_call_operand.vmem [shape: bf16[2,64], index: 0, kind: input, shape index: {}]
  %s1 = inlined_call_operand.vmem [shape: bf16[32,32], index: 1, kind: input, shape index: {}]
  %s2 = inlined_call_operand.vmem [shape: f32[1,32], index: 2, kind: input, shape index: {}]
  %s3 = inlined_call_operand.vmem [shape: bf16[32,32], index: 3, kind: input, shape index: {}]
  %s4 = inlined_call_operand.vmem [shape: f32[1,32], index: 4, kind: input, shape index: {}]
  %s5 = inlined_call_operand.vmem [shape: bf16[32,128], index: 5, kind: input, shape index: {}]
  %s6 = inlined_call_operand.vmem [shape: f32[1,128], index: 6, kind: input, shape index: {}]
  %s7 = inlined_call_operand.vmem [shape: bf16[32,128], index: 7, kind: input, shape index: {}]
  %s8 = inlined_call_operand.vmem [shape: f32[1,128], index: 8, kind: input, shape index: {}]
  %s9 = inlined_call_operand.vmem [shape: f32[2,256], index: 9, kind: output, shape index: {}]
  %s10 = sld [smem:[#allocation0]]
  $region46: #{contrastive_qf_forward.12} parent=0
    _
  %s12 = ssub.s32 1, %s10
  %s13 = scalar_select 0, %s12, %s10
  // Predicated region
  $region2: #{contrastive_qf_forward.12} parent=0 // pred_check
    _
  $region3: #{contrastive_qf_forward.12} parent=0 // pred_check_branch
    %15 = sbr.rel (0) target = $region5
  $region4: #{contrastive_qf_forward.12} parent=0 // pred_region
    _
  $region5: #{contrastive_qf_forward.12} parent=0 // pred_fallthru
    _
  // Predicated region
  $region6: #{contrastive_qf_forward.12} parent=0 // pred_check
    _
  $region7: #{contrastive_qf_forward.12} parent=0 // pred_check_branch
    %17 = sbr.rel (0) target = $region9
  $region8: #{contrastive_qf_forward.12} parent=0 // pred_region
    _
  $region9: #{contrastive_qf_forward.12} parent=0 // pred_fallthru
    _
  // Predicated region
  $region10: #{contrastive_qf_forward.12} parent=0 // pred_check
    _
  $region11: #{contrastive_qf_forward.12} parent=0 // pred_check_branch
    %19 = sbr.rel (0) target = $region13
  $region12: #{contrastive_qf_forward.12} parent=0 // pred_region
    _
  $region13: #{contrastive_qf_forward.12} parent=0 // pred_fallthru
    _
  // Predicated region
  $region14: #{contrastive_qf_forward.12} parent=0 // pred_check
    _
  $region15: #{contrastive_qf_forward.12} parent=0 // pred_check_branch
    %21 = sbr.rel (0) target = $region17
  $region16: #{contrastive_qf_forward.12} parent=0 // pred_region
    _
  $region17: #{contrastive_qf_forward.12} parent=0 // pred_fallthru
    _
  // Predicated region
  $region18: #{contrastive_qf_forward.12} parent=0 // pred_check
    _
  $region19: #{contrastive_qf_forward.12} parent=0 // pred_check_branch
    %23 = sbr.rel (0) target = $region21
  $region20: #{contrastive_qf_forward.12} parent=0 // pred_region
    _
  $region21: #{contrastive_qf_forward.12} parent=0 // pred_fallthru
    _
  // Predicated region
  $region22: #{contrastive_qf_forward.12} parent=0 // pred_check
    _
  $region23: #{contrastive_qf_forward.12} parent=0 // pred_check_branch
    %25 = sbr.rel (0) target = $region25
  $region24: #{contrastive_qf_forward.12} parent=0 // pred_region
    _
  $region25: #{contrastive_qf_forward.12} parent=0 // pred_fallthru
    _
  // Predicated region
  $region26: #{contrastive_qf_forward.12} parent=0 // pred_check
    _
  $region27: #{contrastive_qf_forward.12} parent=0 // pred_check_branch
    %27 = sbr.rel (0) target = $region29
  $region28: #{contrastive_qf_forward.12} parent=0 // pred_region
    _
  $region29: #{contrastive_qf_forward.12} parent=0 // pred_fallthru
    _
  // Predicated region
  $region30: #{contrastive_qf_forward.12} parent=0 // pred_check
    _
  $region31: #{contrastive_qf_forward.12} parent=0 // pred_check_branch
    %29 = sbr.rel (0) target = $region33
  $region32: #{contrastive_qf_forward.12} parent=0 // pred_region
    _
  $region33: #{contrastive_qf_forward.12} parent=0 // pred_fallthru
    _
  // Predicated region
  $region34: #{contrastive_qf_forward.12} parent=0 // pred_check
    _
  $region35: #{contrastive_qf_forward.12} parent=0 // pred_check_branch
    %31 = sbr.rel (0) target = $region37
  $region36: #{contrastive_qf_forward.12} parent=0 // pred_region
    _
  $region37: #{contrastive_qf_forward.12} parent=0 // pred_fallthru
    _
  %v33 = vld [vmem:[%s0] sm:$0x1]
  %v34 = vld [vmem:[%s1] sm:$0xf]
  %v35 = vld [vmem:[%s1 + $0x4] sm:$0xf]
  %v36 = vld [vmem:[%s1 + $0x8] sm:$0xf]
  %v37 = vld [vmem:[%s1 + $0xc] sm:$0xf]
  %v38 = vld [vmem:[%s2] sm:$0x1]
  %v39 = vld [vmem:[%s3] sm:$0xf]
  %v40 = vld [vmem:[%s3 + $0x4] sm:$0xf]
  %v41 = vld [vmem:[%s3 + $0x8] sm:$0xf]
  %v42 = vld [vmem:[%s3 + $0xc] sm:$0xf]
  %v43 = vld [vmem:[%s4] sm:$0x1]
  %v45 = vlaneseq
  %v46 = vshrl.u32 %v45, 7
  %v47 = vsub.s32 0, %v46
  %v48 = vrot.slane %v38, %v47
  %v54 = vunpack.c.l.b16 %v34
  %v55 = vunpack.c.l.b16 %v35
  %v56 = vunpack.c.l.b16 %v36
  %v57 = vunpack.c.l.b16 %v37
  %v58 = vpack.c.b16 %v55, %v54
  %v59 = vpack.c.b16 %v57, %v56
  %vm62 = vcmask 261120
  %v64 = vsel %vm62, %v33, 0
  %66 = vmatprep.subr.bf16.mxu0 0
  %67 = vmatpush1.bf16.msra.mxu0 %v58
  %68 = vmatprep.subr.bf16.mxu0 0
  %69 = vmatpush1.bf16.msra.mxu0 %v59
  %70 = vmatprep.subr.bf16.mxu0 0
  %71 = vmatpush1.bf16.msra.mxu0 0
  %72 = vmatprep.subr.bf16.mxu0 0
  %73 = vmatpush1.bf16.msra.mxu0 0
  %74 = vmatprep.subr.bf16.mxu0 0
  %75 = vmatpush1.bf16.msra.mxu0 0
  %76 = vmatprep.subr.bf16.mxu0 0
  %77 = vmatpush1.bf16.msra.mxu0 0
  %78 = vmatprep.subr.bf16.mxu0 0
  %79 = vmatpush1.bf16.msra.mxu0 0
  %80 = vmatprep.subr.bf16.mxu0 0
  %81 = vmatpush1.bf16.msra.mxu0 0
  %82 = vmatprep.subr.bf16.mxu0 0
  %83 = vmatpush1.bf16.msra.mxu0 0
  %84 = vmatprep.subr.bf16.mxu0 0
  %85 = vmatpush1.bf16.msra.mxu0 0
  %86 = vmatprep.subr.bf16.mxu0 0
  %87 = vmatpush1.bf16.msra.mxu0 0
  %88 = vmatprep.subr.bf16.mxu0 0
  %89 = vmatpush1.bf16.msra.mxu0 0
  %90 = vmatprep.subr.bf16.mxu0 0
  %91 = vmatpush1.bf16.msra.mxu0 0
  %92 = vmatprep.subr.bf16.mxu0 0
  %93 = vmatpush1.bf16.msra.mxu0 0
  %94 = vmatprep.subr.bf16.mxu0 0
  %95 = vmatpush1.bf16.msra.mxu0 0
  %96 = vmatprep.subr.bf16.mxu0 0
  %97 = vmatpush1.bf16.msra.mxu0 0
  %98 = vmatprep.mubr.bf16.mxu0 0
  %99 = vmatmul.mubr.bf16.gmra.mrb[0].mxu0 %v64
  %v100 = vpop.f32.mrb[0].mxu0
  %v101 = vadd.f32 %v48, %v100
  %v102 = vpop.f32.mrb[0].mxu0
  %v103 = vpop.f32.mrb[0].mxu0
  %v104 = vpop.f32.mrb[0].mxu0
  %105 = vdwg.mxu0
  %v107 = vlaneseq
  %v108 = vshrl.u32 %v107, 7
  %v109 = vsub.s32 0, %v108
  %v110 = vrot.slane %v43, %v109
  %v114 = vunpack.c.l.s4 1966171168
  %v115 = vunpack.c.0.s8 %v114
  %v116 = vlaneseq
  %v117 = vshrl.u32 %v116, 7
  %v118 = vsub.s32 %v115, %v117
  %v119 = vrot.slane %v33, %v118
  %v121 = vunpack.c.l.s4 1966171168
  %v122 = vunpack.c.0.s8 %v121
  %v123 = vlaneseq
  %v124 = vshrl.u32 %v123, 7
  %v125 = vsub.s32 %v122, %v124
  %v126 = vrot.slane %v119, %v125
  %127 = vrot.lane.b32.xlu0 %v126, 96
  %v128 = vpop.permute.xlu0 %127
  %v133 = vunpack.c.l.b16 %v39
  %v134 = vunpack.c.l.b16 %v40
  %v135 = vunpack.c.l.b16 %v41
  %v136 = vunpack.c.l.b16 %v42
  %v137 = vpack.c.b16 %v134, %v133
  %v138 = vpack.c.b16 %v136, %v135
  %v142 = vsel %vm62, %v128, 0
  %144 = vmatprep.subr.bf16.mxu0 0
  %145 = vmatpush1.bf16.msra.mxu0 %v137
  %146 = vmatprep.subr.bf16.mxu0 0
  %147 = vmatpush1.bf16.msra.mxu0 %v138
  %148 = vmatprep.subr.bf16.mxu0 0
  %149 = vmatpush1.bf16.msra.mxu0 0
  %150 = vmatprep.subr.bf16.mxu0 0
  %151 = vmatpush1.bf16.msra.mxu0 0
  %152 = vmatprep.subr.bf16.mxu0 0
  %153 = vmatpush1.bf16.msra.mxu0 0
  %154 = vmatprep.subr.bf16.mxu0 0
  %155 = vmatpush1.bf16.msra.mxu0 0
  %156 = vmatprep.subr.bf16.mxu0 0
  %157 = vmatpush1.bf16.msra.mxu0 0
  %158 = vmatprep.subr.bf16.mxu0 0
  %159 = vmatpush1.bf16.msra.mxu0 0
  %160 = vmatprep.subr.bf16.mxu0 0
  %161 = vmatpush1.bf16.msra.mxu0 0
  %162 = vmatprep.subr.bf16.mxu0 0
  %163 = vmatpush1.bf16.msra.mxu0 0
  %164 = vmatprep.subr.bf16.mxu0 0
  %165 = vmatpush1.bf16.msra.mxu0 0
  %166 = vmatprep.subr.bf16.mxu0 0
  %167 = vmatpush1.bf16.msra.mxu0 0
  %168 = vmatprep.subr.bf16.mxu0 0
  %169 = vmatpush1.bf16.msra.mxu0 0
  %170 = vmatprep.subr.bf16.mxu0 0
  %171 = vmatpush1.bf16.msra.mxu0 0
  %172 = vmatprep.subr.bf16.mxu0 0
  %173 = vmatpush1.bf16.msra.mxu0 0
  %174 = vmatprep.subr.bf16.mxu0 0
  %175 = vmatpush1.bf16.msra.mxu0 0
  %176 = vmatprep.mubr.bf16.mxu0 0
  %177 = vmatmul.mubr.bf16.gmra.mrb[0].mxu0 %v142
  %v178 = vpop.f32.mrb[0].mxu0
  %v179 = vadd.f32 %v110, %v178
  %v180 = vpop.f32.mrb[0].mxu0
  %v181 = vpop.f32.mrb[0].mxu0
  %v182 = vpop.f32.mrb[0].mxu0
  %183 = vdwg.mxu0
  %v184 = vmax.f32 %v101, 0.0
  %v185 = vpack.c.bf16 %v184, %v184
  %v186 = vmax.f32 %v179, 0.0
  %v187 = vpack.c.bf16 %v186, %v186
  %v188 = vld [vmem:[%s5] sm:$0xf]
  %v189 = vld [vmem:[%s5 + $0x4] sm:$0xf]
  %v190 = vld [vmem:[%s5 + $0x8] sm:$0xf]
  %v191 = vld [vmem:[%s5 + $0xc] sm:$0xf]
  %v192 = vld [vmem:[%s6] sm:$0x1]
  %v193 = vld [vmem:[%s7] sm:$0xf]
  %v194 = vld [vmem:[%s7 + $0x4] sm:$0xf]
  %v195 = vld [vmem:[%s7 + $0x8] sm:$0xf]
  %v196 = vld [vmem:[%s7 + $0xc] sm:$0xf]
  %v197 = vld [vmem:[%s8] sm:$0x1]
  %v199 = vlaneseq
  %v200 = vshrl.u32 %v199, 7
  %v201 = vsub.s32 0, %v200
  %v202 = vrot.slane %v192, %v201
  %v208 = vunpack.c.l.b16 %v188
  %v209 = vunpack.c.l.b16 %v189
  %v210 = vunpack.c.l.b16 %v190
  %v211 = vunpack.c.l.b16 %v191
  %v212 = vpack.c.b16 %v209, %v208
  %v213 = vpack.c.b16 %v211, %v210
  %v217 = vsel %vm62, %v185, 0
  %219 = vmatprep.subr.bf16.mxu0 0
  %220 = vmatpush1.bf16.msra.mxu0 %v212
  %221 = vmatprep.subr.bf16.mxu0 0
  %222 = vmatpush1.bf16.msra.mxu0 %v213
  %223 = vmatprep.subr.bf16.mxu0 0
  %224 = vmatpush1.bf16.msra.mxu0 0
  %225 = vmatprep.subr.bf16.mxu0 0
  %226 = vmatpush1.bf16.msra.mxu0 0
  %227 = vmatprep.subr.bf16.mxu0 0
  %228 = vmatpush1.bf16.msra.mxu0 0
  %229 = vmatprep.subr.bf16.mxu0 0
  %230 = vmatpush1.bf16.msra.mxu0 0
  %231 = vmatprep.subr.bf16.mxu0 0
  %232 = vmatpush1.bf16.msra.mxu0 0
  %233 = vmatprep.subr.bf16.mxu0 0
  %234 = vmatpush1.bf16.msra.mxu0 0
  %235 = vmatprep.subr.bf16.mxu0 0
  %236 = vmatpush1.bf16.msra.mxu0 0
  %237 = vmatprep.subr.bf16.mxu0 0
  %238 = vmatpush1.bf16.msra.mxu0 0
  %239 = vmatprep.subr.bf16.mxu0 0
  %240 = vmatpush1.bf16.msra.mxu0 0
  %241 = vmatprep.subr.bf16.mxu0 0
  %242 = vmatpush1.bf16.msra.mxu0 0
  %243 = vmatprep.subr.bf16.mxu0 0
  %244 = vmatpush1.bf16.msra.mxu0 0
  %245 = vmatprep.subr.bf16.mxu0 0
  %246 = vmatpush1.bf16.msra.mxu0 0
  %247 = vmatprep.subr.bf16.mxu0 0
  %248 = vmatpush1.bf16.msra.mxu0 0
  %249 = vmatprep.subr.bf16.mxu0 0
  %250 = vmatpush1.bf16.msra.mxu0 0
  %251 = vmatprep.mubr.bf16.mxu0 0
  %252 = vmatmul.mubr.bf16.gmra.mrb[0].mxu0 %v217
  %v253 = vpop.f32.mrb[0].mxu0
  %v254 = vadd.f32 %v202, %v253
  %v255 = vpop.f32.mrb[0].mxu0
  %v256 = vpop.f32.mrb[0].mxu0
  %v257 = vpop.f32.mrb[0].mxu0
  %258 = vdwg.mxu0
  %v260 = vlaneseq
  %v261 = vshrl.u32 %v260, 7
  %v262 = vsub.s32 0, %v261
  %v263 = vrot.slane %v197, %v262
  %v269 = vunpack.c.l.b16 %v193
  %v270 = vunpack.c.l.b16 %v194
  %v271 = vunpack.c.l.b16 %v195
  %v272 = vunpack.c.l.b16 %v196
  %v273 = vpack.c.b16 %v270, %v269
  %v274 = vpack.c.b16 %v272, %v271
  %v278 = vsel %vm62, %v187, 0
  %280 = vmatprep.subr.bf16.mxu0 0
  %281 = vmatpush1.bf16.msra.mxu0 %v273
  %282 = vmatprep.subr.bf16.mxu0 0
  %283 = vmatpush1.bf16.msra.mxu0 %v274
  %284 = vmatprep.subr.bf16.mxu0 0
  %285 = vmatpush1.bf16.msra.mxu0 0
  %286 = vmatprep.subr.bf16.mxu0 0
  %287 = vmatpush1.bf16.msra.mxu0 0
  %288 = vmatprep.subr.bf16.mxu0 0
  %289 = vmatpush1.bf16.msra.mxu0 0
  %290 = vmatprep.subr.bf16.mxu0 0
  %291 = vmatpush1.bf16.msra.mxu0 0
  %292 = vmatprep.subr.bf16.mxu0 0
  %293 = vmatpush1.bf16.msra.mxu0 0
  %294 = vmatprep.subr.bf16.mxu0 0
  %295 = vmatpush1.bf16.msra.mxu0 0
  %296 = vmatprep.subr.bf16.mxu0 0
  %297 = vmatpush1.bf16.msra.mxu0 0
  %298 = vmatprep.subr.bf16.mxu0 0
  %299 = vmatpush1.bf16.msra.mxu0 0
  %300 = vmatprep.subr.bf16.mxu0 0
  %301 = vmatpush1.bf16.msra.mxu0 0
  %302 = vmatprep.subr.bf16.mxu0 0
  %303 = vmatpush1.bf16.msra.mxu0 0
  %304 = vmatprep.subr.bf16.mxu0 0
  %305 = vmatpush1.bf16.msra.mxu0 0
  %306 = vmatprep.subr.bf16.mxu0 0
  %307 = vmatpush1.bf16.msra.mxu0 0
  %308 = vmatprep.subr.bf16.mxu0 0
  %309 = vmatpush1.bf16.msra.mxu0 0
  %310 = vmatprep.subr.bf16.mxu0 0
  %311 = vmatpush1.bf16.msra.mxu0 0
  %312 = vmatprep.mubr.bf16.mxu0 0
  %313 = vmatmul.mubr.bf16.gmra.mrb[0].mxu0 %v278
  %v314 = vpop.f32.mrb[0].mxu0
  %v315 = vadd.f32 %v263, %v314
  %v316 = vpop.f32.mrb[0].mxu0
  %v317 = vpop.f32.mrb[0].mxu0
  %v318 = vpop.f32.mrb[0].mxu0
  %319 = vdwg.mxu0
  %320 = vst [vmem:[%s9] sm:$0x3] %v254
  %321 = vst [vmem:[%s9 + $0x2] sm:$0x3] %v315
  // Predicated region
  $region38: #{contrastive_qf_forward.12} parent=0 // pred_check
    _
  $region39: #{contrastive_qf_forward.12} parent=0 // pred_check_branch
    %323 = sbr.rel (0) target = $region41
  $region40: #{contrastive_qf_forward.12} parent=0 // pred_region
    _
  $region41: #{contrastive_qf_forward.12} parent=0 // pred_fallthru
    _
  // Predicated region
  $region42: #{contrastive_qf_forward.12} parent=0 // pred_check
    _
  $region43: #{contrastive_qf_forward.12} parent=0 // pred_check_branch
    %325 = sbr.rel (0) target = $region45
  $region44: #{contrastive_qf_forward.12} parent=0 // pred_region
    _
  $region45: #{contrastive_qf_forward.12} parent=0 // pred_fallthru
    _

// kernel: contrastive_qf_forward.13
$region0: #{contrastive_qf_forward.13}
  #allocation0 [shape = 'u32[]', space=smem, size = 0x4, offset = 0x4, fixed_abs, tag = 'smem constant byte address 0x4 - core index']
  #allocation1 [shape = 'u32[144,128]{1,0:T(1,128)}', space=vmem, size = 0x12000, scoped, tag = 'internal scratch']
  %s0 = inlined_call_operand.vmem [shape: bf16[2,64], index: 0, kind: input, shape index: {}]
  %s1 = inlined_call_operand.vmem [shape: f32[2,256], index: 1, kind: input, shape index: {}]
  %s2 = inlined_call_operand.vmem [shape: bf16[32,32], index: 2, kind: input, shape index: {}]
  %s3 = inlined_call_operand.vmem [shape: f32[1,32], index: 3, kind: input, shape index: {}]
  %s4 = inlined_call_operand.vmem [shape: bf16[32,32], index: 4, kind: input, shape index: {}]
  %s5 = inlined_call_operand.vmem [shape: f32[1,32], index: 5, kind: input, shape index: {}]
  %s6 = inlined_call_operand.vmem [shape: bf16[32,128], index: 6, kind: input, shape index: {}]
  %s7 = inlined_call_operand.vmem [shape: f32[1,128], index: 7, kind: input, shape index: {}]
  %s8 = inlined_call_operand.vmem [shape: bf16[32,128], index: 8, kind: input, shape index: {}]
  %s9 = inlined_call_operand.vmem [shape: f32[1,128], index: 9, kind: input, shape index: {}]
  %s10 = inlined_call_operand.vmem [shape: f32[2,2,2], index: 10, kind: output, shape index: {}]
  %s11 = sld [smem:[#allocation0]]
  $region50: #{contrastive_qf_forward.13} parent=0
    _
  %s13 = ssub.s32 1, %s11
  %s14 = scalar_select 0, %s13, %s11
  // Predicated region
  $region2: #{contrastive_qf_forward.13} parent=0 // pred_check
    _
  $region3: #{contrastive_qf_forward.13} parent=0 // pred_check_branch
    %16 = sbr.rel (0) target = $region5
  $region4: #{contrastive_qf_forward.13} parent=0 // pred_region
    _
  $region5: #{contrastive_qf_forward.13} parent=0 // pred_fallthru
    _
  // Predicated region
  $region6: #{contrastive_qf_forward.13} parent=0 // pred_check
    _
  $region7: #{contrastive_qf_forward.13} parent=0 // pred_check_branch
    %18 = sbr.rel (0) target = $region9
  $region8: #{contrastive_qf_forward.13} parent=0 // pred_region
    _
  $region9: #{contrastive_qf_forward.13} parent=0 // pred_fallthru
    _
  // Predicated region
  $region10: #{contrastive_qf_forward.13} parent=0 // pred_check
    _
  $region11: #{contrastive_qf_forward.13} parent=0 // pred_check_branch
    %20 = sbr.rel (0) target = $region13
  $region12: #{contrastive_qf_forward.13} parent=0 // pred_region
    _
  $region13: #{contrastive_qf_forward.13} parent=0 // pred_fallthru
    _
  // Predicated region
  $region14: #{contrastive_qf_forward.13} parent=0 // pred_check
    _
  $region15: #{contrastive_qf_forward.13} parent=0 // pred_check_branch
    %22 = sbr.rel (0) target = $region17
  $region16: #{contrastive_qf_forward.13} parent=0 // pred_region
    _
  $region17: #{contrastive_qf_forward.13} parent=0 // pred_fallthru
    _
  // Predicated region
  $region18: #{contrastive_qf_forward.13} parent=0 // pred_check
    _
  $region19: #{contrastive_qf_forward.13} parent=0 // pred_check_branch
    %24 = sbr.rel (0) target = $region21
  $region20: #{contrastive_qf_forward.13} parent=0 // pred_region
    _
  $region21: #{contrastive_qf_forward.13} parent=0 // pred_fallthru
    _
  // Predicated region
  $region22: #{contrastive_qf_forward.13} parent=0 // pred_check
    _
  $region23: #{contrastive_qf_forward.13} parent=0 // pred_check_branch
    %26 = sbr.rel (0) target = $region25
  $region24: #{contrastive_qf_forward.13} parent=0 // pred_region
    _
  $region25: #{contrastive_qf_forward.13} parent=0 // pred_fallthru
    _
  // Predicated region
  $region26: #{contrastive_qf_forward.13} parent=0 // pred_check
    _
  $region27: #{contrastive_qf_forward.13} parent=0 // pred_check_branch
    %28 = sbr.rel (0) target = $region29
  $region28: #{contrastive_qf_forward.13} parent=0 // pred_region
    _
  $region29: #{contrastive_qf_forward.13} parent=0 // pred_fallthru
    _
  // Predicated region
  $region30: #{contrastive_qf_forward.13} parent=0 // pred_check
    _
  $region31: #{contrastive_qf_forward.13} parent=0 // pred_check_branch
    %30 = sbr.rel (0) target = $region33
  $region32: #{contrastive_qf_forward.13} parent=0 // pred_region
    _
  $region33: #{contrastive_qf_forward.13} parent=0 // pred_fallthru
    _
  // Predicated region
  $region34: #{contrastive_qf_forward.13} parent=0 // pred_check
    _
  $region35: #{contrastive_qf_forward.13} parent=0 // pred_check_branch
    %32 = sbr.rel (0) target = $region37
  $region36: #{contrastive_qf_forward.13} parent=0 // pred_region
    _
  $region37: #{contrastive_qf_forward.13} parent=0 // pred_fallthru
    _
  // Predicated region
  $region38: #{contrastive_qf_forward.13} parent=0 // pred_check
    _
  $region39: #{contrastive_qf_forward.13} parent=0 // pred_check_branch
    %34 = sbr.rel (0) target = $region41
  $region40: #{contrastive_qf_forward.13} parent=0 // pred_region
    _
  $region41: #{contrastive_qf_forward.13} parent=0 // pred_fallthru
    _
  %v36 = vld [vmem:[%s0] sm:$0x1]
  %v37 = vld [vmem:[%s2] sm:$0xf]
  %v38 = vld [vmem:[%s2 + $0x4] sm:$0xf]
  %v39 = vld [vmem:[%s2 + $0x8] sm:$0xf]
  %v40 = vld [vmem:[%s2 + $0xc] sm:$0xf]
  %v41 = vld [vmem:[%s3] sm:$0x1]
  %v42 = vld [vmem:[%s4] sm:$0xf]
  %v43 = vld [vmem:[%s4 + $0x4] sm:$0xf]
  %v44 = vld [vmem:[%s4 + $0x8] sm:$0xf]
  %v45 = vld [vmem:[%s4 + $0xc] sm:$0xf]
  %v46 = vld [vmem:[%s5] sm:$0x1]
  %v48 = vlaneseq
  %v49 = vshrl.u32 %v48, 7
  %v50 = vsub.s32 0, %v49
  %v51 = vrot.slane %v41, %v50
  %v57 = vunpack.c.l.b16 %v37
  %v58 = vunpack.c.l.b16 %v38
  %v59 = vunpack.c.l.b16 %v39
  %v60 = vunpack.c.l.b16 %v40
  %v61 = vpack.c.b16 %v58, %v57
  %v62 = vpack.c.b16 %v60, %v59
  %vm65 = vcmask 261120
  %v67 = vsel %vm65, %v36, 0
  %69 = vmatprep.subr.bf16.mxu0 0
  %70 = vmatpush1.bf16.msra.mxu0 %v61
  %71 = vmatprep.subr.bf16.mxu0 0
  %72 = vmatpush1.bf16.msra.mxu0 %v62
  %73 = vmatprep.subr.bf16.mxu0 0
  %74 = vmatpush1.bf16.msra.mxu0 0
  %75 = vmatprep.subr.bf16.mxu0 0
  %76 = vmatpush1.bf16.msra.mxu0 0
  %77 = vmatprep.subr.bf16.mxu0 0
  %78 = vmatpush1.bf16.msra.mxu0 0
  %79 = vmatprep.subr.bf16.mxu0 0
  %80 = vmatpush1.bf16.msra.mxu0 0
  %81 = vmatprep.subr.bf16.mxu0 0
  %82 = vmatpush1.bf16.msra.mxu0 0
  %83 = vmatprep.subr.bf16.mxu0 0
  %84 = vmatpush1.bf16.msra.mxu0 0
  %85 = vmatprep.subr.bf16.mxu0 0
  %86 = vmatpush1.bf16.msra.mxu0 0
  %87 = vmatprep.subr.bf16.mxu0 0
  %88 = vmatpush1.bf16.msra.mxu0 0
  %89 = vmatprep.subr.bf16.mxu0 0
  %90 = vmatpush1.bf16.msra.mxu0 0
  %91 = vmatprep.subr.bf16.mxu0 0
  %92 = vmatpush1.bf16.msra.mxu0 0
  %93 = vmatprep.subr.bf16.mxu0 0
  %94 = vmatpush1.bf16.msra.mxu0 0
  %95 = vmatprep.subr.bf16.mxu0 0
  %96 = vmatpush1.bf16.msra.mxu0 0
  %97 = vmatprep.subr.bf16.mxu0 0
  %98 = vmatpush1.bf16.msra.mxu0 0
  %99 = vmatprep.subr.bf16.mxu0 0
  %100 = vmatpush1.bf16.msra.mxu0 0
  %101 = vmatprep.mubr.bf16.mxu0 0
  %102 = vmatmul.mubr.bf16.gmra.mrb[0].mxu0 %v67
  %v103 = vpop.f32.mrb[0].mxu0
  %v104 = vadd.f32 %v51, %v103
  %v105 = vpop.f32.mrb[0].mxu0
  %v106 = vpop.f32.mrb[0].mxu0
  %v107 = vpop.f32.mrb[0].mxu0
  %108 = vdwg.mxu0
  %v110 = vlaneseq
  %v111 = vshrl.u32 %v110, 7
  %v112 = vsub.s32 0, %v111
  %v113 = vrot.slane %v46, %v112
  %v117 = vunpack.c.l.s4 1966171168
  %v118 = vunpack.c.0.s8 %v117
  %v119 = vlaneseq
  %v120 = vshrl.u32 %v119, 7
  %v121 = vsub.s32 %v118, %v120
  %v122 = vrot.slane %v36, %v121
  %v124 = vunpack.c.l.s4 1966171168
  %v125 = vunpack.c.0.s8 %v124
  %v126 = vlaneseq
  %v127 = vshrl.u32 %v126, 7
  %v128 = vsub.s32 %v125, %v127
  %v129 = vrot.slane %v122, %v128
  %130 = vrot.lane.b32.xlu0 %v129, 96
  %v131 = vpop.permute.xlu0 %130
  %v136 = vunpack.c.l.b16 %v42
  %v137 = vunpack.c.l.b16 %v43
  %v138 = vunpack.c.l.b16 %v44
  %v139 = vunpack.c.l.b16 %v45
  %v140 = vpack.c.b16 %v137, %v136
  %v141 = vpack.c.b16 %v139, %v138
  %v145 = vsel %vm65, %v131, 0
  %147 = vmatprep.subr.bf16.mxu0 0
  %148 = vmatpush1.bf16.msra.mxu0 %v140
  %149 = vmatprep.subr.bf16.mxu0 0
  %150 = vmatpush1.bf16.msra.mxu0 %v141
  %151 = vmatprep.subr.bf16.mxu0 0
  %152 = vmatpush1.bf16.msra.mxu0 0
  %153 = vmatprep.subr.bf16.mxu0 0
  %154 = vmatpush1.bf16.msra.mxu0 0
  %155 = vmatprep.subr.bf16.mxu0 0
  %156 = vmatpush1.bf16.msra.mxu0 0
  %157 = vmatprep.subr.bf16.mxu0 0
  %158 = vmatpush1.bf16.msra.mxu0 0
  %159 = vmatprep.subr.bf16.mxu0 0
  %160 = vmatpush1.bf16.msra.mxu0 0
  %161 = vmatprep.subr.bf16.mxu0 0
  %162 = vmatpush1.bf16.msra.mxu0 0
  %163 = vmatprep.subr.bf16.mxu0 0
  %164 = vmatpush1.bf16.msra.mxu0 0
  %165 = vmatprep.subr.bf16.mxu0 0
  %166 = vmatpush1.bf16.msra.mxu0 0
  %167 = vmatprep.subr.bf16.mxu0 0
  %168 = vmatpush1.bf16.msra.mxu0 0
  %169 = vmatprep.subr.bf16.mxu0 0
  %170 = vmatpush1.bf16.msra.mxu0 0
  %171 = vmatprep.subr.bf16.mxu0 0
  %172 = vmatpush1.bf16.msra.mxu0 0
  %173 = vmatprep.subr.bf16.mxu0 0
  %174 = vmatpush1.bf16.msra.mxu0 0
  %175 = vmatprep.subr.bf16.mxu0 0
  %176 = vmatpush1.bf16.msra.mxu0 0
  %177 = vmatprep.subr.bf16.mxu0 0
  %178 = vmatpush1.bf16.msra.mxu0 0
  %179 = vmatprep.mubr.bf16.mxu0 0
  %180 = vmatmul.mubr.bf16.gmra.mrb[0].mxu0 %v145
  %v181 = vpop.f32.mrb[0].mxu0
  %v182 = vadd.f32 %v113, %v181
  %v183 = vpop.f32.mrb[0].mxu0
  %v184 = vpop.f32.mrb[0].mxu0
  %v185 = vpop.f32.mrb[0].mxu0
  %186 = vdwg.mxu0
  %v187 = vmax.f32 %v104, 0.0
  %v188 = vpack.c.bf16 %v187, %v187
  %v189 = vmax.f32 %v182, 0.0
  %v190 = vpack.c.bf16 %v189, %v189
  %v191 = vld [vmem:[%s6] sm:$0xf]
  %v192 = vld [vmem:[%s6 + $0x4] sm:$0xf]
  %v193 = vld [vmem:[%s6 + $0x8] sm:$0xf]
  %v194 = vld [vmem:[%s6 + $0xc] sm:$0xf]
  %v195 = vld [vmem:[%s7] sm:$0x1]
  %v196 = vld [vmem:[%s8] sm:$0xf]
  %v197 = vld [vmem:[%s8 + $0x4] sm:$0xf]
  %v198 = vld [vmem:[%s8 + $0x8] sm:$0xf]
  %v199 = vld [vmem:[%s8 + $0xc] sm:$0xf]
  %v200 = vld [vmem:[%s9] sm:$0x1]
  %v202 = vlaneseq
  %v203 = vshrl.u32 %v202, 7
  %v204 = vsub.s32 0, %v203
  %v205 = vrot.slane %v195, %v204
  %v211 = vunpack.c.l.b16 %v191
  %v212 = vunpack.c.l.b16 %v192
  %v213 = vunpack.c.l.b16 %v193
  %v214 = vunpack.c.l.b16 %v194
  %v215 = vpack.c.b16 %v212, %v211
  %v216 = vpack.c.b16 %v214, %v213
  %v220 = vsel %vm65, %v188, 0
  %222 = vmatprep.subr.bf16.mxu0 0
  %223 = vmatpush1.bf16.msra.mxu0 %v215
  %224 = vmatprep.subr.bf16.mxu0 0
  %225 = vmatpush1.bf16.msra.mxu0 %v216
  %226 = vmatprep.subr.bf16.mxu0 0
  %227 = vmatpush1.bf16.msra.mxu0 0
  %228 = vmatprep.subr.bf16.mxu0 0
  %229 = vmatpush1.bf16.msra.mxu0 0
  %230 = vmatprep.subr.bf16.mxu0 0
  %231 = vmatpush1.bf16.msra.mxu0 0
  %232 = vmatprep.subr.bf16.mxu0 0
  %233 = vmatpush1.bf16.msra.mxu0 0
  %234 = vmatprep.subr.bf16.mxu0 0
  %235 = vmatpush1.bf16.msra.mxu0 0
  %236 = vmatprep.subr.bf16.mxu0 0
  %237 = vmatpush1.bf16.msra.mxu0 0
  %238 = vmatprep.subr.bf16.mxu0 0
  %239 = vmatpush1.bf16.msra.mxu0 0
  %240 = vmatprep.subr.bf16.mxu0 0
  %241 = vmatpush1.bf16.msra.mxu0 0
  %242 = vmatprep.subr.bf16.mxu0 0
  %243 = vmatpush1.bf16.msra.mxu0 0
  %244 = vmatprep.subr.bf16.mxu0 0
  %245 = vmatpush1.bf16.msra.mxu0 0
  %246 = vmatprep.subr.bf16.mxu0 0
  %247 = vmatpush1.bf16.msra.mxu0 0
  %248 = vmatprep.subr.bf16.mxu0 0
  %249 = vmatpush1.bf16.msra.mxu0 0
  %250 = vmatprep.subr.bf16.mxu0 0
  %251 = vmatpush1.bf16.msra.mxu0 0
  %252 = vmatprep.subr.bf16.mxu0 0
  %253 = vmatpush1.bf16.msra.mxu0 0
  %254 = vmatprep.mubr.bf16.mxu0 0
  %255 = vmatmul.mubr.bf16.gmra.mrb[0].mxu0 %v220
  %v256 = vpop.f32.mrb[0].mxu0
  %v257 = vadd.f32 %v205, %v256
  %v258 = vpop.f32.mrb[0].mxu0
  %v259 = vpop.f32.mrb[0].mxu0
  %v260 = vpop.f32.mrb[0].mxu0
  %261 = vdwg.mxu0
  %v263 = vlaneseq
  %v264 = vshrl.u32 %v263, 7
  %v265 = vsub.s32 0, %v264
  %v266 = vrot.slane %v200, %v265
  %v272 = vunpack.c.l.b16 %v196
  %v273 = vunpack.c.l.b16 %v197
  %v274 = vunpack.c.l.b16 %v198
  %v275 = vunpack.c.l.b16 %v199
  %v276 = vpack.c.b16 %v273, %v272
  %v277 = vpack.c.b16 %v275, %v274
  %v281 = vsel %vm65, %v190, 0
  %283 = vmatprep.subr.bf16.mxu0 0
  %284 = vmatpush1.bf16.msra.mxu0 %v276
  %285 = vmatprep.subr.bf16.mxu0 0
  %286 = vmatpush1.bf16.msra.mxu0 %v277
  %287 = vmatprep.subr.bf16.mxu0 0
  %288 = vmatpush1.bf16.msra.mxu0 0
  %289 = vmatprep.subr.bf16.mxu0 0
  %290 = vmatpush1.bf16.msra.mxu0 0
  %291 = vmatprep.subr.bf16.mxu0 0
  %292 = vmatpush1.bf16.msra.mxu0 0
  %293 = vmatprep.subr.bf16.mxu0 0
  %294 = vmatpush1.bf16.msra.mxu0 0
  %295 = vmatprep.subr.bf16.mxu0 0
  %296 = vmatpush1.bf16.msra.mxu0 0
  %297 = vmatprep.subr.bf16.mxu0 0
  %298 = vmatpush1.bf16.msra.mxu0 0
  %299 = vmatprep.subr.bf16.mxu0 0
  %300 = vmatpush1.bf16.msra.mxu0 0
  %301 = vmatprep.subr.bf16.mxu0 0
  %302 = vmatpush1.bf16.msra.mxu0 0
  %303 = vmatprep.subr.bf16.mxu0 0
  %304 = vmatpush1.bf16.msra.mxu0 0
  %305 = vmatprep.subr.bf16.mxu0 0
  %306 = vmatpush1.bf16.msra.mxu0 0
  %307 = vmatprep.subr.bf16.mxu0 0
  %308 = vmatpush1.bf16.msra.mxu0 0
  %309 = vmatprep.subr.bf16.mxu0 0
  %310 = vmatpush1.bf16.msra.mxu0 0
  %311 = vmatprep.subr.bf16.mxu0 0
  %312 = vmatpush1.bf16.msra.mxu0 0
  %313 = vmatprep.subr.bf16.mxu0 0
  %314 = vmatpush1.bf16.msra.mxu0 0
  %315 = vmatprep.mubr.bf16.mxu0 0
  %316 = vmatmul.mubr.bf16.gmra.mrb[0].mxu0 %v281
  %v317 = vpop.f32.mrb[0].mxu0
  %v318 = vadd.f32 %v266, %v317
  %v319 = vpop.f32.mrb[0].mxu0
  %v320 = vpop.f32.mrb[0].mxu0
  %v321 = vpop.f32.mrb[0].mxu0
  %322 = vdwg.mxu0
  %v323 = vld [vmem:[%s1] sm:$0xf]
  %324 = vmatprep.subr.mxu0 0.0
  %325 = vmatpush1.xpose.msra.mxu0 %v323
  %326 = vmatprep.subr.mxu0 0.0
  %327 = vmatpush1.xpose.msra.mxu0 0.0
  %328 = vmatprep.subr.mxu0 0.0
  %329 = vmatpush1.xpose.msra.mxu0 0.0
  %330 = vmatprep.subr.mxu0 0.0
  %331 = vmatpush1.xpose.msra.mxu0 0.0
  %332 = vmatprep.subr.mxu0 0.0
  %333 = vmatpush1.xpose.msra.mxu0 0.0
  %334 = vmatprep.subr.mxu0 0.0
  %335 = vmatpush1.xpose.msra.mxu0 0.0
  %336 = vmatprep.subr.mxu0 0.0
  %337 = vmatpush1.xpose.msra.mxu0 0.0
  %338 = vmatprep.subr.mxu0 0.0
  %339 = vmatpush1.xpose.msra.mxu0 0.0
  %340 = vmatprep.subr.mxu0 0.0
  %341 = vmatpush1.xpose.msra.mxu0 0.0
  %342 = vmatprep.subr.mxu0 0.0
  %343 = vmatpush1.xpose.msra.mxu0 0.0
  %344 = vmatprep.subr.mxu0 0.0
  %345 = vmatpush1.xpose.msra.mxu0 0.0
  %346 = vmatprep.subr.mxu0 0.0
  %347 = vmatpush1.xpose.msra.mxu0 0.0
  %348 = vmatprep.subr.mxu0 0.0
  %349 = vmatpush1.xpose.msra.mxu0 0.0
  %350 = vmatprep.subr.mxu0 0.0
  %351 = vmatpush1.xpose.msra.mxu0 0.0
  %352 = vmatprep.subr.mxu0 0.0
  %353 = vmatpush1.xpose.msra.mxu0 0.0
  %354 = vmatprep.subr.mxu0 0.0
  %355 = vmatpush1.xpose.msra.mxu0 0.0
  %356 = vmatprep.subr.mxu0 0.0
  %357 = vmatpush1.xpose.msra.mxu0 0.0
  %358 = vmatprep.subr.mxu0 0.0
  %359 = vmatpush1.xpose.msra.mxu0 0.0
  %360 = vmatprep.subr.mxu0 0.0
  %361 = vmatpush1.xpose.msra.mxu0 0.0
  %362 = vmatprep.subr.mxu0 0.0
  %363 = vmatpush1.xpose.msra.mxu0 0.0
  %364 = vmatprep.subr.mxu0 0.0
  %365 = vmatpush1.xpose.msra.mxu0 0.0
  %366 = vmatprep.subr.mxu0 0.0
  %367 = vmatpush1.xpose.msra.mxu0 0.0
  %368 = vmatprep.subr.mxu0 0.0
  %369 = vmatpush1.xpose.msra.mxu0 0.0
  %370 = vmatprep.subr.mxu0 0.0
  %371 = vmatpush1.xpose.msra.mxu0 0.0
  %372 = vmatprep.subr.mxu0 0.0
  %373 = vmatpush1.xpose.msra.mxu0 0.0
  %374 = vmatprep.subr.mxu0 0.0
  %375 = vmatpush1.xpose.msra.mxu0 0.0
  %376 = vmatprep.subr.mxu0 0.0
  %377 = vmatpush1.xpose.msra.mxu0 0.0
  %378 = vmatprep.subr.mxu0 0.0
  %379 = vmatpush1.xpose.msra.mxu0 0.0
  %380 = vmatprep.subr.mxu0 0.0
  %381 = vmatpush1.xpose.msra.mxu0 0.0
  %382 = vmatprep.subr.mxu0 0.0
  %383 = vmatpush1.xpose.msra.mxu0 0.0
  %384 = vmatprep.subr.mxu0 0.0
  %385 = vmatpush1.xpose.msra.mxu0 0.0
  %386 = vmatprep.subr.mxu0 0.0
  %387 = vmatpush1.xpose.msra.mxu0 0.0
  %388 = vmatprep.mubr.f32.mxu0 0.0
  %389 = vmatmul.mubr.f32.gmra.mrb[0].mxu0 %v257
  %v390 = vpop.f32.mrb[0].mxu0
  %v391 = vadd.f32 0.0, %v390
  %v392 = vpop.f32.mrb[0].mxu0
  %393 = vdwg.mxu0
  %vm394 = vcmask 9216
  %395 = vst.msk [vmem:[%s10] sm:$0x3] %vm394, %v391
  %v398 = vunpack.c.l.s4 1983009808
  %v399 = vunpack.c.0.s8 %v398
  %v400 = vlaneseq
  %v401 = vshrl.u32 %v400, 7
  %v402 = vsub.s32 %v399, %v401
  %v403 = vrot.slane %v323, %v402
  %v404 = vcombine.high %v403, %v403
  %406 = vmatprep.subr.mxu0 0.0
  %407 = vmatpush1.xpose.msra.mxu0 %v404
  %408 = vmatprep.subr.mxu0 0.0
  %409 = vmatpush1.xpose.msra.mxu0 0.0
  %410 = vmatprep.subr.mxu0 0.0
  %411 = vmatpush1.xpose.msra.mxu0 0.0
  %412 = vmatprep.subr.mxu0 0.0
  %413 = vmatpush1.xpose.msra.mxu0 0.0
  %414 = vmatprep.subr.mxu0 0.0
  %415 = vmatpush1.xpose.msra.mxu0 0.0
  %416 = vmatprep.subr.mxu0 0.0
  %417 = vmatpush1.xpose.msra.mxu0 0.0
  %418 = vmatprep.subr.mxu0 0.0
  %419 = vmatpush1.xpose.msra.mxu0 0.0
  %420 = vmatprep.subr.mxu0 0.0
  %421 = vmatpush1.xpose.msra.mxu0 0.0
  %422 = vmatprep.subr.mxu0 0.0
  %423 = vmatpush1.xpose.msra.mxu0 0.0
  %424 = vmatprep.subr.mxu0 0.0
  %425 = vmatpush1.xpose.msra.mxu0 0.0
  %426 = vmatprep.subr.mxu0 0.0
  %427 = vmatpush1.xpose.msra.mxu0 0.0
  %428 = vmatprep.subr.mxu0 0.0
  %429 = vmatpush1.xpose.msra.mxu0 0.0
  %430 = vmatprep.subr.mxu0 0.0
  %431 = vmatpush1.xpose.msra.mxu0 0.0
  %432 = vmatprep.subr.mxu0 0.0
  %433 = vmatpush1.xpose.msra.mxu0 0.0
  %434 = vmatprep.subr.mxu0 0.0
  %435 = vmatpush1.xpose.msra.mxu0 0.0
  %436 = vmatprep.subr.mxu0 0.0
  %437 = vmatpush1.xpose.msra.mxu0 0.0
  %438 = vmatprep.subr.mxu0 0.0
  %439 = vmatpush1.xpose.msra.mxu0 0.0
  %440 = vmatprep.subr.mxu0 0.0
  %441 = vmatpush1.xpose.msra.mxu0 0.0
  %442 = vmatprep.subr.mxu0 0.0
  %443 = vmatpush1.xpose.msra.mxu0 0.0
  %444 = vmatprep.subr.mxu0 0.0
  %445 = vmatpush1.xpose.msra.mxu0 0.0
  %446 = vmatprep.subr.mxu0 0.0
  %447 = vmatpush1.xpose.msra.mxu0 0.0
  %448 = vmatprep.subr.mxu0 0.0
  %449 = vmatpush1.xpose.msra.mxu0 0.0
  %450 = vmatprep.subr.mxu0 0.0
  %451 = vmatpush1.xpose.msra.mxu0 0.0
  %452 = vmatprep.subr.mxu0 0.0
  %453 = vmatpush1.xpose.msra.mxu0 0.0
  %454 = vmatprep.subr.mxu0 0.0
  %455 = vmatpush1.xpose.msra.mxu0 0.0
  %456 = vmatprep.subr.mxu0 0.0
  %457 = vmatpush1.xpose.msra.mxu0 0.0
  %458 = vmatprep.subr.mxu0 0.0
  %459 = vmatpush1.xpose.msra.mxu0 0.0
  %460 = vmatprep.subr.mxu0 0.0
  %461 = vmatpush1.xpose.msra.mxu0 0.0
  %462 = vmatprep.subr.mxu0 0.0
  %463 = vmatpush1.xpose.msra.mxu0 0.0
  %464 = vmatprep.subr.mxu0 0.0
  %465 = vmatpush1.xpose.msra.mxu0 0.0
  %466 = vmatprep.subr.mxu0 0.0
  %467 = vmatpush1.xpose.msra.mxu0 0.0
  %468 = vmatprep.subr.mxu0 0.0
  %469 = vmatpush1.xpose.msra.mxu0 0.0
  %470 = vmatprep.mubr.f32.mxu0 0.0
  %471 = vmatmul.mubr.f32.gmra.mrb[0].mxu0 %v318
  %v472 = vpop.f32.mrb[0].mxu0
  %v473 = vadd.f32 0.0, %v472
  %v474 = vpop.f32.mrb[0].mxu0
  %475 = vdwg.mxu0
  %s476 = scalar_lea.vmem %s10, 2
  %477 = vst.msk [vmem:[%s476] sm:$0x3] %vm394, %v473
  // Predicated region
  $region42: #{contrastive_qf_forward.13} parent=0 // pred_check
    _
  $region43: #{contrastive_qf_forward.13} parent=0 // pred_check_branch
    %479 = sbr.rel (0) target = $region45
  $region44: #{contrastive_qf_forward.13} parent=0 // pred_region
    _
  $region45: #{contrastive_qf_forward.13} parent=0 // pred_fallthru
    _
  // Predicated region
  $region46: #{contrastive_qf_forward.13} parent=0 // pred_check
    _
  $region47: #{contrastive_qf_forward.13} parent=0 // pred_check_branch
    %481 = sbr.rel (0) target = $region49
  $region48: #{contrastive_qf_forward.13} parent=0 // pred_region
    _
  $region49: #{contrastive_qf_forward.13} parent=0 // pred_fallthru
    _

</llo_original>
